<compile_context>
chip_gen: v5e
topology: v5e:2x2
jax: 0.10.0
libtpu: 0.0.40
codegen_flags: <defaults>
</compile_context>

<pallas_src>
import jax
import jax.numpy as jnp
from jax.experimental import pallas as pl
from jax.experimental.pallas import tpu as pltpu

X_DIM = 784
N = 600
N0 = 150
LEAKY_SLOPE = 0.2
NUM_LAYERS = 6

# Original (logical) layer dims and their lane-padded storage dims.
LAYER_DIMS = [(X_DIM, N), (N, N), (N, N), (N, N), (N, N0), (N0, 1)]
PAD_IN = [X_DIM, 640, 640, 640, 640, 256]
PAD_OUT = [640, 640, 640, 640, 256, 128]

BIAS_ROWS = 8      # sublane-aligned packed-bias buffer (rows 6,7 unused)
BIAS_COLS = 640    # max padded output width

BATCH_ALIGN = 16   # bf16 sublane packing (16, 128)


def _round_up(x, m):
    return ((x + m - 1) // m) * m


def discriminator_kernel(x_ref, w1_ref, w2_ref, w3_ref, w4_ref, w5_ref,
                         w6_ref, b_ref, o_ref):
    """One batch tile through the whole MLP chain.

    Weights (bf16) and the packed bias (f32) are VMEM-resident across the
    batch grid (constant index_map, single-buffered). Activations, bias adds
    and LeakyReLU are f32 (v5e has no native bf16 VPU path); matmuls run on
    the MXU in bf16 with f32 accumulation.
    """
    h = x_ref[...]                                   # [TB, 784] bf16

    def layer(h, w_ref, row, out_dim, activate):
        hb = h.astype(jnp.bfloat16)                  # bf16 MXU pass
        y = jnp.dot(hb, w_ref[...], preferred_element_type=jnp.float32)
        y = y + b_ref[row:row + 1, :out_dim]         # f32 bias add
        if activate:
            y = jnp.maximum(y, LEAKY_SLOPE * y)      # LeakyReLU(0.2)
        return y

    h = layer(h, w1_ref, 0, 640, True)    # Linear(784,600)+Dropout+LeakyReLU
    h = layer(h, w2_ref, 1, 640, True)    # Linear(600,600)+Dropout+LeakyReLU
    h = layer(h, w3_ref, 2, 640, True)
    h = layer(h, w4_ref, 3, 640, True)
    h = layer(h, w5_ref, 4, 256, True)    # Linear(600,150)+Dropout+LeakyReLU
    # Final Linear(150 -> 1): lane-padded to 128 output columns so the store
    # is unmasked; only column 0 is meaningful (sliced off outside).
    o_ref[...] = layer(h, w6_ref, 5, 128, False)


def _batch_tiling(batch, block_batch):
    """Pick (tile_rows, num_tiles): tile as large as block_batch allows and,
    when more than one tile is needed, keep the grid length even so both v7x
    TensorCores get the same number of 'parallel' steps."""
    tb = min(block_batch, _round_up(batch, BATCH_ALIGN))
    n_tiles = -(-batch // tb)
    if n_tiles > 1 and n_tiles % 2 == 1:
        n_tiles += 1
        tb = _round_up(-(-batch // n_tiles), BATCH_ALIGN)
    return tb, n_tiles


def discriminator_forward(x, kernel_params, *, block_batch=1024):
    """x: [B, 784] (f32 or bf16). kernel_params: ([6 padded bf16 W], packed f32 bias)."""
    ws, b_packed = kernel_params
    batch = x.shape[0]

    tb, n_tiles = _batch_tiling(batch, block_batch)
    b_pad = tb * n_tiles

    x = x.astype(jnp.bfloat16)                 # kernel quantizes anyway; halves x DMA
    if b_pad != batch:
        x = jnp.pad(x, ((0, b_pad - batch), (0, 0)))

    resident = pl.Buffered(1)                  # constant block index: no re-DMA,
                                               # no need for a second buffer
    x_spec = pl.BlockSpec((tb, X_DIM), lambda i: (i, 0))
    w_specs = [pl.BlockSpec(w.shape, lambda i: (0, 0), pipeline_mode=resident)
               for w in ws]
    b_spec = pl.BlockSpec(b_packed.shape, lambda i: (0, 0),
                          pipeline_mode=resident)
    out_spec = pl.BlockSpec((tb, 128), lambda i: (i, 0))

    out = pl.pallas_call(
        discriminator_kernel,
        out_shape=jax.ShapeDtypeStruct((b_pad, 128), jnp.float32),
        grid=(n_tiles,),
        in_specs=[x_spec] + w_specs + [b_spec],
        out_specs=out_spec,
        compiler_params=pltpu.CompilerParams(
            dimension_semantics=("parallel",),
            vmem_limit_bytes=48 << 20,
        ),
    )(x, *ws, b_packed)

    return out[:batch, :1]


def init_params(key):
    """PyTorch-style Linear init: U(-1/sqrt(fan_in), 1/sqrt(fan_in)), f32."""
    raw = []
    for (fan_in, fan_out) in LAYER_DIMS:
        key, kw, kb = jax.random.split(key, 3)
        bound = 1.0 / jnp.sqrt(float(fan_in))
        w = jax.random.uniform(kw, (fan_in, fan_out), jnp.float32,
                               minval=-bound, maxval=bound)
        b = jax.random.uniform(kb, (fan_out,), jnp.float32,
                               minval=-bound, maxval=bound)
        raw.append((w, b))
    return raw


def pack_params(raw):
    """Pad weights to lane-dense shapes, cast to bf16, pack biases (f32)."""
    ws = []
    b_packed = jnp.zeros((BIAS_ROWS, BIAS_COLS), jnp.float32)
    for i, (w, b) in enumerate(raw):
        wp = jnp.zeros((PAD_IN[i], PAD_OUT[i]), jnp.float32)
        wp = wp.at[: w.shape[0], : w.shape[1]].set(w)
        ws.append(wp.astype(jnp.bfloat16))
        b_packed = b_packed.at[i, : b.shape[0]].set(b)
    return ws, b_packed


def reference_forward(x, raw):
    """Pure-JAX reference with the same bf16 weight/activation quantization
    (f32 accumulation), so the tolerance check stays tight."""
    h = x
    for i, (w, b) in enumerate(raw):
        y = jnp.dot(h.astype(jnp.bfloat16), w.astype(jnp.bfloat16),
                    preferred_element_type=jnp.float32) + b[None, :]
        h = jnp.maximum(y, LEAKY_SLOPE * y) if i < NUM_LAYERS - 1 else y
    return h


if __name__ == "__main__":
    key = jax.random.PRNGKey(0)
    key, kx = jax.random.split(key)

    batch = 8
    x = jax.random.normal(kx, (batch, X_DIM), jnp.float32)

    raw_params = init_params(key)
    kernel_params = pack_params(raw_params)

    out = discriminator_forward(x, kernel_params)
    out = jax.block_until_ready(out)

    ref = reference_forward(x, raw_params)
    assert out.shape == (batch, 1), out.shape
    max_err = jnp.max(jnp.abs(out - ref))
    assert jnp.allclose(out, ref, atol=5e-3, rtol=5e-3), max_err

    print("KERNEL_OK")
</pallas_src>

<mosaic_0001>
module attributes {stable_mosaic.version = 11 : i64} {
  func.func @discriminator_kernel(%arg0: i32, %arg1: memref<16x784xbf16, #tpu.memory_space<vmem>>, %arg2: memref<784x640xbf16, #tpu.memory_space<vmem>>, %arg3: memref<640x640xbf16, #tpu.memory_space<vmem>>, %arg4: memref<640x640xbf16, #tpu.memory_space<vmem>>, %arg5: memref<640x640xbf16, #tpu.memory_space<vmem>>, %arg6: memref<640x256xbf16, #tpu.memory_space<vmem>>, %arg7: memref<256x128xbf16, #tpu.memory_space<vmem>>, %arg8: memref<8x640xf32, #tpu.memory_space<vmem>>, %arg9: memref<16x128xf32, #tpu.memory_space<vmem>>) attributes {dimension_semantics = [#tpu.dimension_semantics<parallel>], iteration_bounds = array<i64: 1>, scalar_prefetch = 0 : i64, scratch_operands = 0 : i64, tpu.core_type = #tpu.core_type<tc>, window_params = [{transform_indices = @transform_0, window_bounds = array<i64: 16, 784>}, {pipeline_mode = #tpu.pipeline_mode<synchronous>, transform_indices = @transform_1, window_bounds = array<i64: 784, 640>}, {pipeline_mode = #tpu.pipeline_mode<synchronous>, transform_indices = @transform_2, window_bounds = array<i64: 640, 640>}, {pipeline_mode = #tpu.pipeline_mode<synchronous>, transform_indices = @transform_3, window_bounds = array<i64: 640, 640>}, {pipeline_mode = #tpu.pipeline_mode<synchronous>, transform_indices = @transform_4, window_bounds = array<i64: 640, 640>}, {pipeline_mode = #tpu.pipeline_mode<synchronous>, transform_indices = @transform_5, window_bounds = array<i64: 640, 256>}, {pipeline_mode = #tpu.pipeline_mode<synchronous>, transform_indices = @transform_6, window_bounds = array<i64: 256, 128>}, {pipeline_mode = #tpu.pipeline_mode<synchronous>, transform_indices = @transform_7, window_bounds = array<i64: 8, 640>}, {transform_indices = @transform_8, window_bounds = array<i64: 16, 128>}]} {
    %c0 = arith.constant 0 : index
    %c0_0 = arith.constant 0 : index
    %0 = vector.load %arg1[%c0, %c0_0] : memref<16x784xbf16, #tpu.memory_space<vmem>>, vector<16x784xbf16>
    %c0_1 = arith.constant 0 : index
    %c0_2 = arith.constant 0 : index
    %1 = vector.load %arg2[%c0_1, %c0_2] : memref<784x640xbf16, #tpu.memory_space<vmem>>, vector<784x640xbf16>
    %cst = arith.constant dense<0.000000e+00> : vector<16x640xf32>
    %2 = tpu.matmul %0, %1, %cst {dimension_numbers = #tpu.dot_dimension_numbers<[1], [0], [0], [1], [0, 0, 1, 1], [], []>} : vector<16x784xbf16>, vector<784x640xbf16>, vector<16x640xf32> -> vector<16x640xf32>
    %c0_3 = arith.constant 0 : index
    %c0_4 = arith.constant 0 : index
    %3 = vector.load %arg8[%c0_3, %c0_4] : memref<8x640xf32, #tpu.memory_space<vmem>>, vector<1x640xf32>
    %4 = vector.broadcast %3 : vector<1x640xf32> to vector<16x640xf32>
    %5 = arith.addf %2, %4 : vector<16x640xf32>
    %cst_5 = arith.constant 2.000000e-01 : f32
    %6 = vector.broadcast %cst_5 : f32 to vector<16x640xf32>
    %7 = arith.mulf %6, %5 : vector<16x640xf32>
    %8 = arith.maximumf %5, %7 : vector<16x640xf32>
    %9 = arith.truncf %8 : vector<16x640xf32> to vector<16x640xbf16>
    %c0_6 = arith.constant 0 : index
    %c0_7 = arith.constant 0 : index
    %10 = vector.load %arg3[%c0_6, %c0_7] : memref<640x640xbf16, #tpu.memory_space<vmem>>, vector<640x640xbf16>
    %cst_8 = arith.constant dense<0.000000e+00> : vector<16x640xf32>
    %11 = tpu.matmul %9, %10, %cst_8 {dimension_numbers = #tpu.dot_dimension_numbers<[1], [0], [0], [1], [0, 0, 1, 1], [], []>} : vector<16x640xbf16>, vector<640x640xbf16>, vector<16x640xf32> -> vector<16x640xf32>
    %c1 = arith.constant 1 : index
    %c0_9 = arith.constant 0 : index
    %12 = vector.load %arg8[%c1, %c0_9] : memref<8x640xf32, #tpu.memory_space<vmem>>, vector<1x640xf32>
    %13 = vector.broadcast %12 : vector<1x640xf32> to vector<16x640xf32>
    %14 = arith.addf %11, %13 : vector<16x640xf32>
    %cst_10 = arith.constant 2.000000e-01 : f32
    %15 = vector.broadcast %cst_10 : f32 to vector<16x640xf32>
    %16 = arith.mulf %15, %14 : vector<16x640xf32>
    %17 = arith.maximumf %14, %16 : vector<16x640xf32>
    %18 = arith.truncf %17 : vector<16x640xf32> to vector<16x640xbf16>
    %c0_11 = arith.constant 0 : index
    %c0_12 = arith.constant 0 : index
    %19 = vector.load %arg4[%c0_11, %c0_12] : memref<640x640xbf16, #tpu.memory_space<vmem>>, vector<640x640xbf16>
    %cst_13 = arith.constant dense<0.000000e+00> : vector<16x640xf32>
    %20 = tpu.matmul %18, %19, %cst_13 {dimension_numbers = #tpu.dot_dimension_numbers<[1], [0], [0], [1], [0, 0, 1, 1], [], []>} : vector<16x640xbf16>, vector<640x640xbf16>, vector<16x640xf32> -> vector<16x640xf32>
    %c2 = arith.constant 2 : index
    %c0_14 = arith.constant 0 : index
    %21 = vector.load %arg8[%c2, %c0_14] : memref<8x640xf32, #tpu.memory_space<vmem>>, vector<1x640xf32>
    %22 = vector.broadcast %21 : vector<1x640xf32> to vector<16x640xf32>
    %23 = arith.addf %20, %22 : vector<16x640xf32>
    %cst_15 = arith.constant 2.000000e-01 : f32
    %24 = vector.broadcast %cst_15 : f32 to vector<16x640xf32>
    %25 = arith.mulf %24, %23 : vector<16x640xf32>
    %26 = arith.maximumf %23, %25 : vector<16x640xf32>
    %27 = arith.truncf %26 : vector<16x640xf32> to vector<16x640xbf16>
    %c0_16 = arith.constant 0 : index
    %c0_17 = arith.constant 0 : index
    %28 = vector.load %arg5[%c0_16, %c0_17] : memref<640x640xbf16, #tpu.memory_space<vmem>>, vector<640x640xbf16>
    %cst_18 = arith.constant dense<0.000000e+00> : vector<16x640xf32>
    %29 = tpu.matmul %27, %28, %cst_18 {dimension_numbers = #tpu.dot_dimension_numbers<[1], [0], [0], [1], [0, 0, 1, 1], [], []>} : vector<16x640xbf16>, vector<640x640xbf16>, vector<16x640xf32> -> vector<16x640xf32>
    %c3 = arith.constant 3 : index
    %c0_19 = arith.constant 0 : index
    %30 = vector.load %arg8[%c3, %c0_19] : memref<8x640xf32, #tpu.memory_space<vmem>>, vector<1x640xf32>
    %31 = vector.broadcast %30 : vector<1x640xf32> to vector<16x640xf32>
    %32 = arith.addf %29, %31 : vector<16x640xf32>
    %cst_20 = arith.constant 2.000000e-01 : f32
    %33 = vector.broadcast %cst_20 : f32 to vector<16x640xf32>
    %34 = arith.mulf %33, %32 : vector<16x640xf32>
    %35 = arith.maximumf %32, %34 : vector<16x640xf32>
    %36 = arith.truncf %35 : vector<16x640xf32> to vector<16x640xbf16>
    %c0_21 = arith.constant 0 : index
    %c0_22 = arith.constant 0 : index
    %37 = vector.load %arg6[%c0_21, %c0_22] : memref<640x256xbf16, #tpu.memory_space<vmem>>, vector<640x256xbf16>
    %cst_23 = arith.constant dense<0.000000e+00> : vector<16x256xf32>
    %38 = tpu.matmul %36, %37, %cst_23 {dimension_numbers = #tpu.dot_dimension_numbers<[1], [0], [0], [1], [0, 0, 1, 1], [], []>} : vector<16x640xbf16>, vector<640x256xbf16>, vector<16x256xf32> -> vector<16x256xf32>
    %c4 = arith.constant 4 : index
    %c0_24 = arith.constant 0 : index
    %39 = vector.load %arg8[%c4, %c0_24] : memref<8x640xf32, #tpu.memory_space<vmem>>, vector<1x256xf32>
    %40 = vector.broadcast %39 : vector<1x256xf32> to vector<16x256xf32>
    %41 = arith.addf %38, %40 : vector<16x256xf32>
    %cst_25 = arith.constant 2.000000e-01 : f32
    %42 = vector.broadcast %cst_25 : f32 to vector<16x256xf32>
    %43 = arith.mulf %42, %41 : vector<16x256xf32>
    %44 = arith.maximumf %41, %43 : vector<16x256xf32>
    %45 = arith.truncf %44 : vector<16x256xf32> to vector<16x256xbf16>
    %c0_26 = arith.constant 0 : index
    %c0_27 = arith.constant 0 : index
    %46 = vector.load %arg7[%c0_26, %c0_27] : memref<256x128xbf16, #tpu.memory_space<vmem>>, vector<256x128xbf16>
    %cst_28 = arith.constant dense<0.000000e+00> : vector<16x128xf32>
    %47 = tpu.matmul %45, %46, %cst_28 {dimension_numbers = #tpu.dot_dimension_numbers<[1], [0], [0], [1], [0, 0, 1, 1], [], []>} : vector<16x256xbf16>, vector<256x128xbf16>, vector<16x128xf32> -> vector<16x128xf32>
    %c5 = arith.constant 5 : index
    %c0_29 = arith.constant 0 : index
    %48 = vector.load %arg8[%c5, %c0_29] : memref<8x640xf32, #tpu.memory_space<vmem>>, vector<1x128xf32>
    %49 = vector.broadcast %48 : vector<1x128xf32> to vector<16x128xf32>
    %50 = arith.addf %47, %49 : vector<16x128xf32>
    %c0_30 = arith.constant 0 : index
    %c0_31 = arith.constant 0 : index
    %51 = vector.load %arg9[%c0_30, %c0_31] : memref<16x128xf32, #tpu.memory_space<vmem>>, vector<16x128xf32>
    tpu.vector_store %arg9[%c0_30, %c0_31], %50 {strides = array<i32>} : memref<16x128xf32, #tpu.memory_space<vmem>>, vector<16x128xf32>,
    return
  }
  func.func @transform_0(%arg0: i32) -> (i32, i32) {
    %c0_i32 = arith.constant 0 : i32
    %c0_i32_0 = arith.constant 0 : i32
    return %arg0, %c0_i32 : i32, i32
  }
  func.func @transform_1(%arg0: i32) -> (i32, i32) {
    %c0_i32 = arith.constant 0 : i32
    %c0_i32_0 = arith.constant 0 : i32
    %c0_i32_1 = arith.constant 0 : i32
    return %c0_i32, %c0_i32_0 : i32, i32
  }
  func.func @transform_2(%arg0: i32) -> (i32, i32) {
    %c0_i32 = arith.constant 0 : i32
    %c0_i32_0 = arith.constant 0 : i32
    %c0_i32_1 = arith.constant 0 : i32
    return %c0_i32, %c0_i32_0 : i32, i32
  }
  func.func @transform_3(%arg0: i32) -> (i32, i32) {
    %c0_i32 = arith.constant 0 : i32
    %c0_i32_0 = arith.constant 0 : i32
    %c0_i32_1 = arith.constant 0 : i32
    return %c0_i32, %c0_i32_0 : i32, i32
  }
  func.func @transform_4(%arg0: i32) -> (i32, i32) {
    %c0_i32 = arith.constant 0 : i32
    %c0_i32_0 = arith.constant 0 : i32
    %c0_i32_1 = arith.constant 0 : i32
    return %c0_i32, %c0_i32_0 : i32, i32
  }
  func.func @transform_5(%arg0: i32) -> (i32, i32) {
    %c0_i32 = arith.constant 0 : i32
    %c0_i32_0 = arith.constant 0 : i32
    %c0_i32_1 = arith.constant 0 : i32
    return %c0_i32, %c0_i32_0 : i32, i32
  }
  func.func @transform_6(%arg0: i32) -> (i32, i32) {
    %c0_i32 = arith.constant 0 : i32
    %c0_i32_0 = arith.constant 0 : i32
    %c0_i32_1 = arith.constant 0 : i32
    return %c0_i32, %c0_i32_0 : i32, i32
  }
  func.func @transform_7(%arg0: i32) -> (i32, i32) {
    %c0_i32 = arith.constant 0 : i32
    %c0_i32_0 = arith.constant 0 : i32
    %c0_i32_1 = arith.constant 0 : i32
    return %c0_i32, %c0_i32_0 : i32, i32
  }
  func.func @transform_8(%arg0: i32) -> (i32, i32) {
    %c0_i32 = arith.constant 0 : i32
    %c0_i32_0 = arith.constant 0 : i32
    return %arg0, %c0_i32 : i32, i32
  }
}

</mosaic_0001>

<llo_original>
// kernel: tpu_custom_call.1
$region0: #{tpu_custom_call.1}
  #allocation0 [shape = 'u32[]', space=smem, size = 0x4, offset = 0x4, fixed_abs, tag = 'smem constant byte address 0x4 - core index']
  #allocation1 [shape = 'u32[72,128]{1,0:T(1,128)}', space=vmem, size = 0x9000, scoped, tag = 'internal scratch']
  %s0 = inlined_call_operand.hbm [shape: bf16[16,784], index: 0, kind: input, shape index: {}]
  %s1 = inlined_call_operand.hbm [shape: bf16[784,640], index: 1, kind: input, shape index: {}]
  %s2 = inlined_call_operand.hbm [shape: bf16[640,640], index: 2, kind: input, shape index: {}]
  %s3 = inlined_call_operand.hbm [shape: bf16[640,640], index: 3, kind: input, shape index: {}]
  %s4 = inlined_call_operand.hbm [shape: bf16[640,640], index: 4, kind: input, shape index: {}]
  %s5 = inlined_call_operand.hbm [shape: bf16[640,256], index: 5, kind: input, shape index: {}]
  %s6 = inlined_call_operand.hbm [shape: bf16[256,128], index: 6, kind: input, shape index: {}]
  %s7 = inlined_call_operand.hbm [shape: f32[8,640], index: 7, kind: input, shape index: {}]
  %s8 = inlined_call_operand.hbm [shape: f32[16,128], index: 8, kind: output, shape index: {}]
  %s9 = sld [smem:[#allocation0]]
  $region74: #{tpu_custom_call.1} parent=0
    _
  %s11 = ssub.s32 1, %s9
  %s12 = scalar_select 0, %s11, %s9
  $region1: #{tpu_custom_call.1} parent=0
    #allocation2 [shape = 'u8[28672]{0}', space=vmem, size = 0x7000, scoped, tag = 'input window, operand 0, single buffered']
    #allocation3 [shape = 's32[1]{0}', space=sflag, size = 0x4, scoped, tag = 'scoped memory for tpu_custom_call.1']
    #allocation4 [shape = 's32[1]{0}', space=sflag, size = 0x4, scoped, tag = 'scoped memory for tpu_custom_call.1']
    #allocation5 [shape = 'u8[1003520]{0}', space=vmem, size = 0xf5000, scoped, tag = 'input window, operand 1, single buffered']
    #allocation6 [shape = 's32[1]{0}', space=sflag, size = 0x4, scoped, tag = 'scoped memory for tpu_custom_call.1']
    #allocation7 [shape = 'u8[819200]{0}', space=vmem, size = 0xc8000, scoped, tag = 'input window, operand 2, single buffered']
    #allocation8 [shape = 'u8[819200]{0}', space=vmem, size = 0xc8000, scoped, tag = 'input window, operand 3, single buffered']
    #allocation9 [shape = 's32[1]{0}', space=sflag, size = 0x4, scoped, tag = 'scoped memory for tpu_custom_call.1']
    #allocation10 [shape = 'u8[819200]{0}', space=vmem, size = 0xc8000, scoped, tag = 'input window, operand 4, single buffered']
    #allocation11 [shape = 'u8[327680]{0}', space=vmem, size = 0x50000, scoped, tag = 'input window, operand 5, single buffered']
    #allocation12 [shape = 's32[1]{0}', space=sflag, size = 0x4, scoped, tag = 'scoped memory for tpu_custom_call.1']
    #allocation13 [shape = 'u8[65536]{0}', space=vmem, size = 0x10000, scoped, tag = 'input window, operand 6, single buffered']
    #allocation14 [shape = 'u8[20480]{0}', space=vmem, size = 0x5000, scoped, tag = 'input window, operand 7, single buffered']
    #allocation15 [shape = 's32[1]{0}', space=sflag, size = 0x4, scoped, tag = 'scoped memory for tpu_custom_call.1']
    #allocation16 [shape = 'u8[8192]{0}', space=vmem, size = 0x2000, scoped, tag = 'output window, operand 0, single buffered']
    %13 = vsyncpa [#allocation3], 0
    %14 = vsyncpa [#allocation6], 0
    %15 = vsyncpa [#allocation9], 0
    %16 = vsyncpa [#allocation12], 0
    %17 = vsyncpa [#allocation15], 0
    %18 = vsyncpa [#allocation4], 0
    // Predicated region
    $region2: #{tpu_custom_call.1} parent=1 // pred_check
      _
    $region3: #{tpu_custom_call.1} parent=1 // pred_check_branch
      %20 = sbr.rel (0) target = $region5
    $region4: #{tpu_custom_call.1} parent=1 // pred_region
      %22 = vsyncadd [#allocation3], 0
      %s23 = sshll.u32 %s0, 4
      %s24 = int_to_ptr.hbm [resolvable:$true] %s23
      %s25 = sshll.u32 [#allocation2], 4
      %s26 = int_to_ptr.vmem [resolvable:$true] %s25
      %31 = dma.hbm_to_vmem [thread:$0]  %s24, 896, %s26, [#allocation3], 448, 448, 28
    $region5: #{tpu_custom_call.1} parent=1 // pred_fallthru
      _
    // Predicated region
    $region6: #{tpu_custom_call.1} parent=1 // pred_check
      _
    $region7: #{tpu_custom_call.1} parent=1 // pred_check_branch
      %33 = sbr.rel (0) target = $region9
    $region8: #{tpu_custom_call.1} parent=1 // pred_region
      %35 = vsyncadd [#allocation6], 0
      %s36 = sshll.u32 %s1, 4
      %s37 = int_to_ptr.hbm [resolvable:$true] %s36
      %s38 = sshll.u32 [#allocation5], 4
      %s39 = int_to_ptr.vmem [resolvable:$true] %s38
      %44 = dma.hbm_to_vmem [thread:$0]  %s37, 31360, %s39, [#allocation6], 320, 320, 20
    $region9: #{tpu_custom_call.1} parent=1 // pred_fallthru
      _
    // Predicated region
    $region10: #{tpu_custom_call.1} parent=1 // pred_check
      _
    $region11: #{tpu_custom_call.1} parent=1 // pred_check_branch
      %46 = sbr.rel (0) target = $region13
    $region12: #{tpu_custom_call.1} parent=1 // pred_region
      %48 = vsyncadd [#allocation6], 0
      %s49 = sshll.u32 %s2, 4
      %s50 = int_to_ptr.hbm [resolvable:$true] %s49
      %s51 = sshll.u32 [#allocation7], 4
      %s52 = int_to_ptr.vmem [resolvable:$true] %s51
      %57 = dma.hbm_to_vmem [thread:$0]  %s50, 25600, %s52, [#allocation6], 320, 320, 20
    $region13: #{tpu_custom_call.1} parent=1 // pred_fallthru
      _
    // Predicated region
    $region14: #{tpu_custom_call.1} parent=1 // pred_check
      _
    $region15: #{tpu_custom_call.1} parent=1 // pred_check_branch
      %59 = sbr.rel (0) target = $region17
    $region16: #{tpu_custom_call.1} parent=1 // pred_region
      %61 = vsyncadd [#allocation9], 0
      %s62 = sshll.u32 %s3, 4
      %s63 = int_to_ptr.hbm [resolvable:$true] %s62
      %s64 = sshll.u32 [#allocation8], 4
      %s65 = int_to_ptr.vmem [resolvable:$true] %s64
      %70 = dma.hbm_to_vmem [thread:$0]  %s63, 25600, %s65, [#allocation9], 320, 320, 20
    $region17: #{tpu_custom_call.1} parent=1 // pred_fallthru
      _
    // Predicated region
    $region18: #{tpu_custom_call.1} parent=1 // pred_check
      _
    $region19: #{tpu_custom_call.1} parent=1 // pred_check_branch
      %72 = sbr.rel (0) target = $region21
    $region20: #{tpu_custom_call.1} parent=1 // pred_region
      %74 = vsyncadd [#allocation9], 0
      %s75 = sshll.u32 %s4, 4
      %s76 = int_to_ptr.hbm [resolvable:$true] %s75
      %s77 = sshll.u32 [#allocation10], 4
      %s78 = int_to_ptr.vmem [resolvable:$true] %s77
      %83 = dma.hbm_to_vmem [thread:$0]  %s76, 25600, %s78, [#allocation9], 320, 320, 20
    $region21: #{tpu_custom_call.1} parent=1 // pred_fallthru
      _
    // Predicated region
    $region22: #{tpu_custom_call.1} parent=1 // pred_check
      _
    $region23: #{tpu_custom_call.1} parent=1 // pred_check_branch
      %85 = sbr.rel (0) target = $region25
    $region24: #{tpu_custom_call.1} parent=1 // pred_region
      %87 = vsyncadd [#allocation12], 0
      %s88 = sshll.u32 %s5, 4
      %s89 = int_to_ptr.hbm [resolvable:$true] %s88
      %s90 = sshll.u32 [#allocation11], 4
      %s91 = int_to_ptr.vmem [resolvable:$true] %s90
      %96 = dma.hbm_to_vmem [thread:$0]  %s89, 10240, %s91, [#allocation12], 128, 128, 8
    $region25: #{tpu_custom_call.1} parent=1 // pred_fallthru
      _
    // Predicated region
    $region26: #{tpu_custom_call.1} parent=1 // pred_check
      _
    $region27: #{tpu_custom_call.1} parent=1 // pred_check_branch
      %98 = sbr.rel (0) target = $region29
    $region28: #{tpu_custom_call.1} parent=1 // pred_region
      %100 = vsyncadd [#allocation12], 0
      %s101 = sshll.u32 %s6, 4
      %s102 = int_to_ptr.hbm [resolvable:$true] %s101
      %s103 = sshll.u32 [#allocation13], 4
      %s104 = int_to_ptr.vmem [resolvable:$true] %s103
      %109 = dma.hbm_to_vmem [thread:$0]  %s102, 2048, %s104, [#allocation12], 64, 64, 4
    $region29: #{tpu_custom_call.1} parent=1 // pred_fallthru
      _
    // Predicated region
    $region30: #{tpu_custom_call.1} parent=1 // pred_check
      _
    $region31: #{tpu_custom_call.1} parent=1 // pred_check_branch
      %111 = sbr.rel (0) target = $region33
    $region32: #{tpu_custom_call.1} parent=1 // pred_region
      %113 = vsyncadd [#allocation15], 0
      %s115 = sshll.u32 %s7, 4
      %s116 = int_to_ptr.hbm [resolvable:$true] %s115
      %s117 = sshll.u32 [#allocation14], 4
      %s118 = int_to_ptr.vmem [resolvable:$true] %s117
      %120 = dma.hbm_to_vmem [thread:$0]  %s116, 640, %s118, [#allocation15]
    $region33: #{tpu_custom_call.1} parent=1 // pred_fallthru
      _
    // Predicated region
    $region34: #{tpu_custom_call.1} parent=1 // pred_check
      _
    $region35: #{tpu_custom_call.1} parent=1 // pred_check_branch
      %122 = sbr.rel (0) target = $region37
    $region36: #{tpu_custom_call.1} parent=1 // pred_region
      %124 = dma.done [#allocation3], 896
    $region37: #{tpu_custom_call.1} parent=1 // pred_fallthru
      _
    // Predicated region
    $region38: #{tpu_custom_call.1} parent=1 // pred_check
      _
    $region39: #{tpu_custom_call.1} parent=1 // pred_check_branch
      %126 = sbr.rel (0) target = $region41
    $region40: #{tpu_custom_call.1} parent=1 // pred_region
      %128 = dma.done [#allocation6], 31360
    $region41: #{tpu_custom_call.1} parent=1 // pred_fallthru
      _
    // Predicated region
    $region42: #{tpu_custom_call.1} parent=1 // pred_check
      _
    $region43: #{tpu_custom_call.1} parent=1 // pred_check_branch
      %130 = sbr.rel (0) target = $region45
    $region44: #{tpu_custom_call.1} parent=1 // pred_region
      %132 = dma.done [#allocation6], 25600
    $region45: #{tpu_custom_call.1} parent=1 // pred_fallthru
      _
    // Predicated region
    $region46: #{tpu_custom_call.1} parent=1 // pred_check
      _
    $region47: #{tpu_custom_call.1} parent=1 // pred_check_branch
      %134 = sbr.rel (0) target = $region49
    $region48: #{tpu_custom_call.1} parent=1 // pred_region
      %136 = dma.done [#allocation9], 25600
    $region49: #{tpu_custom_call.1} parent=1 // pred_fallthru
      _
    // Predicated region
    $region50: #{tpu_custom_call.1} parent=1 // pred_check
      _
    $region51: #{tpu_custom_call.1} parent=1 // pred_check_branch
      %138 = sbr.rel (0) target = $region53
    $region52: #{tpu_custom_call.1} parent=1 // pred_region
      %140 = dma.done [#allocation9], 25600
    $region53: #{tpu_custom_call.1} parent=1 // pred_fallthru
      _
    // Predicated region
    $region54: #{tpu_custom_call.1} parent=1 // pred_check
      _
    $region55: #{tpu_custom_call.1} parent=1 // pred_check_branch
      %142 = sbr.rel (0) target = $region57
    $region56: #{tpu_custom_call.1} parent=1 // pred_region
      %144 = dma.done [#allocation12], 10240
    $region57: #{tpu_custom_call.1} parent=1 // pred_fallthru
      _
    // Predicated region
    $region58: #{tpu_custom_call.1} parent=1 // pred_check
      _
    $region59: #{tpu_custom_call.1} parent=1 // pred_check_branch
      %146 = sbr.rel (0) target = $region61
    $region60: #{tpu_custom_call.1} parent=1 // pred_region
      %148 = dma.done [#allocation12], 2048
    $region61: #{tpu_custom_call.1} parent=1 // pred_fallthru
      _
    // Predicated region
    $region62: #{tpu_custom_call.1} parent=1 // pred_check
      _
    $region63: #{tpu_custom_call.1} parent=1 // pred_check_branch
      %150 = sbr.rel (0) target = $region65
    $region64: #{tpu_custom_call.1} parent=1 // pred_region
      %152 = dma.done [#allocation15], 640
    $region65: #{tpu_custom_call.1} parent=1 // pred_fallthru
      _
    %v154 = vld [vmem:[#allocation2] sm:$0xff]
    %v155 = vld [vmem:[#allocation2 + $0x8] sm:$0xff]
    %v156 = vld [vmem:[#allocation2 + $0x10] sm:$0xff]
    %v157 = vld [vmem:[#allocation2 + $0x18] sm:$0xf]
    %v158 = vld [vmem:[#allocation2 + $0x1c] sm:$0xff]
    %v159 = vld [vmem:[#allocation2 + $0x24] sm:$0xff]
    %v160 = vld [vmem:[#allocation2 + $0x2c] sm:$0xff]
    %v161 = vld [vmem:[#allocation2 + $0x34] sm:$0xf]
    %v162 = vld [vmem:[#allocation5] sm:$0xff]
    %v163 = vld [vmem:[#allocation5 + $0x8] sm:$0xff]
    %v164 = vld [vmem:[#allocation5 + $0x10] sm:$0xf]
    %v165 = vld [vmem:[#allocation5 + $0x14] sm:$0xff]
    %v166 = vld [vmem:[#allocation5 + $0x1c] sm:$0xff]
    %v167 = vld [vmem:[#allocation5 + $0x24] sm:$0xf]
    %v168 = vld [vmem:[#allocation5 + $0x28] sm:$0xff]
    %v169 = vld [vmem:[#allocation5 + $0x30] sm:$0xff]
    %v170 = vld [vmem:[#allocation5 + $0x38] sm:$0xf]
    %v171 = vld [vmem:[#allocation5 + $0x3c] sm:$0xff]
    %v172 = vld [vmem:[#allocation5 + $0x44] sm:$0xff]
    %v173 = vld [vmem:[#allocation5 + $0x4c] sm:$0xf]
    %v174 = vld [vmem:[#allocation5 + $0x50] sm:$0xff]
    %v175 = vld [vmem:[#allocation5 + $0x58] sm:$0xff]
    %v176 = vld [vmem:[#allocation5 + $0x60] sm:$0xf]
    %v177 = vld [vmem:[#allocation5 + $0x64] sm:$0xff]
    %v178 = vld [vmem:[#allocation5 + $0x6c] sm:$0xff]
    %v179 = vld [vmem:[#allocation5 + $0x74] sm:$0xf]
    %v180 = vld [vmem:[#allocation5 + $0x78] sm:$0xff]
    %v181 = vld [vmem:[#allocation5 + $0x80] sm:$0xff]
    %v182 = vld [vmem:[#allocation5 + $0x88] sm:$0xf]
    %v183 = vld [vmem:[#allocation5 + $0x8c] sm:$0xff]
    %v184 = vld [vmem:[#allocation5 + $0x94] sm:$0xff]
    %v185 = vld [vmem:[#allocation5 + $0x9c] sm:$0xf]
    %v186 = vld [vmem:[#allocation5 + $0xa0] sm:$0xff]
    %v187 = vld [vmem:[#allocation5 + $0xa8] sm:$0xff]
    %v188 = vld [vmem:[#allocation5 + $0xb0] sm:$0xf]
    %v189 = vld [vmem:[#allocation5 + $0xb4] sm:$0xff]
    %v190 = vld [vmem:[#allocation5 + $0xbc] sm:$0xff]
    %v191 = vld [vmem:[#allocation5 + $0xc4] sm:$0xf]
    %v192 = vld [vmem:[#allocation5 + $0xc8] sm:$0xff]
    %v193 = vld [vmem:[#allocation5 + $0xd0] sm:$0xff]
    %v194 = vld [vmem:[#allocation5 + $0xd8] sm:$0xf]
    %v195 = vld [vmem:[#allocation5 + $0xdc] sm:$0xff]
    %v196 = vld [vmem:[#allocation5 + $0xe4] sm:$0xff]
    %v197 = vld [vmem:[#allocation5 + $0xec] sm:$0xf]
    %v198 = vld [vmem:[#allocation5 + $0xf0] sm:$0xff]
    %v199 = vld [vmem:[#allocation5 + $0xf8] sm:$0xff]
    %v200 = vld [vmem:[#allocation5 + $0x100] sm:$0xf]
    %v201 = vld [vmem:[#allocation5 + $0x104] sm:$0xff]
    %v202 = vld [vmem:[#allocation5 + $0x10c] sm:$0xff]
    %v203 = vld [vmem:[#allocation5 + $0x114] sm:$0xf]
    %v204 = vld [vmem:[#allocation5 + $0x118] sm:$0xff]
    %v205 = vld [vmem:[#allocation5 + $0x120] sm:$0xff]
    %v206 = vld [vmem:[#allocation5 + $0x128] sm:$0xf]
    %v207 = vld [vmem:[#allocation5 + $0x12c] sm:$0xff]
    %v208 = vld [vmem:[#allocation5 + $0x134] sm:$0xff]
    %v209 = vld [vmem:[#allocation5 + $0x13c] sm:$0xf]
    %v210 = vld [vmem:[#allocation5 + $0x140] sm:$0xff]
    %v211 = vld [vmem:[#allocation5 + $0x148] sm:$0xff]
    %v212 = vld [vmem:[#allocation5 + $0x150] sm:$0xf]
    %v213 = vld [vmem:[#allocation5 + $0x154] sm:$0xff]
    %v214 = vld [vmem:[#allocation5 + $0x15c] sm:$0xff]
    %v215 = vld [vmem:[#allocation5 + $0x164] sm:$0xf]
    %v216 = vld [vmem:[#allocation5 + $0x168] sm:$0xff]
    %v217 = vld [vmem:[#allocation5 + $0x170] sm:$0xff]
    %v218 = vld [vmem:[#allocation5 + $0x178] sm:$0xf]
    %v219 = vld [vmem:[#allocation5 + $0x17c] sm:$0xff]
    %v220 = vld [vmem:[#allocation5 + $0x184] sm:$0xff]
    %v221 = vld [vmem:[#allocation5 + $0x18c] sm:$0xf]
    %v222 = vld [vmem:[#allocation5 + $0x190] sm:$0xff]
    %v223 = vld [vmem:[#allocation5 + $0x198] sm:$0xff]
    %v224 = vld [vmem:[#allocation5 + $0x1a0] sm:$0xf]
    %v225 = vld [vmem:[#allocation5 + $0x1a4] sm:$0xff]
    %v226 = vld [vmem:[#allocation5 + $0x1ac] sm:$0xff]
    %v227 = vld [vmem:[#allocation5 + $0x1b4] sm:$0xf]
    %v228 = vld [vmem:[#allocation5 + $0x1b8] sm:$0xff]
    %v229 = vld [vmem:[#allocation5 + $0x1c0] sm:$0xff]
    %v230 = vld [vmem:[#allocation5 + $0x1c8] sm:$0xf]
    %v231 = vld [vmem:[#allocation5 + $0x1cc] sm:$0xff]
    %v232 = vld [vmem:[#allocation5 + $0x1d4] sm:$0xff]
    %v233 = vld [vmem:[#allocation5 + $0x1dc] sm:$0xf]
    %v234 = vld [vmem:[#allocation5 + $0x1e0] sm:$0xff]
    %v235 = vld [vmem:[#allocation5 + $0x1e8] sm:$0xff]
    %v236 = vld [vmem:[#allocation5 + $0x1f0] sm:$0xf]
    %v237 = vld [vmem:[#allocation5 + $0x1f4] sm:$0xff]
    %v238 = vld [vmem:[#allocation5 + $0x1fc] sm:$0xff]
    %v239 = vld [vmem:[#allocation5 + $0x204] sm:$0xf]
    %v240 = vld [vmem:[#allocation5 + $0x208] sm:$0xff]
    %v241 = vld [vmem:[#allocation5 + $0x210] sm:$0xff]
    %v242 = vld [vmem:[#allocation5 + $0x218] sm:$0xf]
    %v243 = vld [vmem:[#allocation5 + $0x21c] sm:$0xff]
    %v244 = vld [vmem:[#allocation5 + $0x224] sm:$0xff]
    %v245 = vld [vmem:[#allocation5 + $0x22c] sm:$0xf]
    %v246 = vld [vmem:[#allocation5 + $0x230] sm:$0xff]
    %v247 = vld [vmem:[#allocation5 + $0x238] sm:$0xff]
    %v248 = vld [vmem:[#allocation5 + $0x240] sm:$0xf]
    %v249 = vld [vmem:[#allocation5 + $0x244] sm:$0xff]
    %v250 = vld [vmem:[#allocation5 + $0x24c] sm:$0xff]
    %v251 = vld [vmem:[#allocation5 + $0x254] sm:$0xf]
    %v252 = vld [vmem:[#allocation5 + $0x258] sm:$0xff]
    %v253 = vld [vmem:[#allocation5 + $0x260] sm:$0xff]
    %v254 = vld [vmem:[#allocation5 + $0x268] sm:$0xf]
    %v255 = vld [vmem:[#allocation5 + $0x26c] sm:$0xff]
    %v256 = vld [vmem:[#allocation5 + $0x274] sm:$0xff]
    %v257 = vld [vmem:[#allocation5 + $0x27c] sm:$0xf]
    %v258 = vld [vmem:[#allocation5 + $0x280] sm:$0xff]
    %v259 = vld [vmem:[#allocation5 + $0x288] sm:$0xff]
    %v260 = vld [vmem:[#allocation5 + $0x290] sm:$0xf]
    %v261 = vld [vmem:[#allocation5 + $0x294] sm:$0xff]
    %v262 = vld [vmem:[#allocation5 + $0x29c] sm:$0xff]
    %v263 = vld [vmem:[#allocation5 + $0x2a4] sm:$0xf]
    %v264 = vld [vmem:[#allocation5 + $0x2a8] sm:$0xff]
    %v265 = vld [vmem:[#allocation5 + $0x2b0] sm:$0xff]
    %v266 = vld [vmem:[#allocation5 + $0x2b8] sm:$0xf]
    %v267 = vld [vmem:[#allocation5 + $0x2bc] sm:$0xff]
    %v268 = vld [vmem:[#allocation5 + $0x2c4] sm:$0xff]
    %v269 = vld [vmem:[#allocation5 + $0x2cc] sm:$0xf]
    %v270 = vld [vmem:[#allocation5 + $0x2d0] sm:$0xff]
    %v271 = vld [vmem:[#allocation5 + $0x2d8] sm:$0xff]
    %v272 = vld [vmem:[#allocation5 + $0x2e0] sm:$0xf]
    %v273 = vld [vmem:[#allocation5 + $0x2e4] sm:$0xff]
    %v274 = vld [vmem:[#allocation5 + $0x2ec] sm:$0xff]
    %v275 = vld [vmem:[#allocation5 + $0x2f4] sm:$0xf]
    %v276 = vld [vmem:[#allocation5 + $0x2f8] sm:$0xff]
    %v277 = vld [vmem:[#allocation5 + $0x300] sm:$0xff]
    %v278 = vld [vmem:[#allocation5 + $0x308] sm:$0xf]
    %v279 = vld [vmem:[#allocation5 + $0x30c] sm:$0xff]
    %v280 = vld [vmem:[#allocation5 + $0x314] sm:$0xff]
    %v281 = vld [vmem:[#allocation5 + $0x31c] sm:$0xf]
    %v282 = vld [vmem:[#allocation5 + $0x320] sm:$0xff]
    %v283 = vld [vmem:[#allocation5 + $0x328] sm:$0xff]
    %v284 = vld [vmem:[#allocation5 + $0x330] sm:$0xf]
    %v285 = vld [vmem:[#allocation5 + $0x334] sm:$0xff]
    %v286 = vld [vmem:[#allocation5 + $0x33c] sm:$0xff]
    %v287 = vld [vmem:[#allocation5 + $0x344] sm:$0xf]
    %v288 = vld [vmem:[#allocation5 + $0x348] sm:$0xff]
    %v289 = vld [vmem:[#allocation5 + $0x350] sm:$0xff]
    %v290 = vld [vmem:[#allocation5 + $0x358] sm:$0xf]
    %v291 = vld [vmem:[#allocation5 + $0x35c] sm:$0xff]
    %v292 = vld [vmem:[#allocation5 + $0x364] sm:$0xff]
    %v293 = vld [vmem:[#allocation5 + $0x36c] sm:$0xf]
    %v294 = vld [vmem:[#allocation5 + $0x370] sm:$0xff]
    %v295 = vld [vmem:[#allocation5 + $0x378] sm:$0xff]
    %v296 = vld [vmem:[#allocation5 + $0x380] sm:$0xf]
    %v297 = vld [vmem:[#allocation5 + $0x384] sm:$0xff]
    %v298 = vld [vmem:[#allocation5 + $0x38c] sm:$0xff]
    %v299 = vld [vmem:[#allocation5 + $0x394] sm:$0xf]
    %v300 = vld [vmem:[#allocation5 + $0x398] sm:$0xff]
    %v301 = vld [vmem:[#allocation5 + $0x3a0] sm:$0xff]
    %v302 = vld [vmem:[#allocation5 + $0x3a8] sm:$0xf]
    %v303 = vld [vmem:[#allocation5 + $0x3ac] sm:$0xff]
    %v304 = vld [vmem:[#allocation5 + $0x3b4] sm:$0xff]
    %v305 = vld [vmem:[#allocation5 + $0x3bc] sm:$0xf]
    %v306 = vld [vmem:[#allocation5 + $0x3c0] sm:$0xff]
    %v307 = vld [vmem:[#allocation5 + $0x3c8] sm:$0xff]
    %v308 = vld [vmem:[#allocation5 + $0x3d0] sm:$0xf]
    %v309 = vld [vmem:[#allocation5 + $0x3d4] sm:$0xff]
    %v310 = vld [vmem:[#allocation5 + $0x3dc] sm:$0xff]
    %v311 = vld [vmem:[#allocation5 + $0x3e4] sm:$0xf]
    %v312 = vld [vmem:[#allocation5 + $0x3e8] sm:$0xff]
    %v313 = vld [vmem:[#allocation5 + $0x3f0] sm:$0xff]
    %v314 = vld [vmem:[#allocation5 + $0x3f8] sm:$0xf]
    %v315 = vld [vmem:[#allocation5 + $0x3fc] sm:$0xff]
    %v316 = vld [vmem:[#allocation5 + $0x404] sm:$0xff]
    %v317 = vld [vmem:[#allocation5 + $0x40c] sm:$0xf]
    %v318 = vld [vmem:[#allocation5 + $0x410] sm:$0xff]
    %v319 = vld [vmem:[#allocation5 + $0x418] sm:$0xff]
    %v320 = vld [vmem:[#allocation5 + $0x420] sm:$0xf]
    %v321 = vld [vmem:[#allocation5 + $0x424] sm:$0xff]
    %v322 = vld [vmem:[#allocation5 + $0x42c] sm:$0xff]
    %v323 = vld [vmem:[#allocation5 + $0x434] sm:$0xf]
    %v324 = vld [vmem:[#allocation5 + $0x438] sm:$0xff]
    %v325 = vld [vmem:[#allocation5 + $0x440] sm:$0xff]
    %v326 = vld [vmem:[#allocation5 + $0x448] sm:$0xf]
    %v327 = vld [vmem:[#allocation5 + $0x44c] sm:$0xff]
    %v328 = vld [vmem:[#allocation5 + $0x454] sm:$0xff]
    %v329 = vld [vmem:[#allocation5 + $0x45c] sm:$0xf]
    %v330 = vld [vmem:[#allocation5 + $0x460] sm:$0xff]
    %v331 = vld [vmem:[#allocation5 + $0x468] sm:$0xff]
    %v332 = vld [vmem:[#allocation5 + $0x470] sm:$0xf]
    %v333 = vld [vmem:[#allocation5 + $0x474] sm:$0xff]
    %v334 = vld [vmem:[#allocation5 + $0x47c] sm:$0xff]
    %v335 = vld [vmem:[#allocation5 + $0x484] sm:$0xf]
    %v336 = vld [vmem:[#allocation5 + $0x488] sm:$0xff]
    %v337 = vld [vmem:[#allocation5 + $0x490] sm:$0xff]
    %v338 = vld [vmem:[#allocation5 + $0x498] sm:$0xf]
    %v339 = vld [vmem:[#allocation5 + $0x49c] sm:$0xff]
    %v340 = vld [vmem:[#allocation5 + $0x4a4] sm:$0xff]
    %v341 = vld [vmem:[#allocation5 + $0x4ac] sm:$0xf]
    %v342 = vld [vmem:[#allocation5 + $0x4b0] sm:$0xff]
    %v343 = vld [vmem:[#allocation5 + $0x4b8] sm:$0xff]
    %v344 = vld [vmem:[#allocation5 + $0x4c0] sm:$0xf]
    %v345 = vld [vmem:[#allocation5 + $0x4c4] sm:$0xff]
    %v346 = vld [vmem:[#allocation5 + $0x4cc] sm:$0xff]
    %v347 = vld [vmem:[#allocation5 + $0x4d4] sm:$0xf]
    %v348 = vld [vmem:[#allocation5 + $0x4d8] sm:$0xff]
    %v349 = vld [vmem:[#allocation5 + $0x4e0] sm:$0xff]
    %v350 = vld [vmem:[#allocation5 + $0x4e8] sm:$0xf]
    %v351 = vld [vmem:[#allocation5 + $0x4ec] sm:$0xff]
    %v352 = vld [vmem:[#allocation5 + $0x4f4] sm:$0xff]
    %v353 = vld [vmem:[#allocation5 + $0x4fc] sm:$0xf]
    %v354 = vld [vmem:[#allocation5 + $0x500] sm:$0xff]
    %v355 = vld [vmem:[#allocation5 + $0x508] sm:$0xff]
    %v356 = vld [vmem:[#allocation5 + $0x510] sm:$0xf]
    %v357 = vld [vmem:[#allocation5 + $0x514] sm:$0xff]
    %v358 = vld [vmem:[#allocation5 + $0x51c] sm:$0xff]
    %v359 = vld [vmem:[#allocation5 + $0x524] sm:$0xf]
    %v360 = vld [vmem:[#allocation5 + $0x528] sm:$0xff]
    %v361 = vld [vmem:[#allocation5 + $0x530] sm:$0xff]
    %v362 = vld [vmem:[#allocation5 + $0x538] sm:$0xf]
    %v363 = vld [vmem:[#allocation5 + $0x53c] sm:$0xff]
    %v364 = vld [vmem:[#allocation5 + $0x544] sm:$0xff]
    %v365 = vld [vmem:[#allocation5 + $0x54c] sm:$0xf]
    %v366 = vld [vmem:[#allocation5 + $0x550] sm:$0xff]
    %v367 = vld [vmem:[#allocation5 + $0x558] sm:$0xff]
    %v368 = vld [vmem:[#allocation5 + $0x560] sm:$0xf]
    %v369 = vld [vmem:[#allocation5 + $0x564] sm:$0xff]
    %v370 = vld [vmem:[#allocation5 + $0x56c] sm:$0xff]
    %v371 = vld [vmem:[#allocation5 + $0x574] sm:$0xf]
    %v372 = vld [vmem:[#allocation5 + $0x578] sm:$0xff]
    %v373 = vld [vmem:[#allocation5 + $0x580] sm:$0xff]
    %v374 = vld [vmem:[#allocation5 + $0x588] sm:$0xf]
    %v375 = vld [vmem:[#allocation5 + $0x58c] sm:$0xff]
    %v376 = vld [vmem:[#allocation5 + $0x594] sm:$0xff]
    %v377 = vld [vmem:[#allocation5 + $0x59c] sm:$0xf]
    %v378 = vld [vmem:[#allocation5 + $0x5a0] sm:$0xff]
    %v379 = vld [vmem:[#allocation5 + $0x5a8] sm:$0xff]
    %v380 = vld [vmem:[#allocation5 + $0x5b0] sm:$0xf]
    %v381 = vld [vmem:[#allocation5 + $0x5b4] sm:$0xff]
    %v382 = vld [vmem:[#allocation5 + $0x5bc] sm:$0xff]
    %v383 = vld [vmem:[#allocation5 + $0x5c4] sm:$0xf]
    %v384 = vld [vmem:[#allocation5 + $0x5c8] sm:$0xff]
    %v385 = vld [vmem:[#allocation5 + $0x5d0] sm:$0xff]
    %v386 = vld [vmem:[#allocation5 + $0x5d8] sm:$0xf]
    %v387 = vld [vmem:[#allocation5 + $0x5dc] sm:$0xff]
    %v388 = vld [vmem:[#allocation5 + $0x5e4] sm:$0xff]
    %v389 = vld [vmem:[#allocation5 + $0x5ec] sm:$0xf]
    %v390 = vld [vmem:[#allocation5 + $0x5f0] sm:$0xff]
    %v391 = vld [vmem:[#allocation5 + $0x5f8] sm:$0xff]
    %v392 = vld [vmem:[#allocation5 + $0x600] sm:$0xf]
    %v393 = vld [vmem:[#allocation5 + $0x604] sm:$0xff]
    %v394 = vld [vmem:[#allocation5 + $0x60c] sm:$0xff]
    %v395 = vld [vmem:[#allocation5 + $0x614] sm:$0xf]
    %v396 = vld [vmem:[#allocation5 + $0x618] sm:$0xff]
    %v397 = vld [vmem:[#allocation5 + $0x620] sm:$0xff]
    %v398 = vld [vmem:[#allocation5 + $0x628] sm:$0xf]
    %v399 = vld [vmem:[#allocation5 + $0x62c] sm:$0xff]
    %v400 = vld [vmem:[#allocation5 + $0x634] sm:$0xff]
    %v401 = vld [vmem:[#allocation5 + $0x63c] sm:$0xf]
    %v402 = vld [vmem:[#allocation5 + $0x640] sm:$0xff]
    %v403 = vld [vmem:[#allocation5 + $0x648] sm:$0xff]
    %v404 = vld [vmem:[#allocation5 + $0x650] sm:$0xf]
    %v405 = vld [vmem:[#allocation5 + $0x654] sm:$0xff]
    %v406 = vld [vmem:[#allocation5 + $0x65c] sm:$0xff]
    %v407 = vld [vmem:[#allocation5 + $0x664] sm:$0xf]
    %v408 = vld [vmem:[#allocation5 + $0x668] sm:$0xff]
    %v409 = vld [vmem:[#allocation5 + $0x670] sm:$0xff]
    %v410 = vld [vmem:[#allocation5 + $0x678] sm:$0xf]
    %v411 = vld [vmem:[#allocation5 + $0x67c] sm:$0xff]
    %v412 = vld [vmem:[#allocation5 + $0x684] sm:$0xff]
    %v413 = vld [vmem:[#allocation5 + $0x68c] sm:$0xf]
    %v414 = vld [vmem:[#allocation5 + $0x690] sm:$0xff]
    %v415 = vld [vmem:[#allocation5 + $0x698] sm:$0xff]
    %v416 = vld [vmem:[#allocation5 + $0x6a0] sm:$0xf]
    %v417 = vld [vmem:[#allocation5 + $0x6a4] sm:$0xff]
    %v418 = vld [vmem:[#allocation5 + $0x6ac] sm:$0xff]
    %v419 = vld [vmem:[#allocation5 + $0x6b4] sm:$0xf]
    %v420 = vld [vmem:[#allocation5 + $0x6b8] sm:$0xff]
    %v421 = vld [vmem:[#allocation5 + $0x6c0] sm:$0xff]
    %v422 = vld [vmem:[#allocation5 + $0x6c8] sm:$0xf]
    %v423 = vld [vmem:[#allocation5 + $0x6cc] sm:$0xff]
    %v424 = vld [vmem:[#allocation5 + $0x6d4] sm:$0xff]
    %v425 = vld [vmem:[#allocation5 + $0x6dc] sm:$0xf]
    %v426 = vld [vmem:[#allocation5 + $0x6e0] sm:$0xff]
    %v427 = vld [vmem:[#allocation5 + $0x6e8] sm:$0xff]
    %v428 = vld [vmem:[#allocation5 + $0x6f0] sm:$0xf]
    %v429 = vld [vmem:[#allocation5 + $0x6f4] sm:$0xff]
    %v430 = vld [vmem:[#allocation5 + $0x6fc] sm:$0xff]
    %v431 = vld [vmem:[#allocation5 + $0x704] sm:$0xf]
    %v432 = vld [vmem:[#allocation5 + $0x708] sm:$0xff]
    %v433 = vld [vmem:[#allocation5 + $0x710] sm:$0xff]
    %v434 = vld [vmem:[#allocation5 + $0x718] sm:$0xf]
    %v435 = vld [vmem:[#allocation5 + $0x71c] sm:$0xff]
    %v436 = vld [vmem:[#allocation5 + $0x724] sm:$0xff]
    %v437 = vld [vmem:[#allocation5 + $0x72c] sm:$0xf]
    %v438 = vld [vmem:[#allocation5 + $0x730] sm:$0xff]
    %v439 = vld [vmem:[#allocation5 + $0x738] sm:$0xff]
    %v440 = vld [vmem:[#allocation5 + $0x740] sm:$0xf]
    %v441 = vld [vmem:[#allocation5 + $0x744] sm:$0xff]
    %v442 = vld [vmem:[#allocation5 + $0x74c] sm:$0xff]
    %v443 = vld [vmem:[#allocation5 + $0x754] sm:$0xf]
    %v444 = vld [vmem:[#allocation5 + $0x758] sm:$0xff]
    %v445 = vld [vmem:[#allocation5 + $0x760] sm:$0xff]
    %v446 = vld [vmem:[#allocation5 + $0x768] sm:$0xf]
    %v447 = vld [vmem:[#allocation5 + $0x76c] sm:$0xff]
    %v448 = vld [vmem:[#allocation5 + $0x774] sm:$0xff]
    %v449 = vld [vmem:[#allocation5 + $0x77c] sm:$0xf]
    %v450 = vld [vmem:[#allocation5 + $0x780] sm:$0xff]
    %v451 = vld [vmem:[#allocation5 + $0x788] sm:$0xff]
    %v452 = vld [vmem:[#allocation5 + $0x790] sm:$0xf]
    %v453 = vld [vmem:[#allocation5 + $0x794] sm:$0xff]
    %v454 = vld [vmem:[#allocation5 + $0x79c] sm:$0xff]
    %v455 = vld [vmem:[#allocation5 + $0x7a4] sm:$0xf]
    %v456 = vld [vmem:[#allocation14] ss:$8 sm:$0xf]
    %v457 = vld [vmem:[#allocation14] ss:$8 sm:$0x10]
    %v458 = vor.u32 %v456, %v457
    %v460 = vperm.slane %v458, 0
    %v461 = vperm.slane %v458, 1
    %v462 = vperm.slane %v458, 2
    %v463 = vperm.slane %v458, 3
    %v464 = vperm.slane %v458, 4
    %v478 = vunpack.c.l.b16 %v154
    %v479 = vunpack.c.h.b16 %v154
    %v480 = vunpack.c.l.b16 %v155
    %v481 = vunpack.c.h.b16 %v155
    %v482 = vunpack.c.l.b16 %v156
    %v483 = vunpack.c.h.b16 %v156
    %v484 = vunpack.c.l.b16 %v157
    %v485 = vunpack.c.l.b16 %v158
    %v486 = vunpack.c.h.b16 %v158
    %v487 = vunpack.c.l.b16 %v159
    %v488 = vunpack.c.h.b16 %v159
    %v489 = vunpack.c.l.b16 %v160
    %v490 = vunpack.c.h.b16 %v160
    %v491 = vunpack.c.l.b16 %v161
    %v492 = vpack.c.b16 %v485, %v478
    %v493 = vpack.c.b16 %v486, %v479
    %v494 = vpack.c.b16 %v487, %v480
    %v495 = vpack.c.b16 %v488, %v481
    %v496 = vpack.c.b16 %v489, %v482
    %v497 = vpack.c.b16 %v490, %v483
    %v498 = vpack.c.b16 %v491, %v484
    %v799 = vunpack.c.l.b16 %v162
    %v800 = vunpack.c.h.b16 %v162
    %v801 = vunpack.c.l.b16 %v163
    %v802 = vunpack.c.h.b16 %v163
    %v803 = vunpack.c.l.b16 %v164
    %v804 = vunpack.c.l.b16 %v165
    %v805 = vunpack.c.h.b16 %v165
    %v806 = vunpack.c.l.b16 %v166
    %v807 = vunpack.c.h.b16 %v166
    %v808 = vunpack.c.l.b16 %v167
    %v809 = vunpack.c.l.b16 %v168
    %v810 = vunpack.c.h.b16 %v168
    %v811 = vunpack.c.l.b16 %v169
    %v812 = vunpack.c.h.b16 %v169
    %v813 = vunpack.c.l.b16 %v170
    %v814 = vunpack.c.l.b16 %v171
    %v815 = vunpack.c.h.b16 %v171
    %v816 = vunpack.c.l.b16 %v172
    %v817 = vunpack.c.h.b16 %v172
    %v818 = vunpack.c.l.b16 %v173
    %v819 = vunpack.c.l.b16 %v174
    %v820 = vunpack.c.h.b16 %v174
    %v821 = vunpack.c.l.b16 %v175
    %v822 = vunpack.c.h.b16 %v175
    %v823 = vunpack.c.l.b16 %v176
    %v824 = vunpack.c.l.b16 %v177
    %v825 = vunpack.c.h.b16 %v177
    %v826 = vunpack.c.l.b16 %v178
    %v827 = vunpack.c.h.b16 %v178
    %v828 = vunpack.c.l.b16 %v179
    %v829 = vunpack.c.l.b16 %v180
    %v830 = vunpack.c.h.b16 %v180
    %v831 = vunpack.c.l.b16 %v181
    %v832 = vunpack.c.h.b16 %v181
    %v833 = vunpack.c.l.b16 %v182
    %v834 = vunpack.c.l.b16 %v183
    %v835 = vunpack.c.h.b16 %v183
    %v836 = vunpack.c.l.b16 %v184
    %v837 = vunpack.c.h.b16 %v184
    %v838 = vunpack.c.l.b16 %v185
    %v839 = vunpack.c.l.b16 %v186
    %v840 = vunpack.c.h.b16 %v186
    %v841 = vunpack.c.l.b16 %v187
    %v842 = vunpack.c.h.b16 %v187
    %v843 = vunpack.c.l.b16 %v188
    %v844 = vunpack.c.l.b16 %v189
    %v845 = vunpack.c.h.b16 %v189
    %v846 = vunpack.c.l.b16 %v190
    %v847 = vunpack.c.h.b16 %v190
    %v848 = vunpack.c.l.b16 %v191
    %v849 = vunpack.c.l.b16 %v192
    %v850 = vunpack.c.h.b16 %v192
    %v851 = vunpack.c.l.b16 %v193
    %v852 = vunpack.c.h.b16 %v193
    %v853 = vunpack.c.l.b16 %v194
    %v854 = vunpack.c.l.b16 %v195
    %v855 = vunpack.c.h.b16 %v195
    %v856 = vunpack.c.l.b16 %v196
    %v857 = vunpack.c.h.b16 %v196
    %v858 = vunpack.c.l.b16 %v197
    %v859 = vunpack.c.l.b16 %v198
    %v860 = vunpack.c.h.b16 %v198
    %v861 = vunpack.c.l.b16 %v199
    %v862 = vunpack.c.h.b16 %v199
    %v863 = vunpack.c.l.b16 %v200
    %v864 = vunpack.c.l.b16 %v201
    %v865 = vunpack.c.h.b16 %v201
    %v866 = vunpack.c.l.b16 %v202
    %v867 = vunpack.c.h.b16 %v202
    %v868 = vunpack.c.l.b16 %v203
    %v869 = vunpack.c.l.b16 %v204
    %v870 = vunpack.c.h.b16 %v204
    %v871 = vunpack.c.l.b16 %v205
    %v872 = vunpack.c.h.b16 %v205
    %v873 = vunpack.c.l.b16 %v206
    %v874 = vunpack.c.l.b16 %v207
    %v875 = vunpack.c.h.b16 %v207
    %v876 = vunpack.c.l.b16 %v208
    %v877 = vunpack.c.h.b16 %v208
    %v878 = vunpack.c.l.b16 %v209
    %v879 = vunpack.c.l.b16 %v210
    %v880 = vunpack.c.h.b16 %v210
    %v881 = vunpack.c.l.b16 %v211
    %v882 = vunpack.c.h.b16 %v211
    %v883 = vunpack.c.l.b16 %v212
    %v884 = vunpack.c.l.b16 %v213
    %v885 = vunpack.c.h.b16 %v213
    %v886 = vunpack.c.l.b16 %v214
    %v887 = vunpack.c.h.b16 %v214
    %v888 = vunpack.c.l.b16 %v215
    %v889 = vunpack.c.l.b16 %v216
    %v890 = vunpack.c.h.b16 %v216
    %v891 = vunpack.c.l.b16 %v217
    %v892 = vunpack.c.h.b16 %v217
    %v893 = vunpack.c.l.b16 %v218
    %v894 = vunpack.c.l.b16 %v219
    %v895 = vunpack.c.h.b16 %v219
    %v896 = vunpack.c.l.b16 %v220
    %v897 = vunpack.c.h.b16 %v220
    %v898 = vunpack.c.l.b16 %v221
    %v899 = vunpack.c.l.b16 %v222
    %v900 = vunpack.c.h.b16 %v222
    %v901 = vunpack.c.l.b16 %v223
    %v902 = vunpack.c.h.b16 %v223
    %v903 = vunpack.c.l.b16 %v224
    %v904 = vunpack.c.l.b16 %v225
    %v905 = vunpack.c.h.b16 %v225
    %v906 = vunpack.c.l.b16 %v226
    %v907 = vunpack.c.h.b16 %v226
    %v908 = vunpack.c.l.b16 %v227
    %v909 = vunpack.c.l.b16 %v228
    %v910 = vunpack.c.h.b16 %v228
    %v911 = vunpack.c.l.b16 %v229
    %v912 = vunpack.c.h.b16 %v229
    %v913 = vunpack.c.l.b16 %v230
    %v914 = vunpack.c.l.b16 %v231
    %v915 = vunpack.c.h.b16 %v231
    %v916 = vunpack.c.l.b16 %v232
    %v917 = vunpack.c.h.b16 %v232
    %v918 = vunpack.c.l.b16 %v233
    %v919 = vunpack.c.l.b16 %v234
    %v920 = vunpack.c.h.b16 %v234
    %v921 = vunpack.c.l.b16 %v235
    %v922 = vunpack.c.h.b16 %v235
    %v923 = vunpack.c.l.b16 %v236
    %v924 = vunpack.c.l.b16 %v237
    %v925 = vunpack.c.h.b16 %v237
    %v926 = vunpack.c.l.b16 %v238
    %v927 = vunpack.c.h.b16 %v238
    %v928 = vunpack.c.l.b16 %v239
    %v929 = vunpack.c.l.b16 %v240
    %v930 = vunpack.c.h.b16 %v240
    %v931 = vunpack.c.l.b16 %v241
    %v932 = vunpack.c.h.b16 %v241
    %v933 = vunpack.c.l.b16 %v242
    %v934 = vunpack.c.l.b16 %v243
    %v935 = vunpack.c.h.b16 %v243
    %v936 = vunpack.c.l.b16 %v244
    %v937 = vunpack.c.h.b16 %v244
    %v938 = vunpack.c.l.b16 %v245
    %v939 = vunpack.c.l.b16 %v246
    %v940 = vunpack.c.h.b16 %v246
    %v941 = vunpack.c.l.b16 %v247
    %v942 = vunpack.c.h.b16 %v247
    %v943 = vunpack.c.l.b16 %v248
    %v944 = vunpack.c.l.b16 %v249
    %v945 = vunpack.c.h.b16 %v249
    %v946 = vunpack.c.l.b16 %v250
    %v947 = vunpack.c.h.b16 %v250
    %v948 = vunpack.c.l.b16 %v251
    %v949 = vunpack.c.l.b16 %v252
    %v950 = vunpack.c.h.b16 %v252
    %v951 = vunpack.c.l.b16 %v253
    %v952 = vunpack.c.h.b16 %v253
    %v953 = vunpack.c.l.b16 %v254
    %v954 = vunpack.c.l.b16 %v255
    %v955 = vunpack.c.h.b16 %v255
    %v956 = vunpack.c.l.b16 %v256
    %v957 = vunpack.c.h.b16 %v256
    %v958 = vunpack.c.l.b16 %v257
    %v959 = vunpack.c.l.b16 %v258
    %v960 = vunpack.c.h.b16 %v258
    %v961 = vunpack.c.l.b16 %v259
    %v962 = vunpack.c.h.b16 %v259
    %v963 = vunpack.c.l.b16 %v260
    %v964 = vunpack.c.l.b16 %v261
    %v965 = vunpack.c.h.b16 %v261
    %v966 = vunpack.c.l.b16 %v262
    %v967 = vunpack.c.h.b16 %v262
    %v968 = vunpack.c.l.b16 %v263
    %v969 = vunpack.c.l.b16 %v264
    %v970 = vunpack.c.h.b16 %v264
    %v971 = vunpack.c.l.b16 %v265
    %v972 = vunpack.c.h.b16 %v265
    %v973 = vunpack.c.l.b16 %v266
    %v974 = vunpack.c.l.b16 %v267
    %v975 = vunpack.c.h.b16 %v267
    %v976 = vunpack.c.l.b16 %v268
    %v977 = vunpack.c.h.b16 %v268
    %v978 = vunpack.c.l.b16 %v269
    %v979 = vunpack.c.l.b16 %v270
    %v980 = vunpack.c.h.b16 %v270
    %v981 = vunpack.c.l.b16 %v271
    %v982 = vunpack.c.h.b16 %v271
    %v983 = vunpack.c.l.b16 %v272
    %v984 = vunpack.c.l.b16 %v273
    %v985 = vunpack.c.h.b16 %v273
    %v986 = vunpack.c.l.b16 %v274
    %v987 = vunpack.c.h.b16 %v274
    %v988 = vunpack.c.l.b16 %v275
    %v989 = vunpack.c.l.b16 %v276
    %v990 = vunpack.c.h.b16 %v276
    %v991 = vunpack.c.l.b16 %v277
    %v992 = vunpack.c.h.b16 %v277
    %v993 = vunpack.c.l.b16 %v278
    %v994 = vunpack.c.l.b16 %v279
    %v995 = vunpack.c.h.b16 %v279
    %v996 = vunpack.c.l.b16 %v280
    %v997 = vunpack.c.h.b16 %v280
    %v998 = vunpack.c.l.b16 %v281
    %v999 = vunpack.c.l.b16 %v282
    %v1000 = vunpack.c.h.b16 %v282
    %v1001 = vunpack.c.l.b16 %v283
    %v1002 = vunpack.c.h.b16 %v283
    %v1003 = vunpack.c.l.b16 %v284
    %v1004 = vunpack.c.l.b16 %v285
    %v1005 = vunpack.c.h.b16 %v285
    %v1006 = vunpack.c.l.b16 %v286
    %v1007 = vunpack.c.h.b16 %v286
    %v1008 = vunpack.c.l.b16 %v287
    %v1009 = vunpack.c.l.b16 %v288
    %v1010 = vunpack.c.h.b16 %v288
    %v1011 = vunpack.c.l.b16 %v289
    %v1012 = vunpack.c.h.b16 %v289
    %v1013 = vunpack.c.l.b16 %v290
    %v1014 = vunpack.c.l.b16 %v291
    %v1015 = vunpack.c.h.b16 %v291
    %v1016 = vunpack.c.l.b16 %v292
    %v1017 = vunpack.c.h.b16 %v292
    %v1018 = vunpack.c.l.b16 %v293
    %v1019 = vunpack.c.l.b16 %v294
    %v1020 = vunpack.c.h.b16 %v294
    %v1021 = vunpack.c.l.b16 %v295
    %v1022 = vunpack.c.h.b16 %v295
    %v1023 = vunpack.c.l.b16 %v296
    %v1024 = vunpack.c.l.b16 %v297
    %v1025 = vunpack.c.h.b16 %v297
    %v1026 = vunpack.c.l.b16 %v298
    %v1027 = vunpack.c.h.b16 %v298
    %v1028 = vunpack.c.l.b16 %v299
    %v1029 = vunpack.c.l.b16 %v300
    %v1030 = vunpack.c.h.b16 %v300
    %v1031 = vunpack.c.l.b16 %v301
    %v1032 = vunpack.c.h.b16 %v301
    %v1033 = vunpack.c.l.b16 %v302
    %v1034 = vunpack.c.l.b16 %v303
    %v1035 = vunpack.c.h.b16 %v303
    %v1036 = vunpack.c.l.b16 %v304
    %v1037 = vunpack.c.h.b16 %v304
    %v1038 = vunpack.c.l.b16 %v305
    %v1039 = vunpack.c.l.b16 %v306
    %v1040 = vunpack.c.h.b16 %v306
    %v1041 = vunpack.c.l.b16 %v307
    %v1042 = vunpack.c.h.b16 %v307
    %v1043 = vunpack.c.l.b16 %v308
    %v1044 = vunpack.c.l.b16 %v309
    %v1045 = vunpack.c.h.b16 %v309
    %v1046 = vunpack.c.l.b16 %v310
    %v1047 = vunpack.c.h.b16 %v310
    %v1048 = vunpack.c.l.b16 %v311
    %v1049 = vunpack.c.l.b16 %v312
    %v1050 = vunpack.c.h.b16 %v312
    %v1051 = vunpack.c.l.b16 %v313
    %v1052 = vunpack.c.h.b16 %v313
    %v1053 = vunpack.c.l.b16 %v314
    %v1054 = vunpack.c.l.b16 %v315
    %v1055 = vunpack.c.h.b16 %v315
    %v1056 = vunpack.c.l.b16 %v316
    %v1057 = vunpack.c.h.b16 %v316
    %v1058 = vunpack.c.l.b16 %v317
    %v1059 = vunpack.c.l.b16 %v318
    %v1060 = vunpack.c.h.b16 %v318
    %v1061 = vunpack.c.l.b16 %v319
    %v1062 = vunpack.c.h.b16 %v319
    %v1063 = vunpack.c.l.b16 %v320
    %v1064 = vunpack.c.l.b16 %v321
    %v1065 = vunpack.c.h.b16 %v321
    %v1066 = vunpack.c.l.b16 %v322
    %v1067 = vunpack.c.h.b16 %v322
    %v1068 = vunpack.c.l.b16 %v323
    %v1069 = vunpack.c.l.b16 %v324
    %v1070 = vunpack.c.h.b16 %v324
    %v1071 = vunpack.c.l.b16 %v325
    %v1072 = vunpack.c.h.b16 %v325
    %v1073 = vunpack.c.l.b16 %v326
    %v1074 = vunpack.c.l.b16 %v327
    %v1075 = vunpack.c.h.b16 %v327
    %v1076 = vunpack.c.l.b16 %v328
    %v1077 = vunpack.c.h.b16 %v328
    %v1078 = vunpack.c.l.b16 %v329
    %v1079 = vunpack.c.l.b16 %v330
    %v1080 = vunpack.c.h.b16 %v330
    %v1081 = vunpack.c.l.b16 %v331
    %v1082 = vunpack.c.h.b16 %v331
    %v1083 = vunpack.c.l.b16 %v332
    %v1084 = vunpack.c.l.b16 %v333
    %v1085 = vunpack.c.h.b16 %v333
    %v1086 = vunpack.c.l.b16 %v334
    %v1087 = vunpack.c.h.b16 %v334
    %v1088 = vunpack.c.l.b16 %v335
    %v1089 = vunpack.c.l.b16 %v336
    %v1090 = vunpack.c.h.b16 %v336
    %v1091 = vunpack.c.l.b16 %v337
    %v1092 = vunpack.c.h.b16 %v337
    %v1093 = vunpack.c.l.b16 %v338
    %v1094 = vunpack.c.l.b16 %v339
    %v1095 = vunpack.c.h.b16 %v339
    %v1096 = vunpack.c.l.b16 %v340
    %v1097 = vunpack.c.h.b16 %v340
    %v1098 = vunpack.c.l.b16 %v341
    %v1099 = vunpack.c.l.b16 %v342
    %v1100 = vunpack.c.h.b16 %v342
    %v1101 = vunpack.c.l.b16 %v343
    %v1102 = vunpack.c.h.b16 %v343
    %v1103 = vunpack.c.l.b16 %v344
    %v1104 = vunpack.c.l.b16 %v345
    %v1105 = vunpack.c.h.b16 %v345
    %v1106 = vunpack.c.l.b16 %v346
    %v1107 = vunpack.c.h.b16 %v346
    %v1108 = vunpack.c.l.b16 %v347
    %v1109 = vunpack.c.l.b16 %v348
    %v1110 = vunpack.c.h.b16 %v348
    %v1111 = vunpack.c.l.b16 %v349
    %v1112 = vunpack.c.h.b16 %v349
    %v1113 = vunpack.c.l.b16 %v350
    %v1114 = vunpack.c.l.b16 %v351
    %v1115 = vunpack.c.h.b16 %v351
    %v1116 = vunpack.c.l.b16 %v352
    %v1117 = vunpack.c.h.b16 %v352
    %v1118 = vunpack.c.l.b16 %v353
    %v1119 = vunpack.c.l.b16 %v354
    %v1120 = vunpack.c.h.b16 %v354
    %v1121 = vunpack.c.l.b16 %v355
    %v1122 = vunpack.c.h.b16 %v355
    %v1123 = vunpack.c.l.b16 %v356
    %v1124 = vunpack.c.l.b16 %v357
    %v1125 = vunpack.c.h.b16 %v357
    %v1126 = vunpack.c.l.b16 %v358
    %v1127 = vunpack.c.h.b16 %v358
    %v1128 = vunpack.c.l.b16 %v359
    %v1129 = vunpack.c.l.b16 %v360
    %v1130 = vunpack.c.h.b16 %v360
    %v1131 = vunpack.c.l.b16 %v361
    %v1132 = vunpack.c.h.b16 %v361
    %v1133 = vunpack.c.l.b16 %v362
    %v1134 = vunpack.c.l.b16 %v363
    %v1135 = vunpack.c.h.b16 %v363
    %v1136 = vunpack.c.l.b16 %v364
    %v1137 = vunpack.c.h.b16 %v364
    %v1138 = vunpack.c.l.b16 %v365
    %v1139 = vunpack.c.l.b16 %v366
    %v1140 = vunpack.c.h.b16 %v366
    %v1141 = vunpack.c.l.b16 %v367
    %v1142 = vunpack.c.h.b16 %v367
    %v1143 = vunpack.c.l.b16 %v368
    %v1144 = vunpack.c.l.b16 %v369
    %v1145 = vunpack.c.h.b16 %v369
    %v1146 = vunpack.c.l.b16 %v370
    %v1147 = vunpack.c.h.b16 %v370
    %v1148 = vunpack.c.l.b16 %v371
    %v1149 = vunpack.c.l.b16 %v372
    %v1150 = vunpack.c.h.b16 %v372
    %v1151 = vunpack.c.l.b16 %v373
    %v1152 = vunpack.c.h.b16 %v373
    %v1153 = vunpack.c.l.b16 %v374
    %v1154 = vunpack.c.l.b16 %v375
    %v1155 = vunpack.c.h.b16 %v375
    %v1156 = vunpack.c.l.b16 %v376
    %v1157 = vunpack.c.h.b16 %v376
    %v1158 = vunpack.c.l.b16 %v377
    %v1159 = vunpack.c.l.b16 %v378
    %v1160 = vunpack.c.h.b16 %v378
    %v1161 = vunpack.c.l.b16 %v379
    %v1162 = vunpack.c.h.b16 %v379
    %v1163 = vunpack.c.l.b16 %v380
    %v1164 = vunpack.c.l.b16 %v381
    %v1165 = vunpack.c.h.b16 %v381
    %v1166 = vunpack.c.l.b16 %v382
    %v1167 = vunpack.c.h.b16 %v382
    %v1168 = vunpack.c.l.b16 %v383
    %v1169 = vunpack.c.l.b16 %v384
    %v1170 = vunpack.c.h.b16 %v384
    %v1171 = vunpack.c.l.b16 %v385
    %v1172 = vunpack.c.h.b16 %v385
    %v1173 = vunpack.c.l.b16 %v386
    %v1174 = vunpack.c.l.b16 %v387
    %v1175 = vunpack.c.h.b16 %v387
    %v1176 = vunpack.c.l.b16 %v388
    %v1177 = vunpack.c.h.b16 %v388
    %v1178 = vunpack.c.l.b16 %v389
    %v1179 = vunpack.c.l.b16 %v390
    %v1180 = vunpack.c.h.b16 %v390
    %v1181 = vunpack.c.l.b16 %v391
    %v1182 = vunpack.c.h.b16 %v391
    %v1183 = vunpack.c.l.b16 %v392
    %v1184 = vunpack.c.l.b16 %v393
    %v1185 = vunpack.c.h.b16 %v393
    %v1186 = vunpack.c.l.b16 %v394
    %v1187 = vunpack.c.h.b16 %v394
    %v1188 = vunpack.c.l.b16 %v395
    %v1189 = vunpack.c.l.b16 %v396
    %v1190 = vunpack.c.h.b16 %v396
    %v1191 = vunpack.c.l.b16 %v397
    %v1192 = vunpack.c.h.b16 %v397
    %v1193 = vunpack.c.l.b16 %v398
    %v1194 = vunpack.c.l.b16 %v399
    %v1195 = vunpack.c.h.b16 %v399
    %v1196 = vunpack.c.l.b16 %v400
    %v1197 = vunpack.c.h.b16 %v400
    %v1198 = vunpack.c.l.b16 %v401
    %v1199 = vunpack.c.l.b16 %v402
    %v1200 = vunpack.c.h.b16 %v402
    %v1201 = vunpack.c.l.b16 %v403
    %v1202 = vunpack.c.h.b16 %v403
    %v1203 = vunpack.c.l.b16 %v404
    %v1204 = vunpack.c.l.b16 %v405
    %v1205 = vunpack.c.h.b16 %v405
    %v1206 = vunpack.c.l.b16 %v406
    %v1207 = vunpack.c.h.b16 %v406
    %v1208 = vunpack.c.l.b16 %v407
    %v1209 = vunpack.c.l.b16 %v408
    %v1210 = vunpack.c.h.b16 %v408
    %v1211 = vunpack.c.l.b16 %v409
    %v1212 = vunpack.c.h.b16 %v409
    %v1213 = vunpack.c.l.b16 %v410
    %v1214 = vunpack.c.l.b16 %v411
    %v1215 = vunpack.c.h.b16 %v411
    %v1216 = vunpack.c.l.b16 %v412
    %v1217 = vunpack.c.h.b16 %v412
    %v1218 = vunpack.c.l.b16 %v413
    %v1219 = vunpack.c.l.b16 %v414
    %v1220 = vunpack.c.h.b16 %v414
    %v1221 = vunpack.c.l.b16 %v415
    %v1222 = vunpack.c.h.b16 %v415
    %v1223 = vunpack.c.l.b16 %v416
    %v1224 = vunpack.c.l.b16 %v417
    %v1225 = vunpack.c.h.b16 %v417
    %v1226 = vunpack.c.l.b16 %v418
    %v1227 = vunpack.c.h.b16 %v418
    %v1228 = vunpack.c.l.b16 %v419
    %v1229 = vunpack.c.l.b16 %v420
    %v1230 = vunpack.c.h.b16 %v420
    %v1231 = vunpack.c.l.b16 %v421
    %v1232 = vunpack.c.h.b16 %v421
    %v1233 = vunpack.c.l.b16 %v422
    %v1234 = vunpack.c.l.b16 %v423
    %v1235 = vunpack.c.h.b16 %v423
    %v1236 = vunpack.c.l.b16 %v424
    %v1237 = vunpack.c.h.b16 %v424
    %v1238 = vunpack.c.l.b16 %v425
    %v1239 = vunpack.c.l.b16 %v426
    %v1240 = vunpack.c.h.b16 %v426
    %v1241 = vunpack.c.l.b16 %v427
    %v1242 = vunpack.c.h.b16 %v427
    %v1243 = vunpack.c.l.b16 %v428
    %v1244 = vunpack.c.l.b16 %v429
    %v1245 = vunpack.c.h.b16 %v429
    %v1246 = vunpack.c.l.b16 %v430
    %v1247 = vunpack.c.h.b16 %v430
    %v1248 = vunpack.c.l.b16 %v431
    %v1249 = vunpack.c.l.b16 %v432
    %v1250 = vunpack.c.h.b16 %v432
    %v1251 = vunpack.c.l.b16 %v433
    %v1252 = vunpack.c.h.b16 %v433
    %v1253 = vunpack.c.l.b16 %v434
    %v1254 = vunpack.c.l.b16 %v435
    %v1255 = vunpack.c.h.b16 %v435
    %v1256 = vunpack.c.l.b16 %v436
    %v1257 = vunpack.c.h.b16 %v436
    %v1258 = vunpack.c.l.b16 %v437
    %v1259 = vunpack.c.l.b16 %v438
    %v1260 = vunpack.c.h.b16 %v438
    %v1261 = vunpack.c.l.b16 %v439
    %v1262 = vunpack.c.h.b16 %v439
    %v1263 = vunpack.c.l.b16 %v440
    %v1264 = vunpack.c.l.b16 %v441
    %v1265 = vunpack.c.h.b16 %v441
    %v1266 = vunpack.c.l.b16 %v442
    %v1267 = vunpack.c.h.b16 %v442
    %v1268 = vunpack.c.l.b16 %v443
    %v1269 = vunpack.c.l.b16 %v444
    %v1270 = vunpack.c.h.b16 %v444
    %v1271 = vunpack.c.l.b16 %v445
    %v1272 = vunpack.c.h.b16 %v445
    %v1273 = vunpack.c.l.b16 %v446
    %v1274 = vunpack.c.l.b16 %v447
    %v1275 = vunpack.c.h.b16 %v447
    %v1276 = vunpack.c.l.b16 %v448
    %v1277 = vunpack.c.h.b16 %v448
    %v1278 = vunpack.c.l.b16 %v449
    %v1279 = vunpack.c.l.b16 %v450
    %v1280 = vunpack.c.h.b16 %v450
    %v1281 = vunpack.c.l.b16 %v451
    %v1282 = vunpack.c.h.b16 %v451
    %v1283 = vunpack.c.l.b16 %v452
    %v1284 = vunpack.c.l.b16 %v453
    %v1285 = vunpack.c.h.b16 %v453
    %v1286 = vunpack.c.l.b16 %v454
    %v1287 = vunpack.c.h.b16 %v454
    %v1288 = vunpack.c.l.b16 %v455
    %v1289 = vpack.c.b16 %v804, %v799
    %v1290 = vpack.c.b16 %v805, %v800
    %v1291 = vpack.c.b16 %v806, %v801
    %v1292 = vpack.c.b16 %v807, %v802
    %v1293 = vpack.c.b16 %v808, %v803
    %v1294 = vpack.c.b16 %v814, %v809
    %v1295 = vpack.c.b16 %v815, %v810
    %v1296 = vpack.c.b16 %v816, %v811
    %v1297 = vpack.c.b16 %v817, %v812
    %v1298 = vpack.c.b16 %v818, %v813
    %v1299 = vpack.c.b16 %v824, %v819
    %v1300 = vpack.c.b16 %v825, %v820
    %v1301 = vpack.c.b16 %v826, %v821
    %v1302 = vpack.c.b16 %v827, %v822
    %v1303 = vpack.c.b16 %v828, %v823
    %v1304 = vpack.c.b16 %v834, %v829
    %v1305 = vpack.c.b16 %v835, %v830
    %v1306 = vpack.c.b16 %v836, %v831
    %v1307 = vpack.c.b16 %v837, %v832
    %v1308 = vpack.c.b16 %v838, %v833
    %v1309 = vpack.c.b16 %v844, %v839
    %v1310 = vpack.c.b16 %v845, %v840
    %v1311 = vpack.c.b16 %v846, %v841
    %v1312 = vpack.c.b16 %v847, %v842
    %v1313 = vpack.c.b16 %v848, %v843
    %v1314 = vpack.c.b16 %v854, %v849
    %v1315 = vpack.c.b16 %v855, %v850
    %v1316 = vpack.c.b16 %v856, %v851
    %v1317 = vpack.c.b16 %v857, %v852
    %v1318 = vpack.c.b16 %v858, %v853
    %v1319 = vpack.c.b16 %v864, %v859
    %v1320 = vpack.c.b16 %v865, %v860
    %v1321 = vpack.c.b16 %v866, %v861
    %v1322 = vpack.c.b16 %v867, %v862
    %v1323 = vpack.c.b16 %v868, %v863
    %v1324 = vpack.c.b16 %v874, %v869
    %v1325 = vpack.c.b16 %v875, %v870
    %v1326 = vpack.c.b16 %v876, %v871
    %v1327 = vpack.c.b16 %v877, %v872
    %v1328 = vpack.c.b16 %v878, %v873
    %v1329 = vpack.c.b16 %v884, %v879
    %v1330 = vpack.c.b16 %v885, %v880
    %v1331 = vpack.c.b16 %v886, %v881
    %v1332 = vpack.c.b16 %v887, %v882
    %v1333 = vpack.c.b16 %v888, %v883
    %v1334 = vpack.c.b16 %v894, %v889
    %v1335 = vpack.c.b16 %v895, %v890
    %v1336 = vpack.c.b16 %v896, %v891
    %v1337 = vpack.c.b16 %v897, %v892
    %v1338 = vpack.c.b16 %v898, %v893
    %v1339 = vpack.c.b16 %v904, %v899
    %v1340 = vpack.c.b16 %v905, %v900
    %v1341 = vpack.c.b16 %v906, %v901
    %v1342 = vpack.c.b16 %v907, %v902
    %v1343 = vpack.c.b16 %v908, %v903
    %v1344 = vpack.c.b16 %v914, %v909
    %v1345 = vpack.c.b16 %v915, %v910
    %v1346 = vpack.c.b16 %v916, %v911
    %v1347 = vpack.c.b16 %v917, %v912
    %v1348 = vpack.c.b16 %v918, %v913
    %v1349 = vpack.c.b16 %v924, %v919
    %v1350 = vpack.c.b16 %v925, %v920
    %v1351 = vpack.c.b16 %v926, %v921
    %v1352 = vpack.c.b16 %v927, %v922
    %v1353 = vpack.c.b16 %v928, %v923
    %v1354 = vpack.c.b16 %v934, %v929
    %v1355 = vpack.c.b16 %v935, %v930
    %v1356 = vpack.c.b16 %v936, %v931
    %v1357 = vpack.c.b16 %v937, %v932
    %v1358 = vpack.c.b16 %v938, %v933
    %v1359 = vpack.c.b16 %v944, %v939
    %v1360 = vpack.c.b16 %v945, %v940
    %v1361 = vpack.c.b16 %v946, %v941
    %v1362 = vpack.c.b16 %v947, %v942
    %v1363 = vpack.c.b16 %v948, %v943
    %v1364 = vpack.c.b16 %v954, %v949
    %v1365 = vpack.c.b16 %v955, %v950
    %v1366 = vpack.c.b16 %v956, %v951
    %v1367 = vpack.c.b16 %v957, %v952
    %v1368 = vpack.c.b16 %v958, %v953
    %v1369 = vpack.c.b16 %v964, %v959
    %v1370 = vpack.c.b16 %v965, %v960
    %v1371 = vpack.c.b16 %v966, %v961
    %v1372 = vpack.c.b16 %v967, %v962
    %v1373 = vpack.c.b16 %v968, %v963
    %v1374 = vpack.c.b16 %v974, %v969
    %v1375 = vpack.c.b16 %v975, %v970
    %v1376 = vpack.c.b16 %v976, %v971
    %v1377 = vpack.c.b16 %v977, %v972
    %v1378 = vpack.c.b16 %v978, %v973
    %v1379 = vpack.c.b16 %v984, %v979
    %v1380 = vpack.c.b16 %v985, %v980
    %v1381 = vpack.c.b16 %v986, %v981
    %v1382 = vpack.c.b16 %v987, %v982
    %v1383 = vpack.c.b16 %v988, %v983
    %v1384 = vpack.c.b16 %v994, %v989
    %v1385 = vpack.c.b16 %v995, %v990
    %v1386 = vpack.c.b16 %v996, %v991
    %v1387 = vpack.c.b16 %v997, %v992
    %v1388 = vpack.c.b16 %v998, %v993
    %v1389 = vpack.c.b16 %v1004, %v999
    %v1390 = vpack.c.b16 %v1005, %v1000
    %v1391 = vpack.c.b16 %v1006, %v1001
    %v1392 = vpack.c.b16 %v1007, %v1002
    %v1393 = vpack.c.b16 %v1008, %v1003
    %v1394 = vpack.c.b16 %v1014, %v1009
    %v1395 = vpack.c.b16 %v1015, %v1010
    %v1396 = vpack.c.b16 %v1016, %v1011
    %v1397 = vpack.c.b16 %v1017, %v1012
    %v1398 = vpack.c.b16 %v1018, %v1013
    %v1399 = vpack.c.b16 %v1024, %v1019
    %v1400 = vpack.c.b16 %v1025, %v1020
    %v1401 = vpack.c.b16 %v1026, %v1021
    %v1402 = vpack.c.b16 %v1027, %v1022
    %v1403 = vpack.c.b16 %v1028, %v1023
    %v1404 = vpack.c.b16 %v1034, %v1029
    %v1405 = vpack.c.b16 %v1035, %v1030
    %v1406 = vpack.c.b16 %v1036, %v1031
    %v1407 = vpack.c.b16 %v1037, %v1032
    %v1408 = vpack.c.b16 %v1038, %v1033
    %v1409 = vpack.c.b16 %v1044, %v1039
    %v1410 = vpack.c.b16 %v1045, %v1040
    %v1411 = vpack.c.b16 %v1046, %v1041
    %v1412 = vpack.c.b16 %v1047, %v1042
    %v1413 = vpack.c.b16 %v1048, %v1043
    %v1414 = vpack.c.b16 %v1054, %v1049
    %v1415 = vpack.c.b16 %v1055, %v1050
    %v1416 = vpack.c.b16 %v1056, %v1051
    %v1417 = vpack.c.b16 %v1057, %v1052
    %v1418 = vpack.c.b16 %v1058, %v1053
    %v1419 = vpack.c.b16 %v1064, %v1059
    %v1420 = vpack.c.b16 %v1065, %v1060
    %v1421 = vpack.c.b16 %v1066, %v1061
    %v1422 = vpack.c.b16 %v1067, %v1062
    %v1423 = vpack.c.b16 %v1068, %v1063
    %v1424 = vpack.c.b16 %v1074, %v1069
    %v1425 = vpack.c.b16 %v1075, %v1070
    %v1426 = vpack.c.b16 %v1076, %v1071
    %v1427 = vpack.c.b16 %v1077, %v1072
    %v1428 = vpack.c.b16 %v1078, %v1073
    %v1429 = vpack.c.b16 %v1084, %v1079
    %v1430 = vpack.c.b16 %v1085, %v1080
    %v1431 = vpack.c.b16 %v1086, %v1081
    %v1432 = vpack.c.b16 %v1087, %v1082
    %v1433 = vpack.c.b16 %v1088, %v1083
    %v1434 = vpack.c.b16 %v1094, %v1089
    %v1435 = vpack.c.b16 %v1095, %v1090
    %v1436 = vpack.c.b16 %v1096, %v1091
    %v1437 = vpack.c.b16 %v1097, %v1092
    %v1438 = vpack.c.b16 %v1098, %v1093
    %v1439 = vpack.c.b16 %v1104, %v1099
    %v1440 = vpack.c.b16 %v1105, %v1100
    %v1441 = vpack.c.b16 %v1106, %v1101
    %v1442 = vpack.c.b16 %v1107, %v1102
    %v1443 = vpack.c.b16 %v1108, %v1103
    %v1444 = vpack.c.b16 %v1114, %v1109
    %v1445 = vpack.c.b16 %v1115, %v1110
    %v1446 = vpack.c.b16 %v1116, %v1111
    %v1447 = vpack.c.b16 %v1117, %v1112
    %v1448 = vpack.c.b16 %v1118, %v1113
    %v1449 = vpack.c.b16 %v1124, %v1119
    %v1450 = vpack.c.b16 %v1125, %v1120
    %v1451 = vpack.c.b16 %v1126, %v1121
    %v1452 = vpack.c.b16 %v1127, %v1122
    %v1453 = vpack.c.b16 %v1128, %v1123
    %v1454 = vpack.c.b16 %v1134, %v1129
    %v1455 = vpack.c.b16 %v1135, %v1130
    %v1456 = vpack.c.b16 %v1136, %v1131
    %v1457 = vpack.c.b16 %v1137, %v1132
    %v1458 = vpack.c.b16 %v1138, %v1133
    %v1459 = vpack.c.b16 %v1144, %v1139
    %v1460 = vpack.c.b16 %v1145, %v1140
    %v1461 = vpack.c.b16 %v1146, %v1141
    %v1462 = vpack.c.b16 %v1147, %v1142
    %v1463 = vpack.c.b16 %v1148, %v1143
    %v1464 = vpack.c.b16 %v1154, %v1149
    %v1465 = vpack.c.b16 %v1155, %v1150
    %v1466 = vpack.c.b16 %v1156, %v1151
    %v1467 = vpack.c.b16 %v1157, %v1152
    %v1468 = vpack.c.b16 %v1158, %v1153
    %v1469 = vpack.c.b16 %v1164, %v1159
    %v1470 = vpack.c.b16 %v1165, %v1160
    %v1471 = vpack.c.b16 %v1166, %v1161
    %v1472 = vpack.c.b16 %v1167, %v1162
    %v1473 = vpack.c.b16 %v1168, %v1163
    %v1474 = vpack.c.b16 %v1174, %v1169
    %v1475 = vpack.c.b16 %v1175, %v1170
    %v1476 = vpack.c.b16 %v1176, %v1171
    %v1477 = vpack.c.b16 %v1177, %v1172
    %v1478 = vpack.c.b16 %v1178, %v1173
    %v1479 = vpack.c.b16 %v1184, %v1179
    %v1480 = vpack.c.b16 %v1185, %v1180
    %v1481 = vpack.c.b16 %v1186, %v1181
    %v1482 = vpack.c.b16 %v1187, %v1182
    %v1483 = vpack.c.b16 %v1188, %v1183
    %v1484 = vpack.c.b16 %v1194, %v1189
    %v1485 = vpack.c.b16 %v1195, %v1190
    %v1486 = vpack.c.b16 %v1196, %v1191
    %v1487 = vpack.c.b16 %v1197, %v1192
    %v1488 = vpack.c.b16 %v1198, %v1193
    %v1489 = vpack.c.b16 %v1204, %v1199
    %v1490 = vpack.c.b16 %v1205, %v1200
    %v1491 = vpack.c.b16 %v1206, %v1201
    %v1492 = vpack.c.b16 %v1207, %v1202
    %v1493 = vpack.c.b16 %v1208, %v1203
    %v1494 = vpack.c.b16 %v1214, %v1209
    %v1495 = vpack.c.b16 %v1215, %v1210
    %v1496 = vpack.c.b16 %v1216, %v1211
    %v1497 = vpack.c.b16 %v1217, %v1212
    %v1498 = vpack.c.b16 %v1218, %v1213
    %v1499 = vpack.c.b16 %v1224, %v1219
    %v1500 = vpack.c.b16 %v1225, %v1220
    %v1501 = vpack.c.b16 %v1226, %v1221
    %v1502 = vpack.c.b16 %v1227, %v1222
    %v1503 = vpack.c.b16 %v1228, %v1223
    %v1504 = vpack.c.b16 %v1234, %v1229
    %v1505 = vpack.c.b16 %v1235, %v1230
    %v1506 = vpack.c.b16 %v1236, %v1231
    %v1507 = vpack.c.b16 %v1237, %v1232
    %v1508 = vpack.c.b16 %v1238, %v1233
    %v1509 = vpack.c.b16 %v1244, %v1239
    %v1510 = vpack.c.b16 %v1245, %v1240
    %v1511 = vpack.c.b16 %v1246, %v1241
    %v1512 = vpack.c.b16 %v1247, %v1242
    %v1513 = vpack.c.b16 %v1248, %v1243
    %v1514 = vpack.c.b16 %v1254, %v1249
    %v1515 = vpack.c.b16 %v1255, %v1250
    %v1516 = vpack.c.b16 %v1256, %v1251
    %v1517 = vpack.c.b16 %v1257, %v1252
    %v1518 = vpack.c.b16 %v1258, %v1253
    %v1519 = vpack.c.b16 %v1264, %v1259
    %v1520 = vpack.c.b16 %v1265, %v1260
    %v1521 = vpack.c.b16 %v1266, %v1261
    %v1522 = vpack.c.b16 %v1267, %v1262
    %v1523 = vpack.c.b16 %v1268, %v1263
    %v1524 = vpack.c.b16 %v1274, %v1269
    %v1525 = vpack.c.b16 %v1275, %v1270
    %v1526 = vpack.c.b16 %v1276, %v1271
    %v1527 = vpack.c.b16 %v1277, %v1272
    %v1528 = vpack.c.b16 %v1278, %v1273
    %v1529 = vpack.c.b16 %v1284, %v1279
    %v1530 = vpack.c.b16 %v1285, %v1280
    %v1531 = vpack.c.b16 %v1286, %v1281
    %v1532 = vpack.c.b16 %v1287, %v1282
    %v1533 = vpack.c.b16 %v1288, %v1283
    %vm1779 = vcmask 130048
    %v1781 = vsel %vm1779, %v498, 0
    %1783 = vmatpush.bf16.msra.mxu0 %v1324
    %1784 = vmatpush.bf16.msra.mxu0 %v1319
    %1785 = vmatpush.bf16.msra.mxu0 %v1314
    %1786 = vmatpush.bf16.msra.mxu0 %v1309
    %1787 = vmatpush.bf16.msra.mxu0 %v1304
    %1788 = vmatpush.bf16.msra.mxu0 %v1299
    %1789 = vmatpush.bf16.msra.mxu0 %v1294
    %1790 = vmatpush.bf16.msra.mxu0 %v1289
    %1791 = vmatmul.bf16.gmra.mxu0 %v492
    %v1792 = vpop.f32.mrf.mxu0
    %v1793 = vadd.f32 %v460, %v1792
    %v1794 = vpop.f32.mrf.mxu0
    %v1795 = vadd.f32 %v460, %v1794
    %1796 = vdwg.mxu0
    %1797 = vmatpush.bf16.msra.mxu0 %v1364
    %1798 = vmatpush.bf16.msra.mxu0 %v1359
    %1799 = vmatpush.bf16.msra.mxu0 %v1354
    %1800 = vmatpush.bf16.msra.mxu0 %v1349
    %1801 = vmatpush.bf16.msra.mxu0 %v1344
    %1802 = vmatpush.bf16.msra.mxu0 %v1339
    %1803 = vmatpush.bf16.msra.mxu0 %v1334
    %1804 = vmatpush.bf16.msra.mxu0 %v1329
    %1805 = vmatmul.bf16.gmra.mxu0 %v493
    %v1806 = vpop.f32.mrf.mxu0
    %v1807 = vadd.f32 %v1793, %v1806
    %v1808 = vpop.f32.mrf.mxu0
    %v1809 = vadd.f32 %v1795, %v1808
    %1810 = vdwg.mxu0
    %1811 = vmatpush.bf16.msra.mxu0 %v1404
    %1812 = vmatpush.bf16.msra.mxu0 %v1399
    %1813 = vmatpush.bf16.msra.mxu0 %v1394
    %1814 = vmatpush.bf16.msra.mxu0 %v1389
    %1815 = vmatpush.bf16.msra.mxu0 %v1384
    %1816 = vmatpush.bf16.msra.mxu0 %v1379
    %1817 = vmatpush.bf16.msra.mxu0 %v1374
    %1818 = vmatpush.bf16.msra.mxu0 %v1369
    %1819 = vmatmul.bf16.gmra.mxu0 %v494
    %v1820 = vpop.f32.mrf.mxu0
    %v1821 = vadd.f32 %v1807, %v1820
    %v1822 = vpop.f32.mrf.mxu0
    %v1823 = vadd.f32 %v1809, %v1822
    %1824 = vdwg.mxu0
    %1825 = vmatpush.bf16.msra.mxu0 %v1444
    %1826 = vmatpush.bf16.msra.mxu0 %v1439
    %1827 = vmatpush.bf16.msra.mxu0 %v1434
    %1828 = vmatpush.bf16.msra.mxu0 %v1429
    %1829 = vmatpush.bf16.msra.mxu0 %v1424
    %1830 = vmatpush.bf16.msra.mxu0 %v1419
    %1831 = vmatpush.bf16.msra.mxu0 %v1414
    %1832 = vmatpush.bf16.msra.mxu0 %v1409
    %1833 = vmatmul.bf16.gmra.mxu0 %v495
    %v1834 = vpop.f32.mrf.mxu0
    %v1835 = vadd.f32 %v1821, %v1834
    %v1836 = vpop.f32.mrf.mxu0
    %v1837 = vadd.f32 %v1823, %v1836
    %1838 = vdwg.mxu0
    %1839 = vmatpush.bf16.msra.mxu0 %v1484
    %1840 = vmatpush.bf16.msra.mxu0 %v1479
    %1841 = vmatpush.bf16.msra.mxu0 %v1474
    %1842 = vmatpush.bf16.msra.mxu0 %v1469
    %1843 = vmatpush.bf16.msra.mxu0 %v1464
    %1844 = vmatpush.bf16.msra.mxu0 %v1459
    %1845 = vmatpush.bf16.msra.mxu0 %v1454
    %1846 = vmatpush.bf16.msra.mxu0 %v1449
    %1847 = vmatmul.bf16.gmra.mxu0 %v496
    %v1848 = vpop.f32.mrf.mxu0
    %v1849 = vadd.f32 %v1835, %v1848
    %v1850 = vpop.f32.mrf.mxu0
    %v1851 = vadd.f32 %v1837, %v1850
    %1852 = vdwg.mxu0
    %1853 = vmatpush.bf16.msra.mxu0 %v1524
    %1854 = vmatpush.bf16.msra.mxu0 %v1519
    %1855 = vmatpush.bf16.msra.mxu0 %v1514
    %1856 = vmatpush.bf16.msra.mxu0 %v1509
    %1857 = vmatpush.bf16.msra.mxu0 %v1504
    %1858 = vmatpush.bf16.msra.mxu0 %v1499
    %1859 = vmatpush.bf16.msra.mxu0 %v1494
    %1860 = vmatpush.bf16.msra.mxu0 %v1489
    %1861 = vmatmul.bf16.gmra.mxu0 %v497
    %v1862 = vpop.f32.mrf.mxu0
    %v1863 = vadd.f32 %v1849, %v1862
    %v1864 = vpop.f32.mrf.mxu0
    %v1865 = vadd.f32 %v1851, %v1864
    %1866 = vdwg.mxu0
    %1867 = vmatpush.bf16.msra.mxu0 0
    %1868 = vmatpush.bf16.msra.mxu0 0
    %1869 = vmatpush.bf16.msra.mxu0 0
    %1870 = vmatpush.bf16.msra.mxu0 0
    %1871 = vmatpush.bf16.msra.mxu0 0
    %1872 = vmatpush.bf16.msra.mxu0 0
    %1873 = vmatpush.bf16.msra.mxu0 0
    %1874 = vmatpush.bf16.msra.mxu0 %v1529
    %1875 = vmatmul.bf16.gmra.mxu0 %v1781
    %v1876 = vpop.f32.mrf.mxu0
    %v1877 = vadd.f32 %v1863, %v1876
    %v1878 = vpop.f32.mrf.mxu0
    %v1879 = vadd.f32 %v1865, %v1878
    %1880 = vdwg.mxu0
    %1881 = vmatpush.bf16.msra.mxu0 %v1325
    %1882 = vmatpush.bf16.msra.mxu0 %v1320
    %1883 = vmatpush.bf16.msra.mxu0 %v1315
    %1884 = vmatpush.bf16.msra.mxu0 %v1310
    %1885 = vmatpush.bf16.msra.mxu0 %v1305
    %1886 = vmatpush.bf16.msra.mxu0 %v1300
    %1887 = vmatpush.bf16.msra.mxu0 %v1295
    %1888 = vmatpush.bf16.msra.mxu0 %v1290
    %1889 = vmatmul.bf16.gmra.mxu0 %v492
    %v1890 = vpop.f32.mrf.mxu0
    %v1891 = vadd.f32 %v461, %v1890
    %v1892 = vpop.f32.mrf.mxu0
    %v1893 = vadd.f32 %v461, %v1892
    %1894 = vdwg.mxu0
    %1895 = vmatpush.bf16.msra.mxu0 %v1365
    %1896 = vmatpush.bf16.msra.mxu0 %v1360
    %1897 = vmatpush.bf16.msra.mxu0 %v1355
    %1898 = vmatpush.bf16.msra.mxu0 %v1350
    %1899 = vmatpush.bf16.msra.mxu0 %v1345
    %1900 = vmatpush.bf16.msra.mxu0 %v1340
    %1901 = vmatpush.bf16.msra.mxu0 %v1335
    %1902 = vmatpush.bf16.msra.mxu0 %v1330
    %1903 = vmatmul.bf16.gmra.mxu0 %v493
    %v1904 = vpop.f32.mrf.mxu0
    %v1905 = vadd.f32 %v1891, %v1904
    %v1906 = vpop.f32.mrf.mxu0
    %v1907 = vadd.f32 %v1893, %v1906
    %1908 = vdwg.mxu0
    %1909 = vmatpush.bf16.msra.mxu0 %v1405
    %1910 = vmatpush.bf16.msra.mxu0 %v1400
    %1911 = vmatpush.bf16.msra.mxu0 %v1395
    %1912 = vmatpush.bf16.msra.mxu0 %v1390
    %1913 = vmatpush.bf16.msra.mxu0 %v1385
    %1914 = vmatpush.bf16.msra.mxu0 %v1380
    %1915 = vmatpush.bf16.msra.mxu0 %v1375
    %1916 = vmatpush.bf16.msra.mxu0 %v1370
    %1917 = vmatmul.bf16.gmra.mxu0 %v494
    %v1918 = vpop.f32.mrf.mxu0
    %v1919 = vadd.f32 %v1905, %v1918
    %v1920 = vpop.f32.mrf.mxu0
    %v1921 = vadd.f32 %v1907, %v1920
    %1922 = vdwg.mxu0
    %1923 = vmatpush.bf16.msra.mxu0 %v1445
    %1924 = vmatpush.bf16.msra.mxu0 %v1440
    %1925 = vmatpush.bf16.msra.mxu0 %v1435
    %1926 = vmatpush.bf16.msra.mxu0 %v1430
    %1927 = vmatpush.bf16.msra.mxu0 %v1425
    %1928 = vmatpush.bf16.msra.mxu0 %v1420
    %1929 = vmatpush.bf16.msra.mxu0 %v1415
    %1930 = vmatpush.bf16.msra.mxu0 %v1410
    %1931 = vmatmul.bf16.gmra.mxu0 %v495
    %v1932 = vpop.f32.mrf.mxu0
    %v1933 = vadd.f32 %v1919, %v1932
    %v1934 = vpop.f32.mrf.mxu0
    %v1935 = vadd.f32 %v1921, %v1934
    %1936 = vdwg.mxu0
    %1937 = vmatpush.bf16.msra.mxu0 %v1485
    %1938 = vmatpush.bf16.msra.mxu0 %v1480
    %1939 = vmatpush.bf16.msra.mxu0 %v1475
    %1940 = vmatpush.bf16.msra.mxu0 %v1470
    %1941 = vmatpush.bf16.msra.mxu0 %v1465
    %1942 = vmatpush.bf16.msra.mxu0 %v1460
    %1943 = vmatpush.bf16.msra.mxu0 %v1455
    %1944 = vmatpush.bf16.msra.mxu0 %v1450
    %1945 = vmatmul.bf16.gmra.mxu0 %v496
    %v1946 = vpop.f32.mrf.mxu0
    %v1947 = vadd.f32 %v1933, %v1946
    %v1948 = vpop.f32.mrf.mxu0
    %v1949 = vadd.f32 %v1935, %v1948
    %1950 = vdwg.mxu0
    %1951 = vmatpush.bf16.msra.mxu0 %v1525
    %1952 = vmatpush.bf16.msra.mxu0 %v1520
    %1953 = vmatpush.bf16.msra.mxu0 %v1515
    %1954 = vmatpush.bf16.msra.mxu0 %v1510
    %1955 = vmatpush.bf16.msra.mxu0 %v1505
    %1956 = vmatpush.bf16.msra.mxu0 %v1500
    %1957 = vmatpush.bf16.msra.mxu0 %v1495
    %1958 = vmatpush.bf16.msra.mxu0 %v1490
    %1959 = vmatmul.bf16.gmra.mxu0 %v497
    %v1960 = vpop.f32.mrf.mxu0
    %v1961 = vadd.f32 %v1947, %v1960
    %v1962 = vpop.f32.mrf.mxu0
    %v1963 = vadd.f32 %v1949, %v1962
    %1964 = vdwg.mxu0
    %1965 = vmatpush.bf16.msra.mxu0 0
    %1966 = vmatpush.bf16.msra.mxu0 0
    %1967 = vmatpush.bf16.msra.mxu0 0
    %1968 = vmatpush.bf16.msra.mxu0 0
    %1969 = vmatpush.bf16.msra.mxu0 0
    %1970 = vmatpush.bf16.msra.mxu0 0
    %1971 = vmatpush.bf16.msra.mxu0 0
    %1972 = vmatpush.bf16.msra.mxu0 %v1530
    %1973 = vmatmul.bf16.gmra.mxu0 %v1781
    %v1974 = vpop.f32.mrf.mxu0
    %v1975 = vadd.f32 %v1961, %v1974
    %v1976 = vpop.f32.mrf.mxu0
    %v1977 = vadd.f32 %v1963, %v1976
    %1978 = vdwg.mxu0
    %1979 = vmatpush.bf16.msra.mxu0 %v1326
    %1980 = vmatpush.bf16.msra.mxu0 %v1321
    %1981 = vmatpush.bf16.msra.mxu0 %v1316
    %1982 = vmatpush.bf16.msra.mxu0 %v1311
    %1983 = vmatpush.bf16.msra.mxu0 %v1306
    %1984 = vmatpush.bf16.msra.mxu0 %v1301
    %1985 = vmatpush.bf16.msra.mxu0 %v1296
    %1986 = vmatpush.bf16.msra.mxu0 %v1291
    %1987 = vmatmul.bf16.gmra.mxu0 %v492
    %v1988 = vpop.f32.mrf.mxu0
    %v1989 = vadd.f32 %v462, %v1988
    %v1990 = vpop.f32.mrf.mxu0
    %v1991 = vadd.f32 %v462, %v1990
    %1992 = vdwg.mxu0
    %1993 = vmatpush.bf16.msra.mxu0 %v1366
    %1994 = vmatpush.bf16.msra.mxu0 %v1361
    %1995 = vmatpush.bf16.msra.mxu0 %v1356
    %1996 = vmatpush.bf16.msra.mxu0 %v1351
    %1997 = vmatpush.bf16.msra.mxu0 %v1346
    %1998 = vmatpush.bf16.msra.mxu0 %v1341
    %1999 = vmatpush.bf16.msra.mxu0 %v1336
    %2000 = vmatpush.bf16.msra.mxu0 %v1331
    %2001 = vmatmul.bf16.gmra.mxu0 %v493
    %v2002 = vpop.f32.mrf.mxu0
    %v2003 = vadd.f32 %v1989, %v2002
    %v2004 = vpop.f32.mrf.mxu0
    %v2005 = vadd.f32 %v1991, %v2004
    %2006 = vdwg.mxu0
    %2007 = vmatpush.bf16.msra.mxu0 %v1406
    %2008 = vmatpush.bf16.msra.mxu0 %v1401
    %2009 = vmatpush.bf16.msra.mxu0 %v1396
    %2010 = vmatpush.bf16.msra.mxu0 %v1391
    %2011 = vmatpush.bf16.msra.mxu0 %v1386
    %2012 = vmatpush.bf16.msra.mxu0 %v1381
    %2013 = vmatpush.bf16.msra.mxu0 %v1376
    %2014 = vmatpush.bf16.msra.mxu0 %v1371
    %2015 = vmatmul.bf16.gmra.mxu0 %v494
    %v2016 = vpop.f32.mrf.mxu0
    %v2017 = vadd.f32 %v2003, %v2016
    %v2018 = vpop.f32.mrf.mxu0
    %v2019 = vadd.f32 %v2005, %v2018
    %2020 = vdwg.mxu0
    %2021 = vmatpush.bf16.msra.mxu0 %v1446
    %2022 = vmatpush.bf16.msra.mxu0 %v1441
    %2023 = vmatpush.bf16.msra.mxu0 %v1436
    %2024 = vmatpush.bf16.msra.mxu0 %v1431
    %2025 = vmatpush.bf16.msra.mxu0 %v1426
    %2026 = vmatpush.bf16.msra.mxu0 %v1421
    %2027 = vmatpush.bf16.msra.mxu0 %v1416
    %2028 = vmatpush.bf16.msra.mxu0 %v1411
    %2029 = vmatmul.bf16.gmra.mxu0 %v495
    %v2030 = vpop.f32.mrf.mxu0
    %v2031 = vadd.f32 %v2017, %v2030
    %v2032 = vpop.f32.mrf.mxu0
    %v2033 = vadd.f32 %v2019, %v2032
    %2034 = vdwg.mxu0
    %2035 = vmatpush.bf16.msra.mxu0 %v1486
    %2036 = vmatpush.bf16.msra.mxu0 %v1481
    %2037 = vmatpush.bf16.msra.mxu0 %v1476
    %2038 = vmatpush.bf16.msra.mxu0 %v1471
    %2039 = vmatpush.bf16.msra.mxu0 %v1466
    %2040 = vmatpush.bf16.msra.mxu0 %v1461
    %2041 = vmatpush.bf16.msra.mxu0 %v1456
    %2042 = vmatpush.bf16.msra.mxu0 %v1451
    %2043 = vmatmul.bf16.gmra.mxu0 %v496
    %v2044 = vpop.f32.mrf.mxu0
    %v2045 = vadd.f32 %v2031, %v2044
    %v2046 = vpop.f32.mrf.mxu0
    %v2047 = vadd.f32 %v2033, %v2046
    %2048 = vdwg.mxu0
    %2049 = vmatpush.bf16.msra.mxu0 %v1526
    %2050 = vmatpush.bf16.msra.mxu0 %v1521
    %2051 = vmatpush.bf16.msra.mxu0 %v1516
    %2052 = vmatpush.bf16.msra.mxu0 %v1511
    %2053 = vmatpush.bf16.msra.mxu0 %v1506
    %2054 = vmatpush.bf16.msra.mxu0 %v1501
    %2055 = vmatpush.bf16.msra.mxu0 %v1496
    %2056 = vmatpush.bf16.msra.mxu0 %v1491
    %2057 = vmatmul.bf16.gmra.mxu0 %v497
    %v2058 = vpop.f32.mrf.mxu0
    %v2059 = vadd.f32 %v2045, %v2058
    %v2060 = vpop.f32.mrf.mxu0
    %v2061 = vadd.f32 %v2047, %v2060
    %2062 = vdwg.mxu0
    %2063 = vmatpush.bf16.msra.mxu0 0
    %2064 = vmatpush.bf16.msra.mxu0 0
    %2065 = vmatpush.bf16.msra.mxu0 0
    %2066 = vmatpush.bf16.msra.mxu0 0
    %2067 = vmatpush.bf16.msra.mxu0 0
    %2068 = vmatpush.bf16.msra.mxu0 0
    %2069 = vmatpush.bf16.msra.mxu0 0
    %2070 = vmatpush.bf16.msra.mxu0 %v1531
    %2071 = vmatmul.bf16.gmra.mxu0 %v1781
    %v2072 = vpop.f32.mrf.mxu0
    %v2073 = vadd.f32 %v2059, %v2072
    %v2074 = vpop.f32.mrf.mxu0
    %v2075 = vadd.f32 %v2061, %v2074
    %2076 = vdwg.mxu0
    %2077 = vmatpush.bf16.msra.mxu0 %v1327
    %2078 = vmatpush.bf16.msra.mxu0 %v1322
    %2079 = vmatpush.bf16.msra.mxu0 %v1317
    %2080 = vmatpush.bf16.msra.mxu0 %v1312
    %2081 = vmatpush.bf16.msra.mxu0 %v1307
    %2082 = vmatpush.bf16.msra.mxu0 %v1302
    %2083 = vmatpush.bf16.msra.mxu0 %v1297
    %2084 = vmatpush.bf16.msra.mxu0 %v1292
    %2085 = vmatmul.bf16.gmra.mxu0 %v492
    %v2086 = vpop.f32.mrf.mxu0
    %v2087 = vadd.f32 %v463, %v2086
    %v2088 = vpop.f32.mrf.mxu0
    %v2089 = vadd.f32 %v463, %v2088
    %2090 = vdwg.mxu0
    %2091 = vmatpush.bf16.msra.mxu0 %v1367
    %2092 = vmatpush.bf16.msra.mxu0 %v1362
    %2093 = vmatpush.bf16.msra.mxu0 %v1357
    %2094 = vmatpush.bf16.msra.mxu0 %v1352
    %2095 = vmatpush.bf16.msra.mxu0 %v1347
    %2096 = vmatpush.bf16.msra.mxu0 %v1342
    %2097 = vmatpush.bf16.msra.mxu0 %v1337
    %2098 = vmatpush.bf16.msra.mxu0 %v1332
    %2099 = vmatmul.bf16.gmra.mxu0 %v493
    %v2100 = vpop.f32.mrf.mxu0
    %v2101 = vadd.f32 %v2087, %v2100
    %v2102 = vpop.f32.mrf.mxu0
    %v2103 = vadd.f32 %v2089, %v2102
    %2104 = vdwg.mxu0
    %2105 = vmatpush.bf16.msra.mxu0 %v1407
    %2106 = vmatpush.bf16.msra.mxu0 %v1402
    %2107 = vmatpush.bf16.msra.mxu0 %v1397
    %2108 = vmatpush.bf16.msra.mxu0 %v1392
    %2109 = vmatpush.bf16.msra.mxu0 %v1387
    %2110 = vmatpush.bf16.msra.mxu0 %v1382
    %2111 = vmatpush.bf16.msra.mxu0 %v1377
    %2112 = vmatpush.bf16.msra.mxu0 %v1372
    %2113 = vmatmul.bf16.gmra.mxu0 %v494
    %v2114 = vpop.f32.mrf.mxu0
    %v2115 = vadd.f32 %v2101, %v2114
    %v2116 = vpop.f32.mrf.mxu0
    %v2117 = vadd.f32 %v2103, %v2116
    %2118 = vdwg.mxu0
    %2119 = vmatpush.bf16.msra.mxu0 %v1447
    %2120 = vmatpush.bf16.msra.mxu0 %v1442
    %2121 = vmatpush.bf16.msra.mxu0 %v1437
    %2122 = vmatpush.bf16.msra.mxu0 %v1432
    %2123 = vmatpush.bf16.msra.mxu0 %v1427
    %2124 = vmatpush.bf16.msra.mxu0 %v1422
    %2125 = vmatpush.bf16.msra.mxu0 %v1417
    %2126 = vmatpush.bf16.msra.mxu0 %v1412
    %2127 = vmatmul.bf16.gmra.mxu0 %v495
    %v2128 = vpop.f32.mrf.mxu0
    %v2129 = vadd.f32 %v2115, %v2128
    %v2130 = vpop.f32.mrf.mxu0
    %v2131 = vadd.f32 %v2117, %v2130
    %2132 = vdwg.mxu0
    %2133 = vmatpush.bf16.msra.mxu0 %v1487
    %2134 = vmatpush.bf16.msra.mxu0 %v1482
    %2135 = vmatpush.bf16.msra.mxu0 %v1477
    %2136 = vmatpush.bf16.msra.mxu0 %v1472
    %2137 = vmatpush.bf16.msra.mxu0 %v1467
    %2138 = vmatpush.bf16.msra.mxu0 %v1462
    %2139 = vmatpush.bf16.msra.mxu0 %v1457
    %2140 = vmatpush.bf16.msra.mxu0 %v1452
    %2141 = vmatmul.bf16.gmra.mxu0 %v496
    %v2142 = vpop.f32.mrf.mxu0
    %v2143 = vadd.f32 %v2129, %v2142
    %v2144 = vpop.f32.mrf.mxu0
    %v2145 = vadd.f32 %v2131, %v2144
    %2146 = vdwg.mxu0
    %2147 = vmatpush.bf16.msra.mxu0 %v1527
    %2148 = vmatpush.bf16.msra.mxu0 %v1522
    %2149 = vmatpush.bf16.msra.mxu0 %v1517
    %2150 = vmatpush.bf16.msra.mxu0 %v1512
    %2151 = vmatpush.bf16.msra.mxu0 %v1507
    %2152 = vmatpush.bf16.msra.mxu0 %v1502
    %2153 = vmatpush.bf16.msra.mxu0 %v1497
    %2154 = vmatpush.bf16.msra.mxu0 %v1492
    %2155 = vmatmul.bf16.gmra.mxu0 %v497
    %v2156 = vpop.f32.mrf.mxu0
    %v2157 = vadd.f32 %v2143, %v2156
    %v2158 = vpop.f32.mrf.mxu0
    %v2159 = vadd.f32 %v2145, %v2158
    %2160 = vdwg.mxu0
    %2161 = vmatpush.bf16.msra.mxu0 0
    %2162 = vmatpush.bf16.msra.mxu0 0
    %2163 = vmatpush.bf16.msra.mxu0 0
    %2164 = vmatpush.bf16.msra.mxu0 0
    %2165 = vmatpush.bf16.msra.mxu0 0
    %2166 = vmatpush.bf16.msra.mxu0 0
    %2167 = vmatpush.bf16.msra.mxu0 0
    %2168 = vmatpush.bf16.msra.mxu0 %v1532
    %2169 = vmatmul.bf16.gmra.mxu0 %v1781
    %v2170 = vpop.f32.mrf.mxu0
    %v2171 = vadd.f32 %v2157, %v2170
    %v2172 = vpop.f32.mrf.mxu0
    %v2173 = vadd.f32 %v2159, %v2172
    %2174 = vdwg.mxu0
    %2175 = vmatpush.bf16.msra.mxu0 %v1328
    %2176 = vmatpush.bf16.msra.mxu0 %v1323
    %2177 = vmatpush.bf16.msra.mxu0 %v1318
    %2178 = vmatpush.bf16.msra.mxu0 %v1313
    %2179 = vmatpush.bf16.msra.mxu0 %v1308
    %2180 = vmatpush.bf16.msra.mxu0 %v1303
    %2181 = vmatpush.bf16.msra.mxu0 %v1298
    %2182 = vmatpush.bf16.msra.mxu0 %v1293
    %2183 = vmatmul.bf16.gmra.mxu0 %v492
    %v2184 = vpop.f32.mrf.mxu0
    %v2185 = vadd.f32 %v464, %v2184
    %v2186 = vpop.f32.mrf.mxu0
    %v2187 = vadd.f32 %v464, %v2186
    %2188 = vdwg.mxu0
    %2189 = vmatpush.bf16.msra.mxu0 %v1368
    %2190 = vmatpush.bf16.msra.mxu0 %v1363
    %2191 = vmatpush.bf16.msra.mxu0 %v1358
    %2192 = vmatpush.bf16.msra.mxu0 %v1353
    %2193 = vmatpush.bf16.msra.mxu0 %v1348
    %2194 = vmatpush.bf16.msra.mxu0 %v1343
    %2195 = vmatpush.bf16.msra.mxu0 %v1338
    %2196 = vmatpush.bf16.msra.mxu0 %v1333
    %2197 = vmatmul.bf16.gmra.mxu0 %v493
    %v2198 = vpop.f32.mrf.mxu0
    %v2199 = vadd.f32 %v2185, %v2198
    %v2200 = vpop.f32.mrf.mxu0
    %v2201 = vadd.f32 %v2187, %v2200
    %2202 = vdwg.mxu0
    %2203 = vmatpush.bf16.msra.mxu0 %v1408
    %2204 = vmatpush.bf16.msra.mxu0 %v1403
    %2205 = vmatpush.bf16.msra.mxu0 %v1398
    %2206 = vmatpush.bf16.msra.mxu0 %v1393
    %2207 = vmatpush.bf16.msra.mxu0 %v1388
    %2208 = vmatpush.bf16.msra.mxu0 %v1383
    %2209 = vmatpush.bf16.msra.mxu0 %v1378
    %2210 = vmatpush.bf16.msra.mxu0 %v1373
    %2211 = vmatmul.bf16.gmra.mxu0 %v494
    %v2212 = vpop.f32.mrf.mxu0
    %v2213 = vadd.f32 %v2199, %v2212
    %v2214 = vpop.f32.mrf.mxu0
    %v2215 = vadd.f32 %v2201, %v2214
    %2216 = vdwg.mxu0
    %2217 = vmatpush.bf16.msra.mxu0 %v1448
    %2218 = vmatpush.bf16.msra.mxu0 %v1443
    %2219 = vmatpush.bf16.msra.mxu0 %v1438
    %2220 = vmatpush.bf16.msra.mxu0 %v1433
    %2221 = vmatpush.bf16.msra.mxu0 %v1428
    %2222 = vmatpush.bf16.msra.mxu0 %v1423
    %2223 = vmatpush.bf16.msra.mxu0 %v1418
    %2224 = vmatpush.bf16.msra.mxu0 %v1413
    %2225 = vmatmul.bf16.gmra.mxu0 %v495
    %v2226 = vpop.f32.mrf.mxu0
    %v2227 = vadd.f32 %v2213, %v2226
    %v2228 = vpop.f32.mrf.mxu0
    %v2229 = vadd.f32 %v2215, %v2228
    %2230 = vdwg.mxu0
    %2231 = vmatpush.bf16.msra.mxu0 %v1488
    %2232 = vmatpush.bf16.msra.mxu0 %v1483
    %2233 = vmatpush.bf16.msra.mxu0 %v1478
    %2234 = vmatpush.bf16.msra.mxu0 %v1473
    %2235 = vmatpush.bf16.msra.mxu0 %v1468
    %2236 = vmatpush.bf16.msra.mxu0 %v1463
    %2237 = vmatpush.bf16.msra.mxu0 %v1458
    %2238 = vmatpush.bf16.msra.mxu0 %v1453
    %2239 = vmatmul.bf16.gmra.mxu0 %v496
    %v2240 = vpop.f32.mrf.mxu0
    %v2241 = vadd.f32 %v2227, %v2240
    %v2242 = vpop.f32.mrf.mxu0
    %v2243 = vadd.f32 %v2229, %v2242
    %2244 = vdwg.mxu0
    %2245 = vmatpush.bf16.msra.mxu0 %v1528
    %2246 = vmatpush.bf16.msra.mxu0 %v1523
    %2247 = vmatpush.bf16.msra.mxu0 %v1518
    %2248 = vmatpush.bf16.msra.mxu0 %v1513
    %2249 = vmatpush.bf16.msra.mxu0 %v1508
    %2250 = vmatpush.bf16.msra.mxu0 %v1503
    %2251 = vmatpush.bf16.msra.mxu0 %v1498
    %2252 = vmatpush.bf16.msra.mxu0 %v1493
    %2253 = vmatmul.bf16.gmra.mxu0 %v497
    %v2254 = vpop.f32.mrf.mxu0
    %v2255 = vadd.f32 %v2241, %v2254
    %v2256 = vpop.f32.mrf.mxu0
    %v2257 = vadd.f32 %v2243, %v2256
    %2258 = vdwg.mxu0
    %2259 = vmatpush.bf16.msra.mxu0 0
    %2260 = vmatpush.bf16.msra.mxu0 0
    %2261 = vmatpush.bf16.msra.mxu0 0
    %2262 = vmatpush.bf16.msra.mxu0 0
    %2263 = vmatpush.bf16.msra.mxu0 0
    %2264 = vmatpush.bf16.msra.mxu0 0
    %2265 = vmatpush.bf16.msra.mxu0 0
    %2266 = vmatpush.bf16.msra.mxu0 %v1533
    %2267 = vmatmul.bf16.gmra.mxu0 %v1781
    %v2268 = vpop.f32.mrf.mxu0
    %v2269 = vadd.f32 %v2255, %v2268
    %v2270 = vpop.f32.mrf.mxu0
    %v2271 = vadd.f32 %v2257, %v2270
    %2272 = vdwg.mxu0
    %v2273 = vmul.f32 %v1877, 0.2
    %v2274 = vmul.f32 %v1975, 0.2
    %v2275 = vmul.f32 %v2073, 0.2
    %v2276 = vmul.f32 %v2171, 0.2
    %v2277 = vmul.f32 %v2269, 0.2
    %v2278 = vmul.f32 %v1879, 0.2
    %v2279 = vmul.f32 %v1977, 0.2
    %v2280 = vmul.f32 %v2075, 0.2
    %v2281 = vmul.f32 %v2173, 0.2
    %v2282 = vmul.f32 %v2271, 0.2
    %v2283 = vmax.f32 %v1877, %v2273
    %v2284 = vmax.f32 %v1975, %v2274
    %v2285 = vmax.f32 %v2073, %v2275
    %v2286 = vmax.f32 %v2171, %v2276
    %v2287 = vmax.f32 %v2269, %v2277
    %v2288 = vmax.f32 %v1879, %v2278
    %v2289 = vmax.f32 %v1977, %v2279
    %v2290 = vmax.f32 %v2075, %v2280
    %v2291 = vmax.f32 %v2173, %v2281
    %v2292 = vmax.f32 %v2271, %v2282
    %v2293 = vpack.c.bf16 %v2288, %v2283
    %v2294 = vpack.c.bf16 %v2289, %v2284
    %v2295 = vpack.c.bf16 %v2290, %v2285
    %v2296 = vpack.c.bf16 %v2291, %v2286
    %v2297 = vpack.c.bf16 %v2292, %v2287
    %v2298 = vld [vmem:[#allocation7] sm:$0xff]
    %v2299 = vld [vmem:[#allocation7 + $0x8] sm:$0xff]
    %v2300 = vld [vmem:[#allocation7 + $0x10] sm:$0xf]
    %v2301 = vld [vmem:[#allocation7 + $0x14] sm:$0xff]
    %v2302 = vld [vmem:[#allocation7 + $0x1c] sm:$0xff]
    %v2303 = vld [vmem:[#allocation7 + $0x24] sm:$0xf]
    %v2304 = vld [vmem:[#allocation7 + $0x28] sm:$0xff]
    %v2305 = vld [vmem:[#allocation7 + $0x30] sm:$0xff]
    %v2306 = vld [vmem:[#allocation7 + $0x38] sm:$0xf]
    %v2307 = vld [vmem:[#allocation7 + $0x3c] sm:$0xff]
    %v2308 = vld [vmem:[#allocation7 + $0x44] sm:$0xff]
    %v2309 = vld [vmem:[#allocation7 + $0x4c] sm:$0xf]
    %v2310 = vld [vmem:[#allocation7 + $0x50] sm:$0xff]
    %v2311 = vld [vmem:[#allocation7 + $0x58] sm:$0xff]
    %v2312 = vld [vmem:[#allocation7 + $0x60] sm:$0xf]
    %v2313 = vld [vmem:[#allocation7 + $0x64] sm:$0xff]
    %v2314 = vld [vmem:[#allocation7 + $0x6c] sm:$0xff]
    %v2315 = vld [vmem:[#allocation7 + $0x74] sm:$0xf]
    %v2316 = vld [vmem:[#allocation7 + $0x78] sm:$0xff]
    %v2317 = vld [vmem:[#allocation7 + $0x80] sm:$0xff]
    %v2318 = vld [vmem:[#allocation7 + $0x88] sm:$0xf]
    %v2319 = vld [vmem:[#allocation7 + $0x8c] sm:$0xff]
    %v2320 = vld [vmem:[#allocation7 + $0x94] sm:$0xff]
    %v2321 = vld [vmem:[#allocation7 + $0x9c] sm:$0xf]
    %v2322 = vld [vmem:[#allocation7 + $0xa0] sm:$0xff]
    %v2323 = vld [vmem:[#allocation7 + $0xa8] sm:$0xff]
    %v2324 = vld [vmem:[#allocation7 + $0xb0] sm:$0xf]
    %v2325 = vld [vmem:[#allocation7 + $0xb4] sm:$0xff]
    %v2326 = vld [vmem:[#allocation7 + $0xbc] sm:$0xff]
    %v2327 = vld [vmem:[#allocation7 + $0xc4] sm:$0xf]
    %v2328 = vld [vmem:[#allocation7 + $0xc8] sm:$0xff]
    %v2329 = vld [vmem:[#allocation7 + $0xd0] sm:$0xff]
    %v2330 = vld [vmem:[#allocation7 + $0xd8] sm:$0xf]
    %v2331 = vld [vmem:[#allocation7 + $0xdc] sm:$0xff]
    %v2332 = vld [vmem:[#allocation7 + $0xe4] sm:$0xff]
    %v2333 = vld [vmem:[#allocation7 + $0xec] sm:$0xf]
    %v2334 = vld [vmem:[#allocation7 + $0xf0] sm:$0xff]
    %v2335 = vld [vmem:[#allocation7 + $0xf8] sm:$0xff]
    %v2336 = vld [vmem:[#allocation7 + $0x100] sm:$0xf]
    %v2337 = vld [vmem:[#allocation7 + $0x104] sm:$0xff]
    %v2338 = vld [vmem:[#allocation7 + $0x10c] sm:$0xff]
    %v2339 = vld [vmem:[#allocation7 + $0x114] sm:$0xf]
    %v2340 = vld [vmem:[#allocation7 + $0x118] sm:$0xff]
    %v2341 = vld [vmem:[#allocation7 + $0x120] sm:$0xff]
    %v2342 = vld [vmem:[#allocation7 + $0x128] sm:$0xf]
    %v2343 = vld [vmem:[#allocation7 + $0x12c] sm:$0xff]
    %v2344 = vld [vmem:[#allocation7 + $0x134] sm:$0xff]
    %v2345 = vld [vmem:[#allocation7 + $0x13c] sm:$0xf]
    %v2346 = vld [vmem:[#allocation7 + $0x140] sm:$0xff]
    %v2347 = vld [vmem:[#allocation7 + $0x148] sm:$0xff]
    %v2348 = vld [vmem:[#allocation7 + $0x150] sm:$0xf]
    %v2349 = vld [vmem:[#allocation7 + $0x154] sm:$0xff]
    %v2350 = vld [vmem:[#allocation7 + $0x15c] sm:$0xff]
    %v2351 = vld [vmem:[#allocation7 + $0x164] sm:$0xf]
    %v2352 = vld [vmem:[#allocation7 + $0x168] sm:$0xff]
    %v2353 = vld [vmem:[#allocation7 + $0x170] sm:$0xff]
    %v2354 = vld [vmem:[#allocation7 + $0x178] sm:$0xf]
    %v2355 = vld [vmem:[#allocation7 + $0x17c] sm:$0xff]
    %v2356 = vld [vmem:[#allocation7 + $0x184] sm:$0xff]
    %v2357 = vld [vmem:[#allocation7 + $0x18c] sm:$0xf]
    %v2358 = vld [vmem:[#allocation7 + $0x190] sm:$0xff]
    %v2359 = vld [vmem:[#allocation7 + $0x198] sm:$0xff]
    %v2360 = vld [vmem:[#allocation7 + $0x1a0] sm:$0xf]
    %v2361 = vld [vmem:[#allocation7 + $0x1a4] sm:$0xff]
    %v2362 = vld [vmem:[#allocation7 + $0x1ac] sm:$0xff]
    %v2363 = vld [vmem:[#allocation7 + $0x1b4] sm:$0xf]
    %v2364 = vld [vmem:[#allocation7 + $0x1b8] sm:$0xff]
    %v2365 = vld [vmem:[#allocation7 + $0x1c0] sm:$0xff]
    %v2366 = vld [vmem:[#allocation7 + $0x1c8] sm:$0xf]
    %v2367 = vld [vmem:[#allocation7 + $0x1cc] sm:$0xff]
    %v2368 = vld [vmem:[#allocation7 + $0x1d4] sm:$0xff]
    %v2369 = vld [vmem:[#allocation7 + $0x1dc] sm:$0xf]
    %v2370 = vld [vmem:[#allocation7 + $0x1e0] sm:$0xff]
    %v2371 = vld [vmem:[#allocation7 + $0x1e8] sm:$0xff]
    %v2372 = vld [vmem:[#allocation7 + $0x1f0] sm:$0xf]
    %v2373 = vld [vmem:[#allocation7 + $0x1f4] sm:$0xff]
    %v2374 = vld [vmem:[#allocation7 + $0x1fc] sm:$0xff]
    %v2375 = vld [vmem:[#allocation7 + $0x204] sm:$0xf]
    %v2376 = vld [vmem:[#allocation7 + $0x208] sm:$0xff]
    %v2377 = vld [vmem:[#allocation7 + $0x210] sm:$0xff]
    %v2378 = vld [vmem:[#allocation7 + $0x218] sm:$0xf]
    %v2379 = vld [vmem:[#allocation7 + $0x21c] sm:$0xff]
    %v2380 = vld [vmem:[#allocation7 + $0x224] sm:$0xff]
    %v2381 = vld [vmem:[#allocation7 + $0x22c] sm:$0xf]
    %v2382 = vld [vmem:[#allocation7 + $0x230] sm:$0xff]
    %v2383 = vld [vmem:[#allocation7 + $0x238] sm:$0xff]
    %v2384 = vld [vmem:[#allocation7 + $0x240] sm:$0xf]
    %v2385 = vld [vmem:[#allocation7 + $0x244] sm:$0xff]
    %v2386 = vld [vmem:[#allocation7 + $0x24c] sm:$0xff]
    %v2387 = vld [vmem:[#allocation7 + $0x254] sm:$0xf]
    %v2388 = vld [vmem:[#allocation7 + $0x258] sm:$0xff]
    %v2389 = vld [vmem:[#allocation7 + $0x260] sm:$0xff]
    %v2390 = vld [vmem:[#allocation7 + $0x268] sm:$0xf]
    %v2391 = vld [vmem:[#allocation7 + $0x26c] sm:$0xff]
    %v2392 = vld [vmem:[#allocation7 + $0x274] sm:$0xff]
    %v2393 = vld [vmem:[#allocation7 + $0x27c] sm:$0xf]
    %v2394 = vld [vmem:[#allocation7 + $0x280] sm:$0xff]
    %v2395 = vld [vmem:[#allocation7 + $0x288] sm:$0xff]
    %v2396 = vld [vmem:[#allocation7 + $0x290] sm:$0xf]
    %v2397 = vld [vmem:[#allocation7 + $0x294] sm:$0xff]
    %v2398 = vld [vmem:[#allocation7 + $0x29c] sm:$0xff]
    %v2399 = vld [vmem:[#allocation7 + $0x2a4] sm:$0xf]
    %v2400 = vld [vmem:[#allocation7 + $0x2a8] sm:$0xff]
    %v2401 = vld [vmem:[#allocation7 + $0x2b0] sm:$0xff]
    %v2402 = vld [vmem:[#allocation7 + $0x2b8] sm:$0xf]
    %v2403 = vld [vmem:[#allocation7 + $0x2bc] sm:$0xff]
    %v2404 = vld [vmem:[#allocation7 + $0x2c4] sm:$0xff]
    %v2405 = vld [vmem:[#allocation7 + $0x2cc] sm:$0xf]
    %v2406 = vld [vmem:[#allocation7 + $0x2d0] sm:$0xff]
    %v2407 = vld [vmem:[#allocation7 + $0x2d8] sm:$0xff]
    %v2408 = vld [vmem:[#allocation7 + $0x2e0] sm:$0xf]
    %v2409 = vld [vmem:[#allocation7 + $0x2e4] sm:$0xff]
    %v2410 = vld [vmem:[#allocation7 + $0x2ec] sm:$0xff]
    %v2411 = vld [vmem:[#allocation7 + $0x2f4] sm:$0xf]
    %v2412 = vld [vmem:[#allocation7 + $0x2f8] sm:$0xff]
    %v2413 = vld [vmem:[#allocation7 + $0x300] sm:$0xff]
    %v2414 = vld [vmem:[#allocation7 + $0x308] sm:$0xf]
    %v2415 = vld [vmem:[#allocation7 + $0x30c] sm:$0xff]
    %v2416 = vld [vmem:[#allocation7 + $0x314] sm:$0xff]
    %v2417 = vld [vmem:[#allocation7 + $0x31c] sm:$0xf]
    %v2418 = vld [vmem:[#allocation7 + $0x320] sm:$0xff]
    %v2419 = vld [vmem:[#allocation7 + $0x328] sm:$0xff]
    %v2420 = vld [vmem:[#allocation7 + $0x330] sm:$0xf]
    %v2421 = vld [vmem:[#allocation7 + $0x334] sm:$0xff]
    %v2422 = vld [vmem:[#allocation7 + $0x33c] sm:$0xff]
    %v2423 = vld [vmem:[#allocation7 + $0x344] sm:$0xf]
    %v2424 = vld [vmem:[#allocation7 + $0x348] sm:$0xff]
    %v2425 = vld [vmem:[#allocation7 + $0x350] sm:$0xff]
    %v2426 = vld [vmem:[#allocation7 + $0x358] sm:$0xf]
    %v2427 = vld [vmem:[#allocation7 + $0x35c] sm:$0xff]
    %v2428 = vld [vmem:[#allocation7 + $0x364] sm:$0xff]
    %v2429 = vld [vmem:[#allocation7 + $0x36c] sm:$0xf]
    %v2430 = vld [vmem:[#allocation7 + $0x370] sm:$0xff]
    %v2431 = vld [vmem:[#allocation7 + $0x378] sm:$0xff]
    %v2432 = vld [vmem:[#allocation7 + $0x380] sm:$0xf]
    %v2433 = vld [vmem:[#allocation7 + $0x384] sm:$0xff]
    %v2434 = vld [vmem:[#allocation7 + $0x38c] sm:$0xff]
    %v2435 = vld [vmem:[#allocation7 + $0x394] sm:$0xf]
    %v2436 = vld [vmem:[#allocation7 + $0x398] sm:$0xff]
    %v2437 = vld [vmem:[#allocation7 + $0x3a0] sm:$0xff]
    %v2438 = vld [vmem:[#allocation7 + $0x3a8] sm:$0xf]
    %v2439 = vld [vmem:[#allocation7 + $0x3ac] sm:$0xff]
    %v2440 = vld [vmem:[#allocation7 + $0x3b4] sm:$0xff]
    %v2441 = vld [vmem:[#allocation7 + $0x3bc] sm:$0xf]
    %v2442 = vld [vmem:[#allocation7 + $0x3c0] sm:$0xff]
    %v2443 = vld [vmem:[#allocation7 + $0x3c8] sm:$0xff]
    %v2444 = vld [vmem:[#allocation7 + $0x3d0] sm:$0xf]
    %v2445 = vld [vmem:[#allocation7 + $0x3d4] sm:$0xff]
    %v2446 = vld [vmem:[#allocation7 + $0x3dc] sm:$0xff]
    %v2447 = vld [vmem:[#allocation7 + $0x3e4] sm:$0xf]
    %v2448 = vld [vmem:[#allocation7 + $0x3e8] sm:$0xff]
    %v2449 = vld [vmem:[#allocation7 + $0x3f0] sm:$0xff]
    %v2450 = vld [vmem:[#allocation7 + $0x3f8] sm:$0xf]
    %v2451 = vld [vmem:[#allocation7 + $0x3fc] sm:$0xff]
    %v2452 = vld [vmem:[#allocation7 + $0x404] sm:$0xff]
    %v2453 = vld [vmem:[#allocation7 + $0x40c] sm:$0xf]
    %v2454 = vld [vmem:[#allocation7 + $0x410] sm:$0xff]
    %v2455 = vld [vmem:[#allocation7 + $0x418] sm:$0xff]
    %v2456 = vld [vmem:[#allocation7 + $0x420] sm:$0xf]
    %v2457 = vld [vmem:[#allocation7 + $0x424] sm:$0xff]
    %v2458 = vld [vmem:[#allocation7 + $0x42c] sm:$0xff]
    %v2459 = vld [vmem:[#allocation7 + $0x434] sm:$0xf]
    %v2460 = vld [vmem:[#allocation7 + $0x438] sm:$0xff]
    %v2461 = vld [vmem:[#allocation7 + $0x440] sm:$0xff]
    %v2462 = vld [vmem:[#allocation7 + $0x448] sm:$0xf]
    %v2463 = vld [vmem:[#allocation7 + $0x44c] sm:$0xff]
    %v2464 = vld [vmem:[#allocation7 + $0x454] sm:$0xff]
    %v2465 = vld [vmem:[#allocation7 + $0x45c] sm:$0xf]
    %v2466 = vld [vmem:[#allocation7 + $0x460] sm:$0xff]
    %v2467 = vld [vmem:[#allocation7 + $0x468] sm:$0xff]
    %v2468 = vld [vmem:[#allocation7 + $0x470] sm:$0xf]
    %v2469 = vld [vmem:[#allocation7 + $0x474] sm:$0xff]
    %v2470 = vld [vmem:[#allocation7 + $0x47c] sm:$0xff]
    %v2471 = vld [vmem:[#allocation7 + $0x484] sm:$0xf]
    %v2472 = vld [vmem:[#allocation7 + $0x488] sm:$0xff]
    %v2473 = vld [vmem:[#allocation7 + $0x490] sm:$0xff]
    %v2474 = vld [vmem:[#allocation7 + $0x498] sm:$0xf]
    %v2475 = vld [vmem:[#allocation7 + $0x49c] sm:$0xff]
    %v2476 = vld [vmem:[#allocation7 + $0x4a4] sm:$0xff]
    %v2477 = vld [vmem:[#allocation7 + $0x4ac] sm:$0xf]
    %v2478 = vld [vmem:[#allocation7 + $0x4b0] sm:$0xff]
    %v2479 = vld [vmem:[#allocation7 + $0x4b8] sm:$0xff]
    %v2480 = vld [vmem:[#allocation7 + $0x4c0] sm:$0xf]
    %v2481 = vld [vmem:[#allocation7 + $0x4c4] sm:$0xff]
    %v2482 = vld [vmem:[#allocation7 + $0x4cc] sm:$0xff]
    %v2483 = vld [vmem:[#allocation7 + $0x4d4] sm:$0xf]
    %v2484 = vld [vmem:[#allocation7 + $0x4d8] sm:$0xff]
    %v2485 = vld [vmem:[#allocation7 + $0x4e0] sm:$0xff]
    %v2486 = vld [vmem:[#allocation7 + $0x4e8] sm:$0xf]
    %v2487 = vld [vmem:[#allocation7 + $0x4ec] sm:$0xff]
    %v2488 = vld [vmem:[#allocation7 + $0x4f4] sm:$0xff]
    %v2489 = vld [vmem:[#allocation7 + $0x4fc] sm:$0xf]
    %v2490 = vld [vmem:[#allocation7 + $0x500] sm:$0xff]
    %v2491 = vld [vmem:[#allocation7 + $0x508] sm:$0xff]
    %v2492 = vld [vmem:[#allocation7 + $0x510] sm:$0xf]
    %v2493 = vld [vmem:[#allocation7 + $0x514] sm:$0xff]
    %v2494 = vld [vmem:[#allocation7 + $0x51c] sm:$0xff]
    %v2495 = vld [vmem:[#allocation7 + $0x524] sm:$0xf]
    %v2496 = vld [vmem:[#allocation7 + $0x528] sm:$0xff]
    %v2497 = vld [vmem:[#allocation7 + $0x530] sm:$0xff]
    %v2498 = vld [vmem:[#allocation7 + $0x538] sm:$0xf]
    %v2499 = vld [vmem:[#allocation7 + $0x53c] sm:$0xff]
    %v2500 = vld [vmem:[#allocation7 + $0x544] sm:$0xff]
    %v2501 = vld [vmem:[#allocation7 + $0x54c] sm:$0xf]
    %v2502 = vld [vmem:[#allocation7 + $0x550] sm:$0xff]
    %v2503 = vld [vmem:[#allocation7 + $0x558] sm:$0xff]
    %v2504 = vld [vmem:[#allocation7 + $0x560] sm:$0xf]
    %v2505 = vld [vmem:[#allocation7 + $0x564] sm:$0xff]
    %v2506 = vld [vmem:[#allocation7 + $0x56c] sm:$0xff]
    %v2507 = vld [vmem:[#allocation7 + $0x574] sm:$0xf]
    %v2508 = vld [vmem:[#allocation7 + $0x578] sm:$0xff]
    %v2509 = vld [vmem:[#allocation7 + $0x580] sm:$0xff]
    %v2510 = vld [vmem:[#allocation7 + $0x588] sm:$0xf]
    %v2511 = vld [vmem:[#allocation7 + $0x58c] sm:$0xff]
    %v2512 = vld [vmem:[#allocation7 + $0x594] sm:$0xff]
    %v2513 = vld [vmem:[#allocation7 + $0x59c] sm:$0xf]
    %v2514 = vld [vmem:[#allocation7 + $0x5a0] sm:$0xff]
    %v2515 = vld [vmem:[#allocation7 + $0x5a8] sm:$0xff]
    %v2516 = vld [vmem:[#allocation7 + $0x5b0] sm:$0xf]
    %v2517 = vld [vmem:[#allocation7 + $0x5b4] sm:$0xff]
    %v2518 = vld [vmem:[#allocation7 + $0x5bc] sm:$0xff]
    %v2519 = vld [vmem:[#allocation7 + $0x5c4] sm:$0xf]
    %v2520 = vld [vmem:[#allocation7 + $0x5c8] sm:$0xff]
    %v2521 = vld [vmem:[#allocation7 + $0x5d0] sm:$0xff]
    %v2522 = vld [vmem:[#allocation7 + $0x5d8] sm:$0xf]
    %v2523 = vld [vmem:[#allocation7 + $0x5dc] sm:$0xff]
    %v2524 = vld [vmem:[#allocation7 + $0x5e4] sm:$0xff]
    %v2525 = vld [vmem:[#allocation7 + $0x5ec] sm:$0xf]
    %v2526 = vld [vmem:[#allocation7 + $0x5f0] sm:$0xff]
    %v2527 = vld [vmem:[#allocation7 + $0x5f8] sm:$0xff]
    %v2528 = vld [vmem:[#allocation7 + $0x600] sm:$0xf]
    %v2529 = vld [vmem:[#allocation7 + $0x604] sm:$0xff]
    %v2530 = vld [vmem:[#allocation7 + $0x60c] sm:$0xff]
    %v2531 = vld [vmem:[#allocation7 + $0x614] sm:$0xf]
    %v2532 = vld [vmem:[#allocation7 + $0x618] sm:$0xff]
    %v2533 = vld [vmem:[#allocation7 + $0x620] sm:$0xff]
    %v2534 = vld [vmem:[#allocation7 + $0x628] sm:$0xf]
    %v2535 = vld [vmem:[#allocation7 + $0x62c] sm:$0xff]
    %v2536 = vld [vmem:[#allocation7 + $0x634] sm:$0xff]
    %v2537 = vld [vmem:[#allocation7 + $0x63c] sm:$0xf]
    %s2538 = scalar_lea.vmem [#allocation14], 1
    %v2539 = vld [vmem:[%s2538] ss:$8 sm:$0xf]
    %v2540 = vld [vmem:[%s2538] ss:$8 sm:$0x10]
    %v2541 = vor.u32 %v2539, %v2540
    %v2543 = vperm.slane %v2541, 0
    %v2544 = vperm.slane %v2541, 1
    %v2545 = vperm.slane %v2541, 2
    %v2546 = vperm.slane %v2541, 3
    %v2547 = vperm.slane %v2541, 4
    %v2793 = vunpack.c.l.b16 %v2298
    %v2794 = vunpack.c.h.b16 %v2298
    %v2795 = vunpack.c.l.b16 %v2299
    %v2796 = vunpack.c.h.b16 %v2299
    %v2797 = vunpack.c.l.b16 %v2300
    %v2798 = vunpack.c.l.b16 %v2301
    %v2799 = vunpack.c.h.b16 %v2301
    %v2800 = vunpack.c.l.b16 %v2302
    %v2801 = vunpack.c.h.b16 %v2302
    %v2802 = vunpack.c.l.b16 %v2303
    %v2803 = vunpack.c.l.b16 %v2304
    %v2804 = vunpack.c.h.b16 %v2304
    %v2805 = vunpack.c.l.b16 %v2305
    %v2806 = vunpack.c.h.b16 %v2305
    %v2807 = vunpack.c.l.b16 %v2306
    %v2808 = vunpack.c.l.b16 %v2307
    %v2809 = vunpack.c.h.b16 %v2307
    %v2810 = vunpack.c.l.b16 %v2308
    %v2811 = vunpack.c.h.b16 %v2308
    %v2812 = vunpack.c.l.b16 %v2309
    %v2813 = vunpack.c.l.b16 %v2310
    %v2814 = vunpack.c.h.b16 %v2310
    %v2815 = vunpack.c.l.b16 %v2311
    %v2816 = vunpack.c.h.b16 %v2311
    %v2817 = vunpack.c.l.b16 %v2312
    %v2818 = vunpack.c.l.b16 %v2313
    %v2819 = vunpack.c.h.b16 %v2313
    %v2820 = vunpack.c.l.b16 %v2314
    %v2821 = vunpack.c.h.b16 %v2314
    %v2822 = vunpack.c.l.b16 %v2315
    %v2823 = vunpack.c.l.b16 %v2316
    %v2824 = vunpack.c.h.b16 %v2316
    %v2825 = vunpack.c.l.b16 %v2317
    %v2826 = vunpack.c.h.b16 %v2317
    %v2827 = vunpack.c.l.b16 %v2318
    %v2828 = vunpack.c.l.b16 %v2319
    %v2829 = vunpack.c.h.b16 %v2319
    %v2830 = vunpack.c.l.b16 %v2320
    %v2831 = vunpack.c.h.b16 %v2320
    %v2832 = vunpack.c.l.b16 %v2321
    %v2833 = vunpack.c.l.b16 %v2322
    %v2834 = vunpack.c.h.b16 %v2322
    %v2835 = vunpack.c.l.b16 %v2323
    %v2836 = vunpack.c.h.b16 %v2323
    %v2837 = vunpack.c.l.b16 %v2324
    %v2838 = vunpack.c.l.b16 %v2325
    %v2839 = vunpack.c.h.b16 %v2325
    %v2840 = vunpack.c.l.b16 %v2326
    %v2841 = vunpack.c.h.b16 %v2326
    %v2842 = vunpack.c.l.b16 %v2327
    %v2843 = vunpack.c.l.b16 %v2328
    %v2844 = vunpack.c.h.b16 %v2328
    %v2845 = vunpack.c.l.b16 %v2329
    %v2846 = vunpack.c.h.b16 %v2329
    %v2847 = vunpack.c.l.b16 %v2330
    %v2848 = vunpack.c.l.b16 %v2331
    %v2849 = vunpack.c.h.b16 %v2331
    %v2850 = vunpack.c.l.b16 %v2332
    %v2851 = vunpack.c.h.b16 %v2332
    %v2852 = vunpack.c.l.b16 %v2333
    %v2853 = vunpack.c.l.b16 %v2334
    %v2854 = vunpack.c.h.b16 %v2334
    %v2855 = vunpack.c.l.b16 %v2335
    %v2856 = vunpack.c.h.b16 %v2335
    %v2857 = vunpack.c.l.b16 %v2336
    %v2858 = vunpack.c.l.b16 %v2337
    %v2859 = vunpack.c.h.b16 %v2337
    %v2860 = vunpack.c.l.b16 %v2338
    %v2861 = vunpack.c.h.b16 %v2338
    %v2862 = vunpack.c.l.b16 %v2339
    %v2863 = vunpack.c.l.b16 %v2340
    %v2864 = vunpack.c.h.b16 %v2340
    %v2865 = vunpack.c.l.b16 %v2341
    %v2866 = vunpack.c.h.b16 %v2341
    %v2867 = vunpack.c.l.b16 %v2342
    %v2868 = vunpack.c.l.b16 %v2343
    %v2869 = vunpack.c.h.b16 %v2343
    %v2870 = vunpack.c.l.b16 %v2344
    %v2871 = vunpack.c.h.b16 %v2344
    %v2872 = vunpack.c.l.b16 %v2345
    %v2873 = vunpack.c.l.b16 %v2346
    %v2874 = vunpack.c.h.b16 %v2346
    %v2875 = vunpack.c.l.b16 %v2347
    %v2876 = vunpack.c.h.b16 %v2347
    %v2877 = vunpack.c.l.b16 %v2348
    %v2878 = vunpack.c.l.b16 %v2349
    %v2879 = vunpack.c.h.b16 %v2349
    %v2880 = vunpack.c.l.b16 %v2350
    %v2881 = vunpack.c.h.b16 %v2350
    %v2882 = vunpack.c.l.b16 %v2351
    %v2883 = vunpack.c.l.b16 %v2352
    %v2884 = vunpack.c.h.b16 %v2352
    %v2885 = vunpack.c.l.b16 %v2353
    %v2886 = vunpack.c.h.b16 %v2353
    %v2887 = vunpack.c.l.b16 %v2354
    %v2888 = vunpack.c.l.b16 %v2355
    %v2889 = vunpack.c.h.b16 %v2355
    %v2890 = vunpack.c.l.b16 %v2356
    %v2891 = vunpack.c.h.b16 %v2356
    %v2892 = vunpack.c.l.b16 %v2357
    %v2893 = vunpack.c.l.b16 %v2358
    %v2894 = vunpack.c.h.b16 %v2358
    %v2895 = vunpack.c.l.b16 %v2359
    %v2896 = vunpack.c.h.b16 %v2359
    %v2897 = vunpack.c.l.b16 %v2360
    %v2898 = vunpack.c.l.b16 %v2361
    %v2899 = vunpack.c.h.b16 %v2361
    %v2900 = vunpack.c.l.b16 %v2362
    %v2901 = vunpack.c.h.b16 %v2362
    %v2902 = vunpack.c.l.b16 %v2363
    %v2903 = vunpack.c.l.b16 %v2364
    %v2904 = vunpack.c.h.b16 %v2364
    %v2905 = vunpack.c.l.b16 %v2365
    %v2906 = vunpack.c.h.b16 %v2365
    %v2907 = vunpack.c.l.b16 %v2366
    %v2908 = vunpack.c.l.b16 %v2367
    %v2909 = vunpack.c.h.b16 %v2367
    %v2910 = vunpack.c.l.b16 %v2368
    %v2911 = vunpack.c.h.b16 %v2368
    %v2912 = vunpack.c.l.b16 %v2369
    %v2913 = vunpack.c.l.b16 %v2370
    %v2914 = vunpack.c.h.b16 %v2370
    %v2915 = vunpack.c.l.b16 %v2371
    %v2916 = vunpack.c.h.b16 %v2371
    %v2917 = vunpack.c.l.b16 %v2372
    %v2918 = vunpack.c.l.b16 %v2373
    %v2919 = vunpack.c.h.b16 %v2373
    %v2920 = vunpack.c.l.b16 %v2374
    %v2921 = vunpack.c.h.b16 %v2374
    %v2922 = vunpack.c.l.b16 %v2375
    %v2923 = vunpack.c.l.b16 %v2376
    %v2924 = vunpack.c.h.b16 %v2376
    %v2925 = vunpack.c.l.b16 %v2377
    %v2926 = vunpack.c.h.b16 %v2377
    %v2927 = vunpack.c.l.b16 %v2378
    %v2928 = vunpack.c.l.b16 %v2379
    %v2929 = vunpack.c.h.b16 %v2379
    %v2930 = vunpack.c.l.b16 %v2380
    %v2931 = vunpack.c.h.b16 %v2380
    %v2932 = vunpack.c.l.b16 %v2381
    %v2933 = vunpack.c.l.b16 %v2382
    %v2934 = vunpack.c.h.b16 %v2382
    %v2935 = vunpack.c.l.b16 %v2383
    %v2936 = vunpack.c.h.b16 %v2383
    %v2937 = vunpack.c.l.b16 %v2384
    %v2938 = vunpack.c.l.b16 %v2385
    %v2939 = vunpack.c.h.b16 %v2385
    %v2940 = vunpack.c.l.b16 %v2386
    %v2941 = vunpack.c.h.b16 %v2386
    %v2942 = vunpack.c.l.b16 %v2387
    %v2943 = vunpack.c.l.b16 %v2388
    %v2944 = vunpack.c.h.b16 %v2388
    %v2945 = vunpack.c.l.b16 %v2389
    %v2946 = vunpack.c.h.b16 %v2389
    %v2947 = vunpack.c.l.b16 %v2390
    %v2948 = vunpack.c.l.b16 %v2391
    %v2949 = vunpack.c.h.b16 %v2391
    %v2950 = vunpack.c.l.b16 %v2392
    %v2951 = vunpack.c.h.b16 %v2392
    %v2952 = vunpack.c.l.b16 %v2393
    %v2953 = vunpack.c.l.b16 %v2394
    %v2954 = vunpack.c.h.b16 %v2394
    %v2955 = vunpack.c.l.b16 %v2395
    %v2956 = vunpack.c.h.b16 %v2395
    %v2957 = vunpack.c.l.b16 %v2396
    %v2958 = vunpack.c.l.b16 %v2397
    %v2959 = vunpack.c.h.b16 %v2397
    %v2960 = vunpack.c.l.b16 %v2398
    %v2961 = vunpack.c.h.b16 %v2398
    %v2962 = vunpack.c.l.b16 %v2399
    %v2963 = vunpack.c.l.b16 %v2400
    %v2964 = vunpack.c.h.b16 %v2400
    %v2965 = vunpack.c.l.b16 %v2401
    %v2966 = vunpack.c.h.b16 %v2401
    %v2967 = vunpack.c.l.b16 %v2402
    %v2968 = vunpack.c.l.b16 %v2403
    %v2969 = vunpack.c.h.b16 %v2403
    %v2970 = vunpack.c.l.b16 %v2404
    %v2971 = vunpack.c.h.b16 %v2404
    %v2972 = vunpack.c.l.b16 %v2405
    %v2973 = vunpack.c.l.b16 %v2406
    %v2974 = vunpack.c.h.b16 %v2406
    %v2975 = vunpack.c.l.b16 %v2407
    %v2976 = vunpack.c.h.b16 %v2407
    %v2977 = vunpack.c.l.b16 %v2408
    %v2978 = vunpack.c.l.b16 %v2409
    %v2979 = vunpack.c.h.b16 %v2409
    %v2980 = vunpack.c.l.b16 %v2410
    %v2981 = vunpack.c.h.b16 %v2410
    %v2982 = vunpack.c.l.b16 %v2411
    %v2983 = vunpack.c.l.b16 %v2412
    %v2984 = vunpack.c.h.b16 %v2412
    %v2985 = vunpack.c.l.b16 %v2413
    %v2986 = vunpack.c.h.b16 %v2413
    %v2987 = vunpack.c.l.b16 %v2414
    %v2988 = vunpack.c.l.b16 %v2415
    %v2989 = vunpack.c.h.b16 %v2415
    %v2990 = vunpack.c.l.b16 %v2416
    %v2991 = vunpack.c.h.b16 %v2416
    %v2992 = vunpack.c.l.b16 %v2417
    %v2993 = vunpack.c.l.b16 %v2418
    %v2994 = vunpack.c.h.b16 %v2418
    %v2995 = vunpack.c.l.b16 %v2419
    %v2996 = vunpack.c.h.b16 %v2419
    %v2997 = vunpack.c.l.b16 %v2420
    %v2998 = vunpack.c.l.b16 %v2421
    %v2999 = vunpack.c.h.b16 %v2421
    %v3000 = vunpack.c.l.b16 %v2422
    %v3001 = vunpack.c.h.b16 %v2422
    %v3002 = vunpack.c.l.b16 %v2423
    %v3003 = vunpack.c.l.b16 %v2424
    %v3004 = vunpack.c.h.b16 %v2424
    %v3005 = vunpack.c.l.b16 %v2425
    %v3006 = vunpack.c.h.b16 %v2425
    %v3007 = vunpack.c.l.b16 %v2426
    %v3008 = vunpack.c.l.b16 %v2427
    %v3009 = vunpack.c.h.b16 %v2427
    %v3010 = vunpack.c.l.b16 %v2428
    %v3011 = vunpack.c.h.b16 %v2428
    %v3012 = vunpack.c.l.b16 %v2429
    %v3013 = vunpack.c.l.b16 %v2430
    %v3014 = vunpack.c.h.b16 %v2430
    %v3015 = vunpack.c.l.b16 %v2431
    %v3016 = vunpack.c.h.b16 %v2431
    %v3017 = vunpack.c.l.b16 %v2432
    %v3018 = vunpack.c.l.b16 %v2433
    %v3019 = vunpack.c.h.b16 %v2433
    %v3020 = vunpack.c.l.b16 %v2434
    %v3021 = vunpack.c.h.b16 %v2434
    %v3022 = vunpack.c.l.b16 %v2435
    %v3023 = vunpack.c.l.b16 %v2436
    %v3024 = vunpack.c.h.b16 %v2436
    %v3025 = vunpack.c.l.b16 %v2437
    %v3026 = vunpack.c.h.b16 %v2437
    %v3027 = vunpack.c.l.b16 %v2438
    %v3028 = vunpack.c.l.b16 %v2439
    %v3029 = vunpack.c.h.b16 %v2439
    %v3030 = vunpack.c.l.b16 %v2440
    %v3031 = vunpack.c.h.b16 %v2440
    %v3032 = vunpack.c.l.b16 %v2441
    %v3033 = vunpack.c.l.b16 %v2442
    %v3034 = vunpack.c.h.b16 %v2442
    %v3035 = vunpack.c.l.b16 %v2443
    %v3036 = vunpack.c.h.b16 %v2443
    %v3037 = vunpack.c.l.b16 %v2444
    %v3038 = vunpack.c.l.b16 %v2445
    %v3039 = vunpack.c.h.b16 %v2445
    %v3040 = vunpack.c.l.b16 %v2446
    %v3041 = vunpack.c.h.b16 %v2446
    %v3042 = vunpack.c.l.b16 %v2447
    %v3043 = vunpack.c.l.b16 %v2448
    %v3044 = vunpack.c.h.b16 %v2448
    %v3045 = vunpack.c.l.b16 %v2449
    %v3046 = vunpack.c.h.b16 %v2449
    %v3047 = vunpack.c.l.b16 %v2450
    %v3048 = vunpack.c.l.b16 %v2451
    %v3049 = vunpack.c.h.b16 %v2451
    %v3050 = vunpack.c.l.b16 %v2452
    %v3051 = vunpack.c.h.b16 %v2452
    %v3052 = vunpack.c.l.b16 %v2453
    %v3053 = vunpack.c.l.b16 %v2454
    %v3054 = vunpack.c.h.b16 %v2454
    %v3055 = vunpack.c.l.b16 %v2455
    %v3056 = vunpack.c.h.b16 %v2455
    %v3057 = vunpack.c.l.b16 %v2456
    %v3058 = vunpack.c.l.b16 %v2457
    %v3059 = vunpack.c.h.b16 %v2457
    %v3060 = vunpack.c.l.b16 %v2458
    %v3061 = vunpack.c.h.b16 %v2458
    %v3062 = vunpack.c.l.b16 %v2459
    %v3063 = vunpack.c.l.b16 %v2460
    %v3064 = vunpack.c.h.b16 %v2460
    %v3065 = vunpack.c.l.b16 %v2461
    %v3066 = vunpack.c.h.b16 %v2461
    %v3067 = vunpack.c.l.b16 %v2462
    %v3068 = vunpack.c.l.b16 %v2463
    %v3069 = vunpack.c.h.b16 %v2463
    %v3070 = vunpack.c.l.b16 %v2464
    %v3071 = vunpack.c.h.b16 %v2464
    %v3072 = vunpack.c.l.b16 %v2465
    %v3073 = vunpack.c.l.b16 %v2466
    %v3074 = vunpack.c.h.b16 %v2466
    %v3075 = vunpack.c.l.b16 %v2467
    %v3076 = vunpack.c.h.b16 %v2467
    %v3077 = vunpack.c.l.b16 %v2468
    %v3078 = vunpack.c.l.b16 %v2469
    %v3079 = vunpack.c.h.b16 %v2469
    %v3080 = vunpack.c.l.b16 %v2470
    %v3081 = vunpack.c.h.b16 %v2470
    %v3082 = vunpack.c.l.b16 %v2471
    %v3083 = vunpack.c.l.b16 %v2472
    %v3084 = vunpack.c.h.b16 %v2472
    %v3085 = vunpack.c.l.b16 %v2473
    %v3086 = vunpack.c.h.b16 %v2473
    %v3087 = vunpack.c.l.b16 %v2474
    %v3088 = vunpack.c.l.b16 %v2475
    %v3089 = vunpack.c.h.b16 %v2475
    %v3090 = vunpack.c.l.b16 %v2476
    %v3091 = vunpack.c.h.b16 %v2476
    %v3092 = vunpack.c.l.b16 %v2477
    %v3093 = vunpack.c.l.b16 %v2478
    %v3094 = vunpack.c.h.b16 %v2478
    %v3095 = vunpack.c.l.b16 %v2479
    %v3096 = vunpack.c.h.b16 %v2479
    %v3097 = vunpack.c.l.b16 %v2480
    %v3098 = vunpack.c.l.b16 %v2481
    %v3099 = vunpack.c.h.b16 %v2481
    %v3100 = vunpack.c.l.b16 %v2482
    %v3101 = vunpack.c.h.b16 %v2482
    %v3102 = vunpack.c.l.b16 %v2483
    %v3103 = vunpack.c.l.b16 %v2484
    %v3104 = vunpack.c.h.b16 %v2484
    %v3105 = vunpack.c.l.b16 %v2485
    %v3106 = vunpack.c.h.b16 %v2485
    %v3107 = vunpack.c.l.b16 %v2486
    %v3108 = vunpack.c.l.b16 %v2487
    %v3109 = vunpack.c.h.b16 %v2487
    %v3110 = vunpack.c.l.b16 %v2488
    %v3111 = vunpack.c.h.b16 %v2488
    %v3112 = vunpack.c.l.b16 %v2489
    %v3113 = vunpack.c.l.b16 %v2490
    %v3114 = vunpack.c.h.b16 %v2490
    %v3115 = vunpack.c.l.b16 %v2491
    %v3116 = vunpack.c.h.b16 %v2491
    %v3117 = vunpack.c.l.b16 %v2492
    %v3118 = vunpack.c.l.b16 %v2493
    %v3119 = vunpack.c.h.b16 %v2493
    %v3120 = vunpack.c.l.b16 %v2494
    %v3121 = vunpack.c.h.b16 %v2494
    %v3122 = vunpack.c.l.b16 %v2495
    %v3123 = vunpack.c.l.b16 %v2496
    %v3124 = vunpack.c.h.b16 %v2496
    %v3125 = vunpack.c.l.b16 %v2497
    %v3126 = vunpack.c.h.b16 %v2497
    %v3127 = vunpack.c.l.b16 %v2498
    %v3128 = vunpack.c.l.b16 %v2499
    %v3129 = vunpack.c.h.b16 %v2499
    %v3130 = vunpack.c.l.b16 %v2500
    %v3131 = vunpack.c.h.b16 %v2500
    %v3132 = vunpack.c.l.b16 %v2501
    %v3133 = vunpack.c.l.b16 %v2502
    %v3134 = vunpack.c.h.b16 %v2502
    %v3135 = vunpack.c.l.b16 %v2503
    %v3136 = vunpack.c.h.b16 %v2503
    %v3137 = vunpack.c.l.b16 %v2504
    %v3138 = vunpack.c.l.b16 %v2505
    %v3139 = vunpack.c.h.b16 %v2505
    %v3140 = vunpack.c.l.b16 %v2506
    %v3141 = vunpack.c.h.b16 %v2506
    %v3142 = vunpack.c.l.b16 %v2507
    %v3143 = vunpack.c.l.b16 %v2508
    %v3144 = vunpack.c.h.b16 %v2508
    %v3145 = vunpack.c.l.b16 %v2509
    %v3146 = vunpack.c.h.b16 %v2509
    %v3147 = vunpack.c.l.b16 %v2510
    %v3148 = vunpack.c.l.b16 %v2511
    %v3149 = vunpack.c.h.b16 %v2511
    %v3150 = vunpack.c.l.b16 %v2512
    %v3151 = vunpack.c.h.b16 %v2512
    %v3152 = vunpack.c.l.b16 %v2513
    %v3153 = vunpack.c.l.b16 %v2514
    %v3154 = vunpack.c.h.b16 %v2514
    %v3155 = vunpack.c.l.b16 %v2515
    %v3156 = vunpack.c.h.b16 %v2515
    %v3157 = vunpack.c.l.b16 %v2516
    %v3158 = vunpack.c.l.b16 %v2517
    %v3159 = vunpack.c.h.b16 %v2517
    %v3160 = vunpack.c.l.b16 %v2518
    %v3161 = vunpack.c.h.b16 %v2518
    %v3162 = vunpack.c.l.b16 %v2519
    %v3163 = vunpack.c.l.b16 %v2520
    %v3164 = vunpack.c.h.b16 %v2520
    %v3165 = vunpack.c.l.b16 %v2521
    %v3166 = vunpack.c.h.b16 %v2521
    %v3167 = vunpack.c.l.b16 %v2522
    %v3168 = vunpack.c.l.b16 %v2523
    %v3169 = vunpack.c.h.b16 %v2523
    %v3170 = vunpack.c.l.b16 %v2524
    %v3171 = vunpack.c.h.b16 %v2524
    %v3172 = vunpack.c.l.b16 %v2525
    %v3173 = vunpack.c.l.b16 %v2526
    %v3174 = vunpack.c.h.b16 %v2526
    %v3175 = vunpack.c.l.b16 %v2527
    %v3176 = vunpack.c.h.b16 %v2527
    %v3177 = vunpack.c.l.b16 %v2528
    %v3178 = vunpack.c.l.b16 %v2529
    %v3179 = vunpack.c.h.b16 %v2529
    %v3180 = vunpack.c.l.b16 %v2530
    %v3181 = vunpack.c.h.b16 %v2530
    %v3182 = vunpack.c.l.b16 %v2531
    %v3183 = vunpack.c.l.b16 %v2532
    %v3184 = vunpack.c.h.b16 %v2532
    %v3185 = vunpack.c.l.b16 %v2533
    %v3186 = vunpack.c.h.b16 %v2533
    %v3187 = vunpack.c.l.b16 %v2534
    %v3188 = vunpack.c.l.b16 %v2535
    %v3189 = vunpack.c.h.b16 %v2535
    %v3190 = vunpack.c.l.b16 %v2536
    %v3191 = vunpack.c.h.b16 %v2536
    %v3192 = vunpack.c.l.b16 %v2537
    %v3193 = vpack.c.b16 %v2798, %v2793
    %v3194 = vpack.c.b16 %v2799, %v2794
    %v3195 = vpack.c.b16 %v2800, %v2795
    %v3196 = vpack.c.b16 %v2801, %v2796
    %v3197 = vpack.c.b16 %v2802, %v2797
    %v3198 = vpack.c.b16 %v2808, %v2803
    %v3199 = vpack.c.b16 %v2809, %v2804
    %v3200 = vpack.c.b16 %v2810, %v2805
    %v3201 = vpack.c.b16 %v2811, %v2806
    %v3202 = vpack.c.b16 %v2812, %v2807
    %v3203 = vpack.c.b16 %v2818, %v2813
    %v3204 = vpack.c.b16 %v2819, %v2814
    %v3205 = vpack.c.b16 %v2820, %v2815
    %v3206 = vpack.c.b16 %v2821, %v2816
    %v3207 = vpack.c.b16 %v2822, %v2817
    %v3208 = vpack.c.b16 %v2828, %v2823
    %v3209 = vpack.c.b16 %v2829, %v2824
    %v3210 = vpack.c.b16 %v2830, %v2825
    %v3211 = vpack.c.b16 %v2831, %v2826
    %v3212 = vpack.c.b16 %v2832, %v2827
    %v3213 = vpack.c.b16 %v2838, %v2833
    %v3214 = vpack.c.b16 %v2839, %v2834
    %v3215 = vpack.c.b16 %v2840, %v2835
    %v3216 = vpack.c.b16 %v2841, %v2836
    %v3217 = vpack.c.b16 %v2842, %v2837
    %v3218 = vpack.c.b16 %v2848, %v2843
    %v3219 = vpack.c.b16 %v2849, %v2844
    %v3220 = vpack.c.b16 %v2850, %v2845
    %v3221 = vpack.c.b16 %v2851, %v2846
    %v3222 = vpack.c.b16 %v2852, %v2847
    %v3223 = vpack.c.b16 %v2858, %v2853
    %v3224 = vpack.c.b16 %v2859, %v2854
    %v3225 = vpack.c.b16 %v2860, %v2855
    %v3226 = vpack.c.b16 %v2861, %v2856
    %v3227 = vpack.c.b16 %v2862, %v2857
    %v3228 = vpack.c.b16 %v2868, %v2863
    %v3229 = vpack.c.b16 %v2869, %v2864
    %v3230 = vpack.c.b16 %v2870, %v2865
    %v3231 = vpack.c.b16 %v2871, %v2866
    %v3232 = vpack.c.b16 %v2872, %v2867
    %v3233 = vpack.c.b16 %v2878, %v2873
    %v3234 = vpack.c.b16 %v2879, %v2874
    %v3235 = vpack.c.b16 %v2880, %v2875
    %v3236 = vpack.c.b16 %v2881, %v2876
    %v3237 = vpack.c.b16 %v2882, %v2877
    %v3238 = vpack.c.b16 %v2888, %v2883
    %v3239 = vpack.c.b16 %v2889, %v2884
    %v3240 = vpack.c.b16 %v2890, %v2885
    %v3241 = vpack.c.b16 %v2891, %v2886
    %v3242 = vpack.c.b16 %v2892, %v2887
    %v3243 = vpack.c.b16 %v2898, %v2893
    %v3244 = vpack.c.b16 %v2899, %v2894
    %v3245 = vpack.c.b16 %v2900, %v2895
    %v3246 = vpack.c.b16 %v2901, %v2896
    %v3247 = vpack.c.b16 %v2902, %v2897
    %v3248 = vpack.c.b16 %v2908, %v2903
    %v3249 = vpack.c.b16 %v2909, %v2904
    %v3250 = vpack.c.b16 %v2910, %v2905
    %v3251 = vpack.c.b16 %v2911, %v2906
    %v3252 = vpack.c.b16 %v2912, %v2907
    %v3253 = vpack.c.b16 %v2918, %v2913
    %v3254 = vpack.c.b16 %v2919, %v2914
    %v3255 = vpack.c.b16 %v2920, %v2915
    %v3256 = vpack.c.b16 %v2921, %v2916
    %v3257 = vpack.c.b16 %v2922, %v2917
    %v3258 = vpack.c.b16 %v2928, %v2923
    %v3259 = vpack.c.b16 %v2929, %v2924
    %v3260 = vpack.c.b16 %v2930, %v2925
    %v3261 = vpack.c.b16 %v2931, %v2926
    %v3262 = vpack.c.b16 %v2932, %v2927
    %v3263 = vpack.c.b16 %v2938, %v2933
    %v3264 = vpack.c.b16 %v2939, %v2934
    %v3265 = vpack.c.b16 %v2940, %v2935
    %v3266 = vpack.c.b16 %v2941, %v2936
    %v3267 = vpack.c.b16 %v2942, %v2937
    %v3268 = vpack.c.b16 %v2948, %v2943
    %v3269 = vpack.c.b16 %v2949, %v2944
    %v3270 = vpack.c.b16 %v2950, %v2945
    %v3271 = vpack.c.b16 %v2951, %v2946
    %v3272 = vpack.c.b16 %v2952, %v2947
    %v3273 = vpack.c.b16 %v2958, %v2953
    %v3274 = vpack.c.b16 %v2959, %v2954
    %v3275 = vpack.c.b16 %v2960, %v2955
    %v3276 = vpack.c.b16 %v2961, %v2956
    %v3277 = vpack.c.b16 %v2962, %v2957
    %v3278 = vpack.c.b16 %v2968, %v2963
    %v3279 = vpack.c.b16 %v2969, %v2964
    %v3280 = vpack.c.b16 %v2970, %v2965
    %v3281 = vpack.c.b16 %v2971, %v2966
    %v3282 = vpack.c.b16 %v2972, %v2967
    %v3283 = vpack.c.b16 %v2978, %v2973
    %v3284 = vpack.c.b16 %v2979, %v2974
    %v3285 = vpack.c.b16 %v2980, %v2975
    %v3286 = vpack.c.b16 %v2981, %v2976
    %v3287 = vpack.c.b16 %v2982, %v2977
    %v3288 = vpack.c.b16 %v2988, %v2983
    %v3289 = vpack.c.b16 %v2989, %v2984
    %v3290 = vpack.c.b16 %v2990, %v2985
    %v3291 = vpack.c.b16 %v2991, %v2986
    %v3292 = vpack.c.b16 %v2992, %v2987
    %v3293 = vpack.c.b16 %v2998, %v2993
    %v3294 = vpack.c.b16 %v2999, %v2994
    %v3295 = vpack.c.b16 %v3000, %v2995
    %v3296 = vpack.c.b16 %v3001, %v2996
    %v3297 = vpack.c.b16 %v3002, %v2997
    %v3298 = vpack.c.b16 %v3008, %v3003
    %v3299 = vpack.c.b16 %v3009, %v3004
    %v3300 = vpack.c.b16 %v3010, %v3005
    %v3301 = vpack.c.b16 %v3011, %v3006
    %v3302 = vpack.c.b16 %v3012, %v3007
    %v3303 = vpack.c.b16 %v3018, %v3013
    %v3304 = vpack.c.b16 %v3019, %v3014
    %v3305 = vpack.c.b16 %v3020, %v3015
    %v3306 = vpack.c.b16 %v3021, %v3016
    %v3307 = vpack.c.b16 %v3022, %v3017
    %v3308 = vpack.c.b16 %v3028, %v3023
    %v3309 = vpack.c.b16 %v3029, %v3024
    %v3310 = vpack.c.b16 %v3030, %v3025
    %v3311 = vpack.c.b16 %v3031, %v3026
    %v3312 = vpack.c.b16 %v3032, %v3027
    %v3313 = vpack.c.b16 %v3038, %v3033
    %v3314 = vpack.c.b16 %v3039, %v3034
    %v3315 = vpack.c.b16 %v3040, %v3035
    %v3316 = vpack.c.b16 %v3041, %v3036
    %v3317 = vpack.c.b16 %v3042, %v3037
    %v3318 = vpack.c.b16 %v3048, %v3043
    %v3319 = vpack.c.b16 %v3049, %v3044
    %v3320 = vpack.c.b16 %v3050, %v3045
    %v3321 = vpack.c.b16 %v3051, %v3046
    %v3322 = vpack.c.b16 %v3052, %v3047
    %v3323 = vpack.c.b16 %v3058, %v3053
    %v3324 = vpack.c.b16 %v3059, %v3054
    %v3325 = vpack.c.b16 %v3060, %v3055
    %v3326 = vpack.c.b16 %v3061, %v3056
    %v3327 = vpack.c.b16 %v3062, %v3057
    %v3328 = vpack.c.b16 %v3068, %v3063
    %v3329 = vpack.c.b16 %v3069, %v3064
    %v3330 = vpack.c.b16 %v3070, %v3065
    %v3331 = vpack.c.b16 %v3071, %v3066
    %v3332 = vpack.c.b16 %v3072, %v3067
    %v3333 = vpack.c.b16 %v3078, %v3073
    %v3334 = vpack.c.b16 %v3079, %v3074
    %v3335 = vpack.c.b16 %v3080, %v3075
    %v3336 = vpack.c.b16 %v3081, %v3076
    %v3337 = vpack.c.b16 %v3082, %v3077
    %v3338 = vpack.c.b16 %v3088, %v3083
    %v3339 = vpack.c.b16 %v3089, %v3084
    %v3340 = vpack.c.b16 %v3090, %v3085
    %v3341 = vpack.c.b16 %v3091, %v3086
    %v3342 = vpack.c.b16 %v3092, %v3087
    %v3343 = vpack.c.b16 %v3098, %v3093
    %v3344 = vpack.c.b16 %v3099, %v3094
    %v3345 = vpack.c.b16 %v3100, %v3095
    %v3346 = vpack.c.b16 %v3101, %v3096
    %v3347 = vpack.c.b16 %v3102, %v3097
    %v3348 = vpack.c.b16 %v3108, %v3103
    %v3349 = vpack.c.b16 %v3109, %v3104
    %v3350 = vpack.c.b16 %v3110, %v3105
    %v3351 = vpack.c.b16 %v3111, %v3106
    %v3352 = vpack.c.b16 %v3112, %v3107
    %v3353 = vpack.c.b16 %v3118, %v3113
    %v3354 = vpack.c.b16 %v3119, %v3114
    %v3355 = vpack.c.b16 %v3120, %v3115
    %v3356 = vpack.c.b16 %v3121, %v3116
    %v3357 = vpack.c.b16 %v3122, %v3117
    %v3358 = vpack.c.b16 %v3128, %v3123
    %v3359 = vpack.c.b16 %v3129, %v3124
    %v3360 = vpack.c.b16 %v3130, %v3125
    %v3361 = vpack.c.b16 %v3131, %v3126
    %v3362 = vpack.c.b16 %v3132, %v3127
    %v3363 = vpack.c.b16 %v3138, %v3133
    %v3364 = vpack.c.b16 %v3139, %v3134
    %v3365 = vpack.c.b16 %v3140, %v3135
    %v3366 = vpack.c.b16 %v3141, %v3136
    %v3367 = vpack.c.b16 %v3142, %v3137
    %v3368 = vpack.c.b16 %v3148, %v3143
    %v3369 = vpack.c.b16 %v3149, %v3144
    %v3370 = vpack.c.b16 %v3150, %v3145
    %v3371 = vpack.c.b16 %v3151, %v3146
    %v3372 = vpack.c.b16 %v3152, %v3147
    %v3373 = vpack.c.b16 %v3158, %v3153
    %v3374 = vpack.c.b16 %v3159, %v3154
    %v3375 = vpack.c.b16 %v3160, %v3155
    %v3376 = vpack.c.b16 %v3161, %v3156
    %v3377 = vpack.c.b16 %v3162, %v3157
    %v3378 = vpack.c.b16 %v3168, %v3163
    %v3379 = vpack.c.b16 %v3169, %v3164
    %v3380 = vpack.c.b16 %v3170, %v3165
    %v3381 = vpack.c.b16 %v3171, %v3166
    %v3382 = vpack.c.b16 %v3172, %v3167
    %v3383 = vpack.c.b16 %v3178, %v3173
    %v3384 = vpack.c.b16 %v3179, %v3174
    %v3385 = vpack.c.b16 %v3180, %v3175
    %v3386 = vpack.c.b16 %v3181, %v3176
    %v3387 = vpack.c.b16 %v3182, %v3177
    %v3388 = vpack.c.b16 %v3188, %v3183
    %v3389 = vpack.c.b16 %v3189, %v3184
    %v3390 = vpack.c.b16 %v3190, %v3185
    %v3391 = vpack.c.b16 %v3191, %v3186
    %v3392 = vpack.c.b16 %v3192, %v3187
    %3593 = vmatpush.bf16.msra.mxu0 %v3228
    %3594 = vmatpush.bf16.msra.mxu0 %v3223
    %3595 = vmatpush.bf16.msra.mxu0 %v3218
    %3596 = vmatpush.bf16.msra.mxu0 %v3213
    %3597 = vmatpush.bf16.msra.mxu0 %v3208
    %3598 = vmatpush.bf16.msra.mxu0 %v3203
    %3599 = vmatpush.bf16.msra.mxu0 %v3198
    %3600 = vmatpush.bf16.msra.mxu0 %v3193
    %3601 = vmatmul.bf16.gmra.mxu0 %v2293
    %v3602 = vpop.f32.mrf.mxu0
    %v3603 = vadd.f32 %v2543, %v3602
    %v3604 = vpop.f32.mrf.mxu0
    %v3605 = vadd.f32 %v2543, %v3604
    %3606 = vdwg.mxu0
    %3607 = vmatpush.bf16.msra.mxu0 %v3268
    %3608 = vmatpush.bf16.msra.mxu0 %v3263
    %3609 = vmatpush.bf16.msra.mxu0 %v3258
    %3610 = vmatpush.bf16.msra.mxu0 %v3253
    %3611 = vmatpush.bf16.msra.mxu0 %v3248
    %3612 = vmatpush.bf16.msra.mxu0 %v3243
    %3613 = vmatpush.bf16.msra.mxu0 %v3238
    %3614 = vmatpush.bf16.msra.mxu0 %v3233
    %3615 = vmatmul.bf16.gmra.mxu0 %v2294
    %v3616 = vpop.f32.mrf.mxu0
    %v3617 = vadd.f32 %v3603, %v3616
    %v3618 = vpop.f32.mrf.mxu0
    %v3619 = vadd.f32 %v3605, %v3618
    %3620 = vdwg.mxu0
    %3621 = vmatpush.bf16.msra.mxu0 %v3308
    %3622 = vmatpush.bf16.msra.mxu0 %v3303
    %3623 = vmatpush.bf16.msra.mxu0 %v3298
    %3624 = vmatpush.bf16.msra.mxu0 %v3293
    %3625 = vmatpush.bf16.msra.mxu0 %v3288
    %3626 = vmatpush.bf16.msra.mxu0 %v3283
    %3627 = vmatpush.bf16.msra.mxu0 %v3278
    %3628 = vmatpush.bf16.msra.mxu0 %v3273
    %3629 = vmatmul.bf16.gmra.mxu0 %v2295
    %v3630 = vpop.f32.mrf.mxu0
    %v3631 = vadd.f32 %v3617, %v3630
    %v3632 = vpop.f32.mrf.mxu0
    %v3633 = vadd.f32 %v3619, %v3632
    %3634 = vdwg.mxu0
    %3635 = vmatpush.bf16.msra.mxu0 %v3348
    %3636 = vmatpush.bf16.msra.mxu0 %v3343
    %3637 = vmatpush.bf16.msra.mxu0 %v3338
    %3638 = vmatpush.bf16.msra.mxu0 %v3333
    %3639 = vmatpush.bf16.msra.mxu0 %v3328
    %3640 = vmatpush.bf16.msra.mxu0 %v3323
    %3641 = vmatpush.bf16.msra.mxu0 %v3318
    %3642 = vmatpush.bf16.msra.mxu0 %v3313
    %3643 = vmatmul.bf16.gmra.mxu0 %v2296
    %v3644 = vpop.f32.mrf.mxu0
    %v3645 = vadd.f32 %v3631, %v3644
    %v3646 = vpop.f32.mrf.mxu0
    %v3647 = vadd.f32 %v3633, %v3646
    %3648 = vdwg.mxu0
    %3649 = vmatpush.bf16.msra.mxu0 %v3388
    %3650 = vmatpush.bf16.msra.mxu0 %v3383
    %3651 = vmatpush.bf16.msra.mxu0 %v3378
    %3652 = vmatpush.bf16.msra.mxu0 %v3373
    %3653 = vmatpush.bf16.msra.mxu0 %v3368
    %3654 = vmatpush.bf16.msra.mxu0 %v3363
    %3655 = vmatpush.bf16.msra.mxu0 %v3358
    %3656 = vmatpush.bf16.msra.mxu0 %v3353
    %3657 = vmatmul.bf16.gmra.mxu0 %v2297
    %v3658 = vpop.f32.mrf.mxu0
    %v3659 = vadd.f32 %v3645, %v3658
    %v3660 = vpop.f32.mrf.mxu0
    %v3661 = vadd.f32 %v3647, %v3660
    %3662 = vdwg.mxu0
    %3663 = vmatpush.bf16.msra.mxu0 %v3229
    %3664 = vmatpush.bf16.msra.mxu0 %v3224
    %3665 = vmatpush.bf16.msra.mxu0 %v3219
    %3666 = vmatpush.bf16.msra.mxu0 %v3214
    %3667 = vmatpush.bf16.msra.mxu0 %v3209
    %3668 = vmatpush.bf16.msra.mxu0 %v3204
    %3669 = vmatpush.bf16.msra.mxu0 %v3199
    %3670 = vmatpush.bf16.msra.mxu0 %v3194
    %3671 = vmatmul.bf16.gmra.mxu0 %v2293
    %v3672 = vpop.f32.mrf.mxu0
    %v3673 = vadd.f32 %v2544, %v3672
    %v3674 = vpop.f32.mrf.mxu0
    %v3675 = vadd.f32 %v2544, %v3674
    %3676 = vdwg.mxu0
    %3677 = vmatpush.bf16.msra.mxu0 %v3269
    %3678 = vmatpush.bf16.msra.mxu0 %v3264
    %3679 = vmatpush.bf16.msra.mxu0 %v3259
    %3680 = vmatpush.bf16.msra.mxu0 %v3254
    %3681 = vmatpush.bf16.msra.mxu0 %v3249
    %3682 = vmatpush.bf16.msra.mxu0 %v3244
    %3683 = vmatpush.bf16.msra.mxu0 %v3239
    %3684 = vmatpush.bf16.msra.mxu0 %v3234
    %3685 = vmatmul.bf16.gmra.mxu0 %v2294
    %v3686 = vpop.f32.mrf.mxu0
    %v3687 = vadd.f32 %v3673, %v3686
    %v3688 = vpop.f32.mrf.mxu0
    %v3689 = vadd.f32 %v3675, %v3688
    %3690 = vdwg.mxu0
    %3691 = vmatpush.bf16.msra.mxu0 %v3309
    %3692 = vmatpush.bf16.msra.mxu0 %v3304
    %3693 = vmatpush.bf16.msra.mxu0 %v3299
    %3694 = vmatpush.bf16.msra.mxu0 %v3294
    %3695 = vmatpush.bf16.msra.mxu0 %v3289
    %3696 = vmatpush.bf16.msra.mxu0 %v3284
    %3697 = vmatpush.bf16.msra.mxu0 %v3279
    %3698 = vmatpush.bf16.msra.mxu0 %v3274
    %3699 = vmatmul.bf16.gmra.mxu0 %v2295
    %v3700 = vpop.f32.mrf.mxu0
    %v3701 = vadd.f32 %v3687, %v3700
    %v3702 = vpop.f32.mrf.mxu0
    %v3703 = vadd.f32 %v3689, %v3702
    %3704 = vdwg.mxu0
    %3705 = vmatpush.bf16.msra.mxu0 %v3349
    %3706 = vmatpush.bf16.msra.mxu0 %v3344
    %3707 = vmatpush.bf16.msra.mxu0 %v3339
    %3708 = vmatpush.bf16.msra.mxu0 %v3334
    %3709 = vmatpush.bf16.msra.mxu0 %v3329
    %3710 = vmatpush.bf16.msra.mxu0 %v3324
    %3711 = vmatpush.bf16.msra.mxu0 %v3319
    %3712 = vmatpush.bf16.msra.mxu0 %v3314
    %3713 = vmatmul.bf16.gmra.mxu0 %v2296
    %v3714 = vpop.f32.mrf.mxu0
    %v3715 = vadd.f32 %v3701, %v3714
    %v3716 = vpop.f32.mrf.mxu0
    %v3717 = vadd.f32 %v3703, %v3716
    %3718 = vdwg.mxu0
    %3719 = vmatpush.bf16.msra.mxu0 %v3389
    %3720 = vmatpush.bf16.msra.mxu0 %v3384
    %3721 = vmatpush.bf16.msra.mxu0 %v3379
    %3722 = vmatpush.bf16.msra.mxu0 %v3374
    %3723 = vmatpush.bf16.msra.mxu0 %v3369
    %3724 = vmatpush.bf16.msra.mxu0 %v3364
    %3725 = vmatpush.bf16.msra.mxu0 %v3359
    %3726 = vmatpush.bf16.msra.mxu0 %v3354
    %3727 = vmatmul.bf16.gmra.mxu0 %v2297
    %v3728 = vpop.f32.mrf.mxu0
    %v3729 = vadd.f32 %v3715, %v3728
    %v3730 = vpop.f32.mrf.mxu0
    %v3731 = vadd.f32 %v3717, %v3730
    %3732 = vdwg.mxu0
    %3733 = vmatpush.bf16.msra.mxu0 %v3230
    %3734 = vmatpush.bf16.msra.mxu0 %v3225
    %3735 = vmatpush.bf16.msra.mxu0 %v3220
    %3736 = vmatpush.bf16.msra.mxu0 %v3215
    %3737 = vmatpush.bf16.msra.mxu0 %v3210
    %3738 = vmatpush.bf16.msra.mxu0 %v3205
    %3739 = vmatpush.bf16.msra.mxu0 %v3200
    %3740 = vmatpush.bf16.msra.mxu0 %v3195
    %3741 = vmatmul.bf16.gmra.mxu0 %v2293
    %v3742 = vpop.f32.mrf.mxu0
    %v3743 = vadd.f32 %v2545, %v3742
    %v3744 = vpop.f32.mrf.mxu0
    %v3745 = vadd.f32 %v2545, %v3744
    %3746 = vdwg.mxu0
    %3747 = vmatpush.bf16.msra.mxu0 %v3270
    %3748 = vmatpush.bf16.msra.mxu0 %v3265
    %3749 = vmatpush.bf16.msra.mxu0 %v3260
    %3750 = vmatpush.bf16.msra.mxu0 %v3255
    %3751 = vmatpush.bf16.msra.mxu0 %v3250
    %3752 = vmatpush.bf16.msra.mxu0 %v3245
    %3753 = vmatpush.bf16.msra.mxu0 %v3240
    %3754 = vmatpush.bf16.msra.mxu0 %v3235
    %3755 = vmatmul.bf16.gmra.mxu0 %v2294
    %v3756 = vpop.f32.mrf.mxu0
    %v3757 = vadd.f32 %v3743, %v3756
    %v3758 = vpop.f32.mrf.mxu0
    %v3759 = vadd.f32 %v3745, %v3758
    %3760 = vdwg.mxu0
    %3761 = vmatpush.bf16.msra.mxu0 %v3310
    %3762 = vmatpush.bf16.msra.mxu0 %v3305
    %3763 = vmatpush.bf16.msra.mxu0 %v3300
    %3764 = vmatpush.bf16.msra.mxu0 %v3295
    %3765 = vmatpush.bf16.msra.mxu0 %v3290
    %3766 = vmatpush.bf16.msra.mxu0 %v3285
    %3767 = vmatpush.bf16.msra.mxu0 %v3280
    %3768 = vmatpush.bf16.msra.mxu0 %v3275
    %3769 = vmatmul.bf16.gmra.mxu0 %v2295
    %v3770 = vpop.f32.mrf.mxu0
    %v3771 = vadd.f32 %v3757, %v3770
    %v3772 = vpop.f32.mrf.mxu0
    %v3773 = vadd.f32 %v3759, %v3772
    %3774 = vdwg.mxu0
    %3775 = vmatpush.bf16.msra.mxu0 %v3350
    %3776 = vmatpush.bf16.msra.mxu0 %v3345
    %3777 = vmatpush.bf16.msra.mxu0 %v3340
    %3778 = vmatpush.bf16.msra.mxu0 %v3335
    %3779 = vmatpush.bf16.msra.mxu0 %v3330
    %3780 = vmatpush.bf16.msra.mxu0 %v3325
    %3781 = vmatpush.bf16.msra.mxu0 %v3320
    %3782 = vmatpush.bf16.msra.mxu0 %v3315
    %3783 = vmatmul.bf16.gmra.mxu0 %v2296
    %v3784 = vpop.f32.mrf.mxu0
    %v3785 = vadd.f32 %v3771, %v3784
    %v3786 = vpop.f32.mrf.mxu0
    %v3787 = vadd.f32 %v3773, %v3786
    %3788 = vdwg.mxu0
    %3789 = vmatpush.bf16.msra.mxu0 %v3390
    %3790 = vmatpush.bf16.msra.mxu0 %v3385
    %3791 = vmatpush.bf16.msra.mxu0 %v3380
    %3792 = vmatpush.bf16.msra.mxu0 %v3375
    %3793 = vmatpush.bf16.msra.mxu0 %v3370
    %3794 = vmatpush.bf16.msra.mxu0 %v3365
    %3795 = vmatpush.bf16.msra.mxu0 %v3360
    %3796 = vmatpush.bf16.msra.mxu0 %v3355
    %3797 = vmatmul.bf16.gmra.mxu0 %v2297
    %v3798 = vpop.f32.mrf.mxu0
    %v3799 = vadd.f32 %v3785, %v3798
    %v3800 = vpop.f32.mrf.mxu0
    %v3801 = vadd.f32 %v3787, %v3800
    %3802 = vdwg.mxu0
    %3803 = vmatpush.bf16.msra.mxu0 %v3231
    %3804 = vmatpush.bf16.msra.mxu0 %v3226
    %3805 = vmatpush.bf16.msra.mxu0 %v3221
    %3806 = vmatpush.bf16.msra.mxu0 %v3216
    %3807 = vmatpush.bf16.msra.mxu0 %v3211
    %3808 = vmatpush.bf16.msra.mxu0 %v3206
    %3809 = vmatpush.bf16.msra.mxu0 %v3201
    %3810 = vmatpush.bf16.msra.mxu0 %v3196
    %3811 = vmatmul.bf16.gmra.mxu0 %v2293
    %v3812 = vpop.f32.mrf.mxu0
    %v3813 = vadd.f32 %v2546, %v3812
    %v3814 = vpop.f32.mrf.mxu0
    %v3815 = vadd.f32 %v2546, %v3814
    %3816 = vdwg.mxu0
    %3817 = vmatpush.bf16.msra.mxu0 %v3271
    %3818 = vmatpush.bf16.msra.mxu0 %v3266
    %3819 = vmatpush.bf16.msra.mxu0 %v3261
    %3820 = vmatpush.bf16.msra.mxu0 %v3256
    %3821 = vmatpush.bf16.msra.mxu0 %v3251
    %3822 = vmatpush.bf16.msra.mxu0 %v3246
    %3823 = vmatpush.bf16.msra.mxu0 %v3241
    %3824 = vmatpush.bf16.msra.mxu0 %v3236
    %3825 = vmatmul.bf16.gmra.mxu0 %v2294
    %v3826 = vpop.f32.mrf.mxu0
    %v3827 = vadd.f32 %v3813, %v3826
    %v3828 = vpop.f32.mrf.mxu0
    %v3829 = vadd.f32 %v3815, %v3828
    %3830 = vdwg.mxu0
    %3831 = vmatpush.bf16.msra.mxu0 %v3311
    %3832 = vmatpush.bf16.msra.mxu0 %v3306
    %3833 = vmatpush.bf16.msra.mxu0 %v3301
    %3834 = vmatpush.bf16.msra.mxu0 %v3296
    %3835 = vmatpush.bf16.msra.mxu0 %v3291
    %3836 = vmatpush.bf16.msra.mxu0 %v3286
    %3837 = vmatpush.bf16.msra.mxu0 %v3281
    %3838 = vmatpush.bf16.msra.mxu0 %v3276
    %3839 = vmatmul.bf16.gmra.mxu0 %v2295
    %v3840 = vpop.f32.mrf.mxu0
    %v3841 = vadd.f32 %v3827, %v3840
    %v3842 = vpop.f32.mrf.mxu0
    %v3843 = vadd.f32 %v3829, %v3842
    %3844 = vdwg.mxu0
    %3845 = vmatpush.bf16.msra.mxu0 %v3351
    %3846 = vmatpush.bf16.msra.mxu0 %v3346
    %3847 = vmatpush.bf16.msra.mxu0 %v3341
    %3848 = vmatpush.bf16.msra.mxu0 %v3336
    %3849 = vmatpush.bf16.msra.mxu0 %v3331
    %3850 = vmatpush.bf16.msra.mxu0 %v3326
    %3851 = vmatpush.bf16.msra.mxu0 %v3321
    %3852 = vmatpush.bf16.msra.mxu0 %v3316
    %3853 = vmatmul.bf16.gmra.mxu0 %v2296
    %v3854 = vpop.f32.mrf.mxu0
    %v3855 = vadd.f32 %v3841, %v3854
    %v3856 = vpop.f32.mrf.mxu0
    %v3857 = vadd.f32 %v3843, %v3856
    %3858 = vdwg.mxu0
    %3859 = vmatpush.bf16.msra.mxu0 %v3391
    %3860 = vmatpush.bf16.msra.mxu0 %v3386
    %3861 = vmatpush.bf16.msra.mxu0 %v3381
    %3862 = vmatpush.bf16.msra.mxu0 %v3376
    %3863 = vmatpush.bf16.msra.mxu0 %v3371
    %3864 = vmatpush.bf16.msra.mxu0 %v3366
    %3865 = vmatpush.bf16.msra.mxu0 %v3361
    %3866 = vmatpush.bf16.msra.mxu0 %v3356
    %3867 = vmatmul.bf16.gmra.mxu0 %v2297
    %v3868 = vpop.f32.mrf.mxu0
    %v3869 = vadd.f32 %v3855, %v3868
    %v3870 = vpop.f32.mrf.mxu0
    %v3871 = vadd.f32 %v3857, %v3870
    %3872 = vdwg.mxu0
    %3873 = vmatpush.bf16.msra.mxu0 %v3232
    %3874 = vmatpush.bf16.msra.mxu0 %v3227
    %3875 = vmatpush.bf16.msra.mxu0 %v3222
    %3876 = vmatpush.bf16.msra.mxu0 %v3217
    %3877 = vmatpush.bf16.msra.mxu0 %v3212
    %3878 = vmatpush.bf16.msra.mxu0 %v3207
    %3879 = vmatpush.bf16.msra.mxu0 %v3202
    %3880 = vmatpush.bf16.msra.mxu0 %v3197
    %3881 = vmatmul.bf16.gmra.mxu0 %v2293
    %v3882 = vpop.f32.mrf.mxu0
    %v3883 = vadd.f32 %v2547, %v3882
    %v3884 = vpop.f32.mrf.mxu0
    %v3885 = vadd.f32 %v2547, %v3884
    %3886 = vdwg.mxu0
    %3887 = vmatpush.bf16.msra.mxu0 %v3272
    %3888 = vmatpush.bf16.msra.mxu0 %v3267
    %3889 = vmatpush.bf16.msra.mxu0 %v3262
    %3890 = vmatpush.bf16.msra.mxu0 %v3257
    %3891 = vmatpush.bf16.msra.mxu0 %v3252
    %3892 = vmatpush.bf16.msra.mxu0 %v3247
    %3893 = vmatpush.bf16.msra.mxu0 %v3242
    %3894 = vmatpush.bf16.msra.mxu0 %v3237
    %3895 = vmatmul.bf16.gmra.mxu0 %v2294
    %v3896 = vpop.f32.mrf.mxu0
    %v3897 = vadd.f32 %v3883, %v3896
    %v3898 = vpop.f32.mrf.mxu0
    %v3899 = vadd.f32 %v3885, %v3898
    %3900 = vdwg.mxu0
    %3901 = vmatpush.bf16.msra.mxu0 %v3312
    %3902 = vmatpush.bf16.msra.mxu0 %v3307
    %3903 = vmatpush.bf16.msra.mxu0 %v3302
    %3904 = vmatpush.bf16.msra.mxu0 %v3297
    %3905 = vmatpush.bf16.msra.mxu0 %v3292
    %3906 = vmatpush.bf16.msra.mxu0 %v3287
    %3907 = vmatpush.bf16.msra.mxu0 %v3282
    %3908 = vmatpush.bf16.msra.mxu0 %v3277
    %3909 = vmatmul.bf16.gmra.mxu0 %v2295
    %v3910 = vpop.f32.mrf.mxu0
    %v3911 = vadd.f32 %v3897, %v3910
    %v3912 = vpop.f32.mrf.mxu0
    %v3913 = vadd.f32 %v3899, %v3912
    %3914 = vdwg.mxu0
    %3915 = vmatpush.bf16.msra.mxu0 %v3352
    %3916 = vmatpush.bf16.msra.mxu0 %v3347
    %3917 = vmatpush.bf16.msra.mxu0 %v3342
    %3918 = vmatpush.bf16.msra.mxu0 %v3337
    %3919 = vmatpush.bf16.msra.mxu0 %v3332
    %3920 = vmatpush.bf16.msra.mxu0 %v3327
    %3921 = vmatpush.bf16.msra.mxu0 %v3322
    %3922 = vmatpush.bf16.msra.mxu0 %v3317
    %3923 = vmatmul.bf16.gmra.mxu0 %v2296
    %v3924 = vpop.f32.mrf.mxu0
    %v3925 = vadd.f32 %v3911, %v3924
    %v3926 = vpop.f32.mrf.mxu0
    %v3927 = vadd.f32 %v3913, %v3926
    %3928 = vdwg.mxu0
    %3929 = vmatpush.bf16.msra.mxu0 %v3392
    %3930 = vmatpush.bf16.msra.mxu0 %v3387
    %3931 = vmatpush.bf16.msra.mxu0 %v3382
    %3932 = vmatpush.bf16.msra.mxu0 %v3377
    %3933 = vmatpush.bf16.msra.mxu0 %v3372
    %3934 = vmatpush.bf16.msra.mxu0 %v3367
    %3935 = vmatpush.bf16.msra.mxu0 %v3362
    %3936 = vmatpush.bf16.msra.mxu0 %v3357
    %3937 = vmatmul.bf16.gmra.mxu0 %v2297
    %v3938 = vpop.f32.mrf.mxu0
    %v3939 = vadd.f32 %v3925, %v3938
    %v3940 = vpop.f32.mrf.mxu0
    %v3941 = vadd.f32 %v3927, %v3940
    %3942 = vdwg.mxu0
    %v3943 = vmul.f32 %v3659, 0.2
    %v3944 = vmul.f32 %v3729, 0.2
    %v3945 = vmul.f32 %v3799, 0.2
    %v3946 = vmul.f32 %v3869, 0.2
    %v3947 = vmul.f32 %v3939, 0.2
    %v3948 = vmul.f32 %v3661, 0.2
    %v3949 = vmul.f32 %v3731, 0.2
    %v3950 = vmul.f32 %v3801, 0.2
    %v3951 = vmul.f32 %v3871, 0.2
    %v3952 = vmul.f32 %v3941, 0.2
    %v3953 = vmax.f32 %v3659, %v3943
    %v3954 = vmax.f32 %v3729, %v3944
    %v3955 = vmax.f32 %v3799, %v3945
    %v3956 = vmax.f32 %v3869, %v3946
    %v3957 = vmax.f32 %v3939, %v3947
    %v3958 = vmax.f32 %v3661, %v3948
    %v3959 = vmax.f32 %v3731, %v3949
    %v3960 = vmax.f32 %v3801, %v3950
    %v3961 = vmax.f32 %v3871, %v3951
    %v3962 = vmax.f32 %v3941, %v3952
    %v3963 = vpack.c.bf16 %v3958, %v3953
    %v3964 = vpack.c.bf16 %v3959, %v3954
    %v3965 = vpack.c.bf16 %v3960, %v3955
    %v3966 = vpack.c.bf16 %v3961, %v3956
    %v3967 = vpack.c.bf16 %v3962, %v3957
    %v3968 = vld [vmem:[#allocation8] sm:$0xff]
    %v3969 = vld [vmem:[#allocation8 + $0x8] sm:$0xff]
    %v3970 = vld [vmem:[#allocation8 + $0x10] sm:$0xf]
    %v3971 = vld [vmem:[#allocation8 + $0x14] sm:$0xff]
    %v3972 = vld [vmem:[#allocation8 + $0x1c] sm:$0xff]
    %v3973 = vld [vmem:[#allocation8 + $0x24] sm:$0xf]
    %v3974 = vld [vmem:[#allocation8 + $0x28] sm:$0xff]
    %v3975 = vld [vmem:[#allocation8 + $0x30] sm:$0xff]
    %v3976 = vld [vmem:[#allocation8 + $0x38] sm:$0xf]
    %v3977 = vld [vmem:[#allocation8 + $0x3c] sm:$0xff]
    %v3978 = vld [vmem:[#allocation8 + $0x44] sm:$0xff]
    %v3979 = vld [vmem:[#allocation8 + $0x4c] sm:$0xf]
    %v3980 = vld [vmem:[#allocation8 + $0x50] sm:$0xff]
    %v3981 = vld [vmem:[#allocation8 + $0x58] sm:$0xff]
    %v3982 = vld [vmem:[#allocation8 + $0x60] sm:$0xf]
    %v3983 = vld [vmem:[#allocation8 + $0x64] sm:$0xff]
    %v3984 = vld [vmem:[#allocation8 + $0x6c] sm:$0xff]
    %v3985 = vld [vmem:[#allocation8 + $0x74] sm:$0xf]
    %v3986 = vld [vmem:[#allocation8 + $0x78] sm:$0xff]
    %v3987 = vld [vmem:[#allocation8 + $0x80] sm:$0xff]
    %v3988 = vld [vmem:[#allocation8 + $0x88] sm:$0xf]
    %v3989 = vld [vmem:[#allocation8 + $0x8c] sm:$0xff]
    %v3990 = vld [vmem:[#allocation8 + $0x94] sm:$0xff]
    %v3991 = vld [vmem:[#allocation8 + $0x9c] sm:$0xf]
    %v3992 = vld [vmem:[#allocation8 + $0xa0] sm:$0xff]
    %v3993 = vld [vmem:[#allocation8 + $0xa8] sm:$0xff]
    %v3994 = vld [vmem:[#allocation8 + $0xb0] sm:$0xf]
    %v3995 = vld [vmem:[#allocation8 + $0xb4] sm:$0xff]
    %v3996 = vld [vmem:[#allocation8 + $0xbc] sm:$0xff]
    %v3997 = vld [vmem:[#allocation8 + $0xc4] sm:$0xf]
    %v3998 = vld [vmem:[#allocation8 + $0xc8] sm:$0xff]
    %v3999 = vld [vmem:[#allocation8 + $0xd0] sm:$0xff]
    %v4000 = vld [vmem:[#allocation8 + $0xd8] sm:$0xf]
    %v4001 = vld [vmem:[#allocation8 + $0xdc] sm:$0xff]
    %v4002 = vld [vmem:[#allocation8 + $0xe4] sm:$0xff]
    %v4003 = vld [vmem:[#allocation8 + $0xec] sm:$0xf]
    %v4004 = vld [vmem:[#allocation8 + $0xf0] sm:$0xff]
    %v4005 = vld [vmem:[#allocation8 + $0xf8] sm:$0xff]
    %v4006 = vld [vmem:[#allocation8 + $0x100] sm:$0xf]
    %v4007 = vld [vmem:[#allocation8 + $0x104] sm:$0xff]
    %v4008 = vld [vmem:[#allocation8 + $0x10c] sm:$0xff]
    %v4009 = vld [vmem:[#allocation8 + $0x114] sm:$0xf]
    %v4010 = vld [vmem:[#allocation8 + $0x118] sm:$0xff]
    %v4011 = vld [vmem:[#allocation8 + $0x120] sm:$0xff]
    %v4012 = vld [vmem:[#allocation8 + $0x128] sm:$0xf]
    %v4013 = vld [vmem:[#allocation8 + $0x12c] sm:$0xff]
    %v4014 = vld [vmem:[#allocation8 + $0x134] sm:$0xff]
    %v4015 = vld [vmem:[#allocation8 + $0x13c] sm:$0xf]
    %v4016 = vld [vmem:[#allocation8 + $0x140] sm:$0xff]
    %v4017 = vld [vmem:[#allocation8 + $0x148] sm:$0xff]
    %v4018 = vld [vmem:[#allocation8 + $0x150] sm:$0xf]
    %v4019 = vld [vmem:[#allocation8 + $0x154] sm:$0xff]
    %v4020 = vld [vmem:[#allocation8 + $0x15c] sm:$0xff]
    %v4021 = vld [vmem:[#allocation8 + $0x164] sm:$0xf]
    %v4022 = vld [vmem:[#allocation8 + $0x168] sm:$0xff]
    %v4023 = vld [vmem:[#allocation8 + $0x170] sm:$0xff]
    %v4024 = vld [vmem:[#allocation8 + $0x178] sm:$0xf]
    %v4025 = vld [vmem:[#allocation8 + $0x17c] sm:$0xff]
    %v4026 = vld [vmem:[#allocation8 + $0x184] sm:$0xff]
    %v4027 = vld [vmem:[#allocation8 + $0x18c] sm:$0xf]
    %v4028 = vld [vmem:[#allocation8 + $0x190] sm:$0xff]
    %v4029 = vld [vmem:[#allocation8 + $0x198] sm:$0xff]
    %v4030 = vld [vmem:[#allocation8 + $0x1a0] sm:$0xf]
    %v4031 = vld [vmem:[#allocation8 + $0x1a4] sm:$0xff]
    %v4032 = vld [vmem:[#allocation8 + $0x1ac] sm:$0xff]
    %v4033 = vld [vmem:[#allocation8 + $0x1b4] sm:$0xf]
    %v4034 = vld [vmem:[#allocation8 + $0x1b8] sm:$0xff]
    %v4035 = vld [vmem:[#allocation8 + $0x1c0] sm:$0xff]
    %v4036 = vld [vmem:[#allocation8 + $0x1c8] sm:$0xf]
    %v4037 = vld [vmem:[#allocation8 + $0x1cc] sm:$0xff]
    %v4038 = vld [vmem:[#allocation8 + $0x1d4] sm:$0xff]
    %v4039 = vld [vmem:[#allocation8 + $0x1dc] sm:$0xf]
    %v4040 = vld [vmem:[#allocation8 + $0x1e0] sm:$0xff]
    %v4041 = vld [vmem:[#allocation8 + $0x1e8] sm:$0xff]
    %v4042 = vld [vmem:[#allocation8 + $0x1f0] sm:$0xf]
    %v4043 = vld [vmem:[#allocation8 + $0x1f4] sm:$0xff]
    %v4044 = vld [vmem:[#allocation8 + $0x1fc] sm:$0xff]
    %v4045 = vld [vmem:[#allocation8 + $0x204] sm:$0xf]
    %v4046 = vld [vmem:[#allocation8 + $0x208] sm:$0xff]
    %v4047 = vld [vmem:[#allocation8 + $0x210] sm:$0xff]
    %v4048 = vld [vmem:[#allocation8 + $0x218] sm:$0xf]
    %v4049 = vld [vmem:[#allocation8 + $0x21c] sm:$0xff]
    %v4050 = vld [vmem:[#allocation8 + $0x224] sm:$0xff]
    %v4051 = vld [vmem:[#allocation8 + $0x22c] sm:$0xf]
    %v4052 = vld [vmem:[#allocation8 + $0x230] sm:$0xff]
    %v4053 = vld [vmem:[#allocation8 + $0x238] sm:$0xff]
    %v4054 = vld [vmem:[#allocation8 + $0x240] sm:$0xf]
    %v4055 = vld [vmem:[#allocation8 + $0x244] sm:$0xff]
    %v4056 = vld [vmem:[#allocation8 + $0x24c] sm:$0xff]
    %v4057 = vld [vmem:[#allocation8 + $0x254] sm:$0xf]
    %v4058 = vld [vmem:[#allocation8 + $0x258] sm:$0xff]
    %v4059 = vld [vmem:[#allocation8 + $0x260] sm:$0xff]
    %v4060 = vld [vmem:[#allocation8 + $0x268] sm:$0xf]
    %v4061 = vld [vmem:[#allocation8 + $0x26c] sm:$0xff]
    %v4062 = vld [vmem:[#allocation8 + $0x274] sm:$0xff]
    %v4063 = vld [vmem:[#allocation8 + $0x27c] sm:$0xf]
    %v4064 = vld [vmem:[#allocation8 + $0x280] sm:$0xff]
    %v4065 = vld [vmem:[#allocation8 + $0x288] sm:$0xff]
    %v4066 = vld [vmem:[#allocation8 + $0x290] sm:$0xf]
    %v4067 = vld [vmem:[#allocation8 + $0x294] sm:$0xff]
    %v4068 = vld [vmem:[#allocation8 + $0x29c] sm:$0xff]
    %v4069 = vld [vmem:[#allocation8 + $0x2a4] sm:$0xf]
    %v4070 = vld [vmem:[#allocation8 + $0x2a8] sm:$0xff]
    %v4071 = vld [vmem:[#allocation8 + $0x2b0] sm:$0xff]
    %v4072 = vld [vmem:[#allocation8 + $0x2b8] sm:$0xf]
    %v4073 = vld [vmem:[#allocation8 + $0x2bc] sm:$0xff]
    %v4074 = vld [vmem:[#allocation8 + $0x2c4] sm:$0xff]
    %v4075 = vld [vmem:[#allocation8 + $0x2cc] sm:$0xf]
    %v4076 = vld [vmem:[#allocation8 + $0x2d0] sm:$0xff]
    %v4077 = vld [vmem:[#allocation8 + $0x2d8] sm:$0xff]
    %v4078 = vld [vmem:[#allocation8 + $0x2e0] sm:$0xf]
    %v4079 = vld [vmem:[#allocation8 + $0x2e4] sm:$0xff]
    %v4080 = vld [vmem:[#allocation8 + $0x2ec] sm:$0xff]
    %v4081 = vld [vmem:[#allocation8 + $0x2f4] sm:$0xf]
    %v4082 = vld [vmem:[#allocation8 + $0x2f8] sm:$0xff]
    %v4083 = vld [vmem:[#allocation8 + $0x300] sm:$0xff]
    %v4084 = vld [vmem:[#allocation8 + $0x308] sm:$0xf]
    %v4085 = vld [vmem:[#allocation8 + $0x30c] sm:$0xff]
    %v4086 = vld [vmem:[#allocation8 + $0x314] sm:$0xff]
    %v4087 = vld [vmem:[#allocation8 + $0x31c] sm:$0xf]
    %v4088 = vld [vmem:[#allocation8 + $0x320] sm:$0xff]
    %v4089 = vld [vmem:[#allocation8 + $0x328] sm:$0xff]
    %v4090 = vld [vmem:[#allocation8 + $0x330] sm:$0xf]
    %v4091 = vld [vmem:[#allocation8 + $0x334] sm:$0xff]
    %v4092 = vld [vmem:[#allocation8 + $0x33c] sm:$0xff]
    %v4093 = vld [vmem:[#allocation8 + $0x344] sm:$0xf]
    %v4094 = vld [vmem:[#allocation8 + $0x348] sm:$0xff]
    %v4095 = vld [vmem:[#allocation8 + $0x350] sm:$0xff]
    %v4096 = vld [vmem:[#allocation8 + $0x358] sm:$0xf]
    %v4097 = vld [vmem:[#allocation8 + $0x35c] sm:$0xff]
    %v4098 = vld [vmem:[#allocation8 + $0x364] sm:$0xff]
    %v4099 = vld [vmem:[#allocation8 + $0x36c] sm:$0xf]
    %v4100 = vld [vmem:[#allocation8 + $0x370] sm:$0xff]
    %v4101 = vld [vmem:[#allocation8 + $0x378] sm:$0xff]
    %v4102 = vld [vmem:[#allocation8 + $0x380] sm:$0xf]
    %v4103 = vld [vmem:[#allocation8 + $0x384] sm:$0xff]
    %v4104 = vld [vmem:[#allocation8 + $0x38c] sm:$0xff]
    %v4105 = vld [vmem:[#allocation8 + $0x394] sm:$0xf]
    %v4106 = vld [vmem:[#allocation8 + $0x398] sm:$0xff]
    %v4107 = vld [vmem:[#allocation8 + $0x3a0] sm:$0xff]
    %v4108 = vld [vmem:[#allocation8 + $0x3a8] sm:$0xf]
    %v4109 = vld [vmem:[#allocation8 + $0x3ac] sm:$0xff]
    %v4110 = vld [vmem:[#allocation8 + $0x3b4] sm:$0xff]
    %v4111 = vld [vmem:[#allocation8 + $0x3bc] sm:$0xf]
    %v4112 = vld [vmem:[#allocation8 + $0x3c0] sm:$0xff]
    %v4113 = vld [vmem:[#allocation8 + $0x3c8] sm:$0xff]
    %v4114 = vld [vmem:[#allocation8 + $0x3d0] sm:$0xf]
    %v4115 = vld [vmem:[#allocation8 + $0x3d4] sm:$0xff]
    %v4116 = vld [vmem:[#allocation8 + $0x3dc] sm:$0xff]
    %v4117 = vld [vmem:[#allocation8 + $0x3e4] sm:$0xf]
    %v4118 = vld [vmem:[#allocation8 + $0x3e8] sm:$0xff]
    %v4119 = vld [vmem:[#allocation8 + $0x3f0] sm:$0xff]
    %v4120 = vld [vmem:[#allocation8 + $0x3f8] sm:$0xf]
    %v4121 = vld [vmem:[#allocation8 + $0x3fc] sm:$0xff]
    %v4122 = vld [vmem:[#allocation8 + $0x404] sm:$0xff]
    %v4123 = vld [vmem:[#allocation8 + $0x40c] sm:$0xf]
    %v4124 = vld [vmem:[#allocation8 + $0x410] sm:$0xff]
    %v4125 = vld [vmem:[#allocation8 + $0x418] sm:$0xff]
    %v4126 = vld [vmem:[#allocation8 + $0x420] sm:$0xf]
    %v4127 = vld [vmem:[#allocation8 + $0x424] sm:$0xff]
    %v4128 = vld [vmem:[#allocation8 + $0x42c] sm:$0xff]
    %v4129 = vld [vmem:[#allocation8 + $0x434] sm:$0xf]
    %v4130 = vld [vmem:[#allocation8 + $0x438] sm:$0xff]
    %v4131 = vld [vmem:[#allocation8 + $0x440] sm:$0xff]
    %v4132 = vld [vmem:[#allocation8 + $0x448] sm:$0xf]
    %v4133 = vld [vmem:[#allocation8 + $0x44c] sm:$0xff]
    %v4134 = vld [vmem:[#allocation8 + $0x454] sm:$0xff]
    %v4135 = vld [vmem:[#allocation8 + $0x45c] sm:$0xf]
    %v4136 = vld [vmem:[#allocation8 + $0x460] sm:$0xff]
    %v4137 = vld [vmem:[#allocation8 + $0x468] sm:$0xff]
    %v4138 = vld [vmem:[#allocation8 + $0x470] sm:$0xf]
    %v4139 = vld [vmem:[#allocation8 + $0x474] sm:$0xff]
    %v4140 = vld [vmem:[#allocation8 + $0x47c] sm:$0xff]
    %v4141 = vld [vmem:[#allocation8 + $0x484] sm:$0xf]
    %v4142 = vld [vmem:[#allocation8 + $0x488] sm:$0xff]
    %v4143 = vld [vmem:[#allocation8 + $0x490] sm:$0xff]
    %v4144 = vld [vmem:[#allocation8 + $0x498] sm:$0xf]
    %v4145 = vld [vmem:[#allocation8 + $0x49c] sm:$0xff]
    %v4146 = vld [vmem:[#allocation8 + $0x4a4] sm:$0xff]
    %v4147 = vld [vmem:[#allocation8 + $0x4ac] sm:$0xf]
    %v4148 = vld [vmem:[#allocation8 + $0x4b0] sm:$0xff]
    %v4149 = vld [vmem:[#allocation8 + $0x4b8] sm:$0xff]
    %v4150 = vld [vmem:[#allocation8 + $0x4c0] sm:$0xf]
    %v4151 = vld [vmem:[#allocation8 + $0x4c4] sm:$0xff]
    %v4152 = vld [vmem:[#allocation8 + $0x4cc] sm:$0xff]
    %v4153 = vld [vmem:[#allocation8 + $0x4d4] sm:$0xf]
    %v4154 = vld [vmem:[#allocation8 + $0x4d8] sm:$0xff]
    %v4155 = vld [vmem:[#allocation8 + $0x4e0] sm:$0xff]
    %v4156 = vld [vmem:[#allocation8 + $0x4e8] sm:$0xf]
    %v4157 = vld [vmem:[#allocation8 + $0x4ec] sm:$0xff]
    %v4158 = vld [vmem:[#allocation8 + $0x4f4] sm:$0xff]
    %v4159 = vld [vmem:[#allocation8 + $0x4fc] sm:$0xf]
    %v4160 = vld [vmem:[#allocation8 + $0x500] sm:$0xff]
    %v4161 = vld [vmem:[#allocation8 + $0x508] sm:$0xff]
    %v4162 = vld [vmem:[#allocation8 + $0x510] sm:$0xf]
    %v4163 = vld [vmem:[#allocation8 + $0x514] sm:$0xff]
    %v4164 = vld [vmem:[#allocation8 + $0x51c] sm:$0xff]
    %v4165 = vld [vmem:[#allocation8 + $0x524] sm:$0xf]
    %v4166 = vld [vmem:[#allocation8 + $0x528] sm:$0xff]
    %v4167 = vld [vmem:[#allocation8 + $0x530] sm:$0xff]
    %v4168 = vld [vmem:[#allocation8 + $0x538] sm:$0xf]
    %v4169 = vld [vmem:[#allocation8 + $0x53c] sm:$0xff]
    %v4170 = vld [vmem:[#allocation8 + $0x544] sm:$0xff]
    %v4171 = vld [vmem:[#allocation8 + $0x54c] sm:$0xf]
    %v4172 = vld [vmem:[#allocation8 + $0x550] sm:$0xff]
    %v4173 = vld [vmem:[#allocation8 + $0x558] sm:$0xff]
    %v4174 = vld [vmem:[#allocation8 + $0x560] sm:$0xf]
    %v4175 = vld [vmem:[#allocation8 + $0x564] sm:$0xff]
    %v4176 = vld [vmem:[#allocation8 + $0x56c] sm:$0xff]
    %v4177 = vld [vmem:[#allocation8 + $0x574] sm:$0xf]
    %v4178 = vld [vmem:[#allocation8 + $0x578] sm:$0xff]
    %v4179 = vld [vmem:[#allocation8 + $0x580] sm:$0xff]
    %v4180 = vld [vmem:[#allocation8 + $0x588] sm:$0xf]
    %v4181 = vld [vmem:[#allocation8 + $0x58c] sm:$0xff]
    %v4182 = vld [vmem:[#allocation8 + $0x594] sm:$0xff]
    %v4183 = vld [vmem:[#allocation8 + $0x59c] sm:$0xf]
    %v4184 = vld [vmem:[#allocation8 + $0x5a0] sm:$0xff]
    %v4185 = vld [vmem:[#allocation8 + $0x5a8] sm:$0xff]
    %v4186 = vld [vmem:[#allocation8 + $0x5b0] sm:$0xf]
    %v4187 = vld [vmem:[#allocation8 + $0x5b4] sm:$0xff]
    %v4188 = vld [vmem:[#allocation8 + $0x5bc] sm:$0xff]
    %v4189 = vld [vmem:[#allocation8 + $0x5c4] sm:$0xf]
    %v4190 = vld [vmem:[#allocation8 + $0x5c8] sm:$0xff]
    %v4191 = vld [vmem:[#allocation8 + $0x5d0] sm:$0xff]
    %v4192 = vld [vmem:[#allocation8 + $0x5d8] sm:$0xf]
    %v4193 = vld [vmem:[#allocation8 + $0x5dc] sm:$0xff]
    %v4194 = vld [vmem:[#allocation8 + $0x5e4] sm:$0xff]
    %v4195 = vld [vmem:[#allocation8 + $0x5ec] sm:$0xf]
    %v4196 = vld [vmem:[#allocation8 + $0x5f0] sm:$0xff]
    %v4197 = vld [vmem:[#allocation8 + $0x5f8] sm:$0xff]
    %v4198 = vld [vmem:[#allocation8 + $0x600] sm:$0xf]
    %v4199 = vld [vmem:[#allocation8 + $0x604] sm:$0xff]
    %v4200 = vld [vmem:[#allocation8 + $0x60c] sm:$0xff]
    %v4201 = vld [vmem:[#allocation8 + $0x614] sm:$0xf]
    %v4202 = vld [vmem:[#allocation8 + $0x618] sm:$0xff]
    %v4203 = vld [vmem:[#allocation8 + $0x620] sm:$0xff]
    %v4204 = vld [vmem:[#allocation8 + $0x628] sm:$0xf]
    %v4205 = vld [vmem:[#allocation8 + $0x62c] sm:$0xff]
    %v4206 = vld [vmem:[#allocation8 + $0x634] sm:$0xff]
    %v4207 = vld [vmem:[#allocation8 + $0x63c] sm:$0xf]
    %s4208 = scalar_lea.vmem [#allocation14], 2
    %v4209 = vld [vmem:[%s4208] ss:$8 sm:$0xf]
    %v4210 = vld [vmem:[%s4208] ss:$8 sm:$0x10]
    %v4211 = vor.u32 %v4209, %v4210
    %v4213 = vperm.slane %v4211, 0
    %v4214 = vperm.slane %v4211, 1
    %v4215 = vperm.slane %v4211, 2
    %v4216 = vperm.slane %v4211, 3
    %v4217 = vperm.slane %v4211, 4
    %v4463 = vunpack.c.l.b16 %v3968
    %v4464 = vunpack.c.h.b16 %v3968
    %v4465 = vunpack.c.l.b16 %v3969
    %v4466 = vunpack.c.h.b16 %v3969
    %v4467 = vunpack.c.l.b16 %v3970
    %v4468 = vunpack.c.l.b16 %v3971
    %v4469 = vunpack.c.h.b16 %v3971
    %v4470 = vunpack.c.l.b16 %v3972
    %v4471 = vunpack.c.h.b16 %v3972
    %v4472 = vunpack.c.l.b16 %v3973
    %v4473 = vunpack.c.l.b16 %v3974
    %v4474 = vunpack.c.h.b16 %v3974
    %v4475 = vunpack.c.l.b16 %v3975
    %v4476 = vunpack.c.h.b16 %v3975
    %v4477 = vunpack.c.l.b16 %v3976
    %v4478 = vunpack.c.l.b16 %v3977
    %v4479 = vunpack.c.h.b16 %v3977
    %v4480 = vunpack.c.l.b16 %v3978
    %v4481 = vunpack.c.h.b16 %v3978
    %v4482 = vunpack.c.l.b16 %v3979
    %v4483 = vunpack.c.l.b16 %v3980
    %v4484 = vunpack.c.h.b16 %v3980
    %v4485 = vunpack.c.l.b16 %v3981
    %v4486 = vunpack.c.h.b16 %v3981
    %v4487 = vunpack.c.l.b16 %v3982
    %v4488 = vunpack.c.l.b16 %v3983
    %v4489 = vunpack.c.h.b16 %v3983
    %v4490 = vunpack.c.l.b16 %v3984
    %v4491 = vunpack.c.h.b16 %v3984
    %v4492 = vunpack.c.l.b16 %v3985
    %v4493 = vunpack.c.l.b16 %v3986
    %v4494 = vunpack.c.h.b16 %v3986
    %v4495 = vunpack.c.l.b16 %v3987
    %v4496 = vunpack.c.h.b16 %v3987
    %v4497 = vunpack.c.l.b16 %v3988
    %v4498 = vunpack.c.l.b16 %v3989
    %v4499 = vunpack.c.h.b16 %v3989
    %v4500 = vunpack.c.l.b16 %v3990
    %v4501 = vunpack.c.h.b16 %v3990
    %v4502 = vunpack.c.l.b16 %v3991
    %v4503 = vunpack.c.l.b16 %v3992
    %v4504 = vunpack.c.h.b16 %v3992
    %v4505 = vunpack.c.l.b16 %v3993
    %v4506 = vunpack.c.h.b16 %v3993
    %v4507 = vunpack.c.l.b16 %v3994
    %v4508 = vunpack.c.l.b16 %v3995
    %v4509 = vunpack.c.h.b16 %v3995
    %v4510 = vunpack.c.l.b16 %v3996
    %v4511 = vunpack.c.h.b16 %v3996
    %v4512 = vunpack.c.l.b16 %v3997
    %v4513 = vunpack.c.l.b16 %v3998
    %v4514 = vunpack.c.h.b16 %v3998
    %v4515 = vunpack.c.l.b16 %v3999
    %v4516 = vunpack.c.h.b16 %v3999
    %v4517 = vunpack.c.l.b16 %v4000
    %v4518 = vunpack.c.l.b16 %v4001
    %v4519 = vunpack.c.h.b16 %v4001
    %v4520 = vunpack.c.l.b16 %v4002
    %v4521 = vunpack.c.h.b16 %v4002
    %v4522 = vunpack.c.l.b16 %v4003
    %v4523 = vunpack.c.l.b16 %v4004
    %v4524 = vunpack.c.h.b16 %v4004
    %v4525 = vunpack.c.l.b16 %v4005
    %v4526 = vunpack.c.h.b16 %v4005
    %v4527 = vunpack.c.l.b16 %v4006
    %v4528 = vunpack.c.l.b16 %v4007
    %v4529 = vunpack.c.h.b16 %v4007
    %v4530 = vunpack.c.l.b16 %v4008
    %v4531 = vunpack.c.h.b16 %v4008
    %v4532 = vunpack.c.l.b16 %v4009
    %v4533 = vunpack.c.l.b16 %v4010
    %v4534 = vunpack.c.h.b16 %v4010
    %v4535 = vunpack.c.l.b16 %v4011
    %v4536 = vunpack.c.h.b16 %v4011
    %v4537 = vunpack.c.l.b16 %v4012
    %v4538 = vunpack.c.l.b16 %v4013
    %v4539 = vunpack.c.h.b16 %v4013
    %v4540 = vunpack.c.l.b16 %v4014
    %v4541 = vunpack.c.h.b16 %v4014
    %v4542 = vunpack.c.l.b16 %v4015
    %v4543 = vunpack.c.l.b16 %v4016
    %v4544 = vunpack.c.h.b16 %v4016
    %v4545 = vunpack.c.l.b16 %v4017
    %v4546 = vunpack.c.h.b16 %v4017
    %v4547 = vunpack.c.l.b16 %v4018
    %v4548 = vunpack.c.l.b16 %v4019
    %v4549 = vunpack.c.h.b16 %v4019
    %v4550 = vunpack.c.l.b16 %v4020
    %v4551 = vunpack.c.h.b16 %v4020
    %v4552 = vunpack.c.l.b16 %v4021
    %v4553 = vunpack.c.l.b16 %v4022
    %v4554 = vunpack.c.h.b16 %v4022
    %v4555 = vunpack.c.l.b16 %v4023
    %v4556 = vunpack.c.h.b16 %v4023
    %v4557 = vunpack.c.l.b16 %v4024
    %v4558 = vunpack.c.l.b16 %v4025
    %v4559 = vunpack.c.h.b16 %v4025
    %v4560 = vunpack.c.l.b16 %v4026
    %v4561 = vunpack.c.h.b16 %v4026
    %v4562 = vunpack.c.l.b16 %v4027
    %v4563 = vunpack.c.l.b16 %v4028
    %v4564 = vunpack.c.h.b16 %v4028
    %v4565 = vunpack.c.l.b16 %v4029
    %v4566 = vunpack.c.h.b16 %v4029
    %v4567 = vunpack.c.l.b16 %v4030
    %v4568 = vunpack.c.l.b16 %v4031
    %v4569 = vunpack.c.h.b16 %v4031
    %v4570 = vunpack.c.l.b16 %v4032
    %v4571 = vunpack.c.h.b16 %v4032
    %v4572 = vunpack.c.l.b16 %v4033
    %v4573 = vunpack.c.l.b16 %v4034
    %v4574 = vunpack.c.h.b16 %v4034
    %v4575 = vunpack.c.l.b16 %v4035
    %v4576 = vunpack.c.h.b16 %v4035
    %v4577 = vunpack.c.l.b16 %v4036
    %v4578 = vunpack.c.l.b16 %v4037
    %v4579 = vunpack.c.h.b16 %v4037
    %v4580 = vunpack.c.l.b16 %v4038
    %v4581 = vunpack.c.h.b16 %v4038
    %v4582 = vunpack.c.l.b16 %v4039
    %v4583 = vunpack.c.l.b16 %v4040
    %v4584 = vunpack.c.h.b16 %v4040
    %v4585 = vunpack.c.l.b16 %v4041
    %v4586 = vunpack.c.h.b16 %v4041
    %v4587 = vunpack.c.l.b16 %v4042
    %v4588 = vunpack.c.l.b16 %v4043
    %v4589 = vunpack.c.h.b16 %v4043
    %v4590 = vunpack.c.l.b16 %v4044
    %v4591 = vunpack.c.h.b16 %v4044
    %v4592 = vunpack.c.l.b16 %v4045
    %v4593 = vunpack.c.l.b16 %v4046
    %v4594 = vunpack.c.h.b16 %v4046
    %v4595 = vunpack.c.l.b16 %v4047
    %v4596 = vunpack.c.h.b16 %v4047
    %v4597 = vunpack.c.l.b16 %v4048
    %v4598 = vunpack.c.l.b16 %v4049
    %v4599 = vunpack.c.h.b16 %v4049
    %v4600 = vunpack.c.l.b16 %v4050
    %v4601 = vunpack.c.h.b16 %v4050
    %v4602 = vunpack.c.l.b16 %v4051
    %v4603 = vunpack.c.l.b16 %v4052
    %v4604 = vunpack.c.h.b16 %v4052
    %v4605 = vunpack.c.l.b16 %v4053
    %v4606 = vunpack.c.h.b16 %v4053
    %v4607 = vunpack.c.l.b16 %v4054
    %v4608 = vunpack.c.l.b16 %v4055
    %v4609 = vunpack.c.h.b16 %v4055
    %v4610 = vunpack.c.l.b16 %v4056
    %v4611 = vunpack.c.h.b16 %v4056
    %v4612 = vunpack.c.l.b16 %v4057
    %v4613 = vunpack.c.l.b16 %v4058
    %v4614 = vunpack.c.h.b16 %v4058
    %v4615 = vunpack.c.l.b16 %v4059
    %v4616 = vunpack.c.h.b16 %v4059
    %v4617 = vunpack.c.l.b16 %v4060
    %v4618 = vunpack.c.l.b16 %v4061
    %v4619 = vunpack.c.h.b16 %v4061
    %v4620 = vunpack.c.l.b16 %v4062
    %v4621 = vunpack.c.h.b16 %v4062
    %v4622 = vunpack.c.l.b16 %v4063
    %v4623 = vunpack.c.l.b16 %v4064
    %v4624 = vunpack.c.h.b16 %v4064
    %v4625 = vunpack.c.l.b16 %v4065
    %v4626 = vunpack.c.h.b16 %v4065
    %v4627 = vunpack.c.l.b16 %v4066
    %v4628 = vunpack.c.l.b16 %v4067
    %v4629 = vunpack.c.h.b16 %v4067
    %v4630 = vunpack.c.l.b16 %v4068
    %v4631 = vunpack.c.h.b16 %v4068
    %v4632 = vunpack.c.l.b16 %v4069
    %v4633 = vunpack.c.l.b16 %v4070
    %v4634 = vunpack.c.h.b16 %v4070
    %v4635 = vunpack.c.l.b16 %v4071
    %v4636 = vunpack.c.h.b16 %v4071
    %v4637 = vunpack.c.l.b16 %v4072
    %v4638 = vunpack.c.l.b16 %v4073
    %v4639 = vunpack.c.h.b16 %v4073
    %v4640 = vunpack.c.l.b16 %v4074
    %v4641 = vunpack.c.h.b16 %v4074
    %v4642 = vunpack.c.l.b16 %v4075
    %v4643 = vunpack.c.l.b16 %v4076
    %v4644 = vunpack.c.h.b16 %v4076
    %v4645 = vunpack.c.l.b16 %v4077
    %v4646 = vunpack.c.h.b16 %v4077
    %v4647 = vunpack.c.l.b16 %v4078
    %v4648 = vunpack.c.l.b16 %v4079
    %v4649 = vunpack.c.h.b16 %v4079
    %v4650 = vunpack.c.l.b16 %v4080
    %v4651 = vunpack.c.h.b16 %v4080
    %v4652 = vunpack.c.l.b16 %v4081
    %v4653 = vunpack.c.l.b16 %v4082
    %v4654 = vunpack.c.h.b16 %v4082
    %v4655 = vunpack.c.l.b16 %v4083
    %v4656 = vunpack.c.h.b16 %v4083
    %v4657 = vunpack.c.l.b16 %v4084
    %v4658 = vunpack.c.l.b16 %v4085
    %v4659 = vunpack.c.h.b16 %v4085
    %v4660 = vunpack.c.l.b16 %v4086
    %v4661 = vunpack.c.h.b16 %v4086
    %v4662 = vunpack.c.l.b16 %v4087
    %v4663 = vunpack.c.l.b16 %v4088
    %v4664 = vunpack.c.h.b16 %v4088
    %v4665 = vunpack.c.l.b16 %v4089
    %v4666 = vunpack.c.h.b16 %v4089
    %v4667 = vunpack.c.l.b16 %v4090
    %v4668 = vunpack.c.l.b16 %v4091
    %v4669 = vunpack.c.h.b16 %v4091
    %v4670 = vunpack.c.l.b16 %v4092
    %v4671 = vunpack.c.h.b16 %v4092
    %v4672 = vunpack.c.l.b16 %v4093
    %v4673 = vunpack.c.l.b16 %v4094
    %v4674 = vunpack.c.h.b16 %v4094
    %v4675 = vunpack.c.l.b16 %v4095
    %v4676 = vunpack.c.h.b16 %v4095
    %v4677 = vunpack.c.l.b16 %v4096
    %v4678 = vunpack.c.l.b16 %v4097
    %v4679 = vunpack.c.h.b16 %v4097
    %v4680 = vunpack.c.l.b16 %v4098
    %v4681 = vunpack.c.h.b16 %v4098
    %v4682 = vunpack.c.l.b16 %v4099
    %v4683 = vunpack.c.l.b16 %v4100
    %v4684 = vunpack.c.h.b16 %v4100
    %v4685 = vunpack.c.l.b16 %v4101
    %v4686 = vunpack.c.h.b16 %v4101
    %v4687 = vunpack.c.l.b16 %v4102
    %v4688 = vunpack.c.l.b16 %v4103
    %v4689 = vunpack.c.h.b16 %v4103
    %v4690 = vunpack.c.l.b16 %v4104
    %v4691 = vunpack.c.h.b16 %v4104
    %v4692 = vunpack.c.l.b16 %v4105
    %v4693 = vunpack.c.l.b16 %v4106
    %v4694 = vunpack.c.h.b16 %v4106
    %v4695 = vunpack.c.l.b16 %v4107
    %v4696 = vunpack.c.h.b16 %v4107
    %v4697 = vunpack.c.l.b16 %v4108
    %v4698 = vunpack.c.l.b16 %v4109
    %v4699 = vunpack.c.h.b16 %v4109
    %v4700 = vunpack.c.l.b16 %v4110
    %v4701 = vunpack.c.h.b16 %v4110
    %v4702 = vunpack.c.l.b16 %v4111
    %v4703 = vunpack.c.l.b16 %v4112
    %v4704 = vunpack.c.h.b16 %v4112
    %v4705 = vunpack.c.l.b16 %v4113
    %v4706 = vunpack.c.h.b16 %v4113
    %v4707 = vunpack.c.l.b16 %v4114
    %v4708 = vunpack.c.l.b16 %v4115
    %v4709 = vunpack.c.h.b16 %v4115
    %v4710 = vunpack.c.l.b16 %v4116
    %v4711 = vunpack.c.h.b16 %v4116
    %v4712 = vunpack.c.l.b16 %v4117
    %v4713 = vunpack.c.l.b16 %v4118
    %v4714 = vunpack.c.h.b16 %v4118
    %v4715 = vunpack.c.l.b16 %v4119
    %v4716 = vunpack.c.h.b16 %v4119
    %v4717 = vunpack.c.l.b16 %v4120
    %v4718 = vunpack.c.l.b16 %v4121
    %v4719 = vunpack.c.h.b16 %v4121
    %v4720 = vunpack.c.l.b16 %v4122
    %v4721 = vunpack.c.h.b16 %v4122
    %v4722 = vunpack.c.l.b16 %v4123
    %v4723 = vunpack.c.l.b16 %v4124
    %v4724 = vunpack.c.h.b16 %v4124
    %v4725 = vunpack.c.l.b16 %v4125
    %v4726 = vunpack.c.h.b16 %v4125
    %v4727 = vunpack.c.l.b16 %v4126
    %v4728 = vunpack.c.l.b16 %v4127
    %v4729 = vunpack.c.h.b16 %v4127
    %v4730 = vunpack.c.l.b16 %v4128
    %v4731 = vunpack.c.h.b16 %v4128
    %v4732 = vunpack.c.l.b16 %v4129
    %v4733 = vunpack.c.l.b16 %v4130
    %v4734 = vunpack.c.h.b16 %v4130
    %v4735 = vunpack.c.l.b16 %v4131
    %v4736 = vunpack.c.h.b16 %v4131
    %v4737 = vunpack.c.l.b16 %v4132
    %v4738 = vunpack.c.l.b16 %v4133
    %v4739 = vunpack.c.h.b16 %v4133
    %v4740 = vunpack.c.l.b16 %v4134
    %v4741 = vunpack.c.h.b16 %v4134
    %v4742 = vunpack.c.l.b16 %v4135
    %v4743 = vunpack.c.l.b16 %v4136
    %v4744 = vunpack.c.h.b16 %v4136
    %v4745 = vunpack.c.l.b16 %v4137
    %v4746 = vunpack.c.h.b16 %v4137
    %v4747 = vunpack.c.l.b16 %v4138
    %v4748 = vunpack.c.l.b16 %v4139
    %v4749 = vunpack.c.h.b16 %v4139
    %v4750 = vunpack.c.l.b16 %v4140
    %v4751 = vunpack.c.h.b16 %v4140
    %v4752 = vunpack.c.l.b16 %v4141
    %v4753 = vunpack.c.l.b16 %v4142
    %v4754 = vunpack.c.h.b16 %v4142
    %v4755 = vunpack.c.l.b16 %v4143
    %v4756 = vunpack.c.h.b16 %v4143
    %v4757 = vunpack.c.l.b16 %v4144
    %v4758 = vunpack.c.l.b16 %v4145
    %v4759 = vunpack.c.h.b16 %v4145
    %v4760 = vunpack.c.l.b16 %v4146
    %v4761 = vunpack.c.h.b16 %v4146
    %v4762 = vunpack.c.l.b16 %v4147
    %v4763 = vunpack.c.l.b16 %v4148
    %v4764 = vunpack.c.h.b16 %v4148
    %v4765 = vunpack.c.l.b16 %v4149
    %v4766 = vunpack.c.h.b16 %v4149
    %v4767 = vunpack.c.l.b16 %v4150
    %v4768 = vunpack.c.l.b16 %v4151
    %v4769 = vunpack.c.h.b16 %v4151
    %v4770 = vunpack.c.l.b16 %v4152
    %v4771 = vunpack.c.h.b16 %v4152
    %v4772 = vunpack.c.l.b16 %v4153
    %v4773 = vunpack.c.l.b16 %v4154
    %v4774 = vunpack.c.h.b16 %v4154
    %v4775 = vunpack.c.l.b16 %v4155
    %v4776 = vunpack.c.h.b16 %v4155
    %v4777 = vunpack.c.l.b16 %v4156
    %v4778 = vunpack.c.l.b16 %v4157
    %v4779 = vunpack.c.h.b16 %v4157
    %v4780 = vunpack.c.l.b16 %v4158
    %v4781 = vunpack.c.h.b16 %v4158
    %v4782 = vunpack.c.l.b16 %v4159
    %v4783 = vunpack.c.l.b16 %v4160
    %v4784 = vunpack.c.h.b16 %v4160
    %v4785 = vunpack.c.l.b16 %v4161
    %v4786 = vunpack.c.h.b16 %v4161
    %v4787 = vunpack.c.l.b16 %v4162
    %v4788 = vunpack.c.l.b16 %v4163
    %v4789 = vunpack.c.h.b16 %v4163
    %v4790 = vunpack.c.l.b16 %v4164
    %v4791 = vunpack.c.h.b16 %v4164
    %v4792 = vunpack.c.l.b16 %v4165
    %v4793 = vunpack.c.l.b16 %v4166
    %v4794 = vunpack.c.h.b16 %v4166
    %v4795 = vunpack.c.l.b16 %v4167
    %v4796 = vunpack.c.h.b16 %v4167
    %v4797 = vunpack.c.l.b16 %v4168
    %v4798 = vunpack.c.l.b16 %v4169
    %v4799 = vunpack.c.h.b16 %v4169
    %v4800 = vunpack.c.l.b16 %v4170
    %v4801 = vunpack.c.h.b16 %v4170
    %v4802 = vunpack.c.l.b16 %v4171
    %v4803 = vunpack.c.l.b16 %v4172
    %v4804 = vunpack.c.h.b16 %v4172
    %v4805 = vunpack.c.l.b16 %v4173
    %v4806 = vunpack.c.h.b16 %v4173
    %v4807 = vunpack.c.l.b16 %v4174
    %v4808 = vunpack.c.l.b16 %v4175
    %v4809 = vunpack.c.h.b16 %v4175
    %v4810 = vunpack.c.l.b16 %v4176
    %v4811 = vunpack.c.h.b16 %v4176
    %v4812 = vunpack.c.l.b16 %v4177
    %v4813 = vunpack.c.l.b16 %v4178
    %v4814 = vunpack.c.h.b16 %v4178
    %v4815 = vunpack.c.l.b16 %v4179
    %v4816 = vunpack.c.h.b16 %v4179
    %v4817 = vunpack.c.l.b16 %v4180
    %v4818 = vunpack.c.l.b16 %v4181
    %v4819 = vunpack.c.h.b16 %v4181
    %v4820 = vunpack.c.l.b16 %v4182
    %v4821 = vunpack.c.h.b16 %v4182
    %v4822 = vunpack.c.l.b16 %v4183
    %v4823 = vunpack.c.l.b16 %v4184
    %v4824 = vunpack.c.h.b16 %v4184
    %v4825 = vunpack.c.l.b16 %v4185
    %v4826 = vunpack.c.h.b16 %v4185
    %v4827 = vunpack.c.l.b16 %v4186
    %v4828 = vunpack.c.l.b16 %v4187
    %v4829 = vunpack.c.h.b16 %v4187
    %v4830 = vunpack.c.l.b16 %v4188
    %v4831 = vunpack.c.h.b16 %v4188
    %v4832 = vunpack.c.l.b16 %v4189
    %v4833 = vunpack.c.l.b16 %v4190
    %v4834 = vunpack.c.h.b16 %v4190
    %v4835 = vunpack.c.l.b16 %v4191
    %v4836 = vunpack.c.h.b16 %v4191
    %v4837 = vunpack.c.l.b16 %v4192
    %v4838 = vunpack.c.l.b16 %v4193
    %v4839 = vunpack.c.h.b16 %v4193
    %v4840 = vunpack.c.l.b16 %v4194
    %v4841 = vunpack.c.h.b16 %v4194
    %v4842 = vunpack.c.l.b16 %v4195
    %v4843 = vunpack.c.l.b16 %v4196
    %v4844 = vunpack.c.h.b16 %v4196
    %v4845 = vunpack.c.l.b16 %v4197
    %v4846 = vunpack.c.h.b16 %v4197
    %v4847 = vunpack.c.l.b16 %v4198
    %v4848 = vunpack.c.l.b16 %v4199
    %v4849 = vunpack.c.h.b16 %v4199
    %v4850 = vunpack.c.l.b16 %v4200
    %v4851 = vunpack.c.h.b16 %v4200
    %v4852 = vunpack.c.l.b16 %v4201
    %v4853 = vunpack.c.l.b16 %v4202
    %v4854 = vunpack.c.h.b16 %v4202
    %v4855 = vunpack.c.l.b16 %v4203
    %v4856 = vunpack.c.h.b16 %v4203
    %v4857 = vunpack.c.l.b16 %v4204
    %v4858 = vunpack.c.l.b16 %v4205
    %v4859 = vunpack.c.h.b16 %v4205
    %v4860 = vunpack.c.l.b16 %v4206
    %v4861 = vunpack.c.h.b16 %v4206
    %v4862 = vunpack.c.l.b16 %v4207
    %v4863 = vpack.c.b16 %v4468, %v4463
    %v4864 = vpack.c.b16 %v4469, %v4464
    %v4865 = vpack.c.b16 %v4470, %v4465
    %v4866 = vpack.c.b16 %v4471, %v4466
    %v4867 = vpack.c.b16 %v4472, %v4467
    %v4868 = vpack.c.b16 %v4478, %v4473
    %v4869 = vpack.c.b16 %v4479, %v4474
    %v4870 = vpack.c.b16 %v4480, %v4475
    %v4871 = vpack.c.b16 %v4481, %v4476
    %v4872 = vpack.c.b16 %v4482, %v4477
    %v4873 = vpack.c.b16 %v4488, %v4483
    %v4874 = vpack.c.b16 %v4489, %v4484
    %v4875 = vpack.c.b16 %v4490, %v4485
    %v4876 = vpack.c.b16 %v4491, %v4486
    %v4877 = vpack.c.b16 %v4492, %v4487
    %v4878 = vpack.c.b16 %v4498, %v4493
    %v4879 = vpack.c.b16 %v4499, %v4494
    %v4880 = vpack.c.b16 %v4500, %v4495
    %v4881 = vpack.c.b16 %v4501, %v4496
    %v4882 = vpack.c.b16 %v4502, %v4497
    %v4883 = vpack.c.b16 %v4508, %v4503
    %v4884 = vpack.c.b16 %v4509, %v4504
    %v4885 = vpack.c.b16 %v4510, %v4505
    %v4886 = vpack.c.b16 %v4511, %v4506
    %v4887 = vpack.c.b16 %v4512, %v4507
    %v4888 = vpack.c.b16 %v4518, %v4513
    %v4889 = vpack.c.b16 %v4519, %v4514
    %v4890 = vpack.c.b16 %v4520, %v4515
    %v4891 = vpack.c.b16 %v4521, %v4516
    %v4892 = vpack.c.b16 %v4522, %v4517
    %v4893 = vpack.c.b16 %v4528, %v4523
    %v4894 = vpack.c.b16 %v4529, %v4524
    %v4895 = vpack.c.b16 %v4530, %v4525
    %v4896 = vpack.c.b16 %v4531, %v4526
    %v4897 = vpack.c.b16 %v4532, %v4527
    %v4898 = vpack.c.b16 %v4538, %v4533
    %v4899 = vpack.c.b16 %v4539, %v4534
    %v4900 = vpack.c.b16 %v4540, %v4535
    %v4901 = vpack.c.b16 %v4541, %v4536
    %v4902 = vpack.c.b16 %v4542, %v4537
    %v4903 = vpack.c.b16 %v4548, %v4543
    %v4904 = vpack.c.b16 %v4549, %v4544
    %v4905 = vpack.c.b16 %v4550, %v4545
    %v4906 = vpack.c.b16 %v4551, %v4546
    %v4907 = vpack.c.b16 %v4552, %v4547
    %v4908 = vpack.c.b16 %v4558, %v4553
    %v4909 = vpack.c.b16 %v4559, %v4554
    %v4910 = vpack.c.b16 %v4560, %v4555
    %v4911 = vpack.c.b16 %v4561, %v4556
    %v4912 = vpack.c.b16 %v4562, %v4557
    %v4913 = vpack.c.b16 %v4568, %v4563
    %v4914 = vpack.c.b16 %v4569, %v4564
    %v4915 = vpack.c.b16 %v4570, %v4565
    %v4916 = vpack.c.b16 %v4571, %v4566
    %v4917 = vpack.c.b16 %v4572, %v4567
    %v4918 = vpack.c.b16 %v4578, %v4573
    %v4919 = vpack.c.b16 %v4579, %v4574
    %v4920 = vpack.c.b16 %v4580, %v4575
    %v4921 = vpack.c.b16 %v4581, %v4576
    %v4922 = vpack.c.b16 %v4582, %v4577
    %v4923 = vpack.c.b16 %v4588, %v4583
    %v4924 = vpack.c.b16 %v4589, %v4584
    %v4925 = vpack.c.b16 %v4590, %v4585
    %v4926 = vpack.c.b16 %v4591, %v4586
    %v4927 = vpack.c.b16 %v4592, %v4587
    %v4928 = vpack.c.b16 %v4598, %v4593
    %v4929 = vpack.c.b16 %v4599, %v4594
    %v4930 = vpack.c.b16 %v4600, %v4595
    %v4931 = vpack.c.b16 %v4601, %v4596
    %v4932 = vpack.c.b16 %v4602, %v4597
    %v4933 = vpack.c.b16 %v4608, %v4603
    %v4934 = vpack.c.b16 %v4609, %v4604
    %v4935 = vpack.c.b16 %v4610, %v4605
    %v4936 = vpack.c.b16 %v4611, %v4606
    %v4937 = vpack.c.b16 %v4612, %v4607
    %v4938 = vpack.c.b16 %v4618, %v4613
    %v4939 = vpack.c.b16 %v4619, %v4614
    %v4940 = vpack.c.b16 %v4620, %v4615
    %v4941 = vpack.c.b16 %v4621, %v4616
    %v4942 = vpack.c.b16 %v4622, %v4617
    %v4943 = vpack.c.b16 %v4628, %v4623
    %v4944 = vpack.c.b16 %v4629, %v4624
    %v4945 = vpack.c.b16 %v4630, %v4625
    %v4946 = vpack.c.b16 %v4631, %v4626
    %v4947 = vpack.c.b16 %v4632, %v4627
    %v4948 = vpack.c.b16 %v4638, %v4633
    %v4949 = vpack.c.b16 %v4639, %v4634
    %v4950 = vpack.c.b16 %v4640, %v4635
    %v4951 = vpack.c.b16 %v4641, %v4636
    %v4952 = vpack.c.b16 %v4642, %v4637
    %v4953 = vpack.c.b16 %v4648, %v4643
    %v4954 = vpack.c.b16 %v4649, %v4644
    %v4955 = vpack.c.b16 %v4650, %v4645
    %v4956 = vpack.c.b16 %v4651, %v4646
    %v4957 = vpack.c.b16 %v4652, %v4647
    %v4958 = vpack.c.b16 %v4658, %v4653
    %v4959 = vpack.c.b16 %v4659, %v4654
    %v4960 = vpack.c.b16 %v4660, %v4655
    %v4961 = vpack.c.b16 %v4661, %v4656
    %v4962 = vpack.c.b16 %v4662, %v4657
    %v4963 = vpack.c.b16 %v4668, %v4663
    %v4964 = vpack.c.b16 %v4669, %v4664
    %v4965 = vpack.c.b16 %v4670, %v4665
    %v4966 = vpack.c.b16 %v4671, %v4666
    %v4967 = vpack.c.b16 %v4672, %v4667
    %v4968 = vpack.c.b16 %v4678, %v4673
    %v4969 = vpack.c.b16 %v4679, %v4674
    %v4970 = vpack.c.b16 %v4680, %v4675
    %v4971 = vpack.c.b16 %v4681, %v4676
    %v4972 = vpack.c.b16 %v4682, %v4677
    %v4973 = vpack.c.b16 %v4688, %v4683
    %v4974 = vpack.c.b16 %v4689, %v4684
    %v4975 = vpack.c.b16 %v4690, %v4685
    %v4976 = vpack.c.b16 %v4691, %v4686
    %v4977 = vpack.c.b16 %v4692, %v4687
    %v4978 = vpack.c.b16 %v4698, %v4693
    %v4979 = vpack.c.b16 %v4699, %v4694
    %v4980 = vpack.c.b16 %v4700, %v4695
    %v4981 = vpack.c.b16 %v4701, %v4696
    %v4982 = vpack.c.b16 %v4702, %v4697
    %v4983 = vpack.c.b16 %v4708, %v4703
    %v4984 = vpack.c.b16 %v4709, %v4704
    %v4985 = vpack.c.b16 %v4710, %v4705
    %v4986 = vpack.c.b16 %v4711, %v4706
    %v4987 = vpack.c.b16 %v4712, %v4707
    %v4988 = vpack.c.b16 %v4718, %v4713
    %v4989 = vpack.c.b16 %v4719, %v4714
    %v4990 = vpack.c.b16 %v4720, %v4715
    %v4991 = vpack.c.b16 %v4721, %v4716
    %v4992 = vpack.c.b16 %v4722, %v4717
    %v4993 = vpack.c.b16 %v4728, %v4723
    %v4994 = vpack.c.b16 %v4729, %v4724
    %v4995 = vpack.c.b16 %v4730, %v4725
    %v4996 = vpack.c.b16 %v4731, %v4726
    %v4997 = vpack.c.b16 %v4732, %v4727
    %v4998 = vpack.c.b16 %v4738, %v4733
    %v4999 = vpack.c.b16 %v4739, %v4734
    %v5000 = vpack.c.b16 %v4740, %v4735
    %v5001 = vpack.c.b16 %v4741, %v4736
    %v5002 = vpack.c.b16 %v4742, %v4737
    %v5003 = vpack.c.b16 %v4748, %v4743
    %v5004 = vpack.c.b16 %v4749, %v4744
    %v5005 = vpack.c.b16 %v4750, %v4745
    %v5006 = vpack.c.b16 %v4751, %v4746
    %v5007 = vpack.c.b16 %v4752, %v4747
    %v5008 = vpack.c.b16 %v4758, %v4753
    %v5009 = vpack.c.b16 %v4759, %v4754
    %v5010 = vpack.c.b16 %v4760, %v4755
    %v5011 = vpack.c.b16 %v4761, %v4756
    %v5012 = vpack.c.b16 %v4762, %v4757
    %v5013 = vpack.c.b16 %v4768, %v4763
    %v5014 = vpack.c.b16 %v4769, %v4764
    %v5015 = vpack.c.b16 %v4770, %v4765
    %v5016 = vpack.c.b16 %v4771, %v4766
    %v5017 = vpack.c.b16 %v4772, %v4767
    %v5018 = vpack.c.b16 %v4778, %v4773
    %v5019 = vpack.c.b16 %v4779, %v4774
    %v5020 = vpack.c.b16 %v4780, %v4775
    %v5021 = vpack.c.b16 %v4781, %v4776
    %v5022 = vpack.c.b16 %v4782, %v4777
    %v5023 = vpack.c.b16 %v4788, %v4783
    %v5024 = vpack.c.b16 %v4789, %v4784
    %v5025 = vpack.c.b16 %v4790, %v4785
    %v5026 = vpack.c.b16 %v4791, %v4786
    %v5027 = vpack.c.b16 %v4792, %v4787
    %v5028 = vpack.c.b16 %v4798, %v4793
    %v5029 = vpack.c.b16 %v4799, %v4794
    %v5030 = vpack.c.b16 %v4800, %v4795
    %v5031 = vpack.c.b16 %v4801, %v4796
    %v5032 = vpack.c.b16 %v4802, %v4797
    %v5033 = vpack.c.b16 %v4808, %v4803
    %v5034 = vpack.c.b16 %v4809, %v4804
    %v5035 = vpack.c.b16 %v4810, %v4805
    %v5036 = vpack.c.b16 %v4811, %v4806
    %v5037 = vpack.c.b16 %v4812, %v4807
    %v5038 = vpack.c.b16 %v4818, %v4813
    %v5039 = vpack.c.b16 %v4819, %v4814
    %v5040 = vpack.c.b16 %v4820, %v4815
    %v5041 = vpack.c.b16 %v4821, %v4816
    %v5042 = vpack.c.b16 %v4822, %v4817
    %v5043 = vpack.c.b16 %v4828, %v4823
    %v5044 = vpack.c.b16 %v4829, %v4824
    %v5045 = vpack.c.b16 %v4830, %v4825
    %v5046 = vpack.c.b16 %v4831, %v4826
    %v5047 = vpack.c.b16 %v4832, %v4827
    %v5048 = vpack.c.b16 %v4838, %v4833
    %v5049 = vpack.c.b16 %v4839, %v4834
    %v5050 = vpack.c.b16 %v4840, %v4835
    %v5051 = vpack.c.b16 %v4841, %v4836
    %v5052 = vpack.c.b16 %v4842, %v4837
    %v5053 = vpack.c.b16 %v4848, %v4843
    %v5054 = vpack.c.b16 %v4849, %v4844
    %v5055 = vpack.c.b16 %v4850, %v4845
    %v5056 = vpack.c.b16 %v4851, %v4846
    %v5057 = vpack.c.b16 %v4852, %v4847
    %v5058 = vpack.c.b16 %v4858, %v4853
    %v5059 = vpack.c.b16 %v4859, %v4854
    %v5060 = vpack.c.b16 %v4860, %v4855
    %v5061 = vpack.c.b16 %v4861, %v4856
    %v5062 = vpack.c.b16 %v4862, %v4857
    %5263 = vmatpush.bf16.msra.mxu0 %v4898
    %5264 = vmatpush.bf16.msra.mxu0 %v4893
    %5265 = vmatpush.bf16.msra.mxu0 %v4888
    %5266 = vmatpush.bf16.msra.mxu0 %v4883
    %5267 = vmatpush.bf16.msra.mxu0 %v4878
    %5268 = vmatpush.bf16.msra.mxu0 %v4873
    %5269 = vmatpush.bf16.msra.mxu0 %v4868
    %5270 = vmatpush.bf16.msra.mxu0 %v4863
    %5271 = vmatmul.bf16.gmra.mxu0 %v3963
    %v5272 = vpop.f32.mrf.mxu0
    %v5273 = vadd.f32 %v4213, %v5272
    %v5274 = vpop.f32.mrf.mxu0
    %v5275 = vadd.f32 %v4213, %v5274
    %5276 = vdwg.mxu0
    %5277 = vmatpush.bf16.msra.mxu0 %v4938
    %5278 = vmatpush.bf16.msra.mxu0 %v4933
    %5279 = vmatpush.bf16.msra.mxu0 %v4928
    %5280 = vmatpush.bf16.msra.mxu0 %v4923
    %5281 = vmatpush.bf16.msra.mxu0 %v4918
    %5282 = vmatpush.bf16.msra.mxu0 %v4913
    %5283 = vmatpush.bf16.msra.mxu0 %v4908
    %5284 = vmatpush.bf16.msra.mxu0 %v4903
    %5285 = vmatmul.bf16.gmra.mxu0 %v3964
    %v5286 = vpop.f32.mrf.mxu0
    %v5287 = vadd.f32 %v5273, %v5286
    %v5288 = vpop.f32.mrf.mxu0
    %v5289 = vadd.f32 %v5275, %v5288
    %5290 = vdwg.mxu0
    %5291 = vmatpush.bf16.msra.mxu0 %v4978
    %5292 = vmatpush.bf16.msra.mxu0 %v4973
    %5293 = vmatpush.bf16.msra.mxu0 %v4968
    %5294 = vmatpush.bf16.msra.mxu0 %v4963
    %5295 = vmatpush.bf16.msra.mxu0 %v4958
    %5296 = vmatpush.bf16.msra.mxu0 %v4953
    %5297 = vmatpush.bf16.msra.mxu0 %v4948
    %5298 = vmatpush.bf16.msra.mxu0 %v4943
    %5299 = vmatmul.bf16.gmra.mxu0 %v3965
    %v5300 = vpop.f32.mrf.mxu0
    %v5301 = vadd.f32 %v5287, %v5300
    %v5302 = vpop.f32.mrf.mxu0
    %v5303 = vadd.f32 %v5289, %v5302
    %5304 = vdwg.mxu0
    %5305 = vmatpush.bf16.msra.mxu0 %v5018
    %5306 = vmatpush.bf16.msra.mxu0 %v5013
    %5307 = vmatpush.bf16.msra.mxu0 %v5008
    %5308 = vmatpush.bf16.msra.mxu0 %v5003
    %5309 = vmatpush.bf16.msra.mxu0 %v4998
    %5310 = vmatpush.bf16.msra.mxu0 %v4993
    %5311 = vmatpush.bf16.msra.mxu0 %v4988
    %5312 = vmatpush.bf16.msra.mxu0 %v4983
    %5313 = vmatmul.bf16.gmra.mxu0 %v3966
    %v5314 = vpop.f32.mrf.mxu0
    %v5315 = vadd.f32 %v5301, %v5314
    %v5316 = vpop.f32.mrf.mxu0
    %v5317 = vadd.f32 %v5303, %v5316
    %5318 = vdwg.mxu0
    %5319 = vmatpush.bf16.msra.mxu0 %v5058
    %5320 = vmatpush.bf16.msra.mxu0 %v5053
    %5321 = vmatpush.bf16.msra.mxu0 %v5048
    %5322 = vmatpush.bf16.msra.mxu0 %v5043
    %5323 = vmatpush.bf16.msra.mxu0 %v5038
    %5324 = vmatpush.bf16.msra.mxu0 %v5033
    %5325 = vmatpush.bf16.msra.mxu0 %v5028
    %5326 = vmatpush.bf16.msra.mxu0 %v5023
    %5327 = vmatmul.bf16.gmra.mxu0 %v3967
    %v5328 = vpop.f32.mrf.mxu0
    %v5329 = vadd.f32 %v5315, %v5328
    %v5330 = vpop.f32.mrf.mxu0
    %v5331 = vadd.f32 %v5317, %v5330
    %5332 = vdwg.mxu0
    %5333 = vmatpush.bf16.msra.mxu0 %v4899
    %5334 = vmatpush.bf16.msra.mxu0 %v4894
    %5335 = vmatpush.bf16.msra.mxu0 %v4889
    %5336 = vmatpush.bf16.msra.mxu0 %v4884
    %5337 = vmatpush.bf16.msra.mxu0 %v4879
    %5338 = vmatpush.bf16.msra.mxu0 %v4874
    %5339 = vmatpush.bf16.msra.mxu0 %v4869
    %5340 = vmatpush.bf16.msra.mxu0 %v4864
    %5341 = vmatmul.bf16.gmra.mxu0 %v3963
    %v5342 = vpop.f32.mrf.mxu0
    %v5343 = vadd.f32 %v4214, %v5342
    %v5344 = vpop.f32.mrf.mxu0
    %v5345 = vadd.f32 %v4214, %v5344
    %5346 = vdwg.mxu0
    %5347 = vmatpush.bf16.msra.mxu0 %v4939
    %5348 = vmatpush.bf16.msra.mxu0 %v4934
    %5349 = vmatpush.bf16.msra.mxu0 %v4929
    %5350 = vmatpush.bf16.msra.mxu0 %v4924
    %5351 = vmatpush.bf16.msra.mxu0 %v4919
    %5352 = vmatpush.bf16.msra.mxu0 %v4914
    %5353 = vmatpush.bf16.msra.mxu0 %v4909
    %5354 = vmatpush.bf16.msra.mxu0 %v4904
    %5355 = vmatmul.bf16.gmra.mxu0 %v3964
    %v5356 = vpop.f32.mrf.mxu0
    %v5357 = vadd.f32 %v5343, %v5356
    %v5358 = vpop.f32.mrf.mxu0
    %v5359 = vadd.f32 %v5345, %v5358
    %5360 = vdwg.mxu0
    %5361 = vmatpush.bf16.msra.mxu0 %v4979
    %5362 = vmatpush.bf16.msra.mxu0 %v4974
    %5363 = vmatpush.bf16.msra.mxu0 %v4969
    %5364 = vmatpush.bf16.msra.mxu0 %v4964
    %5365 = vmatpush.bf16.msra.mxu0 %v4959
    %5366 = vmatpush.bf16.msra.mxu0 %v4954
    %5367 = vmatpush.bf16.msra.mxu0 %v4949
    %5368 = vmatpush.bf16.msra.mxu0 %v4944
    %5369 = vmatmul.bf16.gmra.mxu0 %v3965
    %v5370 = vpop.f32.mrf.mxu0
    %v5371 = vadd.f32 %v5357, %v5370
    %v5372 = vpop.f32.mrf.mxu0
    %v5373 = vadd.f32 %v5359, %v5372
    %5374 = vdwg.mxu0
    %5375 = vmatpush.bf16.msra.mxu0 %v5019
    %5376 = vmatpush.bf16.msra.mxu0 %v5014
    %5377 = vmatpush.bf16.msra.mxu0 %v5009
    %5378 = vmatpush.bf16.msra.mxu0 %v5004
    %5379 = vmatpush.bf16.msra.mxu0 %v4999
    %5380 = vmatpush.bf16.msra.mxu0 %v4994
    %5381 = vmatpush.bf16.msra.mxu0 %v4989
    %5382 = vmatpush.bf16.msra.mxu0 %v4984
    %5383 = vmatmul.bf16.gmra.mxu0 %v3966
    %v5384 = vpop.f32.mrf.mxu0
    %v5385 = vadd.f32 %v5371, %v5384
    %v5386 = vpop.f32.mrf.mxu0
    %v5387 = vadd.f32 %v5373, %v5386
    %5388 = vdwg.mxu0
    %5389 = vmatpush.bf16.msra.mxu0 %v5059
    %5390 = vmatpush.bf16.msra.mxu0 %v5054
    %5391 = vmatpush.bf16.msra.mxu0 %v5049
    %5392 = vmatpush.bf16.msra.mxu0 %v5044
    %5393 = vmatpush.bf16.msra.mxu0 %v5039
    %5394 = vmatpush.bf16.msra.mxu0 %v5034
    %5395 = vmatpush.bf16.msra.mxu0 %v5029
    %5396 = vmatpush.bf16.msra.mxu0 %v5024
    %5397 = vmatmul.bf16.gmra.mxu0 %v3967
    %v5398 = vpop.f32.mrf.mxu0
    %v5399 = vadd.f32 %v5385, %v5398
    %v5400 = vpop.f32.mrf.mxu0
    %v5401 = vadd.f32 %v5387, %v5400
    %5402 = vdwg.mxu0
    %5403 = vmatpush.bf16.msra.mxu0 %v4900
    %5404 = vmatpush.bf16.msra.mxu0 %v4895
    %5405 = vmatpush.bf16.msra.mxu0 %v4890
    %5406 = vmatpush.bf16.msra.mxu0 %v4885
    %5407 = vmatpush.bf16.msra.mxu0 %v4880
    %5408 = vmatpush.bf16.msra.mxu0 %v4875
    %5409 = vmatpush.bf16.msra.mxu0 %v4870
    %5410 = vmatpush.bf16.msra.mxu0 %v4865
    %5411 = vmatmul.bf16.gmra.mxu0 %v3963
    %v5412 = vpop.f32.mrf.mxu0
    %v5413 = vadd.f32 %v4215, %v5412
    %v5414 = vpop.f32.mrf.mxu0
    %v5415 = vadd.f32 %v4215, %v5414
    %5416 = vdwg.mxu0
    %5417 = vmatpush.bf16.msra.mxu0 %v4940
    %5418 = vmatpush.bf16.msra.mxu0 %v4935
    %5419 = vmatpush.bf16.msra.mxu0 %v4930
    %5420 = vmatpush.bf16.msra.mxu0 %v4925
    %5421 = vmatpush.bf16.msra.mxu0 %v4920
    %5422 = vmatpush.bf16.msra.mxu0 %v4915
    %5423 = vmatpush.bf16.msra.mxu0 %v4910
    %5424 = vmatpush.bf16.msra.mxu0 %v4905
    %5425 = vmatmul.bf16.gmra.mxu0 %v3964
    %v5426 = vpop.f32.mrf.mxu0
    %v5427 = vadd.f32 %v5413, %v5426
    %v5428 = vpop.f32.mrf.mxu0
    %v5429 = vadd.f32 %v5415, %v5428
    %5430 = vdwg.mxu0
    %5431 = vmatpush.bf16.msra.mxu0 %v4980
    %5432 = vmatpush.bf16.msra.mxu0 %v4975
    %5433 = vmatpush.bf16.msra.mxu0 %v4970
    %5434 = vmatpush.bf16.msra.mxu0 %v4965
    %5435 = vmatpush.bf16.msra.mxu0 %v4960
    %5436 = vmatpush.bf16.msra.mxu0 %v4955
    %5437 = vmatpush.bf16.msra.mxu0 %v4950
    %5438 = vmatpush.bf16.msra.mxu0 %v4945
    %5439 = vmatmul.bf16.gmra.mxu0 %v3965
    %v5440 = vpop.f32.mrf.mxu0
    %v5441 = vadd.f32 %v5427, %v5440
    %v5442 = vpop.f32.mrf.mxu0
    %v5443 = vadd.f32 %v5429, %v5442
    %5444 = vdwg.mxu0
    %5445 = vmatpush.bf16.msra.mxu0 %v5020
    %5446 = vmatpush.bf16.msra.mxu0 %v5015
    %5447 = vmatpush.bf16.msra.mxu0 %v5010
    %5448 = vmatpush.bf16.msra.mxu0 %v5005
    %5449 = vmatpush.bf16.msra.mxu0 %v5000
    %5450 = vmatpush.bf16.msra.mxu0 %v4995
    %5451 = vmatpush.bf16.msra.mxu0 %v4990
    %5452 = vmatpush.bf16.msra.mxu0 %v4985
    %5453 = vmatmul.bf16.gmra.mxu0 %v3966
    %v5454 = vpop.f32.mrf.mxu0
    %v5455 = vadd.f32 %v5441, %v5454
    %v5456 = vpop.f32.mrf.mxu0
    %v5457 = vadd.f32 %v5443, %v5456
    %5458 = vdwg.mxu0
    %5459 = vmatpush.bf16.msra.mxu0 %v5060
    %5460 = vmatpush.bf16.msra.mxu0 %v5055
    %5461 = vmatpush.bf16.msra.mxu0 %v5050
    %5462 = vmatpush.bf16.msra.mxu0 %v5045
    %5463 = vmatpush.bf16.msra.mxu0 %v5040
    %5464 = vmatpush.bf16.msra.mxu0 %v5035
    %5465 = vmatpush.bf16.msra.mxu0 %v5030
    %5466 = vmatpush.bf16.msra.mxu0 %v5025
    %5467 = vmatmul.bf16.gmra.mxu0 %v3967
    %v5468 = vpop.f32.mrf.mxu0
    %v5469 = vadd.f32 %v5455, %v5468
    %v5470 = vpop.f32.mrf.mxu0
    %v5471 = vadd.f32 %v5457, %v5470
    %5472 = vdwg.mxu0
    %5473 = vmatpush.bf16.msra.mxu0 %v4901
    %5474 = vmatpush.bf16.msra.mxu0 %v4896
    %5475 = vmatpush.bf16.msra.mxu0 %v4891
    %5476 = vmatpush.bf16.msra.mxu0 %v4886
    %5477 = vmatpush.bf16.msra.mxu0 %v4881
    %5478 = vmatpush.bf16.msra.mxu0 %v4876
    %5479 = vmatpush.bf16.msra.mxu0 %v4871
    %5480 = vmatpush.bf16.msra.mxu0 %v4866
    %5481 = vmatmul.bf16.gmra.mxu0 %v3963
    %v5482 = vpop.f32.mrf.mxu0
    %v5483 = vadd.f32 %v4216, %v5482
    %v5484 = vpop.f32.mrf.mxu0
    %v5485 = vadd.f32 %v4216, %v5484
    %5486 = vdwg.mxu0
    %5487 = vmatpush.bf16.msra.mxu0 %v4941
    %5488 = vmatpush.bf16.msra.mxu0 %v4936
    %5489 = vmatpush.bf16.msra.mxu0 %v4931
    %5490 = vmatpush.bf16.msra.mxu0 %v4926
    %5491 = vmatpush.bf16.msra.mxu0 %v4921
    %5492 = vmatpush.bf16.msra.mxu0 %v4916
    %5493 = vmatpush.bf16.msra.mxu0 %v4911
    %5494 = vmatpush.bf16.msra.mxu0 %v4906
    %5495 = vmatmul.bf16.gmra.mxu0 %v3964
    %v5496 = vpop.f32.mrf.mxu0
    %v5497 = vadd.f32 %v5483, %v5496
    %v5498 = vpop.f32.mrf.mxu0
    %v5499 = vadd.f32 %v5485, %v5498
    %5500 = vdwg.mxu0
    %5501 = vmatpush.bf16.msra.mxu0 %v4981
    %5502 = vmatpush.bf16.msra.mxu0 %v4976
    %5503 = vmatpush.bf16.msra.mxu0 %v4971
    %5504 = vmatpush.bf16.msra.mxu0 %v4966
    %5505 = vmatpush.bf16.msra.mxu0 %v4961
    %5506 = vmatpush.bf16.msra.mxu0 %v4956
    %5507 = vmatpush.bf16.msra.mxu0 %v4951
    %5508 = vmatpush.bf16.msra.mxu0 %v4946
    %5509 = vmatmul.bf16.gmra.mxu0 %v3965
    %v5510 = vpop.f32.mrf.mxu0
    %v5511 = vadd.f32 %v5497, %v5510
    %v5512 = vpop.f32.mrf.mxu0
    %v5513 = vadd.f32 %v5499, %v5512
    %5514 = vdwg.mxu0
    %5515 = vmatpush.bf16.msra.mxu0 %v5021
    %5516 = vmatpush.bf16.msra.mxu0 %v5016
    %5517 = vmatpush.bf16.msra.mxu0 %v5011
    %5518 = vmatpush.bf16.msra.mxu0 %v5006
    %5519 = vmatpush.bf16.msra.mxu0 %v5001
    %5520 = vmatpush.bf16.msra.mxu0 %v4996
    %5521 = vmatpush.bf16.msra.mxu0 %v4991
    %5522 = vmatpush.bf16.msra.mxu0 %v4986
    %5523 = vmatmul.bf16.gmra.mxu0 %v3966
    %v5524 = vpop.f32.mrf.mxu0
    %v5525 = vadd.f32 %v5511, %v5524
    %v5526 = vpop.f32.mrf.mxu0
    %v5527 = vadd.f32 %v5513, %v5526
    %5528 = vdwg.mxu0
    %5529 = vmatpush.bf16.msra.mxu0 %v5061
    %5530 = vmatpush.bf16.msra.mxu0 %v5056
    %5531 = vmatpush.bf16.msra.mxu0 %v5051
    %5532 = vmatpush.bf16.msra.mxu0 %v5046
    %5533 = vmatpush.bf16.msra.mxu0 %v5041
    %5534 = vmatpush.bf16.msra.mxu0 %v5036
    %5535 = vmatpush.bf16.msra.mxu0 %v5031
    %5536 = vmatpush.bf16.msra.mxu0 %v5026
    %5537 = vmatmul.bf16.gmra.mxu0 %v3967
    %v5538 = vpop.f32.mrf.mxu0
    %v5539 = vadd.f32 %v5525, %v5538
    %v5540 = vpop.f32.mrf.mxu0
    %v5541 = vadd.f32 %v5527, %v5540
    %5542 = vdwg.mxu0
    %5543 = vmatpush.bf16.msra.mxu0 %v4902
    %5544 = vmatpush.bf16.msra.mxu0 %v4897
    %5545 = vmatpush.bf16.msra.mxu0 %v4892
    %5546 = vmatpush.bf16.msra.mxu0 %v4887
    %5547 = vmatpush.bf16.msra.mxu0 %v4882
    %5548 = vmatpush.bf16.msra.mxu0 %v4877
    %5549 = vmatpush.bf16.msra.mxu0 %v4872
    %5550 = vmatpush.bf16.msra.mxu0 %v4867
    %5551 = vmatmul.bf16.gmra.mxu0 %v3963
    %v5552 = vpop.f32.mrf.mxu0
    %v5553 = vadd.f32 %v4217, %v5552
    %v5554 = vpop.f32.mrf.mxu0
    %v5555 = vadd.f32 %v4217, %v5554
    %5556 = vdwg.mxu0
    %5557 = vmatpush.bf16.msra.mxu0 %v4942
    %5558 = vmatpush.bf16.msra.mxu0 %v4937
    %5559 = vmatpush.bf16.msra.mxu0 %v4932
    %5560 = vmatpush.bf16.msra.mxu0 %v4927
    %5561 = vmatpush.bf16.msra.mxu0 %v4922
    %5562 = vmatpush.bf16.msra.mxu0 %v4917
    %5563 = vmatpush.bf16.msra.mxu0 %v4912
    %5564 = vmatpush.bf16.msra.mxu0 %v4907
    %5565 = vmatmul.bf16.gmra.mxu0 %v3964
    %v5566 = vpop.f32.mrf.mxu0
    %v5567 = vadd.f32 %v5553, %v5566
    %v5568 = vpop.f32.mrf.mxu0
    %v5569 = vadd.f32 %v5555, %v5568
    %5570 = vdwg.mxu0
    %5571 = vmatpush.bf16.msra.mxu0 %v4982
    %5572 = vmatpush.bf16.msra.mxu0 %v4977
    %5573 = vmatpush.bf16.msra.mxu0 %v4972
    %5574 = vmatpush.bf16.msra.mxu0 %v4967
    %5575 = vmatpush.bf16.msra.mxu0 %v4962
    %5576 = vmatpush.bf16.msra.mxu0 %v4957
    %5577 = vmatpush.bf16.msra.mxu0 %v4952
    %5578 = vmatpush.bf16.msra.mxu0 %v4947
    %5579 = vmatmul.bf16.gmra.mxu0 %v3965
    %v5580 = vpop.f32.mrf.mxu0
    %v5581 = vadd.f32 %v5567, %v5580
    %v5582 = vpop.f32.mrf.mxu0
    %v5583 = vadd.f32 %v5569, %v5582
    %5584 = vdwg.mxu0
    %5585 = vmatpush.bf16.msra.mxu0 %v5022
    %5586 = vmatpush.bf16.msra.mxu0 %v5017
    %5587 = vmatpush.bf16.msra.mxu0 %v5012
    %5588 = vmatpush.bf16.msra.mxu0 %v5007
    %5589 = vmatpush.bf16.msra.mxu0 %v5002
    %5590 = vmatpush.bf16.msra.mxu0 %v4997
    %5591 = vmatpush.bf16.msra.mxu0 %v4992
    %5592 = vmatpush.bf16.msra.mxu0 %v4987
    %5593 = vmatmul.bf16.gmra.mxu0 %v3966
    %v5594 = vpop.f32.mrf.mxu0
    %v5595 = vadd.f32 %v5581, %v5594
    %v5596 = vpop.f32.mrf.mxu0
    %v5597 = vadd.f32 %v5583, %v5596
    %5598 = vdwg.mxu0
    %5599 = vmatpush.bf16.msra.mxu0 %v5062
    %5600 = vmatpush.bf16.msra.mxu0 %v5057
    %5601 = vmatpush.bf16.msra.mxu0 %v5052
    %5602 = vmatpush.bf16.msra.mxu0 %v5047
    %5603 = vmatpush.bf16.msra.mxu0 %v5042
    %5604 = vmatpush.bf16.msra.mxu0 %v5037
    %5605 = vmatpush.bf16.msra.mxu0 %v5032
    %5606 = vmatpush.bf16.msra.mxu0 %v5027
    %5607 = vmatmul.bf16.gmra.mxu0 %v3967
    %v5608 = vpop.f32.mrf.mxu0
    %v5609 = vadd.f32 %v5595, %v5608
    %v5610 = vpop.f32.mrf.mxu0
    %v5611 = vadd.f32 %v5597, %v5610
    %5612 = vdwg.mxu0
    %v5613 = vmul.f32 %v5329, 0.2
    %v5614 = vmul.f32 %v5399, 0.2
    %v5615 = vmul.f32 %v5469, 0.2
    %v5616 = vmul.f32 %v5539, 0.2
    %v5617 = vmul.f32 %v5609, 0.2
    %v5618 = vmul.f32 %v5331, 0.2
    %v5619 = vmul.f32 %v5401, 0.2
    %v5620 = vmul.f32 %v5471, 0.2
    %v5621 = vmul.f32 %v5541, 0.2
    %v5622 = vmul.f32 %v5611, 0.2
    %v5623 = vmax.f32 %v5329, %v5613
    %v5624 = vmax.f32 %v5399, %v5614
    %v5625 = vmax.f32 %v5469, %v5615
    %v5626 = vmax.f32 %v5539, %v5616
    %v5627 = vmax.f32 %v5609, %v5617
    %v5628 = vmax.f32 %v5331, %v5618
    %v5629 = vmax.f32 %v5401, %v5619
    %v5630 = vmax.f32 %v5471, %v5620
    %v5631 = vmax.f32 %v5541, %v5621
    %v5632 = vmax.f32 %v5611, %v5622
    %v5633 = vpack.c.bf16 %v5628, %v5623
    %v5634 = vpack.c.bf16 %v5629, %v5624
    %v5635 = vpack.c.bf16 %v5630, %v5625
    %v5636 = vpack.c.bf16 %v5631, %v5626
    %v5637 = vpack.c.bf16 %v5632, %v5627
    %v5638 = vld [vmem:[#allocation10] sm:$0xff]
    %v5639 = vld [vmem:[#allocation10 + $0x8] sm:$0xff]
    %v5640 = vld [vmem:[#allocation10 + $0x10] sm:$0xf]
    %v5641 = vld [vmem:[#allocation10 + $0x14] sm:$0xff]
    %v5642 = vld [vmem:[#allocation10 + $0x1c] sm:$0xff]
    %v5643 = vld [vmem:[#allocation10 + $0x24] sm:$0xf]
    %v5644 = vld [vmem:[#allocation10 + $0x28] sm:$0xff]
    %v5645 = vld [vmem:[#allocation10 + $0x30] sm:$0xff]
    %v5646 = vld [vmem:[#allocation10 + $0x38] sm:$0xf]
    %v5647 = vld [vmem:[#allocation10 + $0x3c] sm:$0xff]
    %v5648 = vld [vmem:[#allocation10 + $0x44] sm:$0xff]
    %v5649 = vld [vmem:[#allocation10 + $0x4c] sm:$0xf]
    %v5650 = vld [vmem:[#allocation10 + $0x50] sm:$0xff]
    %v5651 = vld [vmem:[#allocation10 + $0x58] sm:$0xff]
    %v5652 = vld [vmem:[#allocation10 + $0x60] sm:$0xf]
    %v5653 = vld [vmem:[#allocation10 + $0x64] sm:$0xff]
    %v5654 = vld [vmem:[#allocation10 + $0x6c] sm:$0xff]
    %v5655 = vld [vmem:[#allocation10 + $0x74] sm:$0xf]
    %v5656 = vld [vmem:[#allocation10 + $0x78] sm:$0xff]
    %v5657 = vld [vmem:[#allocation10 + $0x80] sm:$0xff]
    %v5658 = vld [vmem:[#allocation10 + $0x88] sm:$0xf]
    %v5659 = vld [vmem:[#allocation10 + $0x8c] sm:$0xff]
    %v5660 = vld [vmem:[#allocation10 + $0x94] sm:$0xff]
    %v5661 = vld [vmem:[#allocation10 + $0x9c] sm:$0xf]
    %v5662 = vld [vmem:[#allocation10 + $0xa0] sm:$0xff]
    %v5663 = vld [vmem:[#allocation10 + $0xa8] sm:$0xff]
    %v5664 = vld [vmem:[#allocation10 + $0xb0] sm:$0xf]
    %v5665 = vld [vmem:[#allocation10 + $0xb4] sm:$0xff]
    %v5666 = vld [vmem:[#allocation10 + $0xbc] sm:$0xff]
    %v5667 = vld [vmem:[#allocation10 + $0xc4] sm:$0xf]
    %v5668 = vld [vmem:[#allocation10 + $0xc8] sm:$0xff]
    %v5669 = vld [vmem:[#allocation10 + $0xd0] sm:$0xff]
    %v5670 = vld [vmem:[#allocation10 + $0xd8] sm:$0xf]
    %v5671 = vld [vmem:[#allocation10 + $0xdc] sm:$0xff]
    %v5672 = vld [vmem:[#allocation10 + $0xe4] sm:$0xff]
    %v5673 = vld [vmem:[#allocation10 + $0xec] sm:$0xf]
    %v5674 = vld [vmem:[#allocation10 + $0xf0] sm:$0xff]
    %v5675 = vld [vmem:[#allocation10 + $0xf8] sm:$0xff]
    %v5676 = vld [vmem:[#allocation10 + $0x100] sm:$0xf]
    %v5677 = vld [vmem:[#allocation10 + $0x104] sm:$0xff]
    %v5678 = vld [vmem:[#allocation10 + $0x10c] sm:$0xff]
    %v5679 = vld [vmem:[#allocation10 + $0x114] sm:$0xf]
    %v5680 = vld [vmem:[#allocation10 + $0x118] sm:$0xff]
    %v5681 = vld [vmem:[#allocation10 + $0x120] sm:$0xff]
    %v5682 = vld [vmem:[#allocation10 + $0x128] sm:$0xf]
    %v5683 = vld [vmem:[#allocation10 + $0x12c] sm:$0xff]
    %v5684 = vld [vmem:[#allocation10 + $0x134] sm:$0xff]
    %v5685 = vld [vmem:[#allocation10 + $0x13c] sm:$0xf]
    %v5686 = vld [vmem:[#allocation10 + $0x140] sm:$0xff]
    %v5687 = vld [vmem:[#allocation10 + $0x148] sm:$0xff]
    %v5688 = vld [vmem:[#allocation10 + $0x150] sm:$0xf]
    %v5689 = vld [vmem:[#allocation10 + $0x154] sm:$0xff]
    %v5690 = vld [vmem:[#allocation10 + $0x15c] sm:$0xff]
    %v5691 = vld [vmem:[#allocation10 + $0x164] sm:$0xf]
    %v5692 = vld [vmem:[#allocation10 + $0x168] sm:$0xff]
    %v5693 = vld [vmem:[#allocation10 + $0x170] sm:$0xff]
    %v5694 = vld [vmem:[#allocation10 + $0x178] sm:$0xf]
    %v5695 = vld [vmem:[#allocation10 + $0x17c] sm:$0xff]
    %v5696 = vld [vmem:[#allocation10 + $0x184] sm:$0xff]
    %v5697 = vld [vmem:[#allocation10 + $0x18c] sm:$0xf]
    %v5698 = vld [vmem:[#allocation10 + $0x190] sm:$0xff]
    %v5699 = vld [vmem:[#allocation10 + $0x198] sm:$0xff]
    %v5700 = vld [vmem:[#allocation10 + $0x1a0] sm:$0xf]
    %v5701 = vld [vmem:[#allocation10 + $0x1a4] sm:$0xff]
    %v5702 = vld [vmem:[#allocation10 + $0x1ac] sm:$0xff]
    %v5703 = vld [vmem:[#allocation10 + $0x1b4] sm:$0xf]
    %v5704 = vld [vmem:[#allocation10 + $0x1b8] sm:$0xff]
    %v5705 = vld [vmem:[#allocation10 + $0x1c0] sm:$0xff]
    %v5706 = vld [vmem:[#allocation10 + $0x1c8] sm:$0xf]
    %v5707 = vld [vmem:[#allocation10 + $0x1cc] sm:$0xff]
    %v5708 = vld [vmem:[#allocation10 + $0x1d4] sm:$0xff]
    %v5709 = vld [vmem:[#allocation10 + $0x1dc] sm:$0xf]
    %v5710 = vld [vmem:[#allocation10 + $0x1e0] sm:$0xff]
    %v5711 = vld [vmem:[#allocation10 + $0x1e8] sm:$0xff]
    %v5712 = vld [vmem:[#allocation10 + $0x1f0] sm:$0xf]
    %v5713 = vld [vmem:[#allocation10 + $0x1f4] sm:$0xff]
    %v5714 = vld [vmem:[#allocation10 + $0x1fc] sm:$0xff]
    %v5715 = vld [vmem:[#allocation10 + $0x204] sm:$0xf]
    %v5716 = vld [vmem:[#allocation10 + $0x208] sm:$0xff]
    %v5717 = vld [vmem:[#allocation10 + $0x210] sm:$0xff]
    %v5718 = vld [vmem:[#allocation10 + $0x218] sm:$0xf]
    %v5719 = vld [vmem:[#allocation10 + $0x21c] sm:$0xff]
    %v5720 = vld [vmem:[#allocation10 + $0x224] sm:$0xff]
    %v5721 = vld [vmem:[#allocation10 + $0x22c] sm:$0xf]
    %v5722 = vld [vmem:[#allocation10 + $0x230] sm:$0xff]
    %v5723 = vld [vmem:[#allocation10 + $0x238] sm:$0xff]
    %v5724 = vld [vmem:[#allocation10 + $0x240] sm:$0xf]
    %v5725 = vld [vmem:[#allocation10 + $0x244] sm:$0xff]
    %v5726 = vld [vmem:[#allocation10 + $0x24c] sm:$0xff]
    %v5727 = vld [vmem:[#allocation10 + $0x254] sm:$0xf]
    %v5728 = vld [vmem:[#allocation10 + $0x258] sm:$0xff]
    %v5729 = vld [vmem:[#allocation10 + $0x260] sm:$0xff]
    %v5730 = vld [vmem:[#allocation10 + $0x268] sm:$0xf]
    %v5731 = vld [vmem:[#allocation10 + $0x26c] sm:$0xff]
    %v5732 = vld [vmem:[#allocation10 + $0x274] sm:$0xff]
    %v5733 = vld [vmem:[#allocation10 + $0x27c] sm:$0xf]
    %v5734 = vld [vmem:[#allocation10 + $0x280] sm:$0xff]
    %v5735 = vld [vmem:[#allocation10 + $0x288] sm:$0xff]
    %v5736 = vld [vmem:[#allocation10 + $0x290] sm:$0xf]
    %v5737 = vld [vmem:[#allocation10 + $0x294] sm:$0xff]
    %v5738 = vld [vmem:[#allocation10 + $0x29c] sm:$0xff]
    %v5739 = vld [vmem:[#allocation10 + $0x2a4] sm:$0xf]
    %v5740 = vld [vmem:[#allocation10 + $0x2a8] sm:$0xff]
    %v5741 = vld [vmem:[#allocation10 + $0x2b0] sm:$0xff]
    %v5742 = vld [vmem:[#allocation10 + $0x2b8] sm:$0xf]
    %v5743 = vld [vmem:[#allocation10 + $0x2bc] sm:$0xff]
    %v5744 = vld [vmem:[#allocation10 + $0x2c4] sm:$0xff]
    %v5745 = vld [vmem:[#allocation10 + $0x2cc] sm:$0xf]
    %v5746 = vld [vmem:[#allocation10 + $0x2d0] sm:$0xff]
    %v5747 = vld [vmem:[#allocation10 + $0x2d8] sm:$0xff]
    %v5748 = vld [vmem:[#allocation10 + $0x2e0] sm:$0xf]
    %v5749 = vld [vmem:[#allocation10 + $0x2e4] sm:$0xff]
    %v5750 = vld [vmem:[#allocation10 + $0x2ec] sm:$0xff]
    %v5751 = vld [vmem:[#allocation10 + $0x2f4] sm:$0xf]
    %v5752 = vld [vmem:[#allocation10 + $0x2f8] sm:$0xff]
    %v5753 = vld [vmem:[#allocation10 + $0x300] sm:$0xff]
    %v5754 = vld [vmem:[#allocation10 + $0x308] sm:$0xf]
    %v5755 = vld [vmem:[#allocation10 + $0x30c] sm:$0xff]
    %v5756 = vld [vmem:[#allocation10 + $0x314] sm:$0xff]
    %v5757 = vld [vmem:[#allocation10 + $0x31c] sm:$0xf]
    %v5758 = vld [vmem:[#allocation10 + $0x320] sm:$0xff]
    %v5759 = vld [vmem:[#allocation10 + $0x328] sm:$0xff]
    %v5760 = vld [vmem:[#allocation10 + $0x330] sm:$0xf]
    %v5761 = vld [vmem:[#allocation10 + $0x334] sm:$0xff]
    %v5762 = vld [vmem:[#allocation10 + $0x33c] sm:$0xff]
    %v5763 = vld [vmem:[#allocation10 + $0x344] sm:$0xf]
    %v5764 = vld [vmem:[#allocation10 + $0x348] sm:$0xff]
    %v5765 = vld [vmem:[#allocation10 + $0x350] sm:$0xff]
    %v5766 = vld [vmem:[#allocation10 + $0x358] sm:$0xf]
    %v5767 = vld [vmem:[#allocation10 + $0x35c] sm:$0xff]
    %v5768 = vld [vmem:[#allocation10 + $0x364] sm:$0xff]
    %v5769 = vld [vmem:[#allocation10 + $0x36c] sm:$0xf]
    %v5770 = vld [vmem:[#allocation10 + $0x370] sm:$0xff]
    %v5771 = vld [vmem:[#allocation10 + $0x378] sm:$0xff]
    %v5772 = vld [vmem:[#allocation10 + $0x380] sm:$0xf]
    %v5773 = vld [vmem:[#allocation10 + $0x384] sm:$0xff]
    %v5774 = vld [vmem:[#allocation10 + $0x38c] sm:$0xff]
    %v5775 = vld [vmem:[#allocation10 + $0x394] sm:$0xf]
    %v5776 = vld [vmem:[#allocation10 + $0x398] sm:$0xff]
    %v5777 = vld [vmem:[#allocation10 + $0x3a0] sm:$0xff]
    %v5778 = vld [vmem:[#allocation10 + $0x3a8] sm:$0xf]
    %v5779 = vld [vmem:[#allocation10 + $0x3ac] sm:$0xff]
    %v5780 = vld [vmem:[#allocation10 + $0x3b4] sm:$0xff]
    %v5781 = vld [vmem:[#allocation10 + $0x3bc] sm:$0xf]
    %v5782 = vld [vmem:[#allocation10 + $0x3c0] sm:$0xff]
    %v5783 = vld [vmem:[#allocation10 + $0x3c8] sm:$0xff]
    %v5784 = vld [vmem:[#allocation10 + $0x3d0] sm:$0xf]
    %v5785 = vld [vmem:[#allocation10 + $0x3d4] sm:$0xff]
    %v5786 = vld [vmem:[#allocation10 + $0x3dc] sm:$0xff]
    %v5787 = vld [vmem:[#allocation10 + $0x3e4] sm:$0xf]
    %v5788 = vld [vmem:[#allocation10 + $0x3e8] sm:$0xff]
    %v5789 = vld [vmem:[#allocation10 + $0x3f0] sm:$0xff]
    %v5790 = vld [vmem:[#allocation10 + $0x3f8] sm:$0xf]
    %v5791 = vld [vmem:[#allocation10 + $0x3fc] sm:$0xff]
    %v5792 = vld [vmem:[#allocation10 + $0x404] sm:$0xff]
    %v5793 = vld [vmem:[#allocation10 + $0x40c] sm:$0xf]
    %v5794 = vld [vmem:[#allocation10 + $0x410] sm:$0xff]
    %v5795 = vld [vmem:[#allocation10 + $0x418] sm:$0xff]
    %v5796 = vld [vmem:[#allocation10 + $0x420] sm:$0xf]
    %v5797 = vld [vmem:[#allocation10 + $0x424] sm:$0xff]
    %v5798 = vld [vmem:[#allocation10 + $0x42c] sm:$0xff]
    %v5799 = vld [vmem:[#allocation10 + $0x434] sm:$0xf]
    %v5800 = vld [vmem:[#allocation10 + $0x438] sm:$0xff]
    %v5801 = vld [vmem:[#allocation10 + $0x440] sm:$0xff]
    %v5802 = vld [vmem:[#allocation10 + $0x448] sm:$0xf]
    %v5803 = vld [vmem:[#allocation10 + $0x44c] sm:$0xff]
    %v5804 = vld [vmem:[#allocation10 + $0x454] sm:$0xff]
    %v5805 = vld [vmem:[#allocation10 + $0x45c] sm:$0xf]
    %v5806 = vld [vmem:[#allocation10 + $0x460] sm:$0xff]
    %v5807 = vld [vmem:[#allocation10 + $0x468] sm:$0xff]
    %v5808 = vld [vmem:[#allocation10 + $0x470] sm:$0xf]
    %v5809 = vld [vmem:[#allocation10 + $0x474] sm:$0xff]
    %v5810 = vld [vmem:[#allocation10 + $0x47c] sm:$0xff]
    %v5811 = vld [vmem:[#allocation10 + $0x484] sm:$0xf]
    %v5812 = vld [vmem:[#allocation10 + $0x488] sm:$0xff]
    %v5813 = vld [vmem:[#allocation10 + $0x490] sm:$0xff]
    %v5814 = vld [vmem:[#allocation10 + $0x498] sm:$0xf]
    %v5815 = vld [vmem:[#allocation10 + $0x49c] sm:$0xff]
    %v5816 = vld [vmem:[#allocation10 + $0x4a4] sm:$0xff]
    %v5817 = vld [vmem:[#allocation10 + $0x4ac] sm:$0xf]
    %v5818 = vld [vmem:[#allocation10 + $0x4b0] sm:$0xff]
    %v5819 = vld [vmem:[#allocation10 + $0x4b8] sm:$0xff]
    %v5820 = vld [vmem:[#allocation10 + $0x4c0] sm:$0xf]
    %v5821 = vld [vmem:[#allocation10 + $0x4c4] sm:$0xff]
    %v5822 = vld [vmem:[#allocation10 + $0x4cc] sm:$0xff]
    %v5823 = vld [vmem:[#allocation10 + $0x4d4] sm:$0xf]
    %v5824 = vld [vmem:[#allocation10 + $0x4d8] sm:$0xff]
    %v5825 = vld [vmem:[#allocation10 + $0x4e0] sm:$0xff]
    %v5826 = vld [vmem:[#allocation10 + $0x4e8] sm:$0xf]
    %v5827 = vld [vmem:[#allocation10 + $0x4ec] sm:$0xff]
    %v5828 = vld [vmem:[#allocation10 + $0x4f4] sm:$0xff]
    %v5829 = vld [vmem:[#allocation10 + $0x4fc] sm:$0xf]
    %v5830 = vld [vmem:[#allocation10 + $0x500] sm:$0xff]
    %v5831 = vld [vmem:[#allocation10 + $0x508] sm:$0xff]
    %v5832 = vld [vmem:[#allocation10 + $0x510] sm:$0xf]
    %v5833 = vld [vmem:[#allocation10 + $0x514] sm:$0xff]
    %v5834 = vld [vmem:[#allocation10 + $0x51c] sm:$0xff]
    %v5835 = vld [vmem:[#allocation10 + $0x524] sm:$0xf]
    %v5836 = vld [vmem:[#allocation10 + $0x528] sm:$0xff]
    %v5837 = vld [vmem:[#allocation10 + $0x530] sm:$0xff]
    %v5838 = vld [vmem:[#allocation10 + $0x538] sm:$0xf]
    %v5839 = vld [vmem:[#allocation10 + $0x53c] sm:$0xff]
    %v5840 = vld [vmem:[#allocation10 + $0x544] sm:$0xff]
    %v5841 = vld [vmem:[#allocation10 + $0x54c] sm:$0xf]
    %v5842 = vld [vmem:[#allocation10 + $0x550] sm:$0xff]
    %v5843 = vld [vmem:[#allocation10 + $0x558] sm:$0xff]
    %v5844 = vld [vmem:[#allocation10 + $0x560] sm:$0xf]
    %v5845 = vld [vmem:[#allocation10 + $0x564] sm:$0xff]
    %v5846 = vld [vmem:[#allocation10 + $0x56c] sm:$0xff]
    %v5847 = vld [vmem:[#allocation10 + $0x574] sm:$0xf]
    %v5848 = vld [vmem:[#allocation10 + $0x578] sm:$0xff]
    %v5849 = vld [vmem:[#allocation10 + $0x580] sm:$0xff]
    %v5850 = vld [vmem:[#allocation10 + $0x588] sm:$0xf]
    %v5851 = vld [vmem:[#allocation10 + $0x58c] sm:$0xff]
    %v5852 = vld [vmem:[#allocation10 + $0x594] sm:$0xff]
    %v5853 = vld [vmem:[#allocation10 + $0x59c] sm:$0xf]
    %v5854 = vld [vmem:[#allocation10 + $0x5a0] sm:$0xff]
    %v5855 = vld [vmem:[#allocation10 + $0x5a8] sm:$0xff]
    %v5856 = vld [vmem:[#allocation10 + $0x5b0] sm:$0xf]
    %v5857 = vld [vmem:[#allocation10 + $0x5b4] sm:$0xff]
    %v5858 = vld [vmem:[#allocation10 + $0x5bc] sm:$0xff]
    %v5859 = vld [vmem:[#allocation10 + $0x5c4] sm:$0xf]
    %v5860 = vld [vmem:[#allocation10 + $0x5c8] sm:$0xff]
    %v5861 = vld [vmem:[#allocation10 + $0x5d0] sm:$0xff]
    %v5862 = vld [vmem:[#allocation10 + $0x5d8] sm:$0xf]
    %v5863 = vld [vmem:[#allocation10 + $0x5dc] sm:$0xff]
    %v5864 = vld [vmem:[#allocation10 + $0x5e4] sm:$0xff]
    %v5865 = vld [vmem:[#allocation10 + $0x5ec] sm:$0xf]
    %v5866 = vld [vmem:[#allocation10 + $0x5f0] sm:$0xff]
    %v5867 = vld [vmem:[#allocation10 + $0x5f8] sm:$0xff]
    %v5868 = vld [vmem:[#allocation10 + $0x600] sm:$0xf]
    %v5869 = vld [vmem:[#allocation10 + $0x604] sm:$0xff]
    %v5870 = vld [vmem:[#allocation10 + $0x60c] sm:$0xff]
    %v5871 = vld [vmem:[#allocation10 + $0x614] sm:$0xf]
    %v5872 = vld [vmem:[#allocation10 + $0x618] sm:$0xff]
    %v5873 = vld [vmem:[#allocation10 + $0x620] sm:$0xff]
    %v5874 = vld [vmem:[#allocation10 + $0x628] sm:$0xf]
    %v5875 = vld [vmem:[#allocation10 + $0x62c] sm:$0xff]
    %v5876 = vld [vmem:[#allocation10 + $0x634] sm:$0xff]
    %v5877 = vld [vmem:[#allocation10 + $0x63c] sm:$0xf]
    %s5878 = scalar_lea.vmem [#allocation14], 3
    %v5879 = vld [vmem:[%s5878] ss:$8 sm:$0xf]
    %v5880 = vld [vmem:[%s5878] ss:$8 sm:$0x10]
    %v5881 = vor.u32 %v5879, %v5880
    %v5883 = vperm.slane %v5881, 0
    %v5884 = vperm.slane %v5881, 1
    %v5885 = vperm.slane %v5881, 2
    %v5886 = vperm.slane %v5881, 3
    %v5887 = vperm.slane %v5881, 4
    %v6133 = vunpack.c.l.b16 %v5638
    %v6134 = vunpack.c.h.b16 %v5638
    %v6135 = vunpack.c.l.b16 %v5639
    %v6136 = vunpack.c.h.b16 %v5639
    %v6137 = vunpack.c.l.b16 %v5640
    %v6138 = vunpack.c.l.b16 %v5641
    %v6139 = vunpack.c.h.b16 %v5641
    %v6140 = vunpack.c.l.b16 %v5642
    %v6141 = vunpack.c.h.b16 %v5642
    %v6142 = vunpack.c.l.b16 %v5643
    %v6143 = vunpack.c.l.b16 %v5644
    %v6144 = vunpack.c.h.b16 %v5644
    %v6145 = vunpack.c.l.b16 %v5645
    %v6146 = vunpack.c.h.b16 %v5645
    %v6147 = vunpack.c.l.b16 %v5646
    %v6148 = vunpack.c.l.b16 %v5647
    %v6149 = vunpack.c.h.b16 %v5647
    %v6150 = vunpack.c.l.b16 %v5648
    %v6151 = vunpack.c.h.b16 %v5648
    %v6152 = vunpack.c.l.b16 %v5649
    %v6153 = vunpack.c.l.b16 %v5650
    %v6154 = vunpack.c.h.b16 %v5650
    %v6155 = vunpack.c.l.b16 %v5651
    %v6156 = vunpack.c.h.b16 %v5651
    %v6157 = vunpack.c.l.b16 %v5652
    %v6158 = vunpack.c.l.b16 %v5653
    %v6159 = vunpack.c.h.b16 %v5653
    %v6160 = vunpack.c.l.b16 %v5654
    %v6161 = vunpack.c.h.b16 %v5654
    %v6162 = vunpack.c.l.b16 %v5655
    %v6163 = vunpack.c.l.b16 %v5656
    %v6164 = vunpack.c.h.b16 %v5656
    %v6165 = vunpack.c.l.b16 %v5657
    %v6166 = vunpack.c.h.b16 %v5657
    %v6167 = vunpack.c.l.b16 %v5658
    %v6168 = vunpack.c.l.b16 %v5659
    %v6169 = vunpack.c.h.b16 %v5659
    %v6170 = vunpack.c.l.b16 %v5660
    %v6171 = vunpack.c.h.b16 %v5660
    %v6172 = vunpack.c.l.b16 %v5661
    %v6173 = vunpack.c.l.b16 %v5662
    %v6174 = vunpack.c.h.b16 %v5662
    %v6175 = vunpack.c.l.b16 %v5663
    %v6176 = vunpack.c.h.b16 %v5663
    %v6177 = vunpack.c.l.b16 %v5664
    %v6178 = vunpack.c.l.b16 %v5665
    %v6179 = vunpack.c.h.b16 %v5665
    %v6180 = vunpack.c.l.b16 %v5666
    %v6181 = vunpack.c.h.b16 %v5666
    %v6182 = vunpack.c.l.b16 %v5667
    %v6183 = vunpack.c.l.b16 %v5668
    %v6184 = vunpack.c.h.b16 %v5668
    %v6185 = vunpack.c.l.b16 %v5669
    %v6186 = vunpack.c.h.b16 %v5669
    %v6187 = vunpack.c.l.b16 %v5670
    %v6188 = vunpack.c.l.b16 %v5671
    %v6189 = vunpack.c.h.b16 %v5671
    %v6190 = vunpack.c.l.b16 %v5672
    %v6191 = vunpack.c.h.b16 %v5672
    %v6192 = vunpack.c.l.b16 %v5673
    %v6193 = vunpack.c.l.b16 %v5674
    %v6194 = vunpack.c.h.b16 %v5674
    %v6195 = vunpack.c.l.b16 %v5675
    %v6196 = vunpack.c.h.b16 %v5675
    %v6197 = vunpack.c.l.b16 %v5676
    %v6198 = vunpack.c.l.b16 %v5677
    %v6199 = vunpack.c.h.b16 %v5677
    %v6200 = vunpack.c.l.b16 %v5678
    %v6201 = vunpack.c.h.b16 %v5678
    %v6202 = vunpack.c.l.b16 %v5679
    %v6203 = vunpack.c.l.b16 %v5680
    %v6204 = vunpack.c.h.b16 %v5680
    %v6205 = vunpack.c.l.b16 %v5681
    %v6206 = vunpack.c.h.b16 %v5681
    %v6207 = vunpack.c.l.b16 %v5682
    %v6208 = vunpack.c.l.b16 %v5683
    %v6209 = vunpack.c.h.b16 %v5683
    %v6210 = vunpack.c.l.b16 %v5684
    %v6211 = vunpack.c.h.b16 %v5684
    %v6212 = vunpack.c.l.b16 %v5685
    %v6213 = vunpack.c.l.b16 %v5686
    %v6214 = vunpack.c.h.b16 %v5686
    %v6215 = vunpack.c.l.b16 %v5687
    %v6216 = vunpack.c.h.b16 %v5687
    %v6217 = vunpack.c.l.b16 %v5688
    %v6218 = vunpack.c.l.b16 %v5689
    %v6219 = vunpack.c.h.b16 %v5689
    %v6220 = vunpack.c.l.b16 %v5690
    %v6221 = vunpack.c.h.b16 %v5690
    %v6222 = vunpack.c.l.b16 %v5691
    %v6223 = vunpack.c.l.b16 %v5692
    %v6224 = vunpack.c.h.b16 %v5692
    %v6225 = vunpack.c.l.b16 %v5693
    %v6226 = vunpack.c.h.b16 %v5693
    %v6227 = vunpack.c.l.b16 %v5694
    %v6228 = vunpack.c.l.b16 %v5695
    %v6229 = vunpack.c.h.b16 %v5695
    %v6230 = vunpack.c.l.b16 %v5696
    %v6231 = vunpack.c.h.b16 %v5696
    %v6232 = vunpack.c.l.b16 %v5697
    %v6233 = vunpack.c.l.b16 %v5698
    %v6234 = vunpack.c.h.b16 %v5698
    %v6235 = vunpack.c.l.b16 %v5699
    %v6236 = vunpack.c.h.b16 %v5699
    %v6237 = vunpack.c.l.b16 %v5700
    %v6238 = vunpack.c.l.b16 %v5701
    %v6239 = vunpack.c.h.b16 %v5701
    %v6240 = vunpack.c.l.b16 %v5702
    %v6241 = vunpack.c.h.b16 %v5702
    %v6242 = vunpack.c.l.b16 %v5703
    %v6243 = vunpack.c.l.b16 %v5704
    %v6244 = vunpack.c.h.b16 %v5704
    %v6245 = vunpack.c.l.b16 %v5705
    %v6246 = vunpack.c.h.b16 %v5705
    %v6247 = vunpack.c.l.b16 %v5706
    %v6248 = vunpack.c.l.b16 %v5707
    %v6249 = vunpack.c.h.b16 %v5707
    %v6250 = vunpack.c.l.b16 %v5708
    %v6251 = vunpack.c.h.b16 %v5708
    %v6252 = vunpack.c.l.b16 %v5709
    %v6253 = vunpack.c.l.b16 %v5710
    %v6254 = vunpack.c.h.b16 %v5710
    %v6255 = vunpack.c.l.b16 %v5711
    %v6256 = vunpack.c.h.b16 %v5711
    %v6257 = vunpack.c.l.b16 %v5712
    %v6258 = vunpack.c.l.b16 %v5713
    %v6259 = vunpack.c.h.b16 %v5713
    %v6260 = vunpack.c.l.b16 %v5714
    %v6261 = vunpack.c.h.b16 %v5714
    %v6262 = vunpack.c.l.b16 %v5715
    %v6263 = vunpack.c.l.b16 %v5716
    %v6264 = vunpack.c.h.b16 %v5716
    %v6265 = vunpack.c.l.b16 %v5717
    %v6266 = vunpack.c.h.b16 %v5717
    %v6267 = vunpack.c.l.b16 %v5718
    %v6268 = vunpack.c.l.b16 %v5719
    %v6269 = vunpack.c.h.b16 %v5719
    %v6270 = vunpack.c.l.b16 %v5720
    %v6271 = vunpack.c.h.b16 %v5720
    %v6272 = vunpack.c.l.b16 %v5721
    %v6273 = vunpack.c.l.b16 %v5722
    %v6274 = vunpack.c.h.b16 %v5722
    %v6275 = vunpack.c.l.b16 %v5723
    %v6276 = vunpack.c.h.b16 %v5723
    %v6277 = vunpack.c.l.b16 %v5724
    %v6278 = vunpack.c.l.b16 %v5725
    %v6279 = vunpack.c.h.b16 %v5725
    %v6280 = vunpack.c.l.b16 %v5726
    %v6281 = vunpack.c.h.b16 %v5726
    %v6282 = vunpack.c.l.b16 %v5727
    %v6283 = vunpack.c.l.b16 %v5728
    %v6284 = vunpack.c.h.b16 %v5728
    %v6285 = vunpack.c.l.b16 %v5729
    %v6286 = vunpack.c.h.b16 %v5729
    %v6287 = vunpack.c.l.b16 %v5730
    %v6288 = vunpack.c.l.b16 %v5731
    %v6289 = vunpack.c.h.b16 %v5731
    %v6290 = vunpack.c.l.b16 %v5732
    %v6291 = vunpack.c.h.b16 %v5732
    %v6292 = vunpack.c.l.b16 %v5733
    %v6293 = vunpack.c.l.b16 %v5734
    %v6294 = vunpack.c.h.b16 %v5734
    %v6295 = vunpack.c.l.b16 %v5735
    %v6296 = vunpack.c.h.b16 %v5735
    %v6297 = vunpack.c.l.b16 %v5736
    %v6298 = vunpack.c.l.b16 %v5737
    %v6299 = vunpack.c.h.b16 %v5737
    %v6300 = vunpack.c.l.b16 %v5738
    %v6301 = vunpack.c.h.b16 %v5738
    %v6302 = vunpack.c.l.b16 %v5739
    %v6303 = vunpack.c.l.b16 %v5740
    %v6304 = vunpack.c.h.b16 %v5740
    %v6305 = vunpack.c.l.b16 %v5741
    %v6306 = vunpack.c.h.b16 %v5741
    %v6307 = vunpack.c.l.b16 %v5742
    %v6308 = vunpack.c.l.b16 %v5743
    %v6309 = vunpack.c.h.b16 %v5743
    %v6310 = vunpack.c.l.b16 %v5744
    %v6311 = vunpack.c.h.b16 %v5744
    %v6312 = vunpack.c.l.b16 %v5745
    %v6313 = vunpack.c.l.b16 %v5746
    %v6314 = vunpack.c.h.b16 %v5746
    %v6315 = vunpack.c.l.b16 %v5747
    %v6316 = vunpack.c.h.b16 %v5747
    %v6317 = vunpack.c.l.b16 %v5748
    %v6318 = vunpack.c.l.b16 %v5749
    %v6319 = vunpack.c.h.b16 %v5749
    %v6320 = vunpack.c.l.b16 %v5750
    %v6321 = vunpack.c.h.b16 %v5750
    %v6322 = vunpack.c.l.b16 %v5751
    %v6323 = vunpack.c.l.b16 %v5752
    %v6324 = vunpack.c.h.b16 %v5752
    %v6325 = vunpack.c.l.b16 %v5753
    %v6326 = vunpack.c.h.b16 %v5753
    %v6327 = vunpack.c.l.b16 %v5754
    %v6328 = vunpack.c.l.b16 %v5755
    %v6329 = vunpack.c.h.b16 %v5755
    %v6330 = vunpack.c.l.b16 %v5756
    %v6331 = vunpack.c.h.b16 %v5756
    %v6332 = vunpack.c.l.b16 %v5757
    %v6333 = vunpack.c.l.b16 %v5758
    %v6334 = vunpack.c.h.b16 %v5758
    %v6335 = vunpack.c.l.b16 %v5759
    %v6336 = vunpack.c.h.b16 %v5759
    %v6337 = vunpack.c.l.b16 %v5760
    %v6338 = vunpack.c.l.b16 %v5761
    %v6339 = vunpack.c.h.b16 %v5761
    %v6340 = vunpack.c.l.b16 %v5762
    %v6341 = vunpack.c.h.b16 %v5762
    %v6342 = vunpack.c.l.b16 %v5763
    %v6343 = vunpack.c.l.b16 %v5764
    %v6344 = vunpack.c.h.b16 %v5764
    %v6345 = vunpack.c.l.b16 %v5765
    %v6346 = vunpack.c.h.b16 %v5765
    %v6347 = vunpack.c.l.b16 %v5766
    %v6348 = vunpack.c.l.b16 %v5767
    %v6349 = vunpack.c.h.b16 %v5767
    %v6350 = vunpack.c.l.b16 %v5768
    %v6351 = vunpack.c.h.b16 %v5768
    %v6352 = vunpack.c.l.b16 %v5769
    %v6353 = vunpack.c.l.b16 %v5770
    %v6354 = vunpack.c.h.b16 %v5770
    %v6355 = vunpack.c.l.b16 %v5771
    %v6356 = vunpack.c.h.b16 %v5771
    %v6357 = vunpack.c.l.b16 %v5772
    %v6358 = vunpack.c.l.b16 %v5773
    %v6359 = vunpack.c.h.b16 %v5773
    %v6360 = vunpack.c.l.b16 %v5774
    %v6361 = vunpack.c.h.b16 %v5774
    %v6362 = vunpack.c.l.b16 %v5775
    %v6363 = vunpack.c.l.b16 %v5776
    %v6364 = vunpack.c.h.b16 %v5776
    %v6365 = vunpack.c.l.b16 %v5777
    %v6366 = vunpack.c.h.b16 %v5777
    %v6367 = vunpack.c.l.b16 %v5778
    %v6368 = vunpack.c.l.b16 %v5779
    %v6369 = vunpack.c.h.b16 %v5779
    %v6370 = vunpack.c.l.b16 %v5780
    %v6371 = vunpack.c.h.b16 %v5780
    %v6372 = vunpack.c.l.b16 %v5781
    %v6373 = vunpack.c.l.b16 %v5782
    %v6374 = vunpack.c.h.b16 %v5782
    %v6375 = vunpack.c.l.b16 %v5783
    %v6376 = vunpack.c.h.b16 %v5783
    %v6377 = vunpack.c.l.b16 %v5784
    %v6378 = vunpack.c.l.b16 %v5785
    %v6379 = vunpack.c.h.b16 %v5785
    %v6380 = vunpack.c.l.b16 %v5786
    %v6381 = vunpack.c.h.b16 %v5786
    %v6382 = vunpack.c.l.b16 %v5787
    %v6383 = vunpack.c.l.b16 %v5788
    %v6384 = vunpack.c.h.b16 %v5788
    %v6385 = vunpack.c.l.b16 %v5789
    %v6386 = vunpack.c.h.b16 %v5789
    %v6387 = vunpack.c.l.b16 %v5790
    %v6388 = vunpack.c.l.b16 %v5791
    %v6389 = vunpack.c.h.b16 %v5791
    %v6390 = vunpack.c.l.b16 %v5792
    %v6391 = vunpack.c.h.b16 %v5792
    %v6392 = vunpack.c.l.b16 %v5793
    %v6393 = vunpack.c.l.b16 %v5794
    %v6394 = vunpack.c.h.b16 %v5794
    %v6395 = vunpack.c.l.b16 %v5795
    %v6396 = vunpack.c.h.b16 %v5795
    %v6397 = vunpack.c.l.b16 %v5796
    %v6398 = vunpack.c.l.b16 %v5797
    %v6399 = vunpack.c.h.b16 %v5797
    %v6400 = vunpack.c.l.b16 %v5798
    %v6401 = vunpack.c.h.b16 %v5798
    %v6402 = vunpack.c.l.b16 %v5799
    %v6403 = vunpack.c.l.b16 %v5800
    %v6404 = vunpack.c.h.b16 %v5800
    %v6405 = vunpack.c.l.b16 %v5801
    %v6406 = vunpack.c.h.b16 %v5801
    %v6407 = vunpack.c.l.b16 %v5802
    %v6408 = vunpack.c.l.b16 %v5803
    %v6409 = vunpack.c.h.b16 %v5803
    %v6410 = vunpack.c.l.b16 %v5804
    %v6411 = vunpack.c.h.b16 %v5804
    %v6412 = vunpack.c.l.b16 %v5805
    %v6413 = vunpack.c.l.b16 %v5806
    %v6414 = vunpack.c.h.b16 %v5806
    %v6415 = vunpack.c.l.b16 %v5807
    %v6416 = vunpack.c.h.b16 %v5807
    %v6417 = vunpack.c.l.b16 %v5808
    %v6418 = vunpack.c.l.b16 %v5809
    %v6419 = vunpack.c.h.b16 %v5809
    %v6420 = vunpack.c.l.b16 %v5810
    %v6421 = vunpack.c.h.b16 %v5810
    %v6422 = vunpack.c.l.b16 %v5811
    %v6423 = vunpack.c.l.b16 %v5812
    %v6424 = vunpack.c.h.b16 %v5812
    %v6425 = vunpack.c.l.b16 %v5813
    %v6426 = vunpack.c.h.b16 %v5813
    %v6427 = vunpack.c.l.b16 %v5814
    %v6428 = vunpack.c.l.b16 %v5815
    %v6429 = vunpack.c.h.b16 %v5815
    %v6430 = vunpack.c.l.b16 %v5816
    %v6431 = vunpack.c.h.b16 %v5816
    %v6432 = vunpack.c.l.b16 %v5817
    %v6433 = vunpack.c.l.b16 %v5818
    %v6434 = vunpack.c.h.b16 %v5818
    %v6435 = vunpack.c.l.b16 %v5819
    %v6436 = vunpack.c.h.b16 %v5819
    %v6437 = vunpack.c.l.b16 %v5820
    %v6438 = vunpack.c.l.b16 %v5821
    %v6439 = vunpack.c.h.b16 %v5821
    %v6440 = vunpack.c.l.b16 %v5822
    %v6441 = vunpack.c.h.b16 %v5822
    %v6442 = vunpack.c.l.b16 %v5823
    %v6443 = vunpack.c.l.b16 %v5824
    %v6444 = vunpack.c.h.b16 %v5824
    %v6445 = vunpack.c.l.b16 %v5825
    %v6446 = vunpack.c.h.b16 %v5825
    %v6447 = vunpack.c.l.b16 %v5826
    %v6448 = vunpack.c.l.b16 %v5827
    %v6449 = vunpack.c.h.b16 %v5827
    %v6450 = vunpack.c.l.b16 %v5828
    %v6451 = vunpack.c.h.b16 %v5828
    %v6452 = vunpack.c.l.b16 %v5829
    %v6453 = vunpack.c.l.b16 %v5830
    %v6454 = vunpack.c.h.b16 %v5830
    %v6455 = vunpack.c.l.b16 %v5831
    %v6456 = vunpack.c.h.b16 %v5831
    %v6457 = vunpack.c.l.b16 %v5832
    %v6458 = vunpack.c.l.b16 %v5833
    %v6459 = vunpack.c.h.b16 %v5833
    %v6460 = vunpack.c.l.b16 %v5834
    %v6461 = vunpack.c.h.b16 %v5834
    %v6462 = vunpack.c.l.b16 %v5835
    %v6463 = vunpack.c.l.b16 %v5836
    %v6464 = vunpack.c.h.b16 %v5836
    %v6465 = vunpack.c.l.b16 %v5837
    %v6466 = vunpack.c.h.b16 %v5837
    %v6467 = vunpack.c.l.b16 %v5838
    %v6468 = vunpack.c.l.b16 %v5839
    %v6469 = vunpack.c.h.b16 %v5839
    %v6470 = vunpack.c.l.b16 %v5840
    %v6471 = vunpack.c.h.b16 %v5840
    %v6472 = vunpack.c.l.b16 %v5841
    %v6473 = vunpack.c.l.b16 %v5842
    %v6474 = vunpack.c.h.b16 %v5842
    %v6475 = vunpack.c.l.b16 %v5843
    %v6476 = vunpack.c.h.b16 %v5843
    %v6477 = vunpack.c.l.b16 %v5844
    %v6478 = vunpack.c.l.b16 %v5845
    %v6479 = vunpack.c.h.b16 %v5845
    %v6480 = vunpack.c.l.b16 %v5846
    %v6481 = vunpack.c.h.b16 %v5846
    %v6482 = vunpack.c.l.b16 %v5847
    %v6483 = vunpack.c.l.b16 %v5848
    %v6484 = vunpack.c.h.b16 %v5848
    %v6485 = vunpack.c.l.b16 %v5849
    %v6486 = vunpack.c.h.b16 %v5849
    %v6487 = vunpack.c.l.b16 %v5850
    %v6488 = vunpack.c.l.b16 %v5851
    %v6489 = vunpack.c.h.b16 %v5851
    %v6490 = vunpack.c.l.b16 %v5852
    %v6491 = vunpack.c.h.b16 %v5852
    %v6492 = vunpack.c.l.b16 %v5853
    %v6493 = vunpack.c.l.b16 %v5854
    %v6494 = vunpack.c.h.b16 %v5854
    %v6495 = vunpack.c.l.b16 %v5855
    %v6496 = vunpack.c.h.b16 %v5855
    %v6497 = vunpack.c.l.b16 %v5856
    %v6498 = vunpack.c.l.b16 %v5857
    %v6499 = vunpack.c.h.b16 %v5857
    %v6500 = vunpack.c.l.b16 %v5858
    %v6501 = vunpack.c.h.b16 %v5858
    %v6502 = vunpack.c.l.b16 %v5859
    %v6503 = vunpack.c.l.b16 %v5860
    %v6504 = vunpack.c.h.b16 %v5860
    %v6505 = vunpack.c.l.b16 %v5861
    %v6506 = vunpack.c.h.b16 %v5861
    %v6507 = vunpack.c.l.b16 %v5862
    %v6508 = vunpack.c.l.b16 %v5863
    %v6509 = vunpack.c.h.b16 %v5863
    %v6510 = vunpack.c.l.b16 %v5864
    %v6511 = vunpack.c.h.b16 %v5864
    %v6512 = vunpack.c.l.b16 %v5865
    %v6513 = vunpack.c.l.b16 %v5866
    %v6514 = vunpack.c.h.b16 %v5866
    %v6515 = vunpack.c.l.b16 %v5867
    %v6516 = vunpack.c.h.b16 %v5867
    %v6517 = vunpack.c.l.b16 %v5868
    %v6518 = vunpack.c.l.b16 %v5869
    %v6519 = vunpack.c.h.b16 %v5869
    %v6520 = vunpack.c.l.b16 %v5870
    %v6521 = vunpack.c.h.b16 %v5870
    %v6522 = vunpack.c.l.b16 %v5871
    %v6523 = vunpack.c.l.b16 %v5872
    %v6524 = vunpack.c.h.b16 %v5872
    %v6525 = vunpack.c.l.b16 %v5873
    %v6526 = vunpack.c.h.b16 %v5873
    %v6527 = vunpack.c.l.b16 %v5874
    %v6528 = vunpack.c.l.b16 %v5875
    %v6529 = vunpack.c.h.b16 %v5875
    %v6530 = vunpack.c.l.b16 %v5876
    %v6531 = vunpack.c.h.b16 %v5876
    %v6532 = vunpack.c.l.b16 %v5877
    %v6533 = vpack.c.b16 %v6138, %v6133
    %v6534 = vpack.c.b16 %v6139, %v6134
    %v6535 = vpack.c.b16 %v6140, %v6135
    %v6536 = vpack.c.b16 %v6141, %v6136
    %v6537 = vpack.c.b16 %v6142, %v6137
    %v6538 = vpack.c.b16 %v6148, %v6143
    %v6539 = vpack.c.b16 %v6149, %v6144
    %v6540 = vpack.c.b16 %v6150, %v6145
    %v6541 = vpack.c.b16 %v6151, %v6146
    %v6542 = vpack.c.b16 %v6152, %v6147
    %v6543 = vpack.c.b16 %v6158, %v6153
    %v6544 = vpack.c.b16 %v6159, %v6154
    %v6545 = vpack.c.b16 %v6160, %v6155
    %v6546 = vpack.c.b16 %v6161, %v6156
    %v6547 = vpack.c.b16 %v6162, %v6157
    %v6548 = vpack.c.b16 %v6168, %v6163
    %v6549 = vpack.c.b16 %v6169, %v6164
    %v6550 = vpack.c.b16 %v6170, %v6165
    %v6551 = vpack.c.b16 %v6171, %v6166
    %v6552 = vpack.c.b16 %v6172, %v6167
    %v6553 = vpack.c.b16 %v6178, %v6173
    %v6554 = vpack.c.b16 %v6179, %v6174
    %v6555 = vpack.c.b16 %v6180, %v6175
    %v6556 = vpack.c.b16 %v6181, %v6176
    %v6557 = vpack.c.b16 %v6182, %v6177
    %v6558 = vpack.c.b16 %v6188, %v6183
    %v6559 = vpack.c.b16 %v6189, %v6184
    %v6560 = vpack.c.b16 %v6190, %v6185
    %v6561 = vpack.c.b16 %v6191, %v6186
    %v6562 = vpack.c.b16 %v6192, %v6187
    %v6563 = vpack.c.b16 %v6198, %v6193
    %v6564 = vpack.c.b16 %v6199, %v6194
    %v6565 = vpack.c.b16 %v6200, %v6195
    %v6566 = vpack.c.b16 %v6201, %v6196
    %v6567 = vpack.c.b16 %v6202, %v6197
    %v6568 = vpack.c.b16 %v6208, %v6203
    %v6569 = vpack.c.b16 %v6209, %v6204
    %v6570 = vpack.c.b16 %v6210, %v6205
    %v6571 = vpack.c.b16 %v6211, %v6206
    %v6572 = vpack.c.b16 %v6212, %v6207
    %v6573 = vpack.c.b16 %v6218, %v6213
    %v6574 = vpack.c.b16 %v6219, %v6214
    %v6575 = vpack.c.b16 %v6220, %v6215
    %v6576 = vpack.c.b16 %v6221, %v6216
    %v6577 = vpack.c.b16 %v6222, %v6217
    %v6578 = vpack.c.b16 %v6228, %v6223
    %v6579 = vpack.c.b16 %v6229, %v6224
    %v6580 = vpack.c.b16 %v6230, %v6225
    %v6581 = vpack.c.b16 %v6231, %v6226
    %v6582 = vpack.c.b16 %v6232, %v6227
    %v6583 = vpack.c.b16 %v6238, %v6233
    %v6584 = vpack.c.b16 %v6239, %v6234
    %v6585 = vpack.c.b16 %v6240, %v6235
    %v6586 = vpack.c.b16 %v6241, %v6236
    %v6587 = vpack.c.b16 %v6242, %v6237
    %v6588 = vpack.c.b16 %v6248, %v6243
    %v6589 = vpack.c.b16 %v6249, %v6244
    %v6590 = vpack.c.b16 %v6250, %v6245
    %v6591 = vpack.c.b16 %v6251, %v6246
    %v6592 = vpack.c.b16 %v6252, %v6247
    %v6593 = vpack.c.b16 %v6258, %v6253
    %v6594 = vpack.c.b16 %v6259, %v6254
    %v6595 = vpack.c.b16 %v6260, %v6255
    %v6596 = vpack.c.b16 %v6261, %v6256
    %v6597 = vpack.c.b16 %v6262, %v6257
    %v6598 = vpack.c.b16 %v6268, %v6263
    %v6599 = vpack.c.b16 %v6269, %v6264
    %v6600 = vpack.c.b16 %v6270, %v6265
    %v6601 = vpack.c.b16 %v6271, %v6266
    %v6602 = vpack.c.b16 %v6272, %v6267
    %v6603 = vpack.c.b16 %v6278, %v6273
    %v6604 = vpack.c.b16 %v6279, %v6274
    %v6605 = vpack.c.b16 %v6280, %v6275
    %v6606 = vpack.c.b16 %v6281, %v6276
    %v6607 = vpack.c.b16 %v6282, %v6277
    %v6608 = vpack.c.b16 %v6288, %v6283
    %v6609 = vpack.c.b16 %v6289, %v6284
    %v6610 = vpack.c.b16 %v6290, %v6285
    %v6611 = vpack.c.b16 %v6291, %v6286
    %v6612 = vpack.c.b16 %v6292, %v6287
    %v6613 = vpack.c.b16 %v6298, %v6293
    %v6614 = vpack.c.b16 %v6299, %v6294
    %v6615 = vpack.c.b16 %v6300, %v6295
    %v6616 = vpack.c.b16 %v6301, %v6296
    %v6617 = vpack.c.b16 %v6302, %v6297
    %v6618 = vpack.c.b16 %v6308, %v6303
    %v6619 = vpack.c.b16 %v6309, %v6304
    %v6620 = vpack.c.b16 %v6310, %v6305
    %v6621 = vpack.c.b16 %v6311, %v6306
    %v6622 = vpack.c.b16 %v6312, %v6307
    %v6623 = vpack.c.b16 %v6318, %v6313
    %v6624 = vpack.c.b16 %v6319, %v6314
    %v6625 = vpack.c.b16 %v6320, %v6315
    %v6626 = vpack.c.b16 %v6321, %v6316
    %v6627 = vpack.c.b16 %v6322, %v6317
    %v6628 = vpack.c.b16 %v6328, %v6323
    %v6629 = vpack.c.b16 %v6329, %v6324
    %v6630 = vpack.c.b16 %v6330, %v6325
    %v6631 = vpack.c.b16 %v6331, %v6326
    %v6632 = vpack.c.b16 %v6332, %v6327
    %v6633 = vpack.c.b16 %v6338, %v6333
    %v6634 = vpack.c.b16 %v6339, %v6334
    %v6635 = vpack.c.b16 %v6340, %v6335
    %v6636 = vpack.c.b16 %v6341, %v6336
    %v6637 = vpack.c.b16 %v6342, %v6337
    %v6638 = vpack.c.b16 %v6348, %v6343
    %v6639 = vpack.c.b16 %v6349, %v6344
    %v6640 = vpack.c.b16 %v6350, %v6345
    %v6641 = vpack.c.b16 %v6351, %v6346
    %v6642 = vpack.c.b16 %v6352, %v6347
    %v6643 = vpack.c.b16 %v6358, %v6353
    %v6644 = vpack.c.b16 %v6359, %v6354
    %v6645 = vpack.c.b16 %v6360, %v6355
    %v6646 = vpack.c.b16 %v6361, %v6356
    %v6647 = vpack.c.b16 %v6362, %v6357
    %v6648 = vpack.c.b16 %v6368, %v6363
    %v6649 = vpack.c.b16 %v6369, %v6364
    %v6650 = vpack.c.b16 %v6370, %v6365
    %v6651 = vpack.c.b16 %v6371, %v6366
    %v6652 = vpack.c.b16 %v6372, %v6367
    %v6653 = vpack.c.b16 %v6378, %v6373
    %v6654 = vpack.c.b16 %v6379, %v6374
    %v6655 = vpack.c.b16 %v6380, %v6375
    %v6656 = vpack.c.b16 %v6381, %v6376
    %v6657 = vpack.c.b16 %v6382, %v6377
    %v6658 = vpack.c.b16 %v6388, %v6383
    %v6659 = vpack.c.b16 %v6389, %v6384
    %v6660 = vpack.c.b16 %v6390, %v6385
    %v6661 = vpack.c.b16 %v6391, %v6386
    %v6662 = vpack.c.b16 %v6392, %v6387
    %v6663 = vpack.c.b16 %v6398, %v6393
    %v6664 = vpack.c.b16 %v6399, %v6394
    %v6665 = vpack.c.b16 %v6400, %v6395
    %v6666 = vpack.c.b16 %v6401, %v6396
    %v6667 = vpack.c.b16 %v6402, %v6397
    %v6668 = vpack.c.b16 %v6408, %v6403
    %v6669 = vpack.c.b16 %v6409, %v6404
    %v6670 = vpack.c.b16 %v6410, %v6405
    %v6671 = vpack.c.b16 %v6411, %v6406
    %v6672 = vpack.c.b16 %v6412, %v6407
    %v6673 = vpack.c.b16 %v6418, %v6413
    %v6674 = vpack.c.b16 %v6419, %v6414
    %v6675 = vpack.c.b16 %v6420, %v6415
    %v6676 = vpack.c.b16 %v6421, %v6416
    %v6677 = vpack.c.b16 %v6422, %v6417
    %v6678 = vpack.c.b16 %v6428, %v6423
    %v6679 = vpack.c.b16 %v6429, %v6424
    %v6680 = vpack.c.b16 %v6430, %v6425
    %v6681 = vpack.c.b16 %v6431, %v6426
    %v6682 = vpack.c.b16 %v6432, %v6427
    %v6683 = vpack.c.b16 %v6438, %v6433
    %v6684 = vpack.c.b16 %v6439, %v6434
    %v6685 = vpack.c.b16 %v6440, %v6435
    %v6686 = vpack.c.b16 %v6441, %v6436
    %v6687 = vpack.c.b16 %v6442, %v6437
    %v6688 = vpack.c.b16 %v6448, %v6443
    %v6689 = vpack.c.b16 %v6449, %v6444
    %v6690 = vpack.c.b16 %v6450, %v6445
    %v6691 = vpack.c.b16 %v6451, %v6446
    %v6692 = vpack.c.b16 %v6452, %v6447
    %v6693 = vpack.c.b16 %v6458, %v6453
    %v6694 = vpack.c.b16 %v6459, %v6454
    %v6695 = vpack.c.b16 %v6460, %v6455
    %v6696 = vpack.c.b16 %v6461, %v6456
    %v6697 = vpack.c.b16 %v6462, %v6457
    %v6698 = vpack.c.b16 %v6468, %v6463
    %v6699 = vpack.c.b16 %v6469, %v6464
    %v6700 = vpack.c.b16 %v6470, %v6465
    %v6701 = vpack.c.b16 %v6471, %v6466
    %v6702 = vpack.c.b16 %v6472, %v6467
    %v6703 = vpack.c.b16 %v6478, %v6473
    %v6704 = vpack.c.b16 %v6479, %v6474
    %v6705 = vpack.c.b16 %v6480, %v6475
    %v6706 = vpack.c.b16 %v6481, %v6476
    %v6707 = vpack.c.b16 %v6482, %v6477
    %v6708 = vpack.c.b16 %v6488, %v6483
    %v6709 = vpack.c.b16 %v6489, %v6484
    %v6710 = vpack.c.b16 %v6490, %v6485
    %v6711 = vpack.c.b16 %v6491, %v6486
    %v6712 = vpack.c.b16 %v6492, %v6487
    %v6713 = vpack.c.b16 %v6498, %v6493
    %v6714 = vpack.c.b16 %v6499, %v6494
    %v6715 = vpack.c.b16 %v6500, %v6495
    %v6716 = vpack.c.b16 %v6501, %v6496
    %v6717 = vpack.c.b16 %v6502, %v6497
    %v6718 = vpack.c.b16 %v6508, %v6503
    %v6719 = vpack.c.b16 %v6509, %v6504
    %v6720 = vpack.c.b16 %v6510, %v6505
    %v6721 = vpack.c.b16 %v6511, %v6506
    %v6722 = vpack.c.b16 %v6512, %v6507
    %v6723 = vpack.c.b16 %v6518, %v6513
    %v6724 = vpack.c.b16 %v6519, %v6514
    %v6725 = vpack.c.b16 %v6520, %v6515
    %v6726 = vpack.c.b16 %v6521, %v6516
    %v6727 = vpack.c.b16 %v6522, %v6517
    %v6728 = vpack.c.b16 %v6528, %v6523
    %v6729 = vpack.c.b16 %v6529, %v6524
    %v6730 = vpack.c.b16 %v6530, %v6525
    %v6731 = vpack.c.b16 %v6531, %v6526
    %v6732 = vpack.c.b16 %v6532, %v6527
    %6933 = vmatpush.bf16.msra.mxu0 %v6568
    %6934 = vmatpush.bf16.msra.mxu0 %v6563
    %6935 = vmatpush.bf16.msra.mxu0 %v6558
    %6936 = vmatpush.bf16.msra.mxu0 %v6553
    %6937 = vmatpush.bf16.msra.mxu0 %v6548
    %6938 = vmatpush.bf16.msra.mxu0 %v6543
    %6939 = vmatpush.bf16.msra.mxu0 %v6538
    %6940 = vmatpush.bf16.msra.mxu0 %v6533
    %6941 = vmatmul.bf16.gmra.mxu0 %v5633
    %v6942 = vpop.f32.mrf.mxu0
    %v6943 = vadd.f32 %v5883, %v6942
    %v6944 = vpop.f32.mrf.mxu0
    %v6945 = vadd.f32 %v5883, %v6944
    %6946 = vdwg.mxu0
    %6947 = vmatpush.bf16.msra.mxu0 %v6608
    %6948 = vmatpush.bf16.msra.mxu0 %v6603
    %6949 = vmatpush.bf16.msra.mxu0 %v6598
    %6950 = vmatpush.bf16.msra.mxu0 %v6593
    %6951 = vmatpush.bf16.msra.mxu0 %v6588
    %6952 = vmatpush.bf16.msra.mxu0 %v6583
    %6953 = vmatpush.bf16.msra.mxu0 %v6578
    %6954 = vmatpush.bf16.msra.mxu0 %v6573
    %6955 = vmatmul.bf16.gmra.mxu0 %v5634
    %v6956 = vpop.f32.mrf.mxu0
    %v6957 = vadd.f32 %v6943, %v6956
    %v6958 = vpop.f32.mrf.mxu0
    %v6959 = vadd.f32 %v6945, %v6958
    %6960 = vdwg.mxu0
    %6961 = vmatpush.bf16.msra.mxu0 %v6648
    %6962 = vmatpush.bf16.msra.mxu0 %v6643
    %6963 = vmatpush.bf16.msra.mxu0 %v6638
    %6964 = vmatpush.bf16.msra.mxu0 %v6633
    %6965 = vmatpush.bf16.msra.mxu0 %v6628
    %6966 = vmatpush.bf16.msra.mxu0 %v6623
    %6967 = vmatpush.bf16.msra.mxu0 %v6618
    %6968 = vmatpush.bf16.msra.mxu0 %v6613
    %6969 = vmatmul.bf16.gmra.mxu0 %v5635
    %v6970 = vpop.f32.mrf.mxu0
    %v6971 = vadd.f32 %v6957, %v6970
    %v6972 = vpop.f32.mrf.mxu0
    %v6973 = vadd.f32 %v6959, %v6972
    %6974 = vdwg.mxu0
    %6975 = vmatpush.bf16.msra.mxu0 %v6688
    %6976 = vmatpush.bf16.msra.mxu0 %v6683
    %6977 = vmatpush.bf16.msra.mxu0 %v6678
    %6978 = vmatpush.bf16.msra.mxu0 %v6673
    %6979 = vmatpush.bf16.msra.mxu0 %v6668
    %6980 = vmatpush.bf16.msra.mxu0 %v6663
    %6981 = vmatpush.bf16.msra.mxu0 %v6658
    %6982 = vmatpush.bf16.msra.mxu0 %v6653
    %6983 = vmatmul.bf16.gmra.mxu0 %v5636
    %v6984 = vpop.f32.mrf.mxu0
    %v6985 = vadd.f32 %v6971, %v6984
    %v6986 = vpop.f32.mrf.mxu0
    %v6987 = vadd.f32 %v6973, %v6986
    %6988 = vdwg.mxu0
    %6989 = vmatpush.bf16.msra.mxu0 %v6728
    %6990 = vmatpush.bf16.msra.mxu0 %v6723
    %6991 = vmatpush.bf16.msra.mxu0 %v6718
    %6992 = vmatpush.bf16.msra.mxu0 %v6713
    %6993 = vmatpush.bf16.msra.mxu0 %v6708
    %6994 = vmatpush.bf16.msra.mxu0 %v6703
    %6995 = vmatpush.bf16.msra.mxu0 %v6698
    %6996 = vmatpush.bf16.msra.mxu0 %v6693
    %6997 = vmatmul.bf16.gmra.mxu0 %v5637
    %v6998 = vpop.f32.mrf.mxu0
    %v6999 = vadd.f32 %v6985, %v6998
    %v7000 = vpop.f32.mrf.mxu0
    %v7001 = vadd.f32 %v6987, %v7000
    %7002 = vdwg.mxu0
    %7003 = vmatpush.bf16.msra.mxu0 %v6569
    %7004 = vmatpush.bf16.msra.mxu0 %v6564
    %7005 = vmatpush.bf16.msra.mxu0 %v6559
    %7006 = vmatpush.bf16.msra.mxu0 %v6554
    %7007 = vmatpush.bf16.msra.mxu0 %v6549
    %7008 = vmatpush.bf16.msra.mxu0 %v6544
    %7009 = vmatpush.bf16.msra.mxu0 %v6539
    %7010 = vmatpush.bf16.msra.mxu0 %v6534
    %7011 = vmatmul.bf16.gmra.mxu0 %v5633
    %v7012 = vpop.f32.mrf.mxu0
    %v7013 = vadd.f32 %v5884, %v7012
    %v7014 = vpop.f32.mrf.mxu0
    %v7015 = vadd.f32 %v5884, %v7014
    %7016 = vdwg.mxu0
    %7017 = vmatpush.bf16.msra.mxu0 %v6609
    %7018 = vmatpush.bf16.msra.mxu0 %v6604
    %7019 = vmatpush.bf16.msra.mxu0 %v6599
    %7020 = vmatpush.bf16.msra.mxu0 %v6594
    %7021 = vmatpush.bf16.msra.mxu0 %v6589
    %7022 = vmatpush.bf16.msra.mxu0 %v6584
    %7023 = vmatpush.bf16.msra.mxu0 %v6579
    %7024 = vmatpush.bf16.msra.mxu0 %v6574
    %7025 = vmatmul.bf16.gmra.mxu0 %v5634
    %v7026 = vpop.f32.mrf.mxu0
    %v7027 = vadd.f32 %v7013, %v7026
    %v7028 = vpop.f32.mrf.mxu0
    %v7029 = vadd.f32 %v7015, %v7028
    %7030 = vdwg.mxu0
    %7031 = vmatpush.bf16.msra.mxu0 %v6649
    %7032 = vmatpush.bf16.msra.mxu0 %v6644
    %7033 = vmatpush.bf16.msra.mxu0 %v6639
    %7034 = vmatpush.bf16.msra.mxu0 %v6634
    %7035 = vmatpush.bf16.msra.mxu0 %v6629
    %7036 = vmatpush.bf16.msra.mxu0 %v6624
    %7037 = vmatpush.bf16.msra.mxu0 %v6619
    %7038 = vmatpush.bf16.msra.mxu0 %v6614
    %7039 = vmatmul.bf16.gmra.mxu0 %v5635
    %v7040 = vpop.f32.mrf.mxu0
    %v7041 = vadd.f32 %v7027, %v7040
    %v7042 = vpop.f32.mrf.mxu0
    %v7043 = vadd.f32 %v7029, %v7042
    %7044 = vdwg.mxu0
    %7045 = vmatpush.bf16.msra.mxu0 %v6689
    %7046 = vmatpush.bf16.msra.mxu0 %v6684
    %7047 = vmatpush.bf16.msra.mxu0 %v6679
    %7048 = vmatpush.bf16.msra.mxu0 %v6674
    %7049 = vmatpush.bf16.msra.mxu0 %v6669
    %7050 = vmatpush.bf16.msra.mxu0 %v6664
    %7051 = vmatpush.bf16.msra.mxu0 %v6659
    %7052 = vmatpush.bf16.msra.mxu0 %v6654
    %7053 = vmatmul.bf16.gmra.mxu0 %v5636
    %v7054 = vpop.f32.mrf.mxu0
    %v7055 = vadd.f32 %v7041, %v7054
    %v7056 = vpop.f32.mrf.mxu0
    %v7057 = vadd.f32 %v7043, %v7056
    %7058 = vdwg.mxu0
    %7059 = vmatpush.bf16.msra.mxu0 %v6729
    %7060 = vmatpush.bf16.msra.mxu0 %v6724
    %7061 = vmatpush.bf16.msra.mxu0 %v6719
    %7062 = vmatpush.bf16.msra.mxu0 %v6714
    %7063 = vmatpush.bf16.msra.mxu0 %v6709
    %7064 = vmatpush.bf16.msra.mxu0 %v6704
    %7065 = vmatpush.bf16.msra.mxu0 %v6699
    %7066 = vmatpush.bf16.msra.mxu0 %v6694
    %7067 = vmatmul.bf16.gmra.mxu0 %v5637
    %v7068 = vpop.f32.mrf.mxu0
    %v7069 = vadd.f32 %v7055, %v7068
    %v7070 = vpop.f32.mrf.mxu0
    %v7071 = vadd.f32 %v7057, %v7070
    %7072 = vdwg.mxu0
    %7073 = vmatpush.bf16.msra.mxu0 %v6570
    %7074 = vmatpush.bf16.msra.mxu0 %v6565
    %7075 = vmatpush.bf16.msra.mxu0 %v6560
    %7076 = vmatpush.bf16.msra.mxu0 %v6555
    %7077 = vmatpush.bf16.msra.mxu0 %v6550
    %7078 = vmatpush.bf16.msra.mxu0 %v6545
    %7079 = vmatpush.bf16.msra.mxu0 %v6540
    %7080 = vmatpush.bf16.msra.mxu0 %v6535
    %7081 = vmatmul.bf16.gmra.mxu0 %v5633
    %v7082 = vpop.f32.mrf.mxu0
    %v7083 = vadd.f32 %v5885, %v7082
    %v7084 = vpop.f32.mrf.mxu0
    %v7085 = vadd.f32 %v5885, %v7084
    %7086 = vdwg.mxu0
    %7087 = vmatpush.bf16.msra.mxu0 %v6610
    %7088 = vmatpush.bf16.msra.mxu0 %v6605
    %7089 = vmatpush.bf16.msra.mxu0 %v6600
    %7090 = vmatpush.bf16.msra.mxu0 %v6595
    %7091 = vmatpush.bf16.msra.mxu0 %v6590
    %7092 = vmatpush.bf16.msra.mxu0 %v6585
    %7093 = vmatpush.bf16.msra.mxu0 %v6580
    %7094 = vmatpush.bf16.msra.mxu0 %v6575
    %7095 = vmatmul.bf16.gmra.mxu0 %v5634
    %v7096 = vpop.f32.mrf.mxu0
    %v7097 = vadd.f32 %v7083, %v7096
    %v7098 = vpop.f32.mrf.mxu0
    %v7099 = vadd.f32 %v7085, %v7098
    %7100 = vdwg.mxu0
    %7101 = vmatpush.bf16.msra.mxu0 %v6650
    %7102 = vmatpush.bf16.msra.mxu0 %v6645
    %7103 = vmatpush.bf16.msra.mxu0 %v6640
    %7104 = vmatpush.bf16.msra.mxu0 %v6635
    %7105 = vmatpush.bf16.msra.mxu0 %v6630
    %7106 = vmatpush.bf16.msra.mxu0 %v6625
    %7107 = vmatpush.bf16.msra.mxu0 %v6620
    %7108 = vmatpush.bf16.msra.mxu0 %v6615
    %7109 = vmatmul.bf16.gmra.mxu0 %v5635
    %v7110 = vpop.f32.mrf.mxu0
    %v7111 = vadd.f32 %v7097, %v7110
    %v7112 = vpop.f32.mrf.mxu0
    %v7113 = vadd.f32 %v7099, %v7112
    %7114 = vdwg.mxu0
    %7115 = vmatpush.bf16.msra.mxu0 %v6690
    %7116 = vmatpush.bf16.msra.mxu0 %v6685
    %7117 = vmatpush.bf16.msra.mxu0 %v6680
    %7118 = vmatpush.bf16.msra.mxu0 %v6675
    %7119 = vmatpush.bf16.msra.mxu0 %v6670
    %7120 = vmatpush.bf16.msra.mxu0 %v6665
    %7121 = vmatpush.bf16.msra.mxu0 %v6660
    %7122 = vmatpush.bf16.msra.mxu0 %v6655
    %7123 = vmatmul.bf16.gmra.mxu0 %v5636
    %v7124 = vpop.f32.mrf.mxu0
    %v7125 = vadd.f32 %v7111, %v7124
    %v7126 = vpop.f32.mrf.mxu0
    %v7127 = vadd.f32 %v7113, %v7126
    %7128 = vdwg.mxu0
    %7129 = vmatpush.bf16.msra.mxu0 %v6730
    %7130 = vmatpush.bf16.msra.mxu0 %v6725
    %7131 = vmatpush.bf16.msra.mxu0 %v6720
    %7132 = vmatpush.bf16.msra.mxu0 %v6715
    %7133 = vmatpush.bf16.msra.mxu0 %v6710
    %7134 = vmatpush.bf16.msra.mxu0 %v6705
    %7135 = vmatpush.bf16.msra.mxu0 %v6700
    %7136 = vmatpush.bf16.msra.mxu0 %v6695
    %7137 = vmatmul.bf16.gmra.mxu0 %v5637
    %v7138 = vpop.f32.mrf.mxu0
    %v7139 = vadd.f32 %v7125, %v7138
    %v7140 = vpop.f32.mrf.mxu0
    %v7141 = vadd.f32 %v7127, %v7140
    %7142 = vdwg.mxu0
    %7143 = vmatpush.bf16.msra.mxu0 %v6571
    %7144 = vmatpush.bf16.msra.mxu0 %v6566
    %7145 = vmatpush.bf16.msra.mxu0 %v6561
    %7146 = vmatpush.bf16.msra.mxu0 %v6556
    %7147 = vmatpush.bf16.msra.mxu0 %v6551
    %7148 = vmatpush.bf16.msra.mxu0 %v6546
    %7149 = vmatpush.bf16.msra.mxu0 %v6541
    %7150 = vmatpush.bf16.msra.mxu0 %v6536
    %7151 = vmatmul.bf16.gmra.mxu0 %v5633
    %v7152 = vpop.f32.mrf.mxu0
    %v7153 = vadd.f32 %v5886, %v7152
    %v7154 = vpop.f32.mrf.mxu0
    %v7155 = vadd.f32 %v5886, %v7154
    %7156 = vdwg.mxu0
    %7157 = vmatpush.bf16.msra.mxu0 %v6611
    %7158 = vmatpush.bf16.msra.mxu0 %v6606
    %7159 = vmatpush.bf16.msra.mxu0 %v6601
    %7160 = vmatpush.bf16.msra.mxu0 %v6596
    %7161 = vmatpush.bf16.msra.mxu0 %v6591
    %7162 = vmatpush.bf16.msra.mxu0 %v6586
    %7163 = vmatpush.bf16.msra.mxu0 %v6581
    %7164 = vmatpush.bf16.msra.mxu0 %v6576
    %7165 = vmatmul.bf16.gmra.mxu0 %v5634
    %v7166 = vpop.f32.mrf.mxu0
    %v7167 = vadd.f32 %v7153, %v7166
    %v7168 = vpop.f32.mrf.mxu0
    %v7169 = vadd.f32 %v7155, %v7168
    %7170 = vdwg.mxu0
    %7171 = vmatpush.bf16.msra.mxu0 %v6651
    %7172 = vmatpush.bf16.msra.mxu0 %v6646
    %7173 = vmatpush.bf16.msra.mxu0 %v6641
    %7174 = vmatpush.bf16.msra.mxu0 %v6636
    %7175 = vmatpush.bf16.msra.mxu0 %v6631
    %7176 = vmatpush.bf16.msra.mxu0 %v6626
    %7177 = vmatpush.bf16.msra.mxu0 %v6621
    %7178 = vmatpush.bf16.msra.mxu0 %v6616
    %7179 = vmatmul.bf16.gmra.mxu0 %v5635
    %v7180 = vpop.f32.mrf.mxu0
    %v7181 = vadd.f32 %v7167, %v7180
    %v7182 = vpop.f32.mrf.mxu0
    %v7183 = vadd.f32 %v7169, %v7182
    %7184 = vdwg.mxu0
    %7185 = vmatpush.bf16.msra.mxu0 %v6691
    %7186 = vmatpush.bf16.msra.mxu0 %v6686
    %7187 = vmatpush.bf16.msra.mxu0 %v6681
    %7188 = vmatpush.bf16.msra.mxu0 %v6676
    %7189 = vmatpush.bf16.msra.mxu0 %v6671
    %7190 = vmatpush.bf16.msra.mxu0 %v6666
    %7191 = vmatpush.bf16.msra.mxu0 %v6661
    %7192 = vmatpush.bf16.msra.mxu0 %v6656
    %7193 = vmatmul.bf16.gmra.mxu0 %v5636
    %v7194 = vpop.f32.mrf.mxu0
    %v7195 = vadd.f32 %v7181, %v7194
    %v7196 = vpop.f32.mrf.mxu0
    %v7197 = vadd.f32 %v7183, %v7196
    %7198 = vdwg.mxu0
    %7199 = vmatpush.bf16.msra.mxu0 %v6731
    %7200 = vmatpush.bf16.msra.mxu0 %v6726
    %7201 = vmatpush.bf16.msra.mxu0 %v6721
    %7202 = vmatpush.bf16.msra.mxu0 %v6716
    %7203 = vmatpush.bf16.msra.mxu0 %v6711
    %7204 = vmatpush.bf16.msra.mxu0 %v6706
    %7205 = vmatpush.bf16.msra.mxu0 %v6701
    %7206 = vmatpush.bf16.msra.mxu0 %v6696
    %7207 = vmatmul.bf16.gmra.mxu0 %v5637
    %v7208 = vpop.f32.mrf.mxu0
    %v7209 = vadd.f32 %v7195, %v7208
    %v7210 = vpop.f32.mrf.mxu0
    %v7211 = vadd.f32 %v7197, %v7210
    %7212 = vdwg.mxu0
    %7213 = vmatpush.bf16.msra.mxu0 %v6572
    %7214 = vmatpush.bf16.msra.mxu0 %v6567
    %7215 = vmatpush.bf16.msra.mxu0 %v6562
    %7216 = vmatpush.bf16.msra.mxu0 %v6557
    %7217 = vmatpush.bf16.msra.mxu0 %v6552
    %7218 = vmatpush.bf16.msra.mxu0 %v6547
    %7219 = vmatpush.bf16.msra.mxu0 %v6542
    %7220 = vmatpush.bf16.msra.mxu0 %v6537
    %7221 = vmatmul.bf16.gmra.mxu0 %v5633
    %v7222 = vpop.f32.mrf.mxu0
    %v7223 = vadd.f32 %v5887, %v7222
    %v7224 = vpop.f32.mrf.mxu0
    %v7225 = vadd.f32 %v5887, %v7224
    %7226 = vdwg.mxu0
    %7227 = vmatpush.bf16.msra.mxu0 %v6612
    %7228 = vmatpush.bf16.msra.mxu0 %v6607
    %7229 = vmatpush.bf16.msra.mxu0 %v6602
    %7230 = vmatpush.bf16.msra.mxu0 %v6597
    %7231 = vmatpush.bf16.msra.mxu0 %v6592
    %7232 = vmatpush.bf16.msra.mxu0 %v6587
    %7233 = vmatpush.bf16.msra.mxu0 %v6582
    %7234 = vmatpush.bf16.msra.mxu0 %v6577
    %7235 = vmatmul.bf16.gmra.mxu0 %v5634
    %v7236 = vpop.f32.mrf.mxu0
    %v7237 = vadd.f32 %v7223, %v7236
    %v7238 = vpop.f32.mrf.mxu0
    %v7239 = vadd.f32 %v7225, %v7238
    %7240 = vdwg.mxu0
    %7241 = vmatpush.bf16.msra.mxu0 %v6652
    %7242 = vmatpush.bf16.msra.mxu0 %v6647
    %7243 = vmatpush.bf16.msra.mxu0 %v6642
    %7244 = vmatpush.bf16.msra.mxu0 %v6637
    %7245 = vmatpush.bf16.msra.mxu0 %v6632
    %7246 = vmatpush.bf16.msra.mxu0 %v6627
    %7247 = vmatpush.bf16.msra.mxu0 %v6622
    %7248 = vmatpush.bf16.msra.mxu0 %v6617
    %7249 = vmatmul.bf16.gmra.mxu0 %v5635
    %v7250 = vpop.f32.mrf.mxu0
    %v7251 = vadd.f32 %v7237, %v7250
    %v7252 = vpop.f32.mrf.mxu0
    %v7253 = vadd.f32 %v7239, %v7252
    %7254 = vdwg.mxu0
    %7255 = vmatpush.bf16.msra.mxu0 %v6692
    %7256 = vmatpush.bf16.msra.mxu0 %v6687
    %7257 = vmatpush.bf16.msra.mxu0 %v6682
    %7258 = vmatpush.bf16.msra.mxu0 %v6677
    %7259 = vmatpush.bf16.msra.mxu0 %v6672
    %7260 = vmatpush.bf16.msra.mxu0 %v6667
    %7261 = vmatpush.bf16.msra.mxu0 %v6662
    %7262 = vmatpush.bf16.msra.mxu0 %v6657
    %7263 = vmatmul.bf16.gmra.mxu0 %v5636
    %v7264 = vpop.f32.mrf.mxu0
    %v7265 = vadd.f32 %v7251, %v7264
    %v7266 = vpop.f32.mrf.mxu0
    %v7267 = vadd.f32 %v7253, %v7266
    %7268 = vdwg.mxu0
    %7269 = vmatpush.bf16.msra.mxu0 %v6732
    %7270 = vmatpush.bf16.msra.mxu0 %v6727
    %7271 = vmatpush.bf16.msra.mxu0 %v6722
    %7272 = vmatpush.bf16.msra.mxu0 %v6717
    %7273 = vmatpush.bf16.msra.mxu0 %v6712
    %7274 = vmatpush.bf16.msra.mxu0 %v6707
    %7275 = vmatpush.bf16.msra.mxu0 %v6702
    %7276 = vmatpush.bf16.msra.mxu0 %v6697
    %7277 = vmatmul.bf16.gmra.mxu0 %v5637
    %v7278 = vpop.f32.mrf.mxu0
    %v7279 = vadd.f32 %v7265, %v7278
    %v7280 = vpop.f32.mrf.mxu0
    %v7281 = vadd.f32 %v7267, %v7280
    %7282 = vdwg.mxu0
    %v7283 = vmul.f32 %v6999, 0.2
    %v7284 = vmul.f32 %v7069, 0.2
    %v7285 = vmul.f32 %v7139, 0.2
    %v7286 = vmul.f32 %v7209, 0.2
    %v7287 = vmul.f32 %v7279, 0.2
    %v7288 = vmul.f32 %v7001, 0.2
    %v7289 = vmul.f32 %v7071, 0.2
    %v7290 = vmul.f32 %v7141, 0.2
    %v7291 = vmul.f32 %v7211, 0.2
    %v7292 = vmul.f32 %v7281, 0.2
    %v7293 = vmax.f32 %v6999, %v7283
    %v7294 = vmax.f32 %v7069, %v7284
    %v7295 = vmax.f32 %v7139, %v7285
    %v7296 = vmax.f32 %v7209, %v7286
    %v7297 = vmax.f32 %v7279, %v7287
    %v7298 = vmax.f32 %v7001, %v7288
    %v7299 = vmax.f32 %v7071, %v7289
    %v7300 = vmax.f32 %v7141, %v7290
    %v7301 = vmax.f32 %v7211, %v7291
    %v7302 = vmax.f32 %v7281, %v7292
    %v7303 = vpack.c.bf16 %v7298, %v7293
    %v7304 = vpack.c.bf16 %v7299, %v7294
    %v7305 = vpack.c.bf16 %v7300, %v7295
    %v7306 = vpack.c.bf16 %v7301, %v7296
    %v7307 = vpack.c.bf16 %v7302, %v7297
    %v7308 = vld [vmem:[#allocation11] sm:$0xff]
    %v7309 = vld [vmem:[#allocation11 + $0x8] sm:$0xff]
    %v7310 = vld [vmem:[#allocation11 + $0x10] sm:$0xff]
    %v7311 = vld [vmem:[#allocation11 + $0x18] sm:$0xff]
    %v7312 = vld [vmem:[#allocation11 + $0x20] sm:$0xff]
    %v7313 = vld [vmem:[#allocation11 + $0x28] sm:$0xff]
    %v7314 = vld [vmem:[#allocation11 + $0x30] sm:$0xff]
    %v7315 = vld [vmem:[#allocation11 + $0x38] sm:$0xff]
    %v7316 = vld [vmem:[#allocation11 + $0x40] sm:$0xff]
    %v7317 = vld [vmem:[#allocation11 + $0x48] sm:$0xff]
    %v7318 = vld [vmem:[#allocation11 + $0x50] sm:$0xff]
    %v7319 = vld [vmem:[#allocation11 + $0x58] sm:$0xff]
    %v7320 = vld [vmem:[#allocation11 + $0x60] sm:$0xff]
    %v7321 = vld [vmem:[#allocation11 + $0x68] sm:$0xff]
    %v7322 = vld [vmem:[#allocation11 + $0x70] sm:$0xff]
    %v7323 = vld [vmem:[#allocation11 + $0x78] sm:$0xff]
    %v7324 = vld [vmem:[#allocation11 + $0x80] sm:$0xff]
    %v7325 = vld [vmem:[#allocation11 + $0x88] sm:$0xff]
    %v7326 = vld [vmem:[#allocation11 + $0x90] sm:$0xff]
    %v7327 = vld [vmem:[#allocation11 + $0x98] sm:$0xff]
    %v7328 = vld [vmem:[#allocation11 + $0xa0] sm:$0xff]
    %v7329 = vld [vmem:[#allocation11 + $0xa8] sm:$0xff]
    %v7330 = vld [vmem:[#allocation11 + $0xb0] sm:$0xff]
    %v7331 = vld [vmem:[#allocation11 + $0xb8] sm:$0xff]
    %v7332 = vld [vmem:[#allocation11 + $0xc0] sm:$0xff]
    %v7333 = vld [vmem:[#allocation11 + $0xc8] sm:$0xff]
    %v7334 = vld [vmem:[#allocation11 + $0xd0] sm:$0xff]
    %v7335 = vld [vmem:[#allocation11 + $0xd8] sm:$0xff]
    %v7336 = vld [vmem:[#allocation11 + $0xe0] sm:$0xff]
    %v7337 = vld [vmem:[#allocation11 + $0xe8] sm:$0xff]
    %v7338 = vld [vmem:[#allocation11 + $0xf0] sm:$0xff]
    %v7339 = vld [vmem:[#allocation11 + $0xf8] sm:$0xff]
    %v7340 = vld [vmem:[#allocation11 + $0x100] sm:$0xff]
    %v7341 = vld [vmem:[#allocation11 + $0x108] sm:$0xff]
    %v7342 = vld [vmem:[#allocation11 + $0x110] sm:$0xff]
    %v7343 = vld [vmem:[#allocation11 + $0x118] sm:$0xff]
    %v7344 = vld [vmem:[#allocation11 + $0x120] sm:$0xff]
    %v7345 = vld [vmem:[#allocation11 + $0x128] sm:$0xff]
    %v7346 = vld [vmem:[#allocation11 + $0x130] sm:$0xff]
    %v7347 = vld [vmem:[#allocation11 + $0x138] sm:$0xff]
    %v7348 = vld [vmem:[#allocation11 + $0x140] sm:$0xff]
    %v7349 = vld [vmem:[#allocation11 + $0x148] sm:$0xff]
    %v7350 = vld [vmem:[#allocation11 + $0x150] sm:$0xff]
    %v7351 = vld [vmem:[#allocation11 + $0x158] sm:$0xff]
    %v7352 = vld [vmem:[#allocation11 + $0x160] sm:$0xff]
    %v7353 = vld [vmem:[#allocation11 + $0x168] sm:$0xff]
    %v7354 = vld [vmem:[#allocation11 + $0x170] sm:$0xff]
    %v7355 = vld [vmem:[#allocation11 + $0x178] sm:$0xff]
    %v7356 = vld [vmem:[#allocation11 + $0x180] sm:$0xff]
    %v7357 = vld [vmem:[#allocation11 + $0x188] sm:$0xff]
    %v7358 = vld [vmem:[#allocation11 + $0x190] sm:$0xff]
    %v7359 = vld [vmem:[#allocation11 + $0x198] sm:$0xff]
    %v7360 = vld [vmem:[#allocation11 + $0x1a0] sm:$0xff]
    %v7361 = vld [vmem:[#allocation11 + $0x1a8] sm:$0xff]
    %v7362 = vld [vmem:[#allocation11 + $0x1b0] sm:$0xff]
    %v7363 = vld [vmem:[#allocation11 + $0x1b8] sm:$0xff]
    %v7364 = vld [vmem:[#allocation11 + $0x1c0] sm:$0xff]
    %v7365 = vld [vmem:[#allocation11 + $0x1c8] sm:$0xff]
    %v7366 = vld [vmem:[#allocation11 + $0x1d0] sm:$0xff]
    %v7367 = vld [vmem:[#allocation11 + $0x1d8] sm:$0xff]
    %v7368 = vld [vmem:[#allocation11 + $0x1e0] sm:$0xff]
    %v7369 = vld [vmem:[#allocation11 + $0x1e8] sm:$0xff]
    %v7370 = vld [vmem:[#allocation11 + $0x1f0] sm:$0xff]
    %v7371 = vld [vmem:[#allocation11 + $0x1f8] sm:$0xff]
    %v7372 = vld [vmem:[#allocation11 + $0x200] sm:$0xff]
    %v7373 = vld [vmem:[#allocation11 + $0x208] sm:$0xff]
    %v7374 = vld [vmem:[#allocation11 + $0x210] sm:$0xff]
    %v7375 = vld [vmem:[#allocation11 + $0x218] sm:$0xff]
    %v7376 = vld [vmem:[#allocation11 + $0x220] sm:$0xff]
    %v7377 = vld [vmem:[#allocation11 + $0x228] sm:$0xff]
    %v7378 = vld [vmem:[#allocation11 + $0x230] sm:$0xff]
    %v7379 = vld [vmem:[#allocation11 + $0x238] sm:$0xff]
    %v7380 = vld [vmem:[#allocation11 + $0x240] sm:$0xff]
    %v7381 = vld [vmem:[#allocation11 + $0x248] sm:$0xff]
    %v7382 = vld [vmem:[#allocation11 + $0x250] sm:$0xff]
    %v7383 = vld [vmem:[#allocation11 + $0x258] sm:$0xff]
    %v7384 = vld [vmem:[#allocation11 + $0x260] sm:$0xff]
    %v7385 = vld [vmem:[#allocation11 + $0x268] sm:$0xff]
    %v7386 = vld [vmem:[#allocation11 + $0x270] sm:$0xff]
    %v7387 = vld [vmem:[#allocation11 + $0x278] sm:$0xff]
    %s7388 = scalar_lea.vmem [#allocation14], 4
    %v7389 = vld [vmem:[%s7388] ss:$8 sm:$0x3]
    %v7391 = vperm.slane %v7389, 0
    %v7392 = vperm.slane %v7389, 1
    %v7475 = vunpack.c.l.b16 %v7308
    %v7476 = vunpack.c.h.b16 %v7308
    %v7477 = vunpack.c.l.b16 %v7309
    %v7478 = vunpack.c.h.b16 %v7309
    %v7479 = vunpack.c.l.b16 %v7310
    %v7480 = vunpack.c.h.b16 %v7310
    %v7481 = vunpack.c.l.b16 %v7311
    %v7482 = vunpack.c.h.b16 %v7311
    %v7483 = vunpack.c.l.b16 %v7312
    %v7484 = vunpack.c.h.b16 %v7312
    %v7485 = vunpack.c.l.b16 %v7313
    %v7486 = vunpack.c.h.b16 %v7313
    %v7487 = vunpack.c.l.b16 %v7314
    %v7488 = vunpack.c.h.b16 %v7314
    %v7489 = vunpack.c.l.b16 %v7315
    %v7490 = vunpack.c.h.b16 %v7315
    %v7491 = vunpack.c.l.b16 %v7316
    %v7492 = vunpack.c.h.b16 %v7316
    %v7493 = vunpack.c.l.b16 %v7317
    %v7494 = vunpack.c.h.b16 %v7317
    %v7495 = vunpack.c.l.b16 %v7318
    %v7496 = vunpack.c.h.b16 %v7318
    %v7497 = vunpack.c.l.b16 %v7319
    %v7498 = vunpack.c.h.b16 %v7319
    %v7499 = vunpack.c.l.b16 %v7320
    %v7500 = vunpack.c.h.b16 %v7320
    %v7501 = vunpack.c.l.b16 %v7321
    %v7502 = vunpack.c.h.b16 %v7321
    %v7503 = vunpack.c.l.b16 %v7322
    %v7504 = vunpack.c.h.b16 %v7322
    %v7505 = vunpack.c.l.b16 %v7323
    %v7506 = vunpack.c.h.b16 %v7323
    %v7507 = vunpack.c.l.b16 %v7324
    %v7508 = vunpack.c.h.b16 %v7324
    %v7509 = vunpack.c.l.b16 %v7325
    %v7510 = vunpack.c.h.b16 %v7325
    %v7511 = vunpack.c.l.b16 %v7326
    %v7512 = vunpack.c.h.b16 %v7326
    %v7513 = vunpack.c.l.b16 %v7327
    %v7514 = vunpack.c.h.b16 %v7327
    %v7515 = vunpack.c.l.b16 %v7328
    %v7516 = vunpack.c.h.b16 %v7328
    %v7517 = vunpack.c.l.b16 %v7329
    %v7518 = vunpack.c.h.b16 %v7329
    %v7519 = vunpack.c.l.b16 %v7330
    %v7520 = vunpack.c.h.b16 %v7330
    %v7521 = vunpack.c.l.b16 %v7331
    %v7522 = vunpack.c.h.b16 %v7331
    %v7523 = vunpack.c.l.b16 %v7332
    %v7524 = vunpack.c.h.b16 %v7332
    %v7525 = vunpack.c.l.b16 %v7333
    %v7526 = vunpack.c.h.b16 %v7333
    %v7527 = vunpack.c.l.b16 %v7334
    %v7528 = vunpack.c.h.b16 %v7334
    %v7529 = vunpack.c.l.b16 %v7335
    %v7530 = vunpack.c.h.b16 %v7335
    %v7531 = vunpack.c.l.b16 %v7336
    %v7532 = vunpack.c.h.b16 %v7336
    %v7533 = vunpack.c.l.b16 %v7337
    %v7534 = vunpack.c.h.b16 %v7337
    %v7535 = vunpack.c.l.b16 %v7338
    %v7536 = vunpack.c.h.b16 %v7338
    %v7537 = vunpack.c.l.b16 %v7339
    %v7538 = vunpack.c.h.b16 %v7339
    %v7539 = vunpack.c.l.b16 %v7340
    %v7540 = vunpack.c.h.b16 %v7340
    %v7541 = vunpack.c.l.b16 %v7341
    %v7542 = vunpack.c.h.b16 %v7341
    %v7543 = vunpack.c.l.b16 %v7342
    %v7544 = vunpack.c.h.b16 %v7342
    %v7545 = vunpack.c.l.b16 %v7343
    %v7546 = vunpack.c.h.b16 %v7343
    %v7547 = vunpack.c.l.b16 %v7344
    %v7548 = vunpack.c.h.b16 %v7344
    %v7549 = vunpack.c.l.b16 %v7345
    %v7550 = vunpack.c.h.b16 %v7345
    %v7551 = vunpack.c.l.b16 %v7346
    %v7552 = vunpack.c.h.b16 %v7346
    %v7553 = vunpack.c.l.b16 %v7347
    %v7554 = vunpack.c.h.b16 %v7347
    %v7555 = vunpack.c.l.b16 %v7348
    %v7556 = vunpack.c.h.b16 %v7348
    %v7557 = vunpack.c.l.b16 %v7349
    %v7558 = vunpack.c.h.b16 %v7349
    %v7559 = vunpack.c.l.b16 %v7350
    %v7560 = vunpack.c.h.b16 %v7350
    %v7561 = vunpack.c.l.b16 %v7351
    %v7562 = vunpack.c.h.b16 %v7351
    %v7563 = vunpack.c.l.b16 %v7352
    %v7564 = vunpack.c.h.b16 %v7352
    %v7565 = vunpack.c.l.b16 %v7353
    %v7566 = vunpack.c.h.b16 %v7353
    %v7567 = vunpack.c.l.b16 %v7354
    %v7568 = vunpack.c.h.b16 %v7354
    %v7569 = vunpack.c.l.b16 %v7355
    %v7570 = vunpack.c.h.b16 %v7355
    %v7571 = vunpack.c.l.b16 %v7356
    %v7572 = vunpack.c.h.b16 %v7356
    %v7573 = vunpack.c.l.b16 %v7357
    %v7574 = vunpack.c.h.b16 %v7357
    %v7575 = vunpack.c.l.b16 %v7358
    %v7576 = vunpack.c.h.b16 %v7358
    %v7577 = vunpack.c.l.b16 %v7359
    %v7578 = vunpack.c.h.b16 %v7359
    %v7579 = vunpack.c.l.b16 %v7360
    %v7580 = vunpack.c.h.b16 %v7360
    %v7581 = vunpack.c.l.b16 %v7361
    %v7582 = vunpack.c.h.b16 %v7361
    %v7583 = vunpack.c.l.b16 %v7362
    %v7584 = vunpack.c.h.b16 %v7362
    %v7585 = vunpack.c.l.b16 %v7363
    %v7586 = vunpack.c.h.b16 %v7363
    %v7587 = vunpack.c.l.b16 %v7364
    %v7588 = vunpack.c.h.b16 %v7364
    %v7589 = vunpack.c.l.b16 %v7365
    %v7590 = vunpack.c.h.b16 %v7365
    %v7591 = vunpack.c.l.b16 %v7366
    %v7592 = vunpack.c.h.b16 %v7366
    %v7593 = vunpack.c.l.b16 %v7367
    %v7594 = vunpack.c.h.b16 %v7367
    %v7595 = vunpack.c.l.b16 %v7368
    %v7596 = vunpack.c.h.b16 %v7368
    %v7597 = vunpack.c.l.b16 %v7369
    %v7598 = vunpack.c.h.b16 %v7369
    %v7599 = vunpack.c.l.b16 %v7370
    %v7600 = vunpack.c.h.b16 %v7370
    %v7601 = vunpack.c.l.b16 %v7371
    %v7602 = vunpack.c.h.b16 %v7371
    %v7603 = vunpack.c.l.b16 %v7372
    %v7604 = vunpack.c.h.b16 %v7372
    %v7605 = vunpack.c.l.b16 %v7373
    %v7606 = vunpack.c.h.b16 %v7373
    %v7607 = vunpack.c.l.b16 %v7374
    %v7608 = vunpack.c.h.b16 %v7374
    %v7609 = vunpack.c.l.b16 %v7375
    %v7610 = vunpack.c.h.b16 %v7375
    %v7611 = vunpack.c.l.b16 %v7376
    %v7612 = vunpack.c.h.b16 %v7376
    %v7613 = vunpack.c.l.b16 %v7377
    %v7614 = vunpack.c.h.b16 %v7377
    %v7615 = vunpack.c.l.b16 %v7378
    %v7616 = vunpack.c.h.b16 %v7378
    %v7617 = vunpack.c.l.b16 %v7379
    %v7618 = vunpack.c.h.b16 %v7379
    %v7619 = vunpack.c.l.b16 %v7380
    %v7620 = vunpack.c.h.b16 %v7380
    %v7621 = vunpack.c.l.b16 %v7381
    %v7622 = vunpack.c.h.b16 %v7381
    %v7623 = vunpack.c.l.b16 %v7382
    %v7624 = vunpack.c.h.b16 %v7382
    %v7625 = vunpack.c.l.b16 %v7383
    %v7626 = vunpack.c.h.b16 %v7383
    %v7627 = vunpack.c.l.b16 %v7384
    %v7628 = vunpack.c.h.b16 %v7384
    %v7629 = vunpack.c.l.b16 %v7385
    %v7630 = vunpack.c.h.b16 %v7385
    %v7631 = vunpack.c.l.b16 %v7386
    %v7632 = vunpack.c.h.b16 %v7386
    %v7633 = vunpack.c.l.b16 %v7387
    %v7634 = vunpack.c.h.b16 %v7387
    %v7635 = vpack.c.b16 %v7477, %v7475
    %v7636 = vpack.c.b16 %v7478, %v7476
    %v7637 = vpack.c.b16 %v7481, %v7479
    %v7638 = vpack.c.b16 %v7482, %v7480
    %v7639 = vpack.c.b16 %v7485, %v7483
    %v7640 = vpack.c.b16 %v7486, %v7484
    %v7641 = vpack.c.b16 %v7489, %v7487
    %v7642 = vpack.c.b16 %v7490, %v7488
    %v7643 = vpack.c.b16 %v7493, %v7491
    %v7644 = vpack.c.b16 %v7494, %v7492
    %v7645 = vpack.c.b16 %v7497, %v7495
    %v7646 = vpack.c.b16 %v7498, %v7496
    %v7647 = vpack.c.b16 %v7501, %v7499
    %v7648 = vpack.c.b16 %v7502, %v7500
    %v7649 = vpack.c.b16 %v7505, %v7503
    %v7650 = vpack.c.b16 %v7506, %v7504
    %v7651 = vpack.c.b16 %v7509, %v7507
    %v7652 = vpack.c.b16 %v7510, %v7508
    %v7653 = vpack.c.b16 %v7513, %v7511
    %v7654 = vpack.c.b16 %v7514, %v7512
    %v7655 = vpack.c.b16 %v7517, %v7515
    %v7656 = vpack.c.b16 %v7518, %v7516
    %v7657 = vpack.c.b16 %v7521, %v7519
    %v7658 = vpack.c.b16 %v7522, %v7520
    %v7659 = vpack.c.b16 %v7525, %v7523
    %v7660 = vpack.c.b16 %v7526, %v7524
    %v7661 = vpack.c.b16 %v7529, %v7527
    %v7662 = vpack.c.b16 %v7530, %v7528
    %v7663 = vpack.c.b16 %v7533, %v7531
    %v7664 = vpack.c.b16 %v7534, %v7532
    %v7665 = vpack.c.b16 %v7537, %v7535
    %v7666 = vpack.c.b16 %v7538, %v7536
    %v7667 = vpack.c.b16 %v7541, %v7539
    %v7668 = vpack.c.b16 %v7542, %v7540
    %v7669 = vpack.c.b16 %v7545, %v7543
    %v7670 = vpack.c.b16 %v7546, %v7544
    %v7671 = vpack.c.b16 %v7549, %v7547
    %v7672 = vpack.c.b16 %v7550, %v7548
    %v7673 = vpack.c.b16 %v7553, %v7551
    %v7674 = vpack.c.b16 %v7554, %v7552
    %v7675 = vpack.c.b16 %v7557, %v7555
    %v7676 = vpack.c.b16 %v7558, %v7556
    %v7677 = vpack.c.b16 %v7561, %v7559
    %v7678 = vpack.c.b16 %v7562, %v7560
    %v7679 = vpack.c.b16 %v7565, %v7563
    %v7680 = vpack.c.b16 %v7566, %v7564
    %v7681 = vpack.c.b16 %v7569, %v7567
    %v7682 = vpack.c.b16 %v7570, %v7568
    %v7683 = vpack.c.b16 %v7573, %v7571
    %v7684 = vpack.c.b16 %v7574, %v7572
    %v7685 = vpack.c.b16 %v7577, %v7575
    %v7686 = vpack.c.b16 %v7578, %v7576
    %v7687 = vpack.c.b16 %v7581, %v7579
    %v7688 = vpack.c.b16 %v7582, %v7580
    %v7689 = vpack.c.b16 %v7585, %v7583
    %v7690 = vpack.c.b16 %v7586, %v7584
    %v7691 = vpack.c.b16 %v7589, %v7587
    %v7692 = vpack.c.b16 %v7590, %v7588
    %v7693 = vpack.c.b16 %v7593, %v7591
    %v7694 = vpack.c.b16 %v7594, %v7592
    %v7695 = vpack.c.b16 %v7597, %v7595
    %v7696 = vpack.c.b16 %v7598, %v7596
    %v7697 = vpack.c.b16 %v7601, %v7599
    %v7698 = vpack.c.b16 %v7602, %v7600
    %v7699 = vpack.c.b16 %v7605, %v7603
    %v7700 = vpack.c.b16 %v7606, %v7604
    %v7701 = vpack.c.b16 %v7609, %v7607
    %v7702 = vpack.c.b16 %v7610, %v7608
    %v7703 = vpack.c.b16 %v7613, %v7611
    %v7704 = vpack.c.b16 %v7614, %v7612
    %v7705 = vpack.c.b16 %v7617, %v7615
    %v7706 = vpack.c.b16 %v7618, %v7616
    %v7707 = vpack.c.b16 %v7621, %v7619
    %v7708 = vpack.c.b16 %v7622, %v7620
    %v7709 = vpack.c.b16 %v7625, %v7623
    %v7710 = vpack.c.b16 %v7626, %v7624
    %v7711 = vpack.c.b16 %v7629, %v7627
    %v7712 = vpack.c.b16 %v7630, %v7628
    %v7713 = vpack.c.b16 %v7633, %v7631
    %v7714 = vpack.c.b16 %v7634, %v7632
    %7795 = vmatpush.bf16.msra.mxu0 %v7649
    %7796 = vmatpush.bf16.msra.mxu0 %v7647
    %7797 = vmatpush.bf16.msra.mxu0 %v7645
    %7798 = vmatpush.bf16.msra.mxu0 %v7643
    %7799 = vmatpush.bf16.msra.mxu0 %v7641
    %7800 = vmatpush.bf16.msra.mxu0 %v7639
    %7801 = vmatpush.bf16.msra.mxu0 %v7637
    %7802 = vmatpush.bf16.msra.mxu0 %v7635
    %7803 = vmatmul.bf16.gmra.mxu0 %v7303
    %v7804 = vpop.f32.mrf.mxu0
    %v7805 = vadd.f32 %v7391, %v7804
    %v7806 = vpop.f32.mrf.mxu0
    %v7807 = vadd.f32 %v7391, %v7806
    %7808 = vdwg.mxu0
    %7809 = vmatpush.bf16.msra.mxu0 %v7665
    %7810 = vmatpush.bf16.msra.mxu0 %v7663
    %7811 = vmatpush.bf16.msra.mxu0 %v7661
    %7812 = vmatpush.bf16.msra.mxu0 %v7659
    %7813 = vmatpush.bf16.msra.mxu0 %v7657
    %7814 = vmatpush.bf16.msra.mxu0 %v7655
    %7815 = vmatpush.bf16.msra.mxu0 %v7653
    %7816 = vmatpush.bf16.msra.mxu0 %v7651
    %7817 = vmatmul.bf16.gmra.mxu0 %v7304
    %v7818 = vpop.f32.mrf.mxu0
    %v7819 = vadd.f32 %v7805, %v7818
    %v7820 = vpop.f32.mrf.mxu0
    %v7821 = vadd.f32 %v7807, %v7820
    %7822 = vdwg.mxu0
    %7823 = vmatpush.bf16.msra.mxu0 %v7681
    %7824 = vmatpush.bf16.msra.mxu0 %v7679
    %7825 = vmatpush.bf16.msra.mxu0 %v7677
    %7826 = vmatpush.bf16.msra.mxu0 %v7675
    %7827 = vmatpush.bf16.msra.mxu0 %v7673
    %7828 = vmatpush.bf16.msra.mxu0 %v7671
    %7829 = vmatpush.bf16.msra.mxu0 %v7669
    %7830 = vmatpush.bf16.msra.mxu0 %v7667
    %7831 = vmatmul.bf16.gmra.mxu0 %v7305
    %v7832 = vpop.f32.mrf.mxu0
    %v7833 = vadd.f32 %v7819, %v7832
    %v7834 = vpop.f32.mrf.mxu0
    %v7835 = vadd.f32 %v7821, %v7834
    %7836 = vdwg.mxu0
    %7837 = vmatpush.bf16.msra.mxu0 %v7697
    %7838 = vmatpush.bf16.msra.mxu0 %v7695
    %7839 = vmatpush.bf16.msra.mxu0 %v7693
    %7840 = vmatpush.bf16.msra.mxu0 %v7691
    %7841 = vmatpush.bf16.msra.mxu0 %v7689
    %7842 = vmatpush.bf16.msra.mxu0 %v7687
    %7843 = vmatpush.bf16.msra.mxu0 %v7685
    %7844 = vmatpush.bf16.msra.mxu0 %v7683
    %7845 = vmatmul.bf16.gmra.mxu0 %v7306
    %v7846 = vpop.f32.mrf.mxu0
    %v7847 = vadd.f32 %v7833, %v7846
    %v7848 = vpop.f32.mrf.mxu0
    %v7849 = vadd.f32 %v7835, %v7848
    %7850 = vdwg.mxu0
    %7851 = vmatpush.bf16.msra.mxu0 %v7713
    %7852 = vmatpush.bf16.msra.mxu0 %v7711
    %7853 = vmatpush.bf16.msra.mxu0 %v7709
    %7854 = vmatpush.bf16.msra.mxu0 %v7707
    %7855 = vmatpush.bf16.msra.mxu0 %v7705
    %7856 = vmatpush.bf16.msra.mxu0 %v7703
    %7857 = vmatpush.bf16.msra.mxu0 %v7701
    %7858 = vmatpush.bf16.msra.mxu0 %v7699
    %7859 = vmatmul.bf16.gmra.mxu0 %v7307
    %v7860 = vpop.f32.mrf.mxu0
    %v7861 = vadd.f32 %v7847, %v7860
    %v7862 = vpop.f32.mrf.mxu0
    %v7863 = vadd.f32 %v7849, %v7862
    %7864 = vdwg.mxu0
    %7865 = vmatpush.bf16.msra.mxu0 %v7650
    %7866 = vmatpush.bf16.msra.mxu0 %v7648
    %7867 = vmatpush.bf16.msra.mxu0 %v7646
    %7868 = vmatpush.bf16.msra.mxu0 %v7644
    %7869 = vmatpush.bf16.msra.mxu0 %v7642
    %7870 = vmatpush.bf16.msra.mxu0 %v7640
    %7871 = vmatpush.bf16.msra.mxu0 %v7638
    %7872 = vmatpush.bf16.msra.mxu0 %v7636
    %7873 = vmatmul.bf16.gmra.mxu0 %v7303
    %v7874 = vpop.f32.mrf.mxu0
    %v7875 = vadd.f32 %v7392, %v7874
    %v7876 = vpop.f32.mrf.mxu0
    %v7877 = vadd.f32 %v7392, %v7876
    %7878 = vdwg.mxu0
    %7879 = vmatpush.bf16.msra.mxu0 %v7666
    %7880 = vmatpush.bf16.msra.mxu0 %v7664
    %7881 = vmatpush.bf16.msra.mxu0 %v7662
    %7882 = vmatpush.bf16.msra.mxu0 %v7660
    %7883 = vmatpush.bf16.msra.mxu0 %v7658
    %7884 = vmatpush.bf16.msra.mxu0 %v7656
    %7885 = vmatpush.bf16.msra.mxu0 %v7654
    %7886 = vmatpush.bf16.msra.mxu0 %v7652
    %7887 = vmatmul.bf16.gmra.mxu0 %v7304
    %v7888 = vpop.f32.mrf.mxu0
    %v7889 = vadd.f32 %v7875, %v7888
    %v7890 = vpop.f32.mrf.mxu0
    %v7891 = vadd.f32 %v7877, %v7890
    %7892 = vdwg.mxu0
    %7893 = vmatpush.bf16.msra.mxu0 %v7682
    %7894 = vmatpush.bf16.msra.mxu0 %v7680
    %7895 = vmatpush.bf16.msra.mxu0 %v7678
    %7896 = vmatpush.bf16.msra.mxu0 %v7676
    %7897 = vmatpush.bf16.msra.mxu0 %v7674
    %7898 = vmatpush.bf16.msra.mxu0 %v7672
    %7899 = vmatpush.bf16.msra.mxu0 %v7670
    %7900 = vmatpush.bf16.msra.mxu0 %v7668
    %7901 = vmatmul.bf16.gmra.mxu0 %v7305
    %v7902 = vpop.f32.mrf.mxu0
    %v7903 = vadd.f32 %v7889, %v7902
    %v7904 = vpop.f32.mrf.mxu0
    %v7905 = vadd.f32 %v7891, %v7904
    %7906 = vdwg.mxu0
    %7907 = vmatpush.bf16.msra.mxu0 %v7698
    %7908 = vmatpush.bf16.msra.mxu0 %v7696
    %7909 = vmatpush.bf16.msra.mxu0 %v7694
    %7910 = vmatpush.bf16.msra.mxu0 %v7692
    %7911 = vmatpush.bf16.msra.mxu0 %v7690
    %7912 = vmatpush.bf16.msra.mxu0 %v7688
    %7913 = vmatpush.bf16.msra.mxu0 %v7686
    %7914 = vmatpush.bf16.msra.mxu0 %v7684
    %7915 = vmatmul.bf16.gmra.mxu0 %v7306
    %v7916 = vpop.f32.mrf.mxu0
    %v7917 = vadd.f32 %v7903, %v7916
    %v7918 = vpop.f32.mrf.mxu0
    %v7919 = vadd.f32 %v7905, %v7918
    %7920 = vdwg.mxu0
    %7921 = vmatpush.bf16.msra.mxu0 %v7714
    %7922 = vmatpush.bf16.msra.mxu0 %v7712
    %7923 = vmatpush.bf16.msra.mxu0 %v7710
    %7924 = vmatpush.bf16.msra.mxu0 %v7708
    %7925 = vmatpush.bf16.msra.mxu0 %v7706
    %7926 = vmatpush.bf16.msra.mxu0 %v7704
    %7927 = vmatpush.bf16.msra.mxu0 %v7702
    %7928 = vmatpush.bf16.msra.mxu0 %v7700
    %7929 = vmatmul.bf16.gmra.mxu0 %v7307
    %v7930 = vpop.f32.mrf.mxu0
    %v7931 = vadd.f32 %v7917, %v7930
    %v7932 = vpop.f32.mrf.mxu0
    %v7933 = vadd.f32 %v7919, %v7932
    %7934 = vdwg.mxu0
    %v7935 = vmul.f32 %v7861, 0.2
    %v7936 = vmul.f32 %v7931, 0.2
    %v7937 = vmul.f32 %v7863, 0.2
    %v7938 = vmul.f32 %v7933, 0.2
    %v7939 = vmax.f32 %v7861, %v7935
    %v7940 = vmax.f32 %v7931, %v7936
    %v7941 = vmax.f32 %v7863, %v7937
    %v7942 = vmax.f32 %v7933, %v7938
    %v7943 = vpack.c.bf16 %v7941, %v7939
    %v7944 = vpack.c.bf16 %v7942, %v7940
    %v7945 = vld [vmem:[#allocation13] sm:$0xf]
    %v7946 = vld [vmem:[#allocation13 + $0x4] sm:$0xf]
    %v7947 = vld [vmem:[#allocation13 + $0x8] sm:$0xf]
    %v7948 = vld [vmem:[#allocation13 + $0xc] sm:$0xf]
    %v7949 = vld [vmem:[#allocation13 + $0x10] sm:$0xf]
    %v7950 = vld [vmem:[#allocation13 + $0x14] sm:$0xf]
    %v7951 = vld [vmem:[#allocation13 + $0x18] sm:$0xf]
    %v7952 = vld [vmem:[#allocation13 + $0x1c] sm:$0xf]
    %v7953 = vld [vmem:[#allocation13 + $0x20] sm:$0xf]
    %v7954 = vld [vmem:[#allocation13 + $0x24] sm:$0xf]
    %v7955 = vld [vmem:[#allocation13 + $0x28] sm:$0xf]
    %v7956 = vld [vmem:[#allocation13 + $0x2c] sm:$0xf]
    %v7957 = vld [vmem:[#allocation13 + $0x30] sm:$0xf]
    %v7958 = vld [vmem:[#allocation13 + $0x34] sm:$0xf]
    %v7959 = vld [vmem:[#allocation13 + $0x38] sm:$0xf]
    %v7960 = vld [vmem:[#allocation13 + $0x3c] sm:$0xf]
    %v7961 = vld [vmem:[#allocation13 + $0x40] sm:$0xf]
    %v7962 = vld [vmem:[#allocation13 + $0x44] sm:$0xf]
    %v7963 = vld [vmem:[#allocation13 + $0x48] sm:$0xf]
    %v7964 = vld [vmem:[#allocation13 + $0x4c] sm:$0xf]
    %v7965 = vld [vmem:[#allocation13 + $0x50] sm:$0xf]
    %v7966 = vld [vmem:[#allocation13 + $0x54] sm:$0xf]
    %v7967 = vld [vmem:[#allocation13 + $0x58] sm:$0xf]
    %v7968 = vld [vmem:[#allocation13 + $0x5c] sm:$0xf]
    %v7969 = vld [vmem:[#allocation13 + $0x60] sm:$0xf]
    %v7970 = vld [vmem:[#allocation13 + $0x64] sm:$0xf]
    %v7971 = vld [vmem:[#allocation13 + $0x68] sm:$0xf]
    %v7972 = vld [vmem:[#allocation13 + $0x6c] sm:$0xf]
    %v7973 = vld [vmem:[#allocation13 + $0x70] sm:$0xf]
    %v7974 = vld [vmem:[#allocation13 + $0x74] sm:$0xf]
    %v7975 = vld [vmem:[#allocation13 + $0x78] sm:$0xf]
    %v7976 = vld [vmem:[#allocation13 + $0x7c] sm:$0xf]
    %v7977 = vld [vmem:[#allocation14 + $0x5] ss:$0 sm:$0xff]
    %v8010 = vunpack.c.l.b16 %v7945
    %v8011 = vunpack.c.l.b16 %v7946
    %v8012 = vunpack.c.l.b16 %v7947
    %v8013 = vunpack.c.l.b16 %v7948
    %v8014 = vunpack.c.l.b16 %v7949
    %v8015 = vunpack.c.l.b16 %v7950
    %v8016 = vunpack.c.l.b16 %v7951
    %v8017 = vunpack.c.l.b16 %v7952
    %v8018 = vunpack.c.l.b16 %v7953
    %v8019 = vunpack.c.l.b16 %v7954
    %v8020 = vunpack.c.l.b16 %v7955
    %v8021 = vunpack.c.l.b16 %v7956
    %v8022 = vunpack.c.l.b16 %v7957
    %v8023 = vunpack.c.l.b16 %v7958
    %v8024 = vunpack.c.l.b16 %v7959
    %v8025 = vunpack.c.l.b16 %v7960
    %v8026 = vunpack.c.l.b16 %v7961
    %v8027 = vunpack.c.l.b16 %v7962
    %v8028 = vunpack.c.l.b16 %v7963
    %v8029 = vunpack.c.l.b16 %v7964
    %v8030 = vunpack.c.l.b16 %v7965
    %v8031 = vunpack.c.l.b16 %v7966
    %v8032 = vunpack.c.l.b16 %v7967
    %v8033 = vunpack.c.l.b16 %v7968
    %v8034 = vunpack.c.l.b16 %v7969
    %v8035 = vunpack.c.l.b16 %v7970
    %v8036 = vunpack.c.l.b16 %v7971
    %v8037 = vunpack.c.l.b16 %v7972
    %v8038 = vunpack.c.l.b16 %v7973
    %v8039 = vunpack.c.l.b16 %v7974
    %v8040 = vunpack.c.l.b16 %v7975
    %v8041 = vunpack.c.l.b16 %v7976
    %v8042 = vpack.c.b16 %v8011, %v8010
    %v8043 = vpack.c.b16 %v8013, %v8012
    %v8044 = vpack.c.b16 %v8015, %v8014
    %v8045 = vpack.c.b16 %v8017, %v8016
    %v8046 = vpack.c.b16 %v8019, %v8018
    %v8047 = vpack.c.b16 %v8021, %v8020
    %v8048 = vpack.c.b16 %v8023, %v8022
    %v8049 = vpack.c.b16 %v8025, %v8024
    %v8050 = vpack.c.b16 %v8027, %v8026
    %v8051 = vpack.c.b16 %v8029, %v8028
    %v8052 = vpack.c.b16 %v8031, %v8030
    %v8053 = vpack.c.b16 %v8033, %v8032
    %v8054 = vpack.c.b16 %v8035, %v8034
    %v8055 = vpack.c.b16 %v8037, %v8036
    %v8056 = vpack.c.b16 %v8039, %v8038
    %v8057 = vpack.c.b16 %v8041, %v8040
    %8074 = vmatpush.bf16.msra.mxu0 %v8049
    %8075 = vmatpush.bf16.msra.mxu0 %v8048
    %8076 = vmatpush.bf16.msra.mxu0 %v8047
    %8077 = vmatpush.bf16.msra.mxu0 %v8046
    %8078 = vmatpush.bf16.msra.mxu0 %v8045
    %8079 = vmatpush.bf16.msra.mxu0 %v8044
    %8080 = vmatpush.bf16.msra.mxu0 %v8043
    %8081 = vmatpush.bf16.msra.mxu0 %v8042
    %8082 = vmatmul.bf16.gmra.mxu0 %v7943
    %v8083 = vpop.f32.mrf.mxu0
    %v8084 = vadd.f32 %v7977, %v8083
    %v8085 = vpop.f32.mrf.mxu0
    %v8086 = vadd.f32 %v7977, %v8085
    %8087 = vdwg.mxu0
    %8088 = vmatpush.bf16.msra.mxu0 %v8057
    %8089 = vmatpush.bf16.msra.mxu0 %v8056
    %8090 = vmatpush.bf16.msra.mxu0 %v8055
    %8091 = vmatpush.bf16.msra.mxu0 %v8054
    %8092 = vmatpush.bf16.msra.mxu0 %v8053
    %8093 = vmatpush.bf16.msra.mxu0 %v8052
    %8094 = vmatpush.bf16.msra.mxu0 %v8051
    %8095 = vmatpush.bf16.msra.mxu0 %v8050
    %8096 = vmatmul.bf16.gmra.mxu0 %v7944
    %v8097 = vpop.f32.mrf.mxu0
    %v8098 = vadd.f32 %v8084, %v8097
    %v8099 = vpop.f32.mrf.mxu0
    %v8100 = vadd.f32 %v8086, %v8099
    %8101 = vdwg.mxu0
    %8102 = vst [vmem:[#allocation16] sm:$0xff] %v8098
    %8103 = vst [vmem:[#allocation16 + $0x8] sm:$0xff] %v8100
    // Predicated region
    $region66: #{tpu_custom_call.1} parent=1 // pred_check
      _
    $region67: #{tpu_custom_call.1} parent=1 // pred_check_branch
      %8105 = sbr.rel (0) target = $region69
    $region68: #{tpu_custom_call.1} parent=1 // pred_region
      %8107 = vsyncadd [#allocation4], 0
      %s8108 = sshll.u32 [#allocation16], 4
      %s8109 = int_to_ptr.vmem [resolvable:$true] %s8108
      %s8110 = sshll.u32 %s8, 4
      %s8111 = int_to_ptr.hbm [resolvable:$true] %s8110
      %8116 = dma.vmem_to_hbm [thread:$0]  %s8109, 256, %s8111, [#allocation4], 128, 128, 8
    $region69: #{tpu_custom_call.1} parent=1 // pred_fallthru
      _
    // Predicated region
    $region70: #{tpu_custom_call.1} parent=1 // pred_check
      _
    $region71: #{tpu_custom_call.1} parent=1 // pred_check_branch
      %8118 = sbr.rel (0) target = $region73
    $region72: #{tpu_custom_call.1} parent=1 // pred_region
      %8120 = dma.done [#allocation4], 256
    $region73: #{tpu_custom_call.1} parent=1 // pred_fallthru
      _
    %8121 = vsyncpa [#allocation3], 1
    %8122 = vsyncpa [#allocation6], 1
    %8123 = vsyncpa [#allocation9], 1
    %8124 = vsyncpa [#allocation12], 1
    %8125 = vsyncpa [#allocation15], 1
    %8126 = vsyncpa [#allocation4], 1

</llo_original>
